<compile_context>
chip_gen: v7x
topology: tpu7x:2x2x1
jax: 0.10.0
libtpu: 0.0.40
codegen_flags: <defaults>
</compile_context>

<pallas_src>
import functools
import math

import jax
import jax.numpy as jnp
from jax.experimental import pallas as pl
from jax.experimental.pallas import tpu as pltpu


# ----------------------------------------------------------------------------
# Small helpers
# ----------------------------------------------------------------------------
def _round_up(x, m):
    return (x + m - 1) // m * m


def _choose_m_tile(M):
    """Largest tm <= 512, multiple of 8, dividing M (padded to a multiple of 8)."""
    Mp = _round_up(max(M, 8), 8)
    cap = min(512, Mp)
    tm = 8
    for cand in range(8, cap + 1, 8):
        if Mp % cand == 0:
            tm = cand
    return tm, Mp


# ----------------------------------------------------------------------------
# Pallas kernels
# ----------------------------------------------------------------------------
def _mm_bias_kernel(x_ref, w_ref, b_ref, o_ref, *, relu):
    # Full-K matmul: x [tm, K] bf16 @ w [K, tn] bf16 (BN scale folded) + bias [1, tn] f32.
    out = jnp.dot(x_ref[...], w_ref[...], preferred_element_type=jnp.float32)
    out = out + b_ref[...]
    if relu:
        out = jnp.maximum(out, 0.0)
    o_ref[...] = out.astype(o_ref.dtype)


def _mm_bias_res_relu_kernel(x_ref, w_ref, b_ref, r_ref, o_ref):
    # Fused conv3 + bn3 + residual add + relu of the bottleneck block (full-K).
    out = jnp.dot(x_ref[...], w_ref[...], preferred_element_type=jnp.float32)
    out = out + b_ref[...] + r_ref[...].astype(jnp.float32)
    o_ref[...] = jnp.maximum(out, 0.0).astype(o_ref.dtype)


def _conv3x3_kernel(x_ref, w_ref, b_ref, o_ref, *, starts, cin, m2):
    # 3x3 / stride-1 conv without im2col.
    #   x_ref: [1, Hp2*Wp, Cin]  flattened, spatially padded image (bf16)
    #   w_ref: [9*Cin, tn]       tap-major folded weights (bf16)
    #   b_ref: [1, tn]           f32 bias
    #   o_ref: [1, m2, tn]       m2 = Ho*Wp rows (junk columns x >= Wo are sliced off
    #                            by the wrapper)
    # For tap t = (ki, kj), the inputs needed by all m2 output positions form ONE
    # contiguous slab of the flattened image starting at ki*Wp + kj.
    acc = None
    for t, s in enumerate(starts):
        xs = x_ref[0, pl.ds(s, m2), :]                       # [m2, Cin]
        wt = w_ref[pl.ds(t * cin, cin), :]                   # [Cin, tn]
        p = jnp.dot(xs, wt, preferred_element_type=jnp.float32)
        acc = p if acc is None else acc + p
    out = acc + b_ref[...]
    o_ref[0] = jnp.maximum(out, 0.0).astype(o_ref.dtype)


def _maxpool_kernel(ee_ref, eo_ref, oe_ref, oo_ref, o_ref, *, ho, wo):
    # 3x3 / stride-2 / pad-1 max pool over 4 (row-parity, col-parity) planes so each of
    # the 9 window taps is a unit-stride slice of one plane.
    def tap(ref, di, dj):
        return ref[:, di:di + ho, dj:dj + wo, :]

    out = tap(ee_ref, 0, 0)
    for ref, di, dj in ((eo_ref, 0, 0), (ee_ref, 0, 1),
                        (oe_ref, 0, 0), (oo_ref, 0, 0), (oe_ref, 0, 1),
                        (ee_ref, 1, 0), (eo_ref, 1, 0), (ee_ref, 1, 1)):
        out = jnp.maximum(out, tap(ref, di, dj))
    o_ref[...] = out


# ----------------------------------------------------------------------------
# pallas_call wrappers
# ----------------------------------------------------------------------------
def _fused_matmul(patches, wmat, bias_row, residual=None, *, relu=True,
                  out_dtype=jnp.bfloat16):
    """patches [M,K] bf16 @ wmat [K,Np] bf16 (+bias [+residual]) with a (tm,tn) grid,
    full-K panels (no K grid axis, no accumulator scratch)."""
    M, K = patches.shape
    Kw, Np = wmat.shape
    assert K == Kw and Np % 128 == 0

    tn = 256 if Np % 256 == 0 else 128
    tm, Mp = _choose_m_tile(M)
    if Mp != M:  # ragged M (avoided for the shapes here, kept as a safety net)
        patches = jnp.pad(patches, ((0, Mp - M), (0, 0)))
        if residual is not None:
            residual = jnp.pad(residual, ((0, Mp - M), (0, 0)))
    # Expose at least 2 grid blocks so both TensorCores (megacore / v7x) get work.
    if (Mp // tm) * (Np // tn) < 2 and tm >= 16 and (tm // 2) % 8 == 0:
        tm //= 2

    grid = (Mp // tm, Np // tn)
    x_spec = pl.BlockSpec((tm, K), lambda i, j: (i, 0))
    w_spec = pl.BlockSpec((K, tn), lambda i, j: (0, j))
    b_spec = pl.BlockSpec((1, tn), lambda i, j: (0, j))
    o_spec = pl.BlockSpec((tm, tn), lambda i, j: (i, j))
    cparams = pltpu.CompilerParams(dimension_semantics=("parallel", "parallel"))
    flops = 2 * Mp * K * Np
    bytes_accessed = (Mp * K + K * Np + Mp * Np) * 2 + Np * 4

    if residual is None:
        out = pl.pallas_call(
            functools.partial(_mm_bias_kernel, relu=relu),
            out_shape=jax.ShapeDtypeStruct((Mp, Np), out_dtype),
            grid=grid,
            in_specs=[x_spec, w_spec, b_spec],
            out_specs=o_spec,
            compiler_params=cparams,
            cost_estimate=pl.CostEstimate(flops=flops, transcendentals=0,
                                          bytes_accessed=bytes_accessed),
        )(patches, wmat, bias_row)
    else:
        r = residual.astype(out_dtype)
        r_spec = pl.BlockSpec((tm, tn), lambda i, j: (i, j))
        out = pl.pallas_call(
            _mm_bias_res_relu_kernel,
            out_shape=jax.ShapeDtypeStruct((Mp, Np), out_dtype),
            grid=grid,
            in_specs=[x_spec, w_spec, b_spec, r_spec],
            out_specs=o_spec,
            compiler_params=cparams,
            # residual is dead after the add -> reuse its HBM buffer as the output
            input_output_aliases={3: 0},
            cost_estimate=pl.CostEstimate(flops=flops, transcendentals=0,
                                          bytes_accessed=bytes_accessed + Mp * Np * 2),
        )(patches, wmat, bias_row, r)

    return out[:M] if Mp != M else out


def conv1x1(x_nhwc, wmat, bias_row, *, relu, residual=None):
    """1x1 conv + folded FrozenBN (+ optional residual) + optional ReLU.  Stride handled
    by the caller (cheap subsample slice done once per block)."""
    N, H, W, Cx = x_nhwc.shape
    coutp = wmat.shape[1]
    patches = x_nhwc.reshape(N * H * W, Cx)
    r2 = None if residual is None else residual.reshape(N * H * W, coutp)
    out = _fused_matmul(patches, wmat, bias_row, r2, relu=relu)
    return out.reshape(N, H, W, coutp)


def conv3x3_s1(x_nhwc, wmat, bias_row):
    """3x3 / stride-1 / pad-1 conv + folded FrozenBN + ReLU, no im2col.

    The padded image is flattened so all 9 taps are contiguous slabs; the kernel computes
    Wp(=W+2) output columns per row and the wrapper drops the 2 junk columns."""
    N, H, W, Cx = x_nhwc.shape
    coutp = wmat.shape[1]
    Wp = W + 2
    Hp2 = H + 3                     # 1 top pad + 2 bottom pads (keeps all tap slabs in-bounds)
    m2 = H * Wp
    xp = jnp.pad(x_nhwc, ((0, 0), (1, 2), (1, 1), (0, 0))).reshape(N, Hp2 * Wp, Cx)

    tn = 256 if coutp % 256 == 0 else 128
    starts = tuple(ki * Wp + kj for ki in range(3) for kj in range(3))
    kern = functools.partial(_conv3x3_kernel, starts=starts, cin=Cx, m2=m2)
    flops = 2 * N * m2 * 9 * Cx * coutp
    bytes_accessed = (N * Hp2 * Wp * Cx + 9 * Cx * coutp + N * m2 * coutp) * 2

    out = pl.pallas_call(
        kern,
        out_shape=jax.ShapeDtypeStruct((N, m2, coutp), jnp.bfloat16),
        grid=(N, coutp // tn),
        in_specs=[pl.BlockSpec((1, Hp2 * Wp, Cx), lambda n, j: (n, 0, 0)),
                  pl.BlockSpec((9 * Cx, tn), lambda n, j: (0, j)),
                  pl.BlockSpec((1, tn), lambda n, j: (0, j))],
        out_specs=pl.BlockSpec((1, m2, tn), lambda n, j: (n, 0, j)),
        compiler_params=pltpu.CompilerParams(
            dimension_semantics=("parallel", "parallel")),
        cost_estimate=pl.CostEstimate(flops=flops, transcendentals=0,
                                      bytes_accessed=bytes_accessed),
    )(xp, wmat, bias_row)
    return out.reshape(N, H, Wp, coutp)[:, :, :W, :]


def _im2col(x, kh, kw, stride, pad):
    """x: [N,H,W,C] -> patches [N*Ho*Wo, kh*kw*C] with (ki, kj, c) row ordering.
    Only used for the 7x7 stem (TODO(synk): replace with space-to-depth)."""
    N, H, W, C = x.shape
    xp = jnp.pad(x, ((0, 0), (pad, pad), (pad, pad), (0, 0)))
    Ho = (H + 2 * pad - kh) // stride + 1
    Wo = (W + 2 * pad - kw) // stride + 1
    cols = []
    for ki in range(kh):
        for kj in range(kw):
            cols.append(xp[:, ki: ki + stride * (Ho - 1) + 1: stride,
                              kj: kj + stride * (Wo - 1) + 1: stride, :])
    p = jnp.stack(cols, axis=3)                               # [N, Ho, Wo, kh*kw, C]
    return p.reshape(N * Ho * Wo, kh * kw * C), Ho, Wo


def conv_im2col(x_nhwc, wmat, bias_row, *, kh, kw, stride, pad, relu=True):
    N = x_nhwc.shape[0]
    patches, Ho, Wo = _im2col(x_nhwc, kh, kw, stride, pad)
    K = wmat.shape[0]
    if patches.shape[1] < K:                                  # K pad (fuses with im2col)
        patches = jnp.pad(patches, ((0, 0), (0, K - patches.shape[1])))
    out = _fused_matmul(patches, wmat, bias_row, relu=relu)
    return out.reshape(N, Ho, Wo, wmat.shape[1])


def max_pool_3x3_s2_p1(x_nhwc):
    N, H, W, C = x_nhwc.shape
    Ho = (H - 1) // 2 + 1
    Wo = (W - 1) // 2 + 1
    xp = jnp.pad(x_nhwc, ((0, 0), (1, 1), (1, 1), (0, 0)),
                 constant_values=-jnp.inf)
    # Parity planes: every 3x3/stride-2 tap becomes a unit-stride slice of one plane.
    planes = (xp[:, 0::2, 0::2, :], xp[:, 0::2, 1::2, :],
              xp[:, 1::2, 0::2, :], xp[:, 1::2, 1::2, :])
    in_specs = [pl.BlockSpec((1,) + p.shape[1:], lambda n: (n, 0, 0, 0))
                for p in planes]
    kern = functools.partial(_maxpool_kernel, ho=Ho, wo=Wo)
    out = pl.pallas_call(
        kern,
        out_shape=jax.ShapeDtypeStruct((N, Ho, Wo, C), x_nhwc.dtype),
        grid=(N,),
        in_specs=in_specs,
        out_specs=pl.BlockSpec((1, Ho, Wo, C), lambda n: (n, 0, 0, 0)),
        compiler_params=pltpu.CompilerParams(dimension_semantics=("parallel",)),
    )(*planes)
    return out


# ----------------------------------------------------------------------------
# Raw parameter construction (deterministic, synthetic weights)
# ----------------------------------------------------------------------------
def _kaiming_uniform(key, shape):
    # nn.init.kaiming_uniform_(w, a=1): gain=1, bound = sqrt(3 / fan_in)
    fan_in = 1
    for d in shape[1:]:
        fan_in *= d
    bound = math.sqrt(3.0 / fan_in)
    return jax.random.uniform(key, shape, jnp.float32, -bound, bound)


def _frozen_bn_params(key, c):
    # FrozenBatchNorm folds to an affine: scale = weight * rsqrt(var), bias = b - mean*scale
    k1, k2 = jax.random.split(key)
    scale = jax.random.uniform(k1, (c,), jnp.float32, 0.5, 1.5)
    bias = 0.1 * jax.random.normal(k2, (c,), jnp.float32)
    return scale, bias


def make_bottleneck_params(key, in_c, bottleneck_c, out_c):
    keys = jax.random.split(key, 8)
    p = {}
    p["w1"] = _kaiming_uniform(keys[0], (bottleneck_c, in_c, 1, 1))
    p["s1"], p["b1"] = _frozen_bn_params(keys[1], bottleneck_c)
    p["w2"] = _kaiming_uniform(keys[2], (bottleneck_c, bottleneck_c, 3, 3))
    p["s2"], p["b2"] = _frozen_bn_params(keys[3], bottleneck_c)
    p["w3"] = _kaiming_uniform(keys[4], (out_c, bottleneck_c, 1, 1))
    p["s3"], p["b3"] = _frozen_bn_params(keys[5], out_c)
    if in_c != out_c:
        p["wd"] = _kaiming_uniform(keys[6], (out_c, in_c, 1, 1))
        p["sd"], p["bd"] = _frozen_bn_params(keys[7], out_c)
    return p


def make_resnet_params(key, cfg):
    """Returns (raw params pytree, static arch tuple)."""
    stem_out = cfg["STEM_OUT_CHANNELS"]
    num_groups = cfg["NUM_GROUPS"]
    width_per_group = cfg["WIDTH_PER_GROUP"]
    res2_out = cfg["RES2_OUT_CHANNELS"]
    stage_specs = cfg["STAGE_SPECS"]

    k_stem, k_rest = jax.random.split(key)
    ks = jax.random.split(k_stem, 2)
    params = {"stem": {"w": _kaiming_uniform(ks[0], (stem_out, 3, 7, 7))},
              "stages": []}
    params["stem"]["s"], params["stem"]["b"] = _frozen_bn_params(ks[1], stem_out)

    arch = []
    in_c = stem_out
    stage_keys = jax.random.split(k_rest, len(stage_specs))
    for (index, block_count, return_features), sk in zip(stage_specs, stage_keys):
        factor = 2 ** (index - 1)
        bottleneck_c = num_groups * width_per_group * factor
        out_c = res2_out * factor
        first_stride = 1 if index == 1 else 2
        block_keys = jax.random.split(sk, block_count)
        blocks, strides = [], []
        stride = first_stride
        for bk in block_keys:
            blocks.append(make_bottleneck_params(bk, in_c, bottleneck_c, out_c))
            strides.append(stride)
            stride = 1
            in_c = out_c
        params["stages"].append(blocks)
        arch.append((tuple(strides), bool(return_features), out_c))
    return params, tuple(arch)


# ----------------------------------------------------------------------------
# One-time parameter preparation (hoisted out of the jitted forward)
# ----------------------------------------------------------------------------
def _prep_conv1x1(w, scale, bias, cin_pad):
    Cout, Cin = w.shape[0], w.shape[1]
    coutp = _round_up(Cout, 128)
    wf = w[:, :, 0, 0].astype(jnp.float32) * scale.astype(jnp.float32)[:, None]
    wm = jnp.zeros((cin_pad, coutp), jnp.float32).at[:Cin, :Cout].set(wf.T)
    br = jnp.zeros((1, coutp), jnp.float32).at[0, :Cout].set(bias.astype(jnp.float32))
    return wm.astype(jnp.bfloat16), br


def _prep_conv_taps(w, scale, bias, cin_pad, k_pad_to=None):
    # rows ordered (ki, kj, cin) -> matches both the 3x3 fast path and the im2col path
    Cout, Cin, kh, kw = w.shape
    coutp = _round_up(Cout, 128)
    wf = w.astype(jnp.float32) * scale.astype(jnp.float32)[:, None, None, None]
    wf = wf.transpose(2, 3, 1, 0)                                   # [kh, kw, Cin, Cout]
    wm = jnp.zeros((kh, kw, cin_pad, coutp), jnp.float32).at[:, :, :Cin, :Cout].set(wf)
    wm = wm.reshape(kh * kw * cin_pad, coutp)
    if k_pad_to is not None and wm.shape[0] < k_pad_to:
        wm = jnp.pad(wm, ((0, k_pad_to - wm.shape[0]), (0, 0)))
    br = jnp.zeros((1, coutp), jnp.float32).at[0, :Cout].set(bias.astype(jnp.float32))
    return wm.astype(jnp.bfloat16), br


def prepare_resnet_params(params):
    """Fold BN scales into weights, pad channels to 128, transpose to [K, Coutp], cast to
    bf16 and pad biases -- once, outside the jitted forward."""
    prep = {}
    w = params["stem"]["w"]
    k_stem = _round_up(w.shape[1] * w.shape[2] * w.shape[3], 128)   # 3*7*7 -> 256
    wm, br = _prep_conv_taps(w, params["stem"]["s"], params["stem"]["b"],
                             cin_pad=w.shape[1], k_pad_to=k_stem)
    prep["stem"] = {"w": wm, "b": br}
    cx = _round_up(w.shape[0], 128)            # padded channels of the stem output

    stages = []
    for blocks in params["stages"]:
        pblocks = []
        for bp in blocks:
            d = {}
            c1p = _round_up(bp["w1"].shape[0], 128)
            d["w1"], d["b1"] = _prep_conv1x1(bp["w1"], bp["s1"], bp["b1"], cx)
            d["w2"], d["b2"] = _prep_conv_taps(bp["w2"], bp["s2"], bp["b2"], c1p)
            c2p = _round_up(bp["w2"].shape[0], 128)
            d["w3"], d["b3"] = _prep_conv1x1(bp["w3"], bp["s3"], bp["b3"], c2p)
            c3p = _round_up(bp["w3"].shape[0], 128)
            if "wd" in bp:
                d["wd"], d["bd"] = _prep_conv1x1(bp["wd"], bp["sd"], bp["bd"], cx)
            cx = c3p
            pblocks.append(d)
        stages.append(pblocks)
    prep["stages"] = stages
    return prep


# ----------------------------------------------------------------------------
# Forward pass (mirrors maskrcnn_benchmark ResNet.forward semantics)
# ----------------------------------------------------------------------------
# TODO(synk): GroupNorm variants (StemWithGN / BottleneckWithGN), DFConv2d (deformable),
#             grouped 3x3 conv (NUM_GROUPS>1), dilation>1 and stride_in_1x1=False
#             (strided 3x3) are not implemented; FrozenBatchNorm / stride_in_1x1=True only.
def stem_forward(x_nhwc, p):
    out = conv_im2col(x_nhwc, p["w"], p["b"], kh=7, kw=7, stride=2, pad=3, relu=True)
    return max_pool_3x3_s2_p1(out)


def bottleneck_forward(x_nhwc, p, stride):
    # stride_in_1x1=True: the stride lives on conv1 (1x1); apply the subsample once and
    # share it between conv1 and the downsample branch.
    xs = x_nhwc if stride == 1 else x_nhwc[:, ::stride, ::stride, :]
    out = conv1x1(xs, p["w1"], p["b1"], relu=True)
    out = conv3x3_s1(out, p["w2"], p["b2"])
    if "wd" in p:
        identity = conv1x1(xs, p["wd"], p["bd"], relu=False)
    else:
        identity = xs            # in_channels == out_channels (stride is 1 in this case)
    # conv3 + bn3 + residual add + relu fused in one Pallas kernel
    return conv1x1(out, p["w3"], p["b3"], relu=True, residual=identity)


def resnet_forward(x_nchw, prep, arch):
    x = jnp.transpose(x_nchw, (0, 2, 3, 1)).astype(jnp.bfloat16)   # NCHW -> NHWC bf16
    x = stem_forward(x, prep["stem"])                              # channels padded to 128
    outputs = []
    for blocks, (strides, ret, out_c) in zip(prep["stages"], arch):
        for bp, stride in zip(blocks, strides):
            x = bottleneck_forward(x, bp, stride)
        if ret:
            outputs.append(
                jnp.transpose(x[..., :out_c], (0, 3, 1, 2)).astype(jnp.float32))
    return outputs


# ----------------------------------------------------------------------------
# Main
# ----------------------------------------------------------------------------
if __name__ == "__main__":
    # Small synthetic config (same structure as R-50-FPN, scaled down):
    #   stem 7x7/s2 -> maxpool 3x3/s2 -> stage1 (stride 1) -> stage2 (stride 2)
    cfg = {
        "STEM_OUT_CHANNELS": 8,
        "NUM_GROUPS": 1,
        "WIDTH_PER_GROUP": 4,
        "RES2_OUT_CHANNELS": 16,
        "STRIDE_IN_1X1": True,
        # (index, block_count, return_features)
        "STAGE_SPECS": ((1, 2, True), (2, 2, True)),
    }

    key = jax.random.PRNGKey(0)
    k_params, k_x = jax.random.split(key)
    raw_params, arch = make_resnet_params(k_params, cfg)
    prep_params = prepare_resnet_params(raw_params)   # one-time weight prep (outside jit)

    x = jax.random.normal(k_x, (2, 3, 32, 32), jnp.float32)  # NCHW like PyTorch

    fwd = jax.jit(lambda inp, prm: resnet_forward(inp, prm, arch))
    outs = fwd(x, prep_params)
    outs = [jax.block_until_ready(o) for o in outs]

    # shape check: stem 32->16->8; stage1 keeps 8, stage2 -> 4
    assert outs[0].shape == (2, 16, 8, 8), outs[0].shape
    assert outs[1].shape == (2, 32, 4, 4), outs[1].shape
    assert all(bool(jnp.all(jnp.isfinite(o))) for o in outs)
    print("KERNEL_OK")
</pallas_src>

<mosaic_0001>
module attributes {stable_mosaic.version = 11 : i64} {
  func.func @_mm_bias_kernel(%arg0: i32, %arg1: i32, %arg2: memref<256x256xbf16, #tpu.memory_space<vmem>>, %arg3: memref<256x128xbf16, #tpu.memory_space<vmem>>, %arg4: memref<1x128xf32, #tpu.memory_space<vmem>>, %arg5: memref<256x128xbf16, #tpu.memory_space<vmem>>) attributes {dimension_semantics = [#tpu.dimension_semantics<parallel>, #tpu.dimension_semantics<parallel>], iteration_bounds = array<i64: 2, 1>, scalar_prefetch = 0 : i64, scratch_operands = 0 : i64, tpu.core_type = #tpu.core_type<tc>, window_params = [{transform_indices = @transform_0, window_bounds = array<i64: 256, 256>}, {transform_indices = @transform_1, window_bounds = array<i64: 256, 128>}, {transform_indices = @transform_2, window_bounds = array<i64: 1, 128>}, {transform_indices = @transform_3, window_bounds = array<i64: 256, 128>}]} {
    %c0 = arith.constant 0 : index
    %c0_0 = arith.constant 0 : index
    %0 = vector.load %arg2[%c0, %c0_0] : memref<256x256xbf16, #tpu.memory_space<vmem>>, vector<256x256xbf16>
    %c0_1 = arith.constant 0 : index
    %c0_2 = arith.constant 0 : index
    %1 = vector.load %arg3[%c0_1, %c0_2] : memref<256x128xbf16, #tpu.memory_space<vmem>>, vector<256x128xbf16>
    %cst = arith.constant dense<0.000000e+00> : vector<256x128xf32>
    %2 = tpu.matmul %0, %1, %cst {dimension_numbers = #tpu.dot_dimension_numbers<[1], [0], [0], [1], [0, 0, 1, 1], [], []>} : vector<256x256xbf16>, vector<256x128xbf16>, vector<256x128xf32> -> vector<256x128xf32>
    %c0_3 = arith.constant 0 : index
    %c0_4 = arith.constant 0 : index
    %3 = vector.load %arg4[%c0_3, %c0_4] : memref<1x128xf32, #tpu.memory_space<vmem>>, vector<1x128xf32>
    %4 = vector.broadcast %3 : vector<1x128xf32> to vector<256x128xf32>
    %5 = arith.addf %2, %4 : vector<256x128xf32>
    %cst_5 = arith.constant 0.000000e+00 : f32
    %6 = vector.broadcast %cst_5 : f32 to vector<256x128xf32>
    %7 = arith.maximumf %5, %6 : vector<256x128xf32>
    %8 = arith.truncf %7 : vector<256x128xf32> to vector<256x128xbf16>
    %c0_6 = arith.constant 0 : index
    %c0_7 = arith.constant 0 : index
    %9 = vector.load %arg5[%c0_6, %c0_7] : memref<256x128xbf16, #tpu.memory_space<vmem>>, vector<256x128xbf16>
    tpu.vector_store %arg5[%c0_6, %c0_7], %8 {strides = array<i32>} : memref<256x128xbf16, #tpu.memory_space<vmem>>, vector<256x128xbf16>,
    return
  }
  func.func @transform_0(%arg0: i32, %arg1: i32) -> (i32, i32) {
    %c0_i32 = arith.constant 0 : i32
    %c0_i32_0 = arith.constant 0 : i32
    return %arg0, %c0_i32 : i32, i32
  }
  func.func @transform_1(%arg0: i32, %arg1: i32) -> (i32, i32) {
    %c0_i32 = arith.constant 0 : i32
    %c0_i32_0 = arith.constant 0 : i32
    return %c0_i32, %arg1 : i32, i32
  }
  func.func @transform_2(%arg0: i32, %arg1: i32) -> (i32, i32) {
    %c0_i32 = arith.constant 0 : i32
    %c0_i32_0 = arith.constant 0 : i32
    return %c0_i32, %arg1 : i32, i32
  }
  func.func @transform_3(%arg0: i32, %arg1: i32) -> (i32, i32) {
    %c0_i32 = arith.constant 0 : i32
    return %arg0, %arg1 : i32, i32
  }
}

module attributes {stable_mosaic.version = 11 : i64} {
  func.func @_mm_bias_kernel(%arg0: i32, %arg1: i32, %arg2: memref<64x128xbf16, #tpu.memory_space<vmem>>, %arg3: memref<128x128xbf16, #tpu.memory_space<vmem>>, %arg4: memref<1x128xf32, #tpu.memory_space<vmem>>, %arg5: memref<64x128xbf16, #tpu.memory_space<vmem>>) attributes {dimension_semantics = [#tpu.dimension_semantics<parallel>, #tpu.dimension_semantics<parallel>], iteration_bounds = array<i64: 2, 1>, scalar_prefetch = 0 : i64, scratch_operands = 0 : i64, tpu.core_type = #tpu.core_type<tc>, window_params = [{transform_indices = @transform_0, window_bounds = array<i64: 64, 128>}, {transform_indices = @transform_1, window_bounds = array<i64: 128, 128>}, {transform_indices = @transform_2, window_bounds = array<i64: 1, 128>}, {transform_indices = @transform_3, window_bounds = array<i64: 64, 128>}]} {
    %c0 = arith.constant 0 : index
    %c0_0 = arith.constant 0 : index
    %0 = vector.load %arg2[%c0, %c0_0] : memref<64x128xbf16, #tpu.memory_space<vmem>>, vector<64x128xbf16>
    %c0_1 = arith.constant 0 : index
    %c0_2 = arith.constant 0 : index
    %1 = vector.load %arg3[%c0_1, %c0_2] : memref<128x128xbf16, #tpu.memory_space<vmem>>, vector<128x128xbf16>
    %cst = arith.constant dense<0.000000e+00> : vector<64x128xf32>
    %2 = tpu.matmul %0, %1, %cst {dimension_numbers = #tpu.dot_dimension_numbers<[1], [0], [0], [1], [0, 0, 1, 1], [], []>} : vector<64x128xbf16>, vector<128x128xbf16>, vector<64x128xf32> -> vector<64x128xf32>
    %c0_3 = arith.constant 0 : index
    %c0_4 = arith.constant 0 : index
    %3 = vector.load %arg4[%c0_3, %c0_4] : memref<1x128xf32, #tpu.memory_space<vmem>>, vector<1x128xf32>
    %4 = vector.broadcast %3 : vector<1x128xf32> to vector<64x128xf32>
    %5 = arith.addf %2, %4 : vector<64x128xf32>
    %cst_5 = arith.constant 0.000000e+00 : f32
    %6 = vector.broadcast %cst_5 : f32 to vector<64x128xf32>
    %7 = arith.maximumf %5, %6 : vector<64x128xf32>
    %8 = arith.truncf %7 : vector<64x128xf32> to vector<64x128xbf16>
    %c0_6 = arith.constant 0 : index
    %c0_7 = arith.constant 0 : index
    %9 = vector.load %arg5[%c0_6, %c0_7] : memref<64x128xbf16, #tpu.memory_space<vmem>>, vector<64x128xbf16>
    tpu.vector_store %arg5[%c0_6, %c0_7], %8 {strides = array<i32>} : memref<64x128xbf16, #tpu.memory_space<vmem>>, vector<64x128xbf16>,
    return
  }
  func.func @transform_0(%arg0: i32, %arg1: i32) -> (i32, i32) {
    %c0_i32 = arith.constant 0 : i32
    %c0_i32_0 = arith.constant 0 : i32
    return %arg0, %c0_i32 : i32, i32
  }
  func.func @transform_1(%arg0: i32, %arg1: i32) -> (i32, i32) {
    %c0_i32 = arith.constant 0 : i32
    %c0_i32_0 = arith.constant 0 : i32
    return %c0_i32, %arg1 : i32, i32
  }
  func.func @transform_2(%arg0: i32, %arg1: i32) -> (i32, i32) {
    %c0_i32 = arith.constant 0 : i32
    %c0_i32_0 = arith.constant 0 : i32
    return %c0_i32, %arg1 : i32, i32
  }
  func.func @transform_3(%arg0: i32, %arg1: i32) -> (i32, i32) {
    %c0_i32 = arith.constant 0 : i32
    return %arg0, %arg1 : i32, i32
  }
}

module attributes {stable_mosaic.version = 11 : i64} {
  func.func @_maxpool_kernel(%arg0: i32, %arg1: memref<1x9x9x128xbf16, #tpu.memory_space<vmem>>, %arg2: memref<1x9x9x128xbf16, #tpu.memory_space<vmem>>, %arg3: memref<1x9x9x128xbf16, #tpu.memory_space<vmem>>, %arg4: memref<1x9x9x128xbf16, #tpu.memory_space<vmem>>, %arg5: memref<1x8x8x128xbf16, #tpu.memory_space<vmem>>) attributes {dimension_semantics = [#tpu.dimension_semantics<parallel>], iteration_bounds = array<i64: 2>, scalar_prefetch = 0 : i64, scratch_operands = 0 : i64, tpu.core_type = #tpu.core_type<tc>, window_params = [{transform_indices = @transform_0, window_bounds = array<i64: 1, 9, 9, 128>}, {transform_indices = @transform_1, window_bounds = array<i64: 1, 9, 9, 128>}, {transform_indices = @transform_2, window_bounds = array<i64: 1, 9, 9, 128>}, {transform_indices = @transform_3, window_bounds = array<i64: 1, 9, 9, 128>}, {transform_indices = @transform_4, window_bounds = array<i64: 1, 8, 8, 128>}]} {
    %c0 = arith.constant 0 : index
    %c0_0 = arith.constant 0 : index
    %c0_1 = arith.constant 0 : index
    %c0_2 = arith.constant 0 : index
    %0 = vector.load %arg1[%c0, %c0_0, %c0_1, %c0_2] : memref<1x9x9x128xbf16, #tpu.memory_space<vmem>>, vector<1x8x8x128xbf16>
    %c0_3 = arith.constant 0 : index
    %c0_4 = arith.constant 0 : index
    %c0_5 = arith.constant 0 : index
    %c0_6 = arith.constant 0 : index
    %1 = vector.load %arg2[%c0_3, %c0_4, %c0_5, %c0_6] : memref<1x9x9x128xbf16, #tpu.memory_space<vmem>>, vector<1x8x8x128xbf16>
    %2 = arith.maximumf %0, %1 : vector<1x8x8x128xbf16>
    %c0_7 = arith.constant 0 : index
    %c0_8 = arith.constant 0 : index
    %c1 = arith.constant 1 : index
    %c0_9 = arith.constant 0 : index
    %3 = vector.load %arg1[%c0_7, %c0_8, %c1, %c0_9] : memref<1x9x9x128xbf16, #tpu.memory_space<vmem>>, vector<1x8x8x128xbf16>
    %4 = arith.maximumf %2, %3 : vector<1x8x8x128xbf16>
    %c0_10 = arith.constant 0 : index
    %c0_11 = arith.constant 0 : index
    %c0_12 = arith.constant 0 : index
    %c0_13 = arith.constant 0 : index
    %5 = vector.load %arg3[%c0_10, %c0_11, %c0_12, %c0_13] : memref<1x9x9x128xbf16, #tpu.memory_space<vmem>>, vector<1x8x8x128xbf16>
    %6 = arith.maximumf %4, %5 : vector<1x8x8x128xbf16>
    %c0_14 = arith.constant 0 : index
    %c0_15 = arith.constant 0 : index
    %c0_16 = arith.constant 0 : index
    %c0_17 = arith.constant 0 : index
    %7 = vector.load %arg4[%c0_14, %c0_15, %c0_16, %c0_17] : memref<1x9x9x128xbf16, #tpu.memory_space<vmem>>, vector<1x8x8x128xbf16>
    %8 = arith.maximumf %6, %7 : vector<1x8x8x128xbf16>
    %c0_18 = arith.constant 0 : index
    %c0_19 = arith.constant 0 : index
    %c1_20 = arith.constant 1 : index
    %c0_21 = arith.constant 0 : index
    %9 = vector.load %arg3[%c0_18, %c0_19, %c1_20, %c0_21] : memref<1x9x9x128xbf16, #tpu.memory_space<vmem>>, vector<1x8x8x128xbf16>
    %10 = arith.maximumf %8, %9 : vector<1x8x8x128xbf16>
    %c0_22 = arith.constant 0 : index
    %c1_23 = arith.constant 1 : index
    %c0_24 = arith.constant 0 : index
    %c0_25 = arith.constant 0 : index
    %11 = vector.load %arg1[%c0_22, %c1_23, %c0_24, %c0_25] : memref<1x9x9x128xbf16, #tpu.memory_space<vmem>>, vector<1x8x8x128xbf16>
    %12 = arith.maximumf %10, %11 : vector<1x8x8x128xbf16>
    %c0_26 = arith.constant 0 : index
    %c1_27 = arith.constant 1 : index
    %c0_28 = arith.constant 0 : index
    %c0_29 = arith.constant 0 : index
    %13 = vector.load %arg2[%c0_26, %c1_27, %c0_28, %c0_29] : memref<1x9x9x128xbf16, #tpu.memory_space<vmem>>, vector<1x8x8x128xbf16>
    %14 = arith.maximumf %12, %13 : vector<1x8x8x128xbf16>
    %c0_30 = arith.constant 0 : index
    %c1_31 = arith.constant 1 : index
    %c1_32 = arith.constant 1 : index
    %c0_33 = arith.constant 0 : index
    %15 = vector.load %arg1[%c0_30, %c1_31, %c1_32, %c0_33] : memref<1x9x9x128xbf16, #tpu.memory_space<vmem>>, vector<1x8x8x128xbf16>
    %16 = arith.maximumf %14, %15 : vector<1x8x8x128xbf16>
    %c0_34 = arith.constant 0 : index
    %c0_35 = arith.constant 0 : index
    %c0_36 = arith.constant 0 : index
    %c0_37 = arith.constant 0 : index
    %17 = vector.load %arg5[%c0_34, %c0_35, %c0_36, %c0_37] : memref<1x8x8x128xbf16, #tpu.memory_space<vmem>>, vector<1x8x8x128xbf16>
    tpu.vector_store %arg5[%c0_34, %c0_35, %c0_36, %c0_37], %16 {strides = array<i32>} : memref<1x8x8x128xbf16, #tpu.memory_space<vmem>>, vector<1x8x8x128xbf16>,
    return
  }
  func.func @transform_0(%arg0: i32) -> (i32, i32, i32, i32) {
    %c0_i32 = arith.constant 0 : i32
    %c0_i32_0 = arith.constant 0 : i32
    %c0_i32_1 = arith.constant 0 : i32
    %c0_i32_2 = arith.constant 0 : i32
    return %arg0, %c0_i32, %c0_i32_0, %c0_i32_1 : i32, i32, i32, i32
  }
  func.func @transform_1(%arg0: i32) -> (i32, i32, i32, i32) {
    %c0_i32 = arith.constant 0 : i32
    %c0_i32_0 = arith.constant 0 : i32
    %c0_i32_1 = arith.constant 0 : i32
    %c0_i32_2 = arith.constant 0 : i32
    return %arg0, %c0_i32, %c0_i32_0, %c0_i32_1 : i32, i32, i32, i32
  }
  func.func @transform_2(%arg0: i32) -> (i32, i32, i32, i32) {
    %c0_i32 = arith.constant 0 : i32
    %c0_i32_0 = arith.constant 0 : i32
    %c0_i32_1 = arith.constant 0 : i32
    %c0_i32_2 = arith.constant 0 : i32
    return %arg0, %c0_i32, %c0_i32_0, %c0_i32_1 : i32, i32, i32, i32
  }
  func.func @transform_3(%arg0: i32) -> (i32, i32, i32, i32) {
    %c0_i32 = arith.constant 0 : i32
    %c0_i32_0 = arith.constant 0 : i32
    %c0_i32_1 = arith.constant 0 : i32
    %c0_i32_2 = arith.constant 0 : i32
    return %arg0, %c0_i32, %c0_i32_0, %c0_i32_1 : i32, i32, i32, i32
  }
  func.func @transform_4(%arg0: i32) -> (i32, i32, i32, i32) {
    %c0_i32 = arith.constant 0 : i32
    %c0_i32_0 = arith.constant 0 : i32
    %c0_i32_1 = arith.constant 0 : i32
    %c0_i32_2 = arith.constant 0 : i32
    return %arg0, %c0_i32, %c0_i32_0, %c0_i32_1 : i32, i32, i32, i32
  }
}

module attributes {stable_mosaic.version = 11 : i64} {
  func.func @_conv3x3_kernel(%arg0: i32, %arg1: i32, %arg2: memref<1x110x128xbf16, #tpu.memory_space<vmem>>, %arg3: memref<1152x128xbf16, #tpu.memory_space<vmem>>, %arg4: memref<1x128xf32, #tpu.memory_space<vmem>>, %arg5: memref<1x80x128xbf16, #tpu.memory_space<vmem>>) attributes {dimension_semantics = [#tpu.dimension_semantics<parallel>, #tpu.dimension_semantics<parallel>], iteration_bounds = array<i64: 2, 1>, scalar_prefetch = 0 : i64, scratch_operands = 0 : i64, tpu.core_type = #tpu.core_type<tc>, window_params = [{transform_indices = @transform_0, window_bounds = array<i64: 1, 110, 128>}, {transform_indices = @transform_1, window_bounds = array<i64: 1152, 128>}, {transform_indices = @transform_2, window_bounds = array<i64: 1, 128>}, {transform_indices = @transform_3, window_bounds = array<i64: 1, 80, 128>}]} {
    %c0 = arith.constant 0 : index
    %c0_0 = arith.constant 0 : index
    %c0_1 = arith.constant 0 : index
    %0 = vector.load %arg2[%c0, %c0_0, %c0_1] : memref<1x110x128xbf16, #tpu.memory_space<vmem>>, vector<1x80x128xbf16>
    %1 = vector.shape_cast %0 : vector<1x80x128xbf16> to vector<80x128xbf16>
    %c0_2 = arith.constant 0 : index
    %c0_3 = arith.constant 0 : index
    %2 = vector.load %arg3[%c0_2, %c0_3] : memref<1152x128xbf16, #tpu.memory_space<vmem>>, vector<128x128xbf16>
    %cst = arith.constant dense<0.000000e+00> : vector<80x128xf32>
    %3 = tpu.matmul %1, %2, %cst {dimension_numbers = #tpu.dot_dimension_numbers<[1], [0], [0], [1], [0, 0, 1, 1], [], []>} : vector<80x128xbf16>, vector<128x128xbf16>, vector<80x128xf32> -> vector<80x128xf32>
    %c0_4 = arith.constant 0 : index
    %c1 = arith.constant 1 : index
    %c0_5 = arith.constant 0 : index
    %4 = vector.load %arg2[%c0_4, %c1, %c0_5] : memref<1x110x128xbf16, #tpu.memory_space<vmem>>, vector<1x80x128xbf16>
    %5 = vector.shape_cast %4 : vector<1x80x128xbf16> to vector<80x128xbf16>
    %c128 = arith.constant 128 : index
    %c0_6 = arith.constant 0 : index
    %6 = vector.load %arg3[%c128, %c0_6] : memref<1152x128xbf16, #tpu.memory_space<vmem>>, vector<128x128xbf16>
    %cst_7 = arith.constant dense<0.000000e+00> : vector<80x128xf32>
    %7 = tpu.matmul %5, %6, %cst_7 {dimension_numbers = #tpu.dot_dimension_numbers<[1], [0], [0], [1], [0, 0, 1, 1], [], []>} : vector<80x128xbf16>, vector<128x128xbf16>, vector<80x128xf32> -> vector<80x128xf32>
    %8 = arith.addf %3, %7 : vector<80x128xf32>
    %c0_8 = arith.constant 0 : index
    %c2 = arith.constant 2 : index
    %c0_9 = arith.constant 0 : index
    %9 = vector.load %arg2[%c0_8, %c2, %c0_9] : memref<1x110x128xbf16, #tpu.memory_space<vmem>>, vector<1x80x128xbf16>
    %10 = vector.shape_cast %9 : vector<1x80x128xbf16> to vector<80x128xbf16>
    %c256 = arith.constant 256 : index
    %c0_10 = arith.constant 0 : index
    %11 = vector.load %arg3[%c256, %c0_10] : memref<1152x128xbf16, #tpu.memory_space<vmem>>, vector<128x128xbf16>
    %cst_11 = arith.constant dense<0.000000e+00> : vector<80x128xf32>
    %12 = tpu.matmul %10, %11, %cst_11 {dimension_numbers = #tpu.dot_dimension_numbers<[1], [0], [0], [1], [0, 0, 1, 1], [], []>} : vector<80x128xbf16>, vector<128x128xbf16>, vector<80x128xf32> -> vector<80x128xf32>
    %13 = arith.addf %8, %12 : vector<80x128xf32>
    %c0_12 = arith.constant 0 : index
    %c10 = arith.constant 10 : index
    %c0_13 = arith.constant 0 : index
    %14 = vector.load %arg2[%c0_12, %c10, %c0_13] : memref<1x110x128xbf16, #tpu.memory_space<vmem>>, vector<1x80x128xbf16>
    %15 = vector.shape_cast %14 : vector<1x80x128xbf16> to vector<80x128xbf16>
    %c384 = arith.constant 384 : index
    %c0_14 = arith.constant 0 : index
    %16 = vector.load %arg3[%c384, %c0_14] : memref<1152x128xbf16, #tpu.memory_space<vmem>>, vector<128x128xbf16>
    %cst_15 = arith.constant dense<0.000000e+00> : vector<80x128xf32>
    %17 = tpu.matmul %15, %16, %cst_15 {dimension_numbers = #tpu.dot_dimension_numbers<[1], [0], [0], [1], [0, 0, 1, 1], [], []>} : vector<80x128xbf16>, vector<128x128xbf16>, vector<80x128xf32> -> vector<80x128xf32>
    %18 = arith.addf %13, %17 : vector<80x128xf32>
    %c0_16 = arith.constant 0 : index
    %c11 = arith.constant 11 : index
    %c0_17 = arith.constant 0 : index
    %19 = vector.load %arg2[%c0_16, %c11, %c0_17] : memref<1x110x128xbf16, #tpu.memory_space<vmem>>, vector<1x80x128xbf16>
    %20 = vector.shape_cast %19 : vector<1x80x128xbf16> to vector<80x128xbf16>
    %c512 = arith.constant 512 : index
    %c0_18 = arith.constant 0 : index
    %21 = vector.load %arg3[%c512, %c0_18] : memref<1152x128xbf16, #tpu.memory_space<vmem>>, vector<128x128xbf16>
    %cst_19 = arith.constant dense<0.000000e+00> : vector<80x128xf32>
    %22 = tpu.matmul %20, %21, %cst_19 {dimension_numbers = #tpu.dot_dimension_numbers<[1], [0], [0], [1], [0, 0, 1, 1], [], []>} : vector<80x128xbf16>, vector<128x128xbf16>, vector<80x128xf32> -> vector<80x128xf32>
    %23 = arith.addf %18, %22 : vector<80x128xf32>
    %c0_20 = arith.constant 0 : index
    %c12 = arith.constant 12 : index
    %c0_21 = arith.constant 0 : index
    %24 = vector.load %arg2[%c0_20, %c12, %c0_21] : memref<1x110x128xbf16, #tpu.memory_space<vmem>>, vector<1x80x128xbf16>
    %25 = vector.shape_cast %24 : vector<1x80x128xbf16> to vector<80x128xbf16>
    %c640 = arith.constant 640 : index
    %c0_22 = arith.constant 0 : index
    %26 = vector.load %arg3[%c640, %c0_22] : memref<1152x128xbf16, #tpu.memory_space<vmem>>, vector<128x128xbf16>
    %cst_23 = arith.constant dense<0.000000e+00> : vector<80x128xf32>
    %27 = tpu.matmul %25, %26, %cst_23 {dimension_numbers = #tpu.dot_dimension_numbers<[1], [0], [0], [1], [0, 0, 1, 1], [], []>} : vector<80x128xbf16>, vector<128x128xbf16>, vector<80x128xf32> -> vector<80x128xf32>
    %28 = arith.addf %23, %27 : vector<80x128xf32>
    %c0_24 = arith.constant 0 : index
    %c20 = arith.constant 20 : index
    %c0_25 = arith.constant 0 : index
    %29 = vector.load %arg2[%c0_24, %c20, %c0_25] : memref<1x110x128xbf16, #tpu.memory_space<vmem>>, vector<1x80x128xbf16>
    %30 = vector.shape_cast %29 : vector<1x80x128xbf16> to vector<80x128xbf16>
    %c768 = arith.constant 768 : index
    %c0_26 = arith.constant 0 : index
    %31 = vector.load %arg3[%c768, %c0_26] : memref<1152x128xbf16, #tpu.memory_space<vmem>>, vector<128x128xbf16>
    %cst_27 = arith.constant dense<0.000000e+00> : vector<80x128xf32>
    %32 = tpu.matmul %30, %31, %cst_27 {dimension_numbers = #tpu.dot_dimension_numbers<[1], [0], [0], [1], [0, 0, 1, 1], [], []>} : vector<80x128xbf16>, vector<128x128xbf16>, vector<80x128xf32> -> vector<80x128xf32>
    %33 = arith.addf %28, %32 : vector<80x128xf32>
    %c0_28 = arith.constant 0 : index
    %c21 = arith.constant 21 : index
    %c0_29 = arith.constant 0 : index
    %34 = vector.load %arg2[%c0_28, %c21, %c0_29] : memref<1x110x128xbf16, #tpu.memory_space<vmem>>, vector<1x80x128xbf16>
    %35 = vector.shape_cast %34 : vector<1x80x128xbf16> to vector<80x128xbf16>
    %c896 = arith.constant 896 : index
    %c0_30 = arith.constant 0 : index
    %36 = vector.load %arg3[%c896, %c0_30] : memref<1152x128xbf16, #tpu.memory_space<vmem>>, vector<128x128xbf16>
    %cst_31 = arith.constant dense<0.000000e+00> : vector<80x128xf32>
    %37 = tpu.matmul %35, %36, %cst_31 {dimension_numbers = #tpu.dot_dimension_numbers<[1], [0], [0], [1], [0, 0, 1, 1], [], []>} : vector<80x128xbf16>, vector<128x128xbf16>, vector<80x128xf32> -> vector<80x128xf32>
    %38 = arith.addf %33, %37 : vector<80x128xf32>
    %c0_32 = arith.constant 0 : index
    %c22 = arith.constant 22 : index
    %c0_33 = arith.constant 0 : index
    %39 = vector.load %arg2[%c0_32, %c22, %c0_33] : memref<1x110x128xbf16, #tpu.memory_space<vmem>>, vector<1x80x128xbf16>
    %40 = vector.shape_cast %39 : vector<1x80x128xbf16> to vector<80x128xbf16>
    %c1024 = arith.constant 1024 : index
    %c0_34 = arith.constant 0 : index
    %41 = vector.load %arg3[%c1024, %c0_34] : memref<1152x128xbf16, #tpu.memory_space<vmem>>, vector<128x128xbf16>
    %cst_35 = arith.constant dense<0.000000e+00> : vector<80x128xf32>
    %42 = tpu.matmul %40, %41, %cst_35 {dimension_numbers = #tpu.dot_dimension_numbers<[1], [0], [0], [1], [0, 0, 1, 1], [], []>} : vector<80x128xbf16>, vector<128x128xbf16>, vector<80x128xf32> -> vector<80x128xf32>
    %43 = arith.addf %38, %42 : vector<80x128xf32>
    %c0_36 = arith.constant 0 : index
    %c0_37 = arith.constant 0 : index
    %44 = vector.load %arg4[%c0_36, %c0_37] : memref<1x128xf32, #tpu.memory_space<vmem>>, vector<1x128xf32>
    %45 = vector.broadcast %44 : vector<1x128xf32> to vector<80x128xf32>
    %46 = arith.addf %43, %45 : vector<80x128xf32>
    %cst_38 = arith.constant 0.000000e+00 : f32
    %47 = vector.broadcast %cst_38 : f32 to vector<80x128xf32>
    %48 = arith.maximumf %46, %47 : vector<80x128xf32>
    %49 = arith.truncf %48 : vector<80x128xf32> to vector<80x128xbf16>
    %c0_39 = arith.constant 0 : index
    %c0_40 = arith.constant 0 : index
    %c0_41 = arith.constant 0 : index
    %50 = vector.load %arg5[%c0_39, %c0_40, %c0_41] : memref<1x80x128xbf16, #tpu.memory_space<vmem>>, vector<1x80x128xbf16>
    %51 = vector.shape_cast %50 : vector<1x80x128xbf16> to vector<80x128xbf16>
    %52 = vector.shape_cast %49 : vector<80x128xbf16> to vector<1x80x128xbf16>
    tpu.vector_store %arg5[%c0_39, %c0_40, %c0_41], %52 {strides = array<i32>} : memref<1x80x128xbf16, #tpu.memory_space<vmem>>, vector<1x80x128xbf16>,
    return
  }
  func.func @transform_0(%arg0: i32, %arg1: i32) -> (i32, i32, i32) {
    %c0_i32 = arith.constant 0 : i32
    %c0_i32_0 = arith.constant 0 : i32
    %c0_i32_1 = arith.constant 0 : i32
    return %arg0, %c0_i32, %c0_i32_0 : i32, i32, i32
  }
  func.func @transform_1(%arg0: i32, %arg1: i32) -> (i32, i32) {
    %c0_i32 = arith.constant 0 : i32
    %c0_i32_0 = arith.constant 0 : i32
    return %c0_i32, %arg1 : i32, i32
  }
  func.func @transform_2(%arg0: i32, %arg1: i32) -> (i32, i32) {
    %c0_i32 = arith.constant 0 : i32
    %c0_i32_0 = arith.constant 0 : i32
    return %c0_i32, %arg1 : i32, i32
  }
  func.func @transform_3(%arg0: i32, %arg1: i32) -> (i32, i32, i32) {
    %c0_i32 = arith.constant 0 : i32
    %c0_i32_0 = arith.constant 0 : i32
    return %arg0, %c0_i32, %arg1 : i32, i32, i32
  }
}

module attributes {stable_mosaic.version = 11 : i64} {
  func.func @_mm_bias_res_relu_kernel(%arg0: i32, %arg1: i32, %arg2: memref<64x128xbf16, #tpu.memory_space<vmem>>, %arg3: memref<128x128xbf16, #tpu.memory_space<vmem>>, %arg4: memref<1x128xf32, #tpu.memory_space<vmem>>, %arg5: memref<64x128xbf16, #tpu.memory_space<vmem>>, %arg6: memref<64x128xbf16, #tpu.memory_space<vmem>>) attributes {dimension_semantics = [#tpu.dimension_semantics<parallel>, #tpu.dimension_semantics<parallel>], iteration_bounds = array<i64: 2, 1>, scalar_prefetch = 0 : i64, scratch_operands = 0 : i64, tpu.core_type = #tpu.core_type<tc>, window_params = [{transform_indices = @transform_0, window_bounds = array<i64: 64, 128>}, {transform_indices = @transform_1, window_bounds = array<i64: 128, 128>}, {transform_indices = @transform_2, window_bounds = array<i64: 1, 128>}, {transform_indices = @transform_3, window_bounds = array<i64: 64, 128>}, {transform_indices = @transform_4, window_bounds = array<i64: 64, 128>}]} {
    %c0 = arith.constant 0 : index
    %c0_0 = arith.constant 0 : index
    %0 = vector.load %arg2[%c0, %c0_0] : memref<64x128xbf16, #tpu.memory_space<vmem>>, vector<64x128xbf16>
    %c0_1 = arith.constant 0 : index
    %c0_2 = arith.constant 0 : index
    %1 = vector.load %arg3[%c0_1, %c0_2] : memref<128x128xbf16, #tpu.memory_space<vmem>>, vector<128x128xbf16>
    %cst = arith.constant dense<0.000000e+00> : vector<64x128xf32>
    %2 = tpu.matmul %0, %1, %cst {dimension_numbers = #tpu.dot_dimension_numbers<[1], [0], [0], [1], [0, 0, 1, 1], [], []>} : vector<64x128xbf16>, vector<128x128xbf16>, vector<64x128xf32> -> vector<64x128xf32>
    %c0_3 = arith.constant 0 : index
    %c0_4 = arith.constant 0 : index
    %3 = vector.load %arg4[%c0_3, %c0_4] : memref<1x128xf32, #tpu.memory_space<vmem>>, vector<1x128xf32>
    %4 = vector.broadcast %3 : vector<1x128xf32> to vector<64x128xf32>
    %5 = arith.addf %2, %4 : vector<64x128xf32>
    %c0_5 = arith.constant 0 : index
    %c0_6 = arith.constant 0 : index
    %6 = vector.load %arg5[%c0_5, %c0_6] : memref<64x128xbf16, #tpu.memory_space<vmem>>, vector<64x128xbf16>
    %7 = arith.extf %6 : vector<64x128xbf16> to vector<64x128xf32>
    %8 = arith.addf %5, %7 : vector<64x128xf32>
    %cst_7 = arith.constant 0.000000e+00 : f32
    %9 = vector.broadcast %cst_7 : f32 to vector<64x128xf32>
    %10 = arith.maximumf %8, %9 : vector<64x128xf32>
    %11 = arith.truncf %10 : vector<64x128xf32> to vector<64x128xbf16>
    %c0_8 = arith.constant 0 : index
    %c0_9 = arith.constant 0 : index
    %12 = vector.load %arg6[%c0_8, %c0_9] : memref<64x128xbf16, #tpu.memory_space<vmem>>, vector<64x128xbf16>
    tpu.vector_store %arg6[%c0_8, %c0_9], %11 {strides = array<i32>} : memref<64x128xbf16, #tpu.memory_space<vmem>>, vector<64x128xbf16>,
    return
  }
  func.func @transform_0(%arg0: i32, %arg1: i32) -> (i32, i32) {
    %c0_i32 = arith.constant 0 : i32
    %c0_i32_0 = arith.constant 0 : i32
    return %arg0, %c0_i32 : i32, i32
  }
  func.func @transform_1(%arg0: i32, %arg1: i32) -> (i32, i32) {
    %c0_i32 = arith.constant 0 : i32
    %c0_i32_0 = arith.constant 0 : i32
    return %c0_i32, %arg1 : i32, i32
  }
  func.func @transform_2(%arg0: i32, %arg1: i32) -> (i32, i32) {
    %c0_i32 = arith.constant 0 : i32
    %c0_i32_0 = arith.constant 0 : i32
    return %c0_i32, %arg1 : i32, i32
  }
  func.func @transform_3(%arg0: i32, %arg1: i32) -> (i32, i32) {
    %c0_i32 = arith.constant 0 : i32
    return %arg0, %arg1 : i32, i32
  }
  func.func @transform_4(%arg0: i32, %arg1: i32) -> (i32, i32) {
    %c0_i32 = arith.constant 0 : i32
    return %arg0, %arg1 : i32, i32
  }
}

module attributes {stable_mosaic.version = 11 : i64} {
  func.func @_mm_bias_kernel(%arg0: i32, %arg1: i32, %arg2: memref<64x128xbf16, #tpu.memory_space<vmem>>, %arg3: memref<128x128xbf16, #tpu.memory_space<vmem>>, %arg4: memref<1x128xf32, #tpu.memory_space<vmem>>, %arg5: memref<64x128xbf16, #tpu.memory_space<vmem>>) attributes {dimension_semantics = [#tpu.dimension_semantics<parallel>, #tpu.dimension_semantics<parallel>], iteration_bounds = array<i64: 2, 1>, scalar_prefetch = 0 : i64, scratch_operands = 0 : i64, tpu.core_type = #tpu.core_type<tc>, window_params = [{transform_indices = @transform_0, window_bounds = array<i64: 64, 128>}, {transform_indices = @transform_1, window_bounds = array<i64: 128, 128>}, {transform_indices = @transform_2, window_bounds = array<i64: 1, 128>}, {transform_indices = @transform_3, window_bounds = array<i64: 64, 128>}]} {
    %c0 = arith.constant 0 : index
    %c0_0 = arith.constant 0 : index
    %0 = vector.load %arg2[%c0, %c0_0] : memref<64x128xbf16, #tpu.memory_space<vmem>>, vector<64x128xbf16>
    %c0_1 = arith.constant 0 : index
    %c0_2 = arith.constant 0 : index
    %1 = vector.load %arg3[%c0_1, %c0_2] : memref<128x128xbf16, #tpu.memory_space<vmem>>, vector<128x128xbf16>
    %cst = arith.constant dense<0.000000e+00> : vector<64x128xf32>
    %2 = tpu.matmul %0, %1, %cst {dimension_numbers = #tpu.dot_dimension_numbers<[1], [0], [0], [1], [0, 0, 1, 1], [], []>} : vector<64x128xbf16>, vector<128x128xbf16>, vector<64x128xf32> -> vector<64x128xf32>
    %c0_3 = arith.constant 0 : index
    %c0_4 = arith.constant 0 : index
    %3 = vector.load %arg4[%c0_3, %c0_4] : memref<1x128xf32, #tpu.memory_space<vmem>>, vector<1x128xf32>
    %4 = vector.broadcast %3 : vector<1x128xf32> to vector<64x128xf32>
    %5 = arith.addf %2, %4 : vector<64x128xf32>
    %6 = arith.truncf %5 : vector<64x128xf32> to vector<64x128xbf16>
    %c0_5 = arith.constant 0 : index
    %c0_6 = arith.constant 0 : index
    %7 = vector.load %arg5[%c0_5, %c0_6] : memref<64x128xbf16, #tpu.memory_space<vmem>>, vector<64x128xbf16>
    tpu.vector_store %arg5[%c0_5, %c0_6], %6 {strides = array<i32>} : memref<64x128xbf16, #tpu.memory_space<vmem>>, vector<64x128xbf16>,
    return
  }
  func.func @transform_0(%arg0: i32, %arg1: i32) -> (i32, i32) {
    %c0_i32 = arith.constant 0 : i32
    %c0_i32_0 = arith.constant 0 : i32
    return %arg0, %c0_i32 : i32, i32
  }
  func.func @transform_1(%arg0: i32, %arg1: i32) -> (i32, i32) {
    %c0_i32 = arith.constant 0 : i32
    %c0_i32_0 = arith.constant 0 : i32
    return %c0_i32, %arg1 : i32, i32
  }
  func.func @transform_2(%arg0: i32, %arg1: i32) -> (i32, i32) {
    %c0_i32 = arith.constant 0 : i32
    %c0_i32_0 = arith.constant 0 : i32
    return %c0_i32, %arg1 : i32, i32
  }
  func.func @transform_3(%arg0: i32, %arg1: i32) -> (i32, i32) {
    %c0_i32 = arith.constant 0 : i32
    return %arg0, %arg1 : i32, i32
  }
}

module attributes {stable_mosaic.version = 11 : i64} {
  func.func @_mm_bias_kernel(%arg0: i32, %arg1: i32, %arg2: memref<16x128xbf16, #tpu.memory_space<vmem>>, %arg3: memref<128x128xbf16, #tpu.memory_space<vmem>>, %arg4: memref<1x128xf32, #tpu.memory_space<vmem>>, %arg5: memref<16x128xbf16, #tpu.memory_space<vmem>>) attributes {dimension_semantics = [#tpu.dimension_semantics<parallel>, #tpu.dimension_semantics<parallel>], iteration_bounds = array<i64: 2, 1>, scalar_prefetch = 0 : i64, scratch_operands = 0 : i64, tpu.core_type = #tpu.core_type<tc>, window_params = [{transform_indices = @transform_0, window_bounds = array<i64: 16, 128>}, {transform_indices = @transform_1, window_bounds = array<i64: 128, 128>}, {transform_indices = @transform_2, window_bounds = array<i64: 1, 128>}, {transform_indices = @transform_3, window_bounds = array<i64: 16, 128>}]} {
    %c0 = arith.constant 0 : index
    %c0_0 = arith.constant 0 : index
    %0 = vector.load %arg2[%c0, %c0_0] : memref<16x128xbf16, #tpu.memory_space<vmem>>, vector<16x128xbf16>
    %c0_1 = arith.constant 0 : index
    %c0_2 = arith.constant 0 : index
    %1 = vector.load %arg3[%c0_1, %c0_2] : memref<128x128xbf16, #tpu.memory_space<vmem>>, vector<128x128xbf16>
    %cst = arith.constant dense<0.000000e+00> : vector<16x128xf32>
    %2 = tpu.matmul %0, %1, %cst {dimension_numbers = #tpu.dot_dimension_numbers<[1], [0], [0], [1], [0, 0, 1, 1], [], []>} : vector<16x128xbf16>, vector<128x128xbf16>, vector<16x128xf32> -> vector<16x128xf32>
    %c0_3 = arith.constant 0 : index
    %c0_4 = arith.constant 0 : index
    %3 = vector.load %arg4[%c0_3, %c0_4] : memref<1x128xf32, #tpu.memory_space<vmem>>, vector<1x128xf32>
    %4 = vector.broadcast %3 : vector<1x128xf32> to vector<16x128xf32>
    %5 = arith.addf %2, %4 : vector<16x128xf32>
    %cst_5 = arith.constant 0.000000e+00 : f32
    %6 = vector.broadcast %cst_5 : f32 to vector<16x128xf32>
    %7 = arith.maximumf %5, %6 : vector<16x128xf32>
    %8 = arith.truncf %7 : vector<16x128xf32> to vector<16x128xbf16>
    %c0_6 = arith.constant 0 : index
    %c0_7 = arith.constant 0 : index
    %9 = vector.load %arg5[%c0_6, %c0_7] : memref<16x128xbf16, #tpu.memory_space<vmem>>, vector<16x128xbf16>
    tpu.vector_store %arg5[%c0_6, %c0_7], %8 {strides = array<i32>} : memref<16x128xbf16, #tpu.memory_space<vmem>>, vector<16x128xbf16>,
    return
  }
  func.func @transform_0(%arg0: i32, %arg1: i32) -> (i32, i32) {
    %c0_i32 = arith.constant 0 : i32
    %c0_i32_0 = arith.constant 0 : i32
    return %arg0, %c0_i32 : i32, i32
  }
  func.func @transform_1(%arg0: i32, %arg1: i32) -> (i32, i32) {
    %c0_i32 = arith.constant 0 : i32
    %c0_i32_0 = arith.constant 0 : i32
    return %c0_i32, %arg1 : i32, i32
  }
  func.func @transform_2(%arg0: i32, %arg1: i32) -> (i32, i32) {
    %c0_i32 = arith.constant 0 : i32
    %c0_i32_0 = arith.constant 0 : i32
    return %c0_i32, %arg1 : i32, i32
  }
  func.func @transform_3(%arg0: i32, %arg1: i32) -> (i32, i32) {
    %c0_i32 = arith.constant 0 : i32
    return %arg0, %arg1 : i32, i32
  }
}

module attributes {stable_mosaic.version = 11 : i64} {
  func.func @_conv3x3_kernel(%arg0: i32, %arg1: i32, %arg2: memref<1x42x128xbf16, #tpu.memory_space<vmem>>, %arg3: memref<1152x128xbf16, #tpu.memory_space<vmem>>, %arg4: memref<1x128xf32, #tpu.memory_space<vmem>>, %arg5: memref<1x24x128xbf16, #tpu.memory_space<vmem>>) attributes {dimension_semantics = [#tpu.dimension_semantics<parallel>, #tpu.dimension_semantics<parallel>], iteration_bounds = array<i64: 2, 1>, scalar_prefetch = 0 : i64, scratch_operands = 0 : i64, tpu.core_type = #tpu.core_type<tc>, window_params = [{transform_indices = @transform_0, window_bounds = array<i64: 1, 42, 128>}, {transform_indices = @transform_1, window_bounds = array<i64: 1152, 128>}, {transform_indices = @transform_2, window_bounds = array<i64: 1, 128>}, {transform_indices = @transform_3, window_bounds = array<i64: 1, 24, 128>}]} {
    %c0 = arith.constant 0 : index
    %c0_0 = arith.constant 0 : index
    %c0_1 = arith.constant 0 : index
    %0 = vector.load %arg2[%c0, %c0_0, %c0_1] : memref<1x42x128xbf16, #tpu.memory_space<vmem>>, vector<1x24x128xbf16>
    %1 = vector.shape_cast %0 : vector<1x24x128xbf16> to vector<24x128xbf16>
    %c0_2 = arith.constant 0 : index
    %c0_3 = arith.constant 0 : index
    %2 = vector.load %arg3[%c0_2, %c0_3] : memref<1152x128xbf16, #tpu.memory_space<vmem>>, vector<128x128xbf16>
    %cst = arith.constant dense<0.000000e+00> : vector<24x128xf32>
    %3 = tpu.matmul %1, %2, %cst {dimension_numbers = #tpu.dot_dimension_numbers<[1], [0], [0], [1], [0, 0, 1, 1], [], []>} : vector<24x128xbf16>, vector<128x128xbf16>, vector<24x128xf32> -> vector<24x128xf32>
    %c0_4 = arith.constant 0 : index
    %c1 = arith.constant 1 : index
    %c0_5 = arith.constant 0 : index
    %4 = vector.load %arg2[%c0_4, %c1, %c0_5] : memref<1x42x128xbf16, #tpu.memory_space<vmem>>, vector<1x24x128xbf16>
    %5 = vector.shape_cast %4 : vector<1x24x128xbf16> to vector<24x128xbf16>
    %c128 = arith.constant 128 : index
    %c0_6 = arith.constant 0 : index
    %6 = vector.load %arg3[%c128, %c0_6] : memref<1152x128xbf16, #tpu.memory_space<vmem>>, vector<128x128xbf16>
    %cst_7 = arith.constant dense<0.000000e+00> : vector<24x128xf32>
    %7 = tpu.matmul %5, %6, %cst_7 {dimension_numbers = #tpu.dot_dimension_numbers<[1], [0], [0], [1], [0, 0, 1, 1], [], []>} : vector<24x128xbf16>, vector<128x128xbf16>, vector<24x128xf32> -> vector<24x128xf32>
    %8 = arith.addf %3, %7 : vector<24x128xf32>
    %c0_8 = arith.constant 0 : index
    %c2 = arith.constant 2 : index
    %c0_9 = arith.constant 0 : index
    %9 = vector.load %arg2[%c0_8, %c2, %c0_9] : memref<1x42x128xbf16, #tpu.memory_space<vmem>>, vector<1x24x128xbf16>
    %10 = vector.shape_cast %9 : vector<1x24x128xbf16> to vector<24x128xbf16>
    %c256 = arith.constant 256 : index
    %c0_10 = arith.constant 0 : index
    %11 = vector.load %arg3[%c256, %c0_10] : memref<1152x128xbf16, #tpu.memory_space<vmem>>, vector<128x128xbf16>
    %cst_11 = arith.constant dense<0.000000e+00> : vector<24x128xf32>
    %12 = tpu.matmul %10, %11, %cst_11 {dimension_numbers = #tpu.dot_dimension_numbers<[1], [0], [0], [1], [0, 0, 1, 1], [], []>} : vector<24x128xbf16>, vector<128x128xbf16>, vector<24x128xf32> -> vector<24x128xf32>
    %13 = arith.addf %8, %12 : vector<24x128xf32>
    %c0_12 = arith.constant 0 : index
    %c6 = arith.constant 6 : index
    %c0_13 = arith.constant 0 : index
    %14 = vector.load %arg2[%c0_12, %c6, %c0_13] : memref<1x42x128xbf16, #tpu.memory_space<vmem>>, vector<1x24x128xbf16>
    %15 = vector.shape_cast %14 : vector<1x24x128xbf16> to vector<24x128xbf16>
    %c384 = arith.constant 384 : index
    %c0_14 = arith.constant 0 : index
    %16 = vector.load %arg3[%c384, %c0_14] : memref<1152x128xbf16, #tpu.memory_space<vmem>>, vector<128x128xbf16>
    %cst_15 = arith.constant dense<0.000000e+00> : vector<24x128xf32>
    %17 = tpu.matmul %15, %16, %cst_15 {dimension_numbers = #tpu.dot_dimension_numbers<[1], [0], [0], [1], [0, 0, 1, 1], [], []>} : vector<24x128xbf16>, vector<128x128xbf16>, vector<24x128xf32> -> vector<24x128xf32>
    %18 = arith.addf %13, %17 : vector<24x128xf32>
    %c0_16 = arith.constant 0 : index
    %c7 = arith.constant 7 : index
    %c0_17 = arith.constant 0 : index
    %19 = vector.load %arg2[%c0_16, %c7, %c0_17] : memref<1x42x128xbf16, #tpu.memory_space<vmem>>, vector<1x24x128xbf16>
    %20 = vector.shape_cast %19 : vector<1x24x128xbf16> to vector<24x128xbf16>
    %c512 = arith.constant 512 : index
    %c0_18 = arith.constant 0 : index
    %21 = vector.load %arg3[%c512, %c0_18] : memref<1152x128xbf16, #tpu.memory_space<vmem>>, vector<128x128xbf16>
    %cst_19 = arith.constant dense<0.000000e+00> : vector<24x128xf32>
    %22 = tpu.matmul %20, %21, %cst_19 {dimension_numbers = #tpu.dot_dimension_numbers<[1], [0], [0], [1], [0, 0, 1, 1], [], []>} : vector<24x128xbf16>, vector<128x128xbf16>, vector<24x128xf32> -> vector<24x128xf32>
    %23 = arith.addf %18, %22 : vector<24x128xf32>
    %c0_20 = arith.constant 0 : index
    %c8 = arith.constant 8 : index
    %c0_21 = arith.constant 0 : index
    %24 = vector.load %arg2[%c0_20, %c8, %c0_21] : memref<1x42x128xbf16, #tpu.memory_space<vmem>>, vector<1x24x128xbf16>
    %25 = vector.shape_cast %24 : vector<1x24x128xbf16> to vector<24x128xbf16>
    %c640 = arith.constant 640 : index
    %c0_22 = arith.constant 0 : index
    %26 = vector.load %arg3[%c640, %c0_22] : memref<1152x128xbf16, #tpu.memory_space<vmem>>, vector<128x128xbf16>
    %cst_23 = arith.constant dense<0.000000e+00> : vector<24x128xf32>
    %27 = tpu.matmul %25, %26, %cst_23 {dimension_numbers = #tpu.dot_dimension_numbers<[1], [0], [0], [1], [0, 0, 1, 1], [], []>} : vector<24x128xbf16>, vector<128x128xbf16>, vector<24x128xf32> -> vector<24x128xf32>
    %28 = arith.addf %23, %27 : vector<24x128xf32>
    %c0_24 = arith.constant 0 : index
    %c12 = arith.constant 12 : index
    %c0_25 = arith.constant 0 : index
    %29 = vector.load %arg2[%c0_24, %c12, %c0_25] : memref<1x42x128xbf16, #tpu.memory_space<vmem>>, vector<1x24x128xbf16>
    %30 = vector.shape_cast %29 : vector<1x24x128xbf16> to vector<24x128xbf16>
    %c768 = arith.constant 768 : index
    %c0_26 = arith.constant 0 : index
    %31 = vector.load %arg3[%c768, %c0_26] : memref<1152x128xbf16, #tpu.memory_space<vmem>>, vector<128x128xbf16>
    %cst_27 = arith.constant dense<0.000000e+00> : vector<24x128xf32>
    %32 = tpu.matmul %30, %31, %cst_27 {dimension_numbers = #tpu.dot_dimension_numbers<[1], [0], [0], [1], [0, 0, 1, 1], [], []>} : vector<24x128xbf16>, vector<128x128xbf16>, vector<24x128xf32> -> vector<24x128xf32>
    %33 = arith.addf %28, %32 : vector<24x128xf32>
    %c0_28 = arith.constant 0 : index
    %c13 = arith.constant 13 : index
    %c0_29 = arith.constant 0 : index
    %34 = vector.load %arg2[%c0_28, %c13, %c0_29] : memref<1x42x128xbf16, #tpu.memory_space<vmem>>, vector<1x24x128xbf16>
    %35 = vector.shape_cast %34 : vector<1x24x128xbf16> to vector<24x128xbf16>
    %c896 = arith.constant 896 : index
    %c0_30 = arith.constant 0 : index
    %36 = vector.load %arg3[%c896, %c0_30] : memref<1152x128xbf16, #tpu.memory_space<vmem>>, vector<128x128xbf16>
    %cst_31 = arith.constant dense<0.000000e+00> : vector<24x128xf32>
    %37 = tpu.matmul %35, %36, %cst_31 {dimension_numbers = #tpu.dot_dimension_numbers<[1], [0], [0], [1], [0, 0, 1, 1], [], []>} : vector<24x128xbf16>, vector<128x128xbf16>, vector<24x128xf32> -> vector<24x128xf32>
    %38 = arith.addf %33, %37 : vector<24x128xf32>
    %c0_32 = arith.constant 0 : index
    %c14 = arith.constant 14 : index
    %c0_33 = arith.constant 0 : index
    %39 = vector.load %arg2[%c0_32, %c14, %c0_33] : memref<1x42x128xbf16, #tpu.memory_space<vmem>>, vector<1x24x128xbf16>
    %40 = vector.shape_cast %39 : vector<1x24x128xbf16> to vector<24x128xbf16>
    %c1024 = arith.constant 1024 : index
    %c0_34 = arith.constant 0 : index
    %41 = vector.load %arg3[%c1024, %c0_34] : memref<1152x128xbf16, #tpu.memory_space<vmem>>, vector<128x128xbf16>
    %cst_35 = arith.constant dense<0.000000e+00> : vector<24x128xf32>
    %42 = tpu.matmul %40, %41, %cst_35 {dimension_numbers = #tpu.dot_dimension_numbers<[1], [0], [0], [1], [0, 0, 1, 1], [], []>} : vector<24x128xbf16>, vector<128x128xbf16>, vector<24x128xf32> -> vector<24x128xf32>
    %43 = arith.addf %38, %42 : vector<24x128xf32>
    %c0_36 = arith.constant 0 : index
    %c0_37 = arith.constant 0 : index
    %44 = vector.load %arg4[%c0_36, %c0_37] : memref<1x128xf32, #tpu.memory_space<vmem>>, vector<1x128xf32>
    %45 = vector.broadcast %44 : vector<1x128xf32> to vector<24x128xf32>
    %46 = arith.addf %43, %45 : vector<24x128xf32>
    %cst_38 = arith.constant 0.000000e+00 : f32
    %47 = vector.broadcast %cst_38 : f32 to vector<24x128xf32>
    %48 = arith.maximumf %46, %47 : vector<24x128xf32>
    %49 = arith.truncf %48 : vector<24x128xf32> to vector<24x128xbf16>
    %c0_39 = arith.constant 0 : index
    %c0_40 = arith.constant 0 : index
    %c0_41 = arith.constant 0 : index
    %50 = vector.load %arg5[%c0_39, %c0_40, %c0_41] : memref<1x24x128xbf16, #tpu.memory_space<vmem>>, vector<1x24x128xbf16>
    %51 = vector.shape_cast %50 : vector<1x24x128xbf16> to vector<24x128xbf16>
    %52 = vector.shape_cast %49 : vector<24x128xbf16> to vector<1x24x128xbf16>
    tpu.vector_store %arg5[%c0_39, %c0_40, %c0_41], %52 {strides = array<i32>} : memref<1x24x128xbf16, #tpu.memory_space<vmem>>, vector<1x24x128xbf16>,
    return
  }
  func.func @transform_0(%arg0: i32, %arg1: i32) -> (i32, i32, i32) {
    %c0_i32 = arith.constant 0 : i32
    %c0_i32_0 = arith.constant 0 : i32
    %c0_i32_1 = arith.constant 0 : i32
    return %arg0, %c0_i32, %c0_i32_0 : i32, i32, i32
  }
  func.func @transform_1(%arg0: i32, %arg1: i32) -> (i32, i32) {
    %c0_i32 = arith.constant 0 : i32
    %c0_i32_0 = arith.constant 0 : i32
    return %c0_i32, %arg1 : i32, i32
  }
  func.func @transform_2(%arg0: i32, %arg1: i32) -> (i32, i32) {
    %c0_i32 = arith.constant 0 : i32
    %c0_i32_0 = arith.constant 0 : i32
    return %c0_i32, %arg1 : i32, i32
  }
  func.func @transform_3(%arg0: i32, %arg1: i32) -> (i32, i32, i32) {
    %c0_i32 = arith.constant 0 : i32
    %c0_i32_0 = arith.constant 0 : i32
    return %arg0, %c0_i32, %arg1 : i32, i32, i32
  }
}

module attributes {stable_mosaic.version = 11 : i64} {
  func.func @_mm_bias_kernel(%arg0: i32, %arg1: i32, %arg2: memref<16x128xbf16, #tpu.memory_space<vmem>>, %arg3: memref<128x128xbf16, #tpu.memory_space<vmem>>, %arg4: memref<1x128xf32, #tpu.memory_space<vmem>>, %arg5: memref<16x128xbf16, #tpu.memory_space<vmem>>) attributes {dimension_semantics = [#tpu.dimension_semantics<parallel>, #tpu.dimension_semantics<parallel>], iteration_bounds = array<i64: 2, 1>, scalar_prefetch = 0 : i64, scratch_operands = 0 : i64, tpu.core_type = #tpu.core_type<tc>, window_params = [{transform_indices = @transform_0, window_bounds = array<i64: 16, 128>}, {transform_indices = @transform_1, window_bounds = array<i64: 128, 128>}, {transform_indices = @transform_2, window_bounds = array<i64: 1, 128>}, {transform_indices = @transform_3, window_bounds = array<i64: 16, 128>}]} {
    %c0 = arith.constant 0 : index
    %c0_0 = arith.constant 0 : index
    %0 = vector.load %arg2[%c0, %c0_0] : memref<16x128xbf16, #tpu.memory_space<vmem>>, vector<16x128xbf16>
    %c0_1 = arith.constant 0 : index
    %c0_2 = arith.constant 0 : index
    %1 = vector.load %arg3[%c0_1, %c0_2] : memref<128x128xbf16, #tpu.memory_space<vmem>>, vector<128x128xbf16>
    %cst = arith.constant dense<0.000000e+00> : vector<16x128xf32>
    %2 = tpu.matmul %0, %1, %cst {dimension_numbers = #tpu.dot_dimension_numbers<[1], [0], [0], [1], [0, 0, 1, 1], [], []>} : vector<16x128xbf16>, vector<128x128xbf16>, vector<16x128xf32> -> vector<16x128xf32>
    %c0_3 = arith.constant 0 : index
    %c0_4 = arith.constant 0 : index
    %3 = vector.load %arg4[%c0_3, %c0_4] : memref<1x128xf32, #tpu.memory_space<vmem>>, vector<1x128xf32>
    %4 = vector.broadcast %3 : vector<1x128xf32> to vector<16x128xf32>
    %5 = arith.addf %2, %4 : vector<16x128xf32>
    %6 = arith.truncf %5 : vector<16x128xf32> to vector<16x128xbf16>
    %c0_5 = arith.constant 0 : index
    %c0_6 = arith.constant 0 : index
    %7 = vector.load %arg5[%c0_5, %c0_6] : memref<16x128xbf16, #tpu.memory_space<vmem>>, vector<16x128xbf16>
    tpu.vector_store %arg5[%c0_5, %c0_6], %6 {strides = array<i32>} : memref<16x128xbf16, #tpu.memory_space<vmem>>, vector<16x128xbf16>,
    return
  }
  func.func @transform_0(%arg0: i32, %arg1: i32) -> (i32, i32) {
    %c0_i32 = arith.constant 0 : i32
    %c0_i32_0 = arith.constant 0 : i32
    return %arg0, %c0_i32 : i32, i32
  }
  func.func @transform_1(%arg0: i32, %arg1: i32) -> (i32, i32) {
    %c0_i32 = arith.constant 0 : i32
    %c0_i32_0 = arith.constant 0 : i32
    return %c0_i32, %arg1 : i32, i32
  }
  func.func @transform_2(%arg0: i32, %arg1: i32) -> (i32, i32) {
    %c0_i32 = arith.constant 0 : i32
    %c0_i32_0 = arith.constant 0 : i32
    return %c0_i32, %arg1 : i32, i32
  }
  func.func @transform_3(%arg0: i32, %arg1: i32) -> (i32, i32) {
    %c0_i32 = arith.constant 0 : i32
    return %arg0, %arg1 : i32, i32
  }
}

module attributes {stable_mosaic.version = 11 : i64} {
  func.func @_mm_bias_res_relu_kernel(%arg0: i32, %arg1: i32, %arg2: memref<16x128xbf16, #tpu.memory_space<vmem>>, %arg3: memref<128x128xbf16, #tpu.memory_space<vmem>>, %arg4: memref<1x128xf32, #tpu.memory_space<vmem>>, %arg5: memref<16x128xbf16, #tpu.memory_space<vmem>>, %arg6: memref<16x128xbf16, #tpu.memory_space<vmem>>) attributes {dimension_semantics = [#tpu.dimension_semantics<parallel>, #tpu.dimension_semantics<parallel>], iteration_bounds = array<i64: 2, 1>, scalar_prefetch = 0 : i64, scratch_operands = 0 : i64, tpu.core_type = #tpu.core_type<tc>, window_params = [{transform_indices = @transform_0, window_bounds = array<i64: 16, 128>}, {transform_indices = @transform_1, window_bounds = array<i64: 128, 128>}, {transform_indices = @transform_2, window_bounds = array<i64: 1, 128>}, {transform_indices = @transform_3, window_bounds = array<i64: 16, 128>}, {transform_indices = @transform_4, window_bounds = array<i64: 16, 128>}]} {
    %c0 = arith.constant 0 : index
    %c0_0 = arith.constant 0 : index
    %0 = vector.load %arg2[%c0, %c0_0] : memref<16x128xbf16, #tpu.memory_space<vmem>>, vector<16x128xbf16>
    %c0_1 = arith.constant 0 : index
    %c0_2 = arith.constant 0 : index
    %1 = vector.load %arg3[%c0_1, %c0_2] : memref<128x128xbf16, #tpu.memory_space<vmem>>, vector<128x128xbf16>
    %cst = arith.constant dense<0.000000e+00> : vector<16x128xf32>
    %2 = tpu.matmul %0, %1, %cst {dimension_numbers = #tpu.dot_dimension_numbers<[1], [0], [0], [1], [0, 0, 1, 1], [], []>} : vector<16x128xbf16>, vector<128x128xbf16>, vector<16x128xf32> -> vector<16x128xf32>
    %c0_3 = arith.constant 0 : index
    %c0_4 = arith.constant 0 : index
    %3 = vector.load %arg4[%c0_3, %c0_4] : memref<1x128xf32, #tpu.memory_space<vmem>>, vector<1x128xf32>
    %4 = vector.broadcast %3 : vector<1x128xf32> to vector<16x128xf32>
    %5 = arith.addf %2, %4 : vector<16x128xf32>
    %c0_5 = arith.constant 0 : index
    %c0_6 = arith.constant 0 : index
    %6 = vector.load %arg5[%c0_5, %c0_6] : memref<16x128xbf16, #tpu.memory_space<vmem>>, vector<16x128xbf16>
    %7 = arith.extf %6 : vector<16x128xbf16> to vector<16x128xf32>
    %8 = arith.addf %5, %7 : vector<16x128xf32>
    %cst_7 = arith.constant 0.000000e+00 : f32
    %9 = vector.broadcast %cst_7 : f32 to vector<16x128xf32>
    %10 = arith.maximumf %8, %9 : vector<16x128xf32>
    %11 = arith.truncf %10 : vector<16x128xf32> to vector<16x128xbf16>
    %c0_8 = arith.constant 0 : index
    %c0_9 = arith.constant 0 : index
    %12 = vector.load %arg6[%c0_8, %c0_9] : memref<16x128xbf16, #tpu.memory_space<vmem>>, vector<16x128xbf16>
    tpu.vector_store %arg6[%c0_8, %c0_9], %11 {strides = array<i32>} : memref<16x128xbf16, #tpu.memory_space<vmem>>, vector<16x128xbf16>,
    return
  }
  func.func @transform_0(%arg0: i32, %arg1: i32) -> (i32, i32) {
    %c0_i32 = arith.constant 0 : i32
    %c0_i32_0 = arith.constant 0 : i32
    return %arg0, %c0_i32 : i32, i32
  }
  func.func @transform_1(%arg0: i32, %arg1: i32) -> (i32, i32) {
    %c0_i32 = arith.constant 0 : i32
    %c0_i32_0 = arith.constant 0 : i32
    return %c0_i32, %arg1 : i32, i32
  }
  func.func @transform_2(%arg0: i32, %arg1: i32) -> (i32, i32) {
    %c0_i32 = arith.constant 0 : i32
    %c0_i32_0 = arith.constant 0 : i32
    return %c0_i32, %arg1 : i32, i32
  }
  func.func @transform_3(%arg0: i32, %arg1: i32) -> (i32, i32) {
    %c0_i32 = arith.constant 0 : i32
    return %arg0, %arg1 : i32, i32
  }
  func.func @transform_4(%arg0: i32, %arg1: i32) -> (i32, i32) {
    %c0_i32 = arith.constant 0 : i32
    return %arg0, %arg1 : i32, i32
  }
}

</mosaic_0001>

<llo_original>
// kernel: _lambda_.16
$region0: #{_lambda_.16}
  #allocation0 [shape = 'u32[]', space=smem, size = 0x4, offset = 0x4, fixed_abs, tag = 'smem constant byte address 0x4 - core index']
  #allocation1 [shape = 'u32[144,128]{1,0:T(1,128)}', space=vmem, size = 0x12000, scoped, tag = 'internal scratch']
  %s0 = inlined_call_operand.vmem [shape: bf16[512,256], index: 0, kind: input, shape index: {}]
  %s1 = inlined_call_operand.vmem [shape: bf16[256,128], index: 1, kind: input, shape index: {}]
  %s2 = inlined_call_operand.vmem [shape: f32[1,128], index: 2, kind: input, shape index: {}]
  %s3 = inlined_call_operand.vmem [shape: bf16[512,128], index: 3, kind: output, shape index: {}]
  %s4 = sld [smem:[#allocation0]]
  $region45: #{_lambda_.16} parent=0
    _
  %s6 = ssub.s32 1, %s4
  %s7 = scalar_select 0, %s6, %s4
  loop: start=0, step=1, limit=4
  $region2: #{_lambda_.16} parent=0 // loop_pre_header
    _
  $region3: #{_lambda_.16} parent=0 // loop_header
    %s9 = sphi 0, %s13
    %p10 = scmp.ge.s32.totalorder %s9, 4
    %s16 = sphi 0, %s28
    %s17 = sphi 0, %s24
    %s18 = sphi 0, %s16
    %s19 = sphi 0, %s17
    %s20 = sphi 0, %s18
    %s21 = sphi 0, %s19
    %s31 = sphi 0, %s33
    %s34 = sphi 0, %s31
    %s35 = sphi 0, %s34
    %s51 = sphi 0, %s35
    %s57 = sphi 0, %s59
    %s60 = sphi 0, %s57
    %s61 = sphi 0, %s60
    %s77 = sphi 0, %s61
    %s83 = sphi 0, %s85
    %s86 = sphi 0, %s83
    %s87 = sphi 0, %s86
    %s103 = sphi 0, %s87
    %s111 = sphi 0, %s113
    %s114 = sphi 0, %s111
    %s115 = sphi 0, %s114
    %s131 = sphi 0, %s115
  $region4: #{_lambda_.16} parent=0 // loop_header_branch
    %12 = sbr.rel (%p10) target = $region8
  $region5: #{_lambda_.16} parent=0 // loop_body
    %s14 = ssub.s32 %s9, 1
    %s15 = ssub.s32 %s9, 2
    %s22 = sadd.s32 1, %s17
    %p23 = scmp.ge.s32.totalorder %s22, 1
    %s24 = scalar_select %p23, 0, %s22
    %s25 = sadd.s32 1, %s16
    %s26 = scalar_select %p23, %s25, %s16
    %p27 = scmp.ge.s32.totalorder %s26, 2
    %s28 = scalar_select %p27, 0, %s26
    %s29 = ssub.s32 %s16, %s28
    %p30 = scmp.eq.s32.totalorder %s29, 0
    %s32 = sadd.s32 %s31, 1
    %s33 = scalar_select %p30, %s31, %s32
    %p36 = pneg %p30
    %p37 = scmp.eq.s32.totalorder %s9, 1
    %p38 = por %p36, %p37
    %p39 = scmp.ne.s32.totalorder %s31, %s34
    %p40 = scmp.eq.s32.totalorder %s9, 0
    %p41 = por %p39, %p40
    %p42 = scmp.ne.s32.totalorder %s31, %s34
    %p43 = scmp.eq.s32.totalorder %s14, 1
    %p44 = por %p42, %p43
    %p45 = scmp.ne.s32.totalorder %s34, %s35
    %p46 = scmp.eq.s32.totalorder %s14, 0
    %p47 = por %p45, %p46
    %p48 = scmp.ne.s32.totalorder %s34, %s35
    %p49 = scmp.eq.s32.totalorder %s15, 1
    %p50 = por %p48, %p49
    %p52 = scmp.ne.s32.totalorder %s35, %s51
    %p53 = scmp.eq.s32.totalorder %s15, 0
    %p54 = por %p52, %p53
    %s55 = ssub.s32 %s17, %s24
    %p56 = scmp.eq.s32.totalorder %s55, 0
    %s58 = sadd.s32 %s57, 1
    %s59 = scalar_select %p56, %s57, %s58
    %p62 = pneg %p56
    %p63 = scmp.eq.s32.totalorder %s9, 1
    %p64 = por %p62, %p63
    %p65 = scmp.ne.s32.totalorder %s57, %s60
    %p66 = scmp.eq.s32.totalorder %s9, 0
    %p67 = por %p65, %p66
    %p68 = scmp.ne.s32.totalorder %s57, %s60
    %p69 = scmp.eq.s32.totalorder %s14, 1
    %p70 = por %p68, %p69
    %p71 = scmp.ne.s32.totalorder %s60, %s61
    %p72 = scmp.eq.s32.totalorder %s14, 0
    %p73 = por %p71, %p72
    %p74 = scmp.ne.s32.totalorder %s60, %s61
    %p75 = scmp.eq.s32.totalorder %s15, 1
    %p76 = por %p74, %p75
    %p78 = scmp.ne.s32.totalorder %s61, %s77
    %p79 = scmp.eq.s32.totalorder %s15, 0
    %p80 = por %p78, %p79
    %s81 = ssub.s32 %s17, %s24
    %p82 = scmp.eq.s32.totalorder %s81, 0
    %s84 = sadd.s32 %s83, 1
    %s85 = scalar_select %p82, %s83, %s84
    %p88 = pneg %p82
    %p89 = scmp.eq.s32.totalorder %s9, 1
    %p90 = por %p88, %p89
    %p91 = scmp.ne.s32.totalorder %s83, %s86
    %p92 = scmp.eq.s32.totalorder %s9, 0
    %p93 = por %p91, %p92
    %p94 = scmp.ne.s32.totalorder %s83, %s86
    %p95 = scmp.eq.s32.totalorder %s14, 1
    %p96 = por %p94, %p95
    %p97 = scmp.ne.s32.totalorder %s86, %s87
    %p98 = scmp.eq.s32.totalorder %s14, 0
    %p99 = por %p97, %p98
    %p100 = scmp.ne.s32.totalorder %s86, %s87
    %p101 = scmp.eq.s32.totalorder %s15, 1
    %p102 = por %p100, %p101
    %p104 = scmp.ne.s32.totalorder %s87, %s103
    %p105 = scmp.eq.s32.totalorder %s15, 0
    %p106 = por %p104, %p105
    %s107 = ssub.s32 %s16, %s28
    %s108 = ssub.s32 %s17, %s24
    %s109 = sor.u32 %s107, %s108
    %p110 = scmp.eq.s32.totalorder %s109, 0
    %s112 = sadd.s32 %s111, 1
    %s113 = scalar_select %p110, %s111, %s112
    %p116 = pneg %p110
    %p117 = scmp.eq.s32.totalorder %s9, 1
    %p118 = por %p116, %p117
    %p119 = scmp.ne.s32.totalorder %s111, %s114
    %p120 = scmp.eq.s32.totalorder %s9, 0
    %p121 = por %p119, %p120
    %p122 = scmp.ne.s32.totalorder %s111, %s114
    %p123 = scmp.eq.s32.totalorder %s14, 1
    %p124 = por %p122, %p123
    %p125 = scmp.ne.s32.totalorder %s114, %s115
    %p126 = scmp.eq.s32.totalorder %s14, 0
    %p127 = por %p125, %p126
    %p128 = scmp.ne.s32.totalorder %s114, %s115
    %p129 = scmp.eq.s32.totalorder %s15, 1
    %p130 = por %p128, %p129
    %p132 = scmp.ne.s32.totalorder %s115, %s131
    %p133 = scmp.eq.s32.totalorder %s15, 0
    %p134 = por %p132, %p133
    %p135 = scmp.le.s32.totalorder 1, %s9
    %p136 = scmp.lt.s32.totalorder %s9, 3
    %p137 = pnand %p135, %p136
    %p138 = pneg %p137
    // Predicated region
    $region9: #{_lambda_.16} parent=5 // pred_check
      _
    $region10: #{_lambda_.16} parent=5 // pred_check_branch
      %140 = sbr.rel (%p137) target = $region12
    $region11: #{_lambda_.16} parent=5 // pred_region
      %s141 = ssub.s32 %s9, 1
      // Predicated region
      $region13: #{_lambda_.16} parent=11 // pred_check
        %p142 = pneg %p73
      $region14: #{_lambda_.16} parent=11 // pred_check_branch
        %144 = sbr.rel (%p142) target = $region16
      $region15: #{_lambda_.16} parent=11 // pred_region
        %p145 = scmp.lt.s32.totalorder %s19, 0
        %s146 = scalar_select %p145, %s19, 0
        %s147 = smul.addr %s146, 4
        %s148 = scalar_lea.vmem %s1, %s147
      $region16: #{_lambda_.16} parent=11 // pred_fallthru
        _
      // Predicated region
      $region17: #{_lambda_.16} parent=11 // pred_check
        %p149 = pneg %p99
      $region18: #{_lambda_.16} parent=11 // pred_check_branch
        %151 = sbr.rel (%p149) target = $region20
      $region19: #{_lambda_.16} parent=11 // pred_region
        %p152 = scmp.lt.s32.totalorder %s19, 0
        %s153 = scalar_select %p152, %s19, 0
        %s154 = scalar_lea.vmem %s2, %s153
      $region20: #{_lambda_.16} parent=11 // pred_fallthru
        _
    $region12: #{_lambda_.16} parent=5 // pred_fallthru
      _
    %p155 = scmp.lt.s32.totalorder %s9, 2
    // Predicated region
    $region21: #{_lambda_.16} parent=5 // pred_check
      %p156 = pneg %p155
    $region22: #{_lambda_.16} parent=5 // pred_check_branch
      %158 = sbr.rel (%p156) target = $region24
    $region23: #{_lambda_.16} parent=5 // pred_region
      // Predicated region
      $region25: #{_lambda_.16} parent=23 // pred_check
        %p159 = pneg %p41
      $region26: #{_lambda_.16} parent=23 // pred_check_branch
        %161 = sbr.rel (%p159) target = $region28
      $region27: #{_lambda_.16} parent=23 // pred_region
        %s162 = smul.u32 32, %s16
        %p163 = scmp.lt.s32.totalorder %s162, 63
        %s164 = scalar_select %p163, %s162, 63
        %s165 = smul.addr %s164, 2
        %s166 = smul.addr %s165, 4
        %s167 = scalar_lea.vmem %s0, %s166
        %s168 = smul.u32 32, %s16
      $region28: #{_lambda_.16} parent=23 // pred_fallthru
        _
    $region24: #{_lambda_.16} parent=5 // pred_fallthru
      _
    %p169 = scmp.le.s32.totalorder 1, %s9
    %p170 = scmp.lt.s32.totalorder %s9, 3
    %p171 = pnand %p169, %p170
    %p172 = pneg %p171
    // Predicated region
    $region29: #{_lambda_.16} parent=5 // pred_check
      _
    $region30: #{_lambda_.16} parent=5 // pred_check_branch
      %174 = sbr.rel (%p171) target = $region32
    $region31: #{_lambda_.16} parent=5 // pred_region
      %s175 = ssub.s32 %s9, 1
      %s176 = smul.u32 32, %s18
      %p177 = scmp.lt.s32.totalorder %s176, 63
      %s178 = scalar_select %p177, %s176, 63
      %s179 = smul.addr %s178, 2
      %s180 = smul.addr %s179, 4
      %s181 = scalar_lea.vmem %s0, %s180
      %p182 = pneg %p47
      %p183 = pneg %p44
      %p184 = scmp.lt.s32.totalorder %s19, 0
      %s185 = scalar_select %p184, %s19, 0
      %s186 = smul.addr %s185, 4
      %s187 = scalar_lea.vmem %s1, %s186
      %p188 = pneg %p73
      %p189 = pneg %p70
      %p190 = scmp.lt.s32.totalorder %s19, 0
      %s191 = scalar_select %p190, %s19, 0
      %s192 = scalar_lea.vmem %s2, %s191
      %p193 = pneg %p99
      %p194 = pneg %p96
      %p195 = pneg %p127
      %p196 = pneg %p124
      %s197 = smul.u32 32, %s18
      %p198 = scmp.lt.s32.totalorder %s197, 63
      %s199 = scalar_select %p198, %s197, 63
      %p200 = scmp.lt.s32.totalorder %s19, 0
      %s201 = scalar_select %p200, %s19, 0
      %s202 = sadd.s32 %s201, %s199
      %s203 = smul.addr %s202, 4
      %s204 = scalar_lea.vmem %s3, %s203
      %s205 = smul.u32 32, %s18
      %p206 = scmp.lt.s32.totalorder %s205, 63
      %s207 = scalar_select %p206, %s205, 63
      %s208 = smul.addr %s207, 2
      %s209 = smul.addr %s208, 4
      %s210 = scalar_lea.vmem %s0, %s209
      %s211 = smul.u32 32, %s18
      %p212 = scmp.lt.s32.totalorder %s19, 0
      %s213 = scalar_select %p212, %s19, 0
      %s214 = smul.addr %s213, 4
      %s215 = scalar_lea.vmem %s1, %s214
      %p216 = scmp.lt.s32.totalorder %s19, 0
      %s217 = scalar_select %p216, %s19, 0
      %s218 = scalar_lea.vmem %s2, %s217
      %s219 = smul.u32 32, %s18
      %p220 = scmp.lt.s32.totalorder %s219, 63
      %s221 = scalar_select %p220, %s219, 63
      %p222 = scmp.lt.s32.totalorder %s19, 0
      %s223 = scalar_select %p222, %s19, 0
      %s224 = sadd.s32 %s223, %s221
      %s225 = smul.addr %s224, 4
      %s226 = scalar_lea.vmem %s3, %s225
      %s227 = smul.u32 32, %s18
      %v229 = vld [vmem:[%s210] sm:$0xff]
      %v230 = vld [vmem:[%s210 + $0x8] sm:$0xff]
      %v231 = vld [vmem:[%s210 + $0x10] sm:$0xff]
      %v232 = vld [vmem:[%s210 + $0x18] sm:$0xff]
      %v233 = vld [vmem:[%s210 + $0x20] sm:$0xff]
      %v234 = vld [vmem:[%s210 + $0x28] sm:$0xff]
      %v235 = vld [vmem:[%s210 + $0x30] sm:$0xff]
      %v236 = vld [vmem:[%s210 + $0x38] sm:$0xff]
      %v237 = vld [vmem:[%s210 + $0x40] sm:$0xff]
      %v238 = vld [vmem:[%s210 + $0x48] sm:$0xff]
      %v239 = vld [vmem:[%s210 + $0x50] sm:$0xff]
      %v240 = vld [vmem:[%s210 + $0x58] sm:$0xff]
      %v241 = vld [vmem:[%s210 + $0x60] sm:$0xff]
      %v242 = vld [vmem:[%s210 + $0x68] sm:$0xff]
      %v243 = vld [vmem:[%s210 + $0x70] sm:$0xff]
      %v244 = vld [vmem:[%s210 + $0x78] sm:$0xff]
      %v245 = vld [vmem:[%s210 + $0x80] sm:$0xff]
      %v246 = vld [vmem:[%s210 + $0x88] sm:$0xff]
      %v247 = vld [vmem:[%s210 + $0x90] sm:$0xff]
      %v248 = vld [vmem:[%s210 + $0x98] sm:$0xff]
      %v249 = vld [vmem:[%s210 + $0xa0] sm:$0xff]
      %v250 = vld [vmem:[%s210 + $0xa8] sm:$0xff]
      %v251 = vld [vmem:[%s210 + $0xb0] sm:$0xff]
      %v252 = vld [vmem:[%s210 + $0xb8] sm:$0xff]
      %v253 = vld [vmem:[%s210 + $0xc0] sm:$0xff]
      %v254 = vld [vmem:[%s210 + $0xc8] sm:$0xff]
      %v255 = vld [vmem:[%s210 + $0xd0] sm:$0xff]
      %v256 = vld [vmem:[%s210 + $0xd8] sm:$0xff]
      %v257 = vld [vmem:[%s210 + $0xe0] sm:$0xff]
      %v258 = vld [vmem:[%s210 + $0xe8] sm:$0xff]
      %v259 = vld [vmem:[%s210 + $0xf0] sm:$0xff]
      %v260 = vld [vmem:[%s210 + $0xf8] sm:$0xff]
      %v261 = vld [vmem:[%s215] sm:$0xf]
      %v262 = vld [vmem:[%s215 + $0x4] sm:$0xf]
      %v263 = vld [vmem:[%s215 + $0x8] sm:$0xf]
      %v264 = vld [vmem:[%s215 + $0xc] sm:$0xf]
      %v265 = vld [vmem:[%s215 + $0x10] sm:$0xf]
      %v266 = vld [vmem:[%s215 + $0x14] sm:$0xf]
      %v267 = vld [vmem:[%s215 + $0x18] sm:$0xf]
      %v268 = vld [vmem:[%s215 + $0x1c] sm:$0xf]
      %v269 = vld [vmem:[%s215 + $0x20] sm:$0xf]
      %v270 = vld [vmem:[%s215 + $0x24] sm:$0xf]
      %v271 = vld [vmem:[%s215 + $0x28] sm:$0xf]
      %v272 = vld [vmem:[%s215 + $0x2c] sm:$0xf]
      %v273 = vld [vmem:[%s215 + $0x30] sm:$0xf]
      %v274 = vld [vmem:[%s215 + $0x34] sm:$0xf]
      %v275 = vld [vmem:[%s215 + $0x38] sm:$0xf]
      %v276 = vld [vmem:[%s215 + $0x3c] sm:$0xf]
      %v277 = vld [vmem:[%s215 + $0x40] sm:$0xf]
      %v278 = vld [vmem:[%s215 + $0x44] sm:$0xf]
      %v279 = vld [vmem:[%s215 + $0x48] sm:$0xf]
      %v280 = vld [vmem:[%s215 + $0x4c] sm:$0xf]
      %v281 = vld [vmem:[%s215 + $0x50] sm:$0xf]
      %v282 = vld [vmem:[%s215 + $0x54] sm:$0xf]
      %v283 = vld [vmem:[%s215 + $0x58] sm:$0xf]
      %v284 = vld [vmem:[%s215 + $0x5c] sm:$0xf]
      %v285 = vld [vmem:[%s215 + $0x60] sm:$0xf]
      %v286 = vld [vmem:[%s215 + $0x64] sm:$0xf]
      %v287 = vld [vmem:[%s215 + $0x68] sm:$0xf]
      %v288 = vld [vmem:[%s215 + $0x6c] sm:$0xf]
      %v289 = vld [vmem:[%s215 + $0x70] sm:$0xf]
      %v290 = vld [vmem:[%s215 + $0x74] sm:$0xf]
      %v291 = vld [vmem:[%s215 + $0x78] sm:$0xf]
      %v292 = vld [vmem:[%s215 + $0x7c] sm:$0xf]
      %v293 = vld [vmem:[%s218] sm:$0x1]
      %v295 = vlaneseq
      %v296 = vshrl.u32 %v295, 7
      %v297 = vsub.s32 0, %v296
      %v298 = vrot.slane %v293, %v297
      %v332 = vunpack.c.l.b16 %v229
      %v333 = vunpack.c.h.b16 %v229
      %v334 = vunpack.c.l.b16 %v230
      %v335 = vunpack.c.h.b16 %v230
      %v336 = vunpack.c.l.b16 %v231
      %v337 = vunpack.c.h.b16 %v231
      %v338 = vunpack.c.l.b16 %v232
      %v339 = vunpack.c.h.b16 %v232
      %v340 = vunpack.c.l.b16 %v233
      %v341 = vunpack.c.h.b16 %v233
      %v342 = vunpack.c.l.b16 %v234
      %v343 = vunpack.c.h.b16 %v234
      %v344 = vunpack.c.l.b16 %v235
      %v345 = vunpack.c.h.b16 %v235
      %v346 = vunpack.c.l.b16 %v236
      %v347 = vunpack.c.h.b16 %v236
      %v348 = vunpack.c.l.b16 %v237
      %v349 = vunpack.c.h.b16 %v237
      %v350 = vunpack.c.l.b16 %v238
      %v351 = vunpack.c.h.b16 %v238
      %v352 = vunpack.c.l.b16 %v239
      %v353 = vunpack.c.h.b16 %v239
      %v354 = vunpack.c.l.b16 %v240
      %v355 = vunpack.c.h.b16 %v240
      %v356 = vunpack.c.l.b16 %v241
      %v357 = vunpack.c.h.b16 %v241
      %v358 = vunpack.c.l.b16 %v242
      %v359 = vunpack.c.h.b16 %v242
      %v360 = vunpack.c.l.b16 %v243
      %v361 = vunpack.c.h.b16 %v243
      %v362 = vunpack.c.l.b16 %v244
      %v363 = vunpack.c.h.b16 %v244
      %v364 = vunpack.c.l.b16 %v245
      %v365 = vunpack.c.h.b16 %v245
      %v366 = vunpack.c.l.b16 %v246
      %v367 = vunpack.c.h.b16 %v246
      %v368 = vunpack.c.l.b16 %v247
      %v369 = vunpack.c.h.b16 %v247
      %v370 = vunpack.c.l.b16 %v248
      %v371 = vunpack.c.h.b16 %v248
      %v372 = vunpack.c.l.b16 %v249
      %v373 = vunpack.c.h.b16 %v249
      %v374 = vunpack.c.l.b16 %v250
      %v375 = vunpack.c.h.b16 %v250
      %v376 = vunpack.c.l.b16 %v251
      %v377 = vunpack.c.h.b16 %v251
      %v378 = vunpack.c.l.b16 %v252
      %v379 = vunpack.c.h.b16 %v252
      %v380 = vunpack.c.l.b16 %v253
      %v381 = vunpack.c.h.b16 %v253
      %v382 = vunpack.c.l.b16 %v254
      %v383 = vunpack.c.h.b16 %v254
      %v384 = vunpack.c.l.b16 %v255
      %v385 = vunpack.c.h.b16 %v255
      %v386 = vunpack.c.l.b16 %v256
      %v387 = vunpack.c.h.b16 %v256
      %v388 = vunpack.c.l.b16 %v257
      %v389 = vunpack.c.h.b16 %v257
      %v390 = vunpack.c.l.b16 %v258
      %v391 = vunpack.c.h.b16 %v258
      %v392 = vunpack.c.l.b16 %v259
      %v393 = vunpack.c.h.b16 %v259
      %v394 = vunpack.c.l.b16 %v260
      %v395 = vunpack.c.h.b16 %v260
      %v396 = vpack.c.b16 %v334, %v332
      %v397 = vpack.c.b16 %v335, %v333
      %v398 = vpack.c.b16 %v338, %v336
      %v399 = vpack.c.b16 %v339, %v337
      %v400 = vpack.c.b16 %v342, %v340
      %v401 = vpack.c.b16 %v343, %v341
      %v402 = vpack.c.b16 %v346, %v344
      %v403 = vpack.c.b16 %v347, %v345
      %v404 = vpack.c.b16 %v350, %v348
      %v405 = vpack.c.b16 %v351, %v349
      %v406 = vpack.c.b16 %v354, %v352
      %v407 = vpack.c.b16 %v355, %v353
      %v408 = vpack.c.b16 %v358, %v356
      %v409 = vpack.c.b16 %v359, %v357
      %v410 = vpack.c.b16 %v362, %v360
      %v411 = vpack.c.b16 %v363, %v361
      %v412 = vpack.c.b16 %v366, %v364
      %v413 = vpack.c.b16 %v367, %v365
      %v414 = vpack.c.b16 %v370, %v368
      %v415 = vpack.c.b16 %v371, %v369
      %v416 = vpack.c.b16 %v374, %v372
      %v417 = vpack.c.b16 %v375, %v373
      %v418 = vpack.c.b16 %v378, %v376
      %v419 = vpack.c.b16 %v379, %v377
      %v420 = vpack.c.b16 %v382, %v380
      %v421 = vpack.c.b16 %v383, %v381
      %v422 = vpack.c.b16 %v386, %v384
      %v423 = vpack.c.b16 %v387, %v385
      %v424 = vpack.c.b16 %v390, %v388
      %v425 = vpack.c.b16 %v391, %v389
      %v426 = vpack.c.b16 %v394, %v392
      %v427 = vpack.c.b16 %v395, %v393
      %v492 = vunpack.c.l.b16 %v261
      %v493 = vunpack.c.l.b16 %v262
      %v494 = vunpack.c.l.b16 %v263
      %v495 = vunpack.c.l.b16 %v264
      %v496 = vunpack.c.l.b16 %v265
      %v497 = vunpack.c.l.b16 %v266
      %v498 = vunpack.c.l.b16 %v267
      %v499 = vunpack.c.l.b16 %v268
      %v500 = vunpack.c.l.b16 %v269
      %v501 = vunpack.c.l.b16 %v270
      %v502 = vunpack.c.l.b16 %v271
      %v503 = vunpack.c.l.b16 %v272
      %v504 = vunpack.c.l.b16 %v273
      %v505 = vunpack.c.l.b16 %v274
      %v506 = vunpack.c.l.b16 %v275
      %v507 = vunpack.c.l.b16 %v276
      %v508 = vunpack.c.l.b16 %v277
      %v509 = vunpack.c.l.b16 %v278
      %v510 = vunpack.c.l.b16 %v279
      %v511 = vunpack.c.l.b16 %v280
      %v512 = vunpack.c.l.b16 %v281
      %v513 = vunpack.c.l.b16 %v282
      %v514 = vunpack.c.l.b16 %v283
      %v515 = vunpack.c.l.b16 %v284
      %v516 = vunpack.c.l.b16 %v285
      %v517 = vunpack.c.l.b16 %v286
      %v518 = vunpack.c.l.b16 %v287
      %v519 = vunpack.c.l.b16 %v288
      %v520 = vunpack.c.l.b16 %v289
      %v521 = vunpack.c.l.b16 %v290
      %v522 = vunpack.c.l.b16 %v291
      %v523 = vunpack.c.l.b16 %v292
      %v524 = vpack.c.b16 %v493, %v492
      %v525 = vpack.c.b16 %v495, %v494
      %v526 = vpack.c.b16 %v497, %v496
      %v527 = vpack.c.b16 %v499, %v498
      %v528 = vpack.c.b16 %v501, %v500
      %v529 = vpack.c.b16 %v503, %v502
      %v530 = vpack.c.b16 %v505, %v504
      %v531 = vpack.c.b16 %v507, %v506
      %v532 = vpack.c.b16 %v509, %v508
      %v533 = vpack.c.b16 %v511, %v510
      %v534 = vpack.c.b16 %v513, %v512
      %v535 = vpack.c.b16 %v515, %v514
      %v536 = vpack.c.b16 %v517, %v516
      %v537 = vpack.c.b16 %v519, %v518
      %v538 = vpack.c.b16 %v521, %v520
      %v539 = vpack.c.b16 %v523, %v522
      %556 = vmatprep.subr.bf16.mxu0 0
      %557 = vmatpush1.bf16.msra.mxu0 %v524
      %558 = vmatprep.subr.bf16.mxu0 0
      %559 = vmatpush1.bf16.msra.mxu0 %v525
      %560 = vmatprep.subr.bf16.mxu0 0
      %561 = vmatpush1.bf16.msra.mxu0 %v526
      %562 = vmatprep.subr.bf16.mxu0 0
      %563 = vmatpush1.bf16.msra.mxu0 %v527
      %564 = vmatprep.subr.bf16.mxu0 0
      %565 = vmatpush1.bf16.msra.mxu0 %v528
      %566 = vmatprep.subr.bf16.mxu0 0
      %567 = vmatpush1.bf16.msra.mxu0 %v529
      %568 = vmatprep.subr.bf16.mxu0 0
      %569 = vmatpush1.bf16.msra.mxu0 %v530
      %570 = vmatprep.subr.bf16.mxu0 0
      %571 = vmatpush1.bf16.msra.mxu0 %v531
      %572 = vmatprep.subr.bf16.mxu0 0
      %573 = vmatpush1.bf16.msra.mxu0 %v532
      %574 = vmatprep.subr.bf16.mxu0 0
      %575 = vmatpush1.bf16.msra.mxu0 %v533
      %576 = vmatprep.subr.bf16.mxu0 0
      %577 = vmatpush1.bf16.msra.mxu0 %v534
      %578 = vmatprep.subr.bf16.mxu0 0
      %579 = vmatpush1.bf16.msra.mxu0 %v535
      %580 = vmatprep.subr.bf16.mxu0 0
      %581 = vmatpush1.bf16.msra.mxu0 %v536
      %582 = vmatprep.subr.bf16.mxu0 0
      %583 = vmatpush1.bf16.msra.mxu0 %v537
      %584 = vmatprep.subr.bf16.mxu0 0
      %585 = vmatpush1.bf16.msra.mxu0 %v538
      %586 = vmatprep.subr.bf16.mxu0 0
      %587 = vmatpush1.bf16.msra.mxu0 %v539
      %588 = vmatprep.mubr.bf16.mxu0 %v397
      %589 = vmatmul.mubr.bf16.gmra.mrb[0].mxu0 %v396
      %v590 = vpop.f32.mrb[0].mxu0
      %v591 = vadd.f32 %v298, %v590
      %v592 = vpop.f32.mrb[0].mxu0
      %v593 = vpop.f32.mrb[0].mxu0
      %v594 = vadd.f32 %v298, %v593
      %v595 = vpop.f32.mrb[0].mxu0
      %596 = vmatprep.mubr.bf16.mxu0 %v399
      %597 = vmatmul.mubr.bf16.gmra.mrb[0].mxu0 %v398
      %v598 = vpop.f32.mrb[0].mxu0
      %v599 = vadd.f32 %v298, %v598
      %v600 = vpop.f32.mrb[0].mxu0
      %v601 = vpop.f32.mrb[0].mxu0
      %v602 = vadd.f32 %v298, %v601
      %v603 = vpop.f32.mrb[0].mxu0
      %604 = vmatprep.mubr.bf16.mxu0 %v401
      %605 = vmatmul.mubr.bf16.gmra.mrb[0].mxu0 %v400
      %v606 = vpop.f32.mrb[0].mxu0
      %v607 = vadd.f32 %v298, %v606
      %v608 = vpop.f32.mrb[0].mxu0
      %v609 = vpop.f32.mrb[0].mxu0
      %v610 = vadd.f32 %v298, %v609
      %v611 = vpop.f32.mrb[0].mxu0
      %612 = vmatprep.mubr.bf16.mxu0 %v403
      %613 = vmatmul.mubr.bf16.gmra.mrb[0].mxu0 %v402
      %v614 = vpop.f32.mrb[0].mxu0
      %v615 = vadd.f32 %v298, %v614
      %v616 = vpop.f32.mrb[0].mxu0
      %v617 = vpop.f32.mrb[0].mxu0
      %v618 = vadd.f32 %v298, %v617
      %v619 = vpop.f32.mrb[0].mxu0
      %620 = vmatprep.mubr.bf16.mxu0 %v405
      %621 = vmatmul.mubr.bf16.gmra.mrb[0].mxu0 %v404
      %v622 = vpop.f32.mrb[0].mxu0
      %v623 = vadd.f32 %v298, %v622
      %v624 = vpop.f32.mrb[0].mxu0
      %v625 = vpop.f32.mrb[0].mxu0
      %v626 = vadd.f32 %v298, %v625
      %v627 = vpop.f32.mrb[0].mxu0
      %628 = vmatprep.mubr.bf16.mxu0 %v407
      %629 = vmatmul.mubr.bf16.gmra.mrb[0].mxu0 %v406
      %v630 = vpop.f32.mrb[0].mxu0
      %v631 = vadd.f32 %v298, %v630
      %v632 = vpop.f32.mrb[0].mxu0
      %v633 = vpop.f32.mrb[0].mxu0
      %v634 = vadd.f32 %v298, %v633
      %v635 = vpop.f32.mrb[0].mxu0
      %636 = vmatprep.mubr.bf16.mxu0 %v409
      %637 = vmatmul.mubr.bf16.gmra.mrb[0].mxu0 %v408
      %v638 = vpop.f32.mrb[0].mxu0
      %v639 = vadd.f32 %v298, %v638
      %v640 = vpop.f32.mrb[0].mxu0
      %v641 = vpop.f32.mrb[0].mxu0
      %v642 = vadd.f32 %v298, %v641
      %v643 = vpop.f32.mrb[0].mxu0
      %644 = vmatprep.mubr.bf16.mxu0 %v411
      %645 = vmatmul.mubr.bf16.gmra.mrb[0].mxu0 %v410
      %v646 = vpop.f32.mrb[0].mxu0
      %v647 = vadd.f32 %v298, %v646
      %v648 = vpop.f32.mrb[0].mxu0
      %v649 = vpop.f32.mrb[0].mxu0
      %v650 = vadd.f32 %v298, %v649
      %v651 = vpop.f32.mrb[0].mxu0
      %652 = vmatprep.mubr.bf16.mxu0 %v413
      %653 = vmatmul.mubr.bf16.gmra.mrb[0].mxu0 %v412
      %v654 = vpop.f32.mrb[0].mxu0
      %v655 = vadd.f32 %v298, %v654
      %v656 = vpop.f32.mrb[0].mxu0
      %v657 = vpop.f32.mrb[0].mxu0
      %v658 = vadd.f32 %v298, %v657
      %v659 = vpop.f32.mrb[0].mxu0
      %660 = vmatprep.mubr.bf16.mxu0 %v415
      %661 = vmatmul.mubr.bf16.gmra.mrb[0].mxu0 %v414
      %v662 = vpop.f32.mrb[0].mxu0
      %v663 = vadd.f32 %v298, %v662
      %v664 = vpop.f32.mrb[0].mxu0
      %v665 = vpop.f32.mrb[0].mxu0
      %v666 = vadd.f32 %v298, %v665
      %v667 = vpop.f32.mrb[0].mxu0
      %668 = vmatprep.mubr.bf16.mxu0 %v417
      %669 = vmatmul.mubr.bf16.gmra.mrb[0].mxu0 %v416
      %v670 = vpop.f32.mrb[0].mxu0
      %v671 = vadd.f32 %v298, %v670
      %v672 = vpop.f32.mrb[0].mxu0
      %v673 = vpop.f32.mrb[0].mxu0
      %v674 = vadd.f32 %v298, %v673
      %v675 = vpop.f32.mrb[0].mxu0
      %676 = vmatprep.mubr.bf16.mxu0 %v419
      %677 = vmatmul.mubr.bf16.gmra.mrb[0].mxu0 %v418
      %v678 = vpop.f32.mrb[0].mxu0
      %v679 = vadd.f32 %v298, %v678
      %v680 = vpop.f32.mrb[0].mxu0
      %v681 = vpop.f32.mrb[0].mxu0
      %v682 = vadd.f32 %v298, %v681
      %v683 = vpop.f32.mrb[0].mxu0
      %684 = vmatprep.mubr.bf16.mxu0 %v421
      %685 = vmatmul.mubr.bf16.gmra.mrb[0].mxu0 %v420
      %v686 = vpop.f32.mrb[0].mxu0
      %v687 = vadd.f32 %v298, %v686
      %v688 = vpop.f32.mrb[0].mxu0
      %v689 = vpop.f32.mrb[0].mxu0
      %v690 = vadd.f32 %v298, %v689
      %v691 = vpop.f32.mrb[0].mxu0
      %692 = vmatprep.mubr.bf16.mxu0 %v423
      %693 = vmatmul.mubr.bf16.gmra.mrb[0].mxu0 %v422
      %v694 = vpop.f32.mrb[0].mxu0
      %v695 = vadd.f32 %v298, %v694
      %v696 = vpop.f32.mrb[0].mxu0
      %v697 = vpop.f32.mrb[0].mxu0
      %v698 = vadd.f32 %v298, %v697
      %v699 = vpop.f32.mrb[0].mxu0
      %700 = vmatprep.mubr.bf16.mxu0 %v425
      %701 = vmatmul.mubr.bf16.gmra.mrb[0].mxu0 %v424
      %v702 = vpop.f32.mrb[0].mxu0
      %v703 = vadd.f32 %v298, %v702
      %v704 = vpop.f32.mrb[0].mxu0
      %v705 = vpop.f32.mrb[0].mxu0
      %v706 = vadd.f32 %v298, %v705
      %v707 = vpop.f32.mrb[0].mxu0
      %708 = vmatprep.mubr.bf16.mxu0 %v427
      %709 = vmatmul.mubr.bf16.gmra.mrb[0].mxu0 %v426
      %v710 = vpop.f32.mrb[0].mxu0
      %v711 = vadd.f32 %v298, %v710
      %v712 = vpop.f32.mrb[0].mxu0
      %v713 = vpop.f32.mrb[0].mxu0
      %v714 = vadd.f32 %v298, %v713
      %v715 = vpop.f32.mrb[0].mxu0
      %716 = vdwg.mxu0
      %v717 = vmax.f32 %v591, 0.0
      %v718 = vmax.f32 %v594, 0.0
      %v719 = vmax.f32 %v599, 0.0
      %v720 = vmax.f32 %v602, 0.0
      %v721 = vmax.f32 %v607, 0.0
      %v722 = vmax.f32 %v610, 0.0
      %v723 = vmax.f32 %v615, 0.0
      %v724 = vmax.f32 %v618, 0.0
      %v725 = vmax.f32 %v623, 0.0
      %v726 = vmax.f32 %v626, 0.0
      %v727 = vmax.f32 %v631, 0.0
      %v728 = vmax.f32 %v634, 0.0
      %v729 = vmax.f32 %v639, 0.0
      %v730 = vmax.f32 %v642, 0.0
      %v731 = vmax.f32 %v647, 0.0
      %v732 = vmax.f32 %v650, 0.0
      %v733 = vmax.f32 %v655, 0.0
      %v734 = vmax.f32 %v658, 0.0
      %v735 = vmax.f32 %v663, 0.0
      %v736 = vmax.f32 %v666, 0.0
      %v737 = vmax.f32 %v671, 0.0
      %v738 = vmax.f32 %v674, 0.0
      %v739 = vmax.f32 %v679, 0.0
      %v740 = vmax.f32 %v682, 0.0
      %v741 = vmax.f32 %v687, 0.0
      %v742 = vmax.f32 %v690, 0.0
      %v743 = vmax.f32 %v695, 0.0
      %v744 = vmax.f32 %v698, 0.0
      %v745 = vmax.f32 %v703, 0.0
      %v746 = vmax.f32 %v706, 0.0
      %v747 = vmax.f32 %v711, 0.0
      %v748 = vmax.f32 %v714, 0.0
      %v749 = vpack.c.bf16 %v718, %v717
      %v750 = vpack.c.bf16 %v720, %v719
      %v751 = vpack.c.bf16 %v722, %v721
      %v752 = vpack.c.bf16 %v724, %v723
      %v753 = vpack.c.bf16 %v726, %v725
      %v754 = vpack.c.bf16 %v728, %v727
      %v755 = vpack.c.bf16 %v730, %v729
      %v756 = vpack.c.bf16 %v732, %v731
      %v757 = vpack.c.bf16 %v734, %v733
      %v758 = vpack.c.bf16 %v736, %v735
      %v759 = vpack.c.bf16 %v738, %v737
      %v760 = vpack.c.bf16 %v740, %v739
      %v761 = vpack.c.bf16 %v742, %v741
      %v762 = vpack.c.bf16 %v744, %v743
      %v763 = vpack.c.bf16 %v746, %v745
      %v764 = vpack.c.bf16 %v748, %v747
      %v781 = vunpack.c.l.b16 %v749
      %v782 = vunpack.c.h.b16 %v749
      %v783 = vunpack.c.l.b16 %v750
      %v784 = vunpack.c.h.b16 %v750
      %v785 = vunpack.c.l.b16 %v751
      %v786 = vunpack.c.h.b16 %v751
      %v787 = vunpack.c.l.b16 %v752
      %v788 = vunpack.c.h.b16 %v752
      %v789 = vunpack.c.l.b16 %v753
      %v790 = vunpack.c.h.b16 %v753
      %v791 = vunpack.c.l.b16 %v754
      %v792 = vunpack.c.h.b16 %v754
      %v793 = vunpack.c.l.b16 %v755
      %v794 = vunpack.c.h.b16 %v755
      %v795 = vunpack.c.l.b16 %v756
      %v796 = vunpack.c.h.b16 %v756
      %v797 = vunpack.c.l.b16 %v757
      %v798 = vunpack.c.h.b16 %v757
      %v799 = vunpack.c.l.b16 %v758
      %v800 = vunpack.c.h.b16 %v758
      %v801 = vunpack.c.l.b16 %v759
      %v802 = vunpack.c.h.b16 %v759
      %v803 = vunpack.c.l.b16 %v760
      %v804 = vunpack.c.h.b16 %v760
      %v805 = vunpack.c.l.b16 %v761
      %v806 = vunpack.c.h.b16 %v761
      %v807 = vunpack.c.l.b16 %v762
      %v808 = vunpack.c.h.b16 %v762
      %v809 = vunpack.c.l.b16 %v763
      %v810 = vunpack.c.h.b16 %v763
      %v811 = vunpack.c.l.b16 %v764
      %v812 = vunpack.c.h.b16 %v764
      %v813 = vpack.c.b16 %v781, %v781
      %v814 = vpack.c.b16 %v782, %v782
      %v815 = vpack.c.b16 %v783, %v783
      %v816 = vpack.c.b16 %v784, %v784
      %v817 = vpack.c.b16 %v785, %v785
      %v818 = vpack.c.b16 %v786, %v786
      %v819 = vpack.c.b16 %v787, %v787
      %v820 = vpack.c.b16 %v788, %v788
      %v821 = vpack.c.b16 %v789, %v789
      %v822 = vpack.c.b16 %v790, %v790
      %v823 = vpack.c.b16 %v791, %v791
      %v824 = vpack.c.b16 %v792, %v792
      %v825 = vpack.c.b16 %v793, %v793
      %v826 = vpack.c.b16 %v794, %v794
      %v827 = vpack.c.b16 %v795, %v795
      %v828 = vpack.c.b16 %v796, %v796
      %v829 = vpack.c.b16 %v797, %v797
      %v830 = vpack.c.b16 %v798, %v798
      %v831 = vpack.c.b16 %v799, %v799
      %v832 = vpack.c.b16 %v800, %v800
      %v833 = vpack.c.b16 %v801, %v801
      %v834 = vpack.c.b16 %v802, %v802
      %v835 = vpack.c.b16 %v803, %v803
      %v836 = vpack.c.b16 %v804, %v804
      %v837 = vpack.c.b16 %v805, %v805
      %v838 = vpack.c.b16 %v806, %v806
      %v839 = vpack.c.b16 %v807, %v807
      %v840 = vpack.c.b16 %v808, %v808
      %v841 = vpack.c.b16 %v809, %v809
      %v842 = vpack.c.b16 %v810, %v810
      %v843 = vpack.c.b16 %v811, %v811
      %v844 = vpack.c.b16 %v812, %v812
      %877 = vst [vmem:[%s226] sm:$0xf] %v813
      %878 = vst [vmem:[%s226 + $0x4] sm:$0xf] %v814
      %879 = vst [vmem:[%s226 + $0x8] sm:$0xf] %v815
      %880 = vst [vmem:[%s226 + $0xc] sm:$0xf] %v816
      %881 = vst [vmem:[%s226 + $0x10] sm:$0xf] %v817
      %882 = vst [vmem:[%s226 + $0x14] sm:$0xf] %v818
      %883 = vst [vmem:[%s226 + $0x18] sm:$0xf] %v819
      %884 = vst [vmem:[%s226 + $0x1c] sm:$0xf] %v820
      %885 = vst [vmem:[%s226 + $0x20] sm:$0xf] %v821
      %886 = vst [vmem:[%s226 + $0x24] sm:$0xf] %v822
      %887 = vst [vmem:[%s226 + $0x28] sm:$0xf] %v823
      %888 = vst [vmem:[%s226 + $0x2c] sm:$0xf] %v824
      %889 = vst [vmem:[%s226 + $0x30] sm:$0xf] %v825
      %890 = vst [vmem:[%s226 + $0x34] sm:$0xf] %v826
      %891 = vst [vmem:[%s226 + $0x38] sm:$0xf] %v827
      %892 = vst [vmem:[%s226 + $0x3c] sm:$0xf] %v828
      %893 = vst [vmem:[%s226 + $0x40] sm:$0xf] %v829
      %894 = vst [vmem:[%s226 + $0x44] sm:$0xf] %v830
      %895 = vst [vmem:[%s226 + $0x48] sm:$0xf] %v831
      %896 = vst [vmem:[%s226 + $0x4c] sm:$0xf] %v832
      %897 = vst [vmem:[%s226 + $0x50] sm:$0xf] %v833
      %898 = vst [vmem:[%s226 + $0x54] sm:$0xf] %v834
      %899 = vst [vmem:[%s226 + $0x58] sm:$0xf] %v835
      %900 = vst [vmem:[%s226 + $0x5c] sm:$0xf] %v836
      %901 = vst [vmem:[%s226 + $0x60] sm:$0xf] %v837
      %902 = vst [vmem:[%s226 + $0x64] sm:$0xf] %v838
      %903 = vst [vmem:[%s226 + $0x68] sm:$0xf] %v839
      %904 = vst [vmem:[%s226 + $0x6c] sm:$0xf] %v840
      %905 = vst [vmem:[%s226 + $0x70] sm:$0xf] %v841
      %906 = vst [vmem:[%s226 + $0x74] sm:$0xf] %v842
      %907 = vst [vmem:[%s226 + $0x78] sm:$0xf] %v843
      %908 = vst [vmem:[%s226 + $0x7c] sm:$0xf] %v844
      %s909 = smul.u32 32, %s18
      %p910 = scmp.lt.s32.totalorder %s909, 63
      %s911 = scalar_select %p910, %s909, 63
      %p912 = scmp.lt.s32.totalorder %s19, 0
      %s913 = scalar_select %p912, %s19, 0
      %s914 = sadd.s32 %s913, %s911
      %s915 = smul.addr %s914, 4
      %s916 = scalar_lea.vmem %s3, %s915
      // Predicated region
      $region33: #{_lambda_.16} parent=31 // pred_check
        %p917 = pneg %p124
      $region34: #{_lambda_.16} parent=31 // pred_check_branch
        %919 = sbr.rel (%p917) target = $region36
      $region35: #{_lambda_.16} parent=31 // pred_region
        %s920 = smul.u32 32, %s18
      $region36: #{_lambda_.16} parent=31 // pred_fallthru
        _
    $region32: #{_lambda_.16} parent=5 // pred_fallthru
      _
    %p921 = scmp.le.s32.totalorder 2, %s9
    // Predicated region
    $region37: #{_lambda_.16} parent=5 // pred_check
      %p922 = pneg %p921
    $region38: #{_lambda_.16} parent=5 // pred_check_branch
      %924 = sbr.rel (%p922) target = $region40
    $region39: #{_lambda_.16} parent=5 // pred_region
      %s925 = ssub.s32 %s9, 2
      // Predicated region
      $region41: #{_lambda_.16} parent=39 // pred_check
        %p926 = pneg %p130
      $region42: #{_lambda_.16} parent=39 // pred_check_branch
        %928 = sbr.rel (%p926) target = $region44
      $region43: #{_lambda_.16} parent=39 // pred_region
        %s929 = smul.u32 32, %s20
        %p930 = scmp.lt.s32.totalorder %s929, 63
        %s931 = scalar_select %p930, %s929, 63
        %p932 = scmp.lt.s32.totalorder %s21, 0
        %s933 = scalar_select %p932, %s21, 0
        %s934 = sadd.s32 %s933, %s931
        %s935 = smul.addr %s934, 4
        %s936 = scalar_lea.vmem %s3, %s935
      $region44: #{_lambda_.16} parent=39 // pred_fallthru
        _
    $region40: #{_lambda_.16} parent=5 // pred_fallthru
      _
  $region6: #{_lambda_.16} parent=0 // loop_footer
    %s13 = sadd.s32 1, %s9
  $region7: #{_lambda_.16} parent=0 // loop_footer_branch
    %8 = sbr.rel target = $region3
  $region8: #{_lambda_.16} parent=0 // loop_exit
    _

// kernel: _lambda_.18
$region0: #{_lambda_.18}
  #allocation0 [shape = 'u32[]', space=smem, size = 0x4, offset = 0x4, fixed_abs, tag = 'smem constant byte address 0x4 - core index']
  #allocation1 [shape = 'u32[144,128]{1,0:T(1,128)}', space=vmem, size = 0x12000, scoped, tag = 'internal scratch']
  %s0 = inlined_call_operand.vmem [shape: bf16[128,128], index: 0, kind: input, shape index: {}]
  %s1 = inlined_call_operand.vmem [shape: bf16[128,128], index: 1, kind: input, shape index: {}]
  %s2 = inlined_call_operand.vmem [shape: f32[1,128], index: 2, kind: input, shape index: {}]
  %s3 = inlined_call_operand.vmem [shape: bf16[128,128], index: 3, kind: output, shape index: {}]
  %s4 = sld [smem:[#allocation0]]
  $region45: #{_lambda_.18} parent=0
    _
  %s6 = ssub.s32 1, %s4
  %s7 = scalar_select 0, %s6, %s4
  loop: start=0, step=1, limit=4
  $region2: #{_lambda_.18} parent=0 // loop_pre_header
    _
  $region3: #{_lambda_.18} parent=0 // loop_header
    %s9 = sphi 0, %s13
    %p10 = scmp.ge.s32.totalorder %s9, 4
    %s16 = sphi 0, %s28
    %s17 = sphi 0, %s24
    %s18 = sphi 0, %s16
    %s19 = sphi 0, %s17
    %s20 = sphi 0, %s18
    %s21 = sphi 0, %s19
    %s31 = sphi 0, %s33
    %s34 = sphi 0, %s31
    %s35 = sphi 0, %s34
    %s51 = sphi 0, %s35
    %s57 = sphi 0, %s59
    %s60 = sphi 0, %s57
    %s61 = sphi 0, %s60
    %s77 = sphi 0, %s61
    %s83 = sphi 0, %s85
    %s86 = sphi 0, %s83
    %s87 = sphi 0, %s86
    %s103 = sphi 0, %s87
    %s111 = sphi 0, %s113
    %s114 = sphi 0, %s111
    %s115 = sphi 0, %s114
    %s131 = sphi 0, %s115
  $region4: #{_lambda_.18} parent=0 // loop_header_branch
    %12 = sbr.rel (%p10) target = $region8
  $region5: #{_lambda_.18} parent=0 // loop_body
    %s14 = ssub.s32 %s9, 1
    %s15 = ssub.s32 %s9, 2
    %s22 = sadd.s32 1, %s17
    %p23 = scmp.ge.s32.totalorder %s22, 1
    %s24 = scalar_select %p23, 0, %s22
    %s25 = sadd.s32 1, %s16
    %s26 = scalar_select %p23, %s25, %s16
    %p27 = scmp.ge.s32.totalorder %s26, 2
    %s28 = scalar_select %p27, 0, %s26
    %s29 = ssub.s32 %s16, %s28
    %p30 = scmp.eq.s32.totalorder %s29, 0
    %s32 = sadd.s32 %s31, 1
    %s33 = scalar_select %p30, %s31, %s32
    %p36 = pneg %p30
    %p37 = scmp.eq.s32.totalorder %s9, 1
    %p38 = por %p36, %p37
    %p39 = scmp.ne.s32.totalorder %s31, %s34
    %p40 = scmp.eq.s32.totalorder %s9, 0
    %p41 = por %p39, %p40
    %p42 = scmp.ne.s32.totalorder %s31, %s34
    %p43 = scmp.eq.s32.totalorder %s14, 1
    %p44 = por %p42, %p43
    %p45 = scmp.ne.s32.totalorder %s34, %s35
    %p46 = scmp.eq.s32.totalorder %s14, 0
    %p47 = por %p45, %p46
    %p48 = scmp.ne.s32.totalorder %s34, %s35
    %p49 = scmp.eq.s32.totalorder %s15, 1
    %p50 = por %p48, %p49
    %p52 = scmp.ne.s32.totalorder %s35, %s51
    %p53 = scmp.eq.s32.totalorder %s15, 0
    %p54 = por %p52, %p53
    %s55 = ssub.s32 %s17, %s24
    %p56 = scmp.eq.s32.totalorder %s55, 0
    %s58 = sadd.s32 %s57, 1
    %s59 = scalar_select %p56, %s57, %s58
    %p62 = pneg %p56
    %p63 = scmp.eq.s32.totalorder %s9, 1
    %p64 = por %p62, %p63
    %p65 = scmp.ne.s32.totalorder %s57, %s60
    %p66 = scmp.eq.s32.totalorder %s9, 0
    %p67 = por %p65, %p66
    %p68 = scmp.ne.s32.totalorder %s57, %s60
    %p69 = scmp.eq.s32.totalorder %s14, 1
    %p70 = por %p68, %p69
    %p71 = scmp.ne.s32.totalorder %s60, %s61
    %p72 = scmp.eq.s32.totalorder %s14, 0
    %p73 = por %p71, %p72
    %p74 = scmp.ne.s32.totalorder %s60, %s61
    %p75 = scmp.eq.s32.totalorder %s15, 1
    %p76 = por %p74, %p75
    %p78 = scmp.ne.s32.totalorder %s61, %s77
    %p79 = scmp.eq.s32.totalorder %s15, 0
    %p80 = por %p78, %p79
    %s81 = ssub.s32 %s17, %s24
    %p82 = scmp.eq.s32.totalorder %s81, 0
    %s84 = sadd.s32 %s83, 1
    %s85 = scalar_select %p82, %s83, %s84
    %p88 = pneg %p82
    %p89 = scmp.eq.s32.totalorder %s9, 1
    %p90 = por %p88, %p89
    %p91 = scmp.ne.s32.totalorder %s83, %s86
    %p92 = scmp.eq.s32.totalorder %s9, 0
    %p93 = por %p91, %p92
    %p94 = scmp.ne.s32.totalorder %s83, %s86
    %p95 = scmp.eq.s32.totalorder %s14, 1
    %p96 = por %p94, %p95
    %p97 = scmp.ne.s32.totalorder %s86, %s87
    %p98 = scmp.eq.s32.totalorder %s14, 0
    %p99 = por %p97, %p98
    %p100 = scmp.ne.s32.totalorder %s86, %s87
    %p101 = scmp.eq.s32.totalorder %s15, 1
    %p102 = por %p100, %p101
    %p104 = scmp.ne.s32.totalorder %s87, %s103
    %p105 = scmp.eq.s32.totalorder %s15, 0
    %p106 = por %p104, %p105
    %s107 = ssub.s32 %s16, %s28
    %s108 = ssub.s32 %s17, %s24
    %s109 = sor.u32 %s107, %s108
    %p110 = scmp.eq.s32.totalorder %s109, 0
    %s112 = sadd.s32 %s111, 1
    %s113 = scalar_select %p110, %s111, %s112
    %p116 = pneg %p110
    %p117 = scmp.eq.s32.totalorder %s9, 1
    %p118 = por %p116, %p117
    %p119 = scmp.ne.s32.totalorder %s111, %s114
    %p120 = scmp.eq.s32.totalorder %s9, 0
    %p121 = por %p119, %p120
    %p122 = scmp.ne.s32.totalorder %s111, %s114
    %p123 = scmp.eq.s32.totalorder %s14, 1
    %p124 = por %p122, %p123
    %p125 = scmp.ne.s32.totalorder %s114, %s115
    %p126 = scmp.eq.s32.totalorder %s14, 0
    %p127 = por %p125, %p126
    %p128 = scmp.ne.s32.totalorder %s114, %s115
    %p129 = scmp.eq.s32.totalorder %s15, 1
    %p130 = por %p128, %p129
    %p132 = scmp.ne.s32.totalorder %s115, %s131
    %p133 = scmp.eq.s32.totalorder %s15, 0
    %p134 = por %p132, %p133
    %p135 = scmp.le.s32.totalorder 1, %s9
    %p136 = scmp.lt.s32.totalorder %s9, 3
    %p137 = pnand %p135, %p136
    %p138 = pneg %p137
    // Predicated region
    $region9: #{_lambda_.18} parent=5 // pred_check
      _
    $region10: #{_lambda_.18} parent=5 // pred_check_branch
      %140 = sbr.rel (%p137) target = $region12
    $region11: #{_lambda_.18} parent=5 // pred_region
      %s141 = ssub.s32 %s9, 1
      // Predicated region
      $region13: #{_lambda_.18} parent=11 // pred_check
        %p142 = pneg %p73
      $region14: #{_lambda_.18} parent=11 // pred_check_branch
        %144 = sbr.rel (%p142) target = $region16
      $region15: #{_lambda_.18} parent=11 // pred_region
        %p145 = scmp.lt.s32.totalorder %s19, 0
        %s146 = scalar_select %p145, %s19, 0
        %s147 = smul.addr %s146, 4
        %s148 = scalar_lea.vmem %s1, %s147
      $region16: #{_lambda_.18} parent=11 // pred_fallthru
        _
      // Predicated region
      $region17: #{_lambda_.18} parent=11 // pred_check
        %p149 = pneg %p99
      $region18: #{_lambda_.18} parent=11 // pred_check_branch
        %151 = sbr.rel (%p149) target = $region20
      $region19: #{_lambda_.18} parent=11 // pred_region
        %p152 = scmp.lt.s32.totalorder %s19, 0
        %s153 = scalar_select %p152, %s19, 0
        %s154 = scalar_lea.vmem %s2, %s153
      $region20: #{_lambda_.18} parent=11 // pred_fallthru
        _
    $region12: #{_lambda_.18} parent=5 // pred_fallthru
      _
    %p155 = scmp.lt.s32.totalorder %s9, 2
    // Predicated region
    $region21: #{_lambda_.18} parent=5 // pred_check
      %p156 = pneg %p155
    $region22: #{_lambda_.18} parent=5 // pred_check_branch
      %158 = sbr.rel (%p156) target = $region24
    $region23: #{_lambda_.18} parent=5 // pred_region
      // Predicated region
      $region25: #{_lambda_.18} parent=23 // pred_check
        %p159 = pneg %p41
      $region26: #{_lambda_.18} parent=23 // pred_check_branch
        %161 = sbr.rel (%p159) target = $region28
      $region27: #{_lambda_.18} parent=23 // pred_region
        %s162 = smul.u32 8, %s16
        %p163 = scmp.lt.s32.totalorder %s162, 15
        %s164 = scalar_select %p163, %s162, 15
        %s165 = smul.addr %s164, 4
        %s166 = scalar_lea.vmem %s0, %s165
        %s167 = smul.u32 8, %s16
      $region28: #{_lambda_.18} parent=23 // pred_fallthru
        _
    $region24: #{_lambda_.18} parent=5 // pred_fallthru
      _
    %p168 = scmp.le.s32.totalorder 1, %s9
    %p169 = scmp.lt.s32.totalorder %s9, 3
    %p170 = pnand %p168, %p169
    %p171 = pneg %p170
    // Predicated region
    $region29: #{_lambda_.18} parent=5 // pred_check
      _
    $region30: #{_lambda_.18} parent=5 // pred_check_branch
      %173 = sbr.rel (%p170) target = $region32
    $region31: #{_lambda_.18} parent=5 // pred_region
      %s174 = ssub.s32 %s9, 1
      %s175 = smul.u32 8, %s18
      %p176 = scmp.lt.s32.totalorder %s175, 15
      %s177 = scalar_select %p176, %s175, 15
      %s178 = smul.addr %s177, 4
      %s179 = scalar_lea.vmem %s0, %s178
      %p180 = pneg %p47
      %p181 = pneg %p44
      %p182 = scmp.lt.s32.totalorder %s19, 0
      %s183 = scalar_select %p182, %s19, 0
      %s184 = smul.addr %s183, 4
      %s185 = scalar_lea.vmem %s1, %s184
      %p186 = pneg %p73
      %p187 = pneg %p70
      %p188 = scmp.lt.s32.totalorder %s19, 0
      %s189 = scalar_select %p188, %s19, 0
      %s190 = scalar_lea.vmem %s2, %s189
      %p191 = pneg %p99
      %p192 = pneg %p96
      %p193 = pneg %p127
      %p194 = pneg %p124
      %s195 = smul.u32 8, %s18
      %p196 = scmp.lt.s32.totalorder %s195, 15
      %s197 = scalar_select %p196, %s195, 15
      %p198 = scmp.lt.s32.totalorder %s19, 0
      %s199 = scalar_select %p198, %s19, 0
      %s200 = sadd.s32 %s199, %s197
      %s201 = smul.addr %s200, 4
      %s202 = scalar_lea.vmem %s3, %s201
      %s203 = smul.u32 8, %s18
      %p204 = scmp.lt.s32.totalorder %s203, 15
      %s205 = scalar_select %p204, %s203, 15
      %s206 = smul.addr %s205, 4
      %s207 = scalar_lea.vmem %s0, %s206
      %s208 = smul.u32 8, %s18
      %p209 = scmp.lt.s32.totalorder %s19, 0
      %s210 = scalar_select %p209, %s19, 0
      %s211 = smul.addr %s210, 4
      %s212 = scalar_lea.vmem %s1, %s211
      %p213 = scmp.lt.s32.totalorder %s19, 0
      %s214 = scalar_select %p213, %s19, 0
      %s215 = scalar_lea.vmem %s2, %s214
      %s216 = smul.u32 8, %s18
      %p217 = scmp.lt.s32.totalorder %s216, 15
      %s218 = scalar_select %p217, %s216, 15
      %p219 = scmp.lt.s32.totalorder %s19, 0
      %s220 = scalar_select %p219, %s19, 0
      %s221 = sadd.s32 %s220, %s218
      %s222 = smul.addr %s221, 4
      %s223 = scalar_lea.vmem %s3, %s222
      %s224 = smul.u32 8, %s18
      %v226 = vld [vmem:[%s207] sm:$0xf]
      %v227 = vld [vmem:[%s207 + $0x4] sm:$0xf]
      %v228 = vld [vmem:[%s207 + $0x8] sm:$0xf]
      %v229 = vld [vmem:[%s207 + $0xc] sm:$0xf]
      %v230 = vld [vmem:[%s207 + $0x10] sm:$0xf]
      %v231 = vld [vmem:[%s207 + $0x14] sm:$0xf]
      %v232 = vld [vmem:[%s207 + $0x18] sm:$0xf]
      %v233 = vld [vmem:[%s207 + $0x1c] sm:$0xf]
      %v234 = vld [vmem:[%s212] sm:$0xf]
      %v235 = vld [vmem:[%s212 + $0x4] sm:$0xf]
      %v236 = vld [vmem:[%s212 + $0x8] sm:$0xf]
      %v237 = vld [vmem:[%s212 + $0xc] sm:$0xf]
      %v238 = vld [vmem:[%s212 + $0x10] sm:$0xf]
      %v239 = vld [vmem:[%s212 + $0x14] sm:$0xf]
      %v240 = vld [vmem:[%s212 + $0x18] sm:$0xf]
      %v241 = vld [vmem:[%s212 + $0x1c] sm:$0xf]
      %v242 = vld [vmem:[%s212 + $0x20] sm:$0xf]
      %v243 = vld [vmem:[%s212 + $0x24] sm:$0xf]
      %v244 = vld [vmem:[%s212 + $0x28] sm:$0xf]
      %v245 = vld [vmem:[%s212 + $0x2c] sm:$0xf]
      %v246 = vld [vmem:[%s212 + $0x30] sm:$0xf]
      %v247 = vld [vmem:[%s212 + $0x34] sm:$0xf]
      %v248 = vld [vmem:[%s212 + $0x38] sm:$0xf]
      %v249 = vld [vmem:[%s212 + $0x3c] sm:$0xf]
      %v250 = vld [vmem:[%s215] sm:$0x1]
      %v252 = vlaneseq
      %v253 = vshrl.u32 %v252, 7
      %v254 = vsub.s32 0, %v253
      %v255 = vrot.slane %v250, %v254
      %v265 = vunpack.c.l.b16 %v226
      %v266 = vunpack.c.l.b16 %v227
      %v267 = vunpack.c.l.b16 %v228
      %v268 = vunpack.c.l.b16 %v229
      %v269 = vunpack.c.l.b16 %v230
      %v270 = vunpack.c.l.b16 %v231
      %v271 = vunpack.c.l.b16 %v232
      %v272 = vunpack.c.l.b16 %v233
      %v273 = vpack.c.b16 %v266, %v265
      %v274 = vpack.c.b16 %v268, %v267
      %v275 = vpack.c.b16 %v270, %v269
      %v276 = vpack.c.b16 %v272, %v271
      %v297 = vunpack.c.l.b16 %v234
      %v298 = vunpack.c.l.b16 %v235
      %v299 = vunpack.c.l.b16 %v236
      %v300 = vunpack.c.l.b16 %v237
      %v301 = vunpack.c.l.b16 %v238
      %v302 = vunpack.c.l.b16 %v239
      %v303 = vunpack.c.l.b16 %v240
      %v304 = vunpack.c.l.b16 %v241
      %v305 = vunpack.c.l.b16 %v242
      %v306 = vunpack.c.l.b16 %v243
      %v307 = vunpack.c.l.b16 %v244
      %v308 = vunpack.c.l.b16 %v245
      %v309 = vunpack.c.l.b16 %v246
      %v310 = vunpack.c.l.b16 %v247
      %v311 = vunpack.c.l.b16 %v248
      %v312 = vunpack.c.l.b16 %v249
      %v313 = vpack.c.b16 %v298, %v297
      %v314 = vpack.c.b16 %v300, %v299
      %v315 = vpack.c.b16 %v302, %v301
      %v316 = vpack.c.b16 %v304, %v303
      %v317 = vpack.c.b16 %v306, %v305
      %v318 = vpack.c.b16 %v308, %v307
      %v319 = vpack.c.b16 %v310, %v309
      %v320 = vpack.c.b16 %v312, %v311
      %329 = vmatprep.subr.bf16.mxu0 0
      %330 = vmatpush1.bf16.msra.mxu0 %v313
      %331 = vmatprep.subr.bf16.mxu0 0
      %332 = vmatpush1.bf16.msra.mxu0 %v314
      %333 = vmatprep.subr.bf16.mxu0 0
      %334 = vmatpush1.bf16.msra.mxu0 %v315
      %335 = vmatprep.subr.bf16.mxu0 0
      %336 = vmatpush1.bf16.msra.mxu0 %v316
      %337 = vmatprep.subr.bf16.mxu0 0
      %338 = vmatpush1.bf16.msra.mxu0 %v317
      %339 = vmatprep.subr.bf16.mxu0 0
      %340 = vmatpush1.bf16.msra.mxu0 %v318
      %341 = vmatprep.subr.bf16.mxu0 0
      %342 = vmatpush1.bf16.msra.mxu0 %v319
      %343 = vmatprep.subr.bf16.mxu0 0
      %344 = vmatpush1.bf16.msra.mxu0 %v320
      %345 = vmatprep.subr.bf16.mxu0 0
      %346 = vmatpush1.bf16.msra.mxu0 0
      %347 = vmatprep.subr.bf16.mxu0 0
      %348 = vmatpush1.bf16.msra.mxu0 0
      %349 = vmatprep.subr.bf16.mxu0 0
      %350 = vmatpush1.bf16.msra.mxu0 0
      %351 = vmatprep.subr.bf16.mxu0 0
      %352 = vmatpush1.bf16.msra.mxu0 0
      %353 = vmatprep.subr.bf16.mxu0 0
      %354 = vmatpush1.bf16.msra.mxu0 0
      %355 = vmatprep.subr.bf16.mxu0 0
      %356 = vmatpush1.bf16.msra.mxu0 0
      %357 = vmatprep.subr.bf16.mxu0 0
      %358 = vmatpush1.bf16.msra.mxu0 0
      %359 = vmatprep.subr.bf16.mxu0 0
      %360 = vmatpush1.bf16.msra.mxu0 0
      %361 = vmatprep.mubr.bf16.mxu0 0
      %362 = vmatmul.mubr.bf16.gmra.mrb[0].mxu0 %v273
      %v363 = vpop.f32.mrb[0].mxu0
      %v364 = vadd.f32 %v255, %v363
      %v365 = vpop.f32.mrb[0].mxu0
      %v366 = vpop.f32.mrb[0].mxu0
      %v367 = vadd.f32 %v255, %v366
      %v368 = vpop.f32.mrb[0].mxu0
      %369 = vmatprep.mubr.bf16.mxu0 0
      %370 = vmatmul.mubr.bf16.gmra.mrb[0].mxu0 %v274
      %v371 = vpop.f32.mrb[0].mxu0
      %v372 = vadd.f32 %v255, %v371
      %v373 = vpop.f32.mrb[0].mxu0
      %v374 = vpop.f32.mrb[0].mxu0
      %v375 = vadd.f32 %v255, %v374
      %v376 = vpop.f32.mrb[0].mxu0
      %377 = vmatprep.mubr.bf16.mxu0 0
      %378 = vmatmul.mubr.bf16.gmra.mrb[0].mxu0 %v275
      %v379 = vpop.f32.mrb[0].mxu0
      %v380 = vadd.f32 %v255, %v379
      %v381 = vpop.f32.mrb[0].mxu0
      %v382 = vpop.f32.mrb[0].mxu0
      %v383 = vadd.f32 %v255, %v382
      %v384 = vpop.f32.mrb[0].mxu0
      %385 = vmatprep.mubr.bf16.mxu0 0
      %386 = vmatmul.mubr.bf16.gmra.mrb[0].mxu0 %v276
      %v387 = vpop.f32.mrb[0].mxu0
      %v388 = vadd.f32 %v255, %v387
      %v389 = vpop.f32.mrb[0].mxu0
      %v390 = vpop.f32.mrb[0].mxu0
      %v391 = vadd.f32 %v255, %v390
      %v392 = vpop.f32.mrb[0].mxu0
      %393 = vdwg.mxu0
      %v394 = vmax.f32 %v364, 0.0
      %v395 = vmax.f32 %v367, 0.0
      %v396 = vmax.f32 %v372, 0.0
      %v397 = vmax.f32 %v375, 0.0
      %v398 = vmax.f32 %v380, 0.0
      %v399 = vmax.f32 %v383, 0.0
      %v400 = vmax.f32 %v388, 0.0
      %v401 = vmax.f32 %v391, 0.0
      %v402 = vpack.c.bf16 %v395, %v394
      %v403 = vpack.c.bf16 %v397, %v396
      %v404 = vpack.c.bf16 %v399, %v398
      %v405 = vpack.c.bf16 %v401, %v400
      %v410 = vunpack.c.l.b16 %v402
      %v411 = vunpack.c.h.b16 %v402
      %v412 = vunpack.c.l.b16 %v403
      %v413 = vunpack.c.h.b16 %v403
      %v414 = vunpack.c.l.b16 %v404
      %v415 = vunpack.c.h.b16 %v404
      %v416 = vunpack.c.l.b16 %v405
      %v417 = vunpack.c.h.b16 %v405
      %v418 = vpack.c.b16 %v410, %v410
      %v419 = vpack.c.b16 %v411, %v411
      %v420 = vpack.c.b16 %v412, %v412
      %v421 = vpack.c.b16 %v413, %v413
      %v422 = vpack.c.b16 %v414, %v414
      %v423 = vpack.c.b16 %v415, %v415
      %v424 = vpack.c.b16 %v416, %v416
      %v425 = vpack.c.b16 %v417, %v417
      %434 = vst [vmem:[%s223] sm:$0xf] %v418
      %435 = vst [vmem:[%s223 + $0x4] sm:$0xf] %v419
      %436 = vst [vmem:[%s223 + $0x8] sm:$0xf] %v420
      %437 = vst [vmem:[%s223 + $0xc] sm:$0xf] %v421
      %438 = vst [vmem:[%s223 + $0x10] sm:$0xf] %v422
      %439 = vst [vmem:[%s223 + $0x14] sm:$0xf] %v423
      %440 = vst [vmem:[%s223 + $0x18] sm:$0xf] %v424
      %441 = vst [vmem:[%s223 + $0x1c] sm:$0xf] %v425
      %s442 = smul.u32 8, %s18
      %p443 = scmp.lt.s32.totalorder %s442, 15
      %s444 = scalar_select %p443, %s442, 15
      %p445 = scmp.lt.s32.totalorder %s19, 0
      %s446 = scalar_select %p445, %s19, 0
      %s447 = sadd.s32 %s446, %s444
      %s448 = smul.addr %s447, 4
      %s449 = scalar_lea.vmem %s3, %s448
      // Predicated region
      $region33: #{_lambda_.18} parent=31 // pred_check
        %p450 = pneg %p124
      $region34: #{_lambda_.18} parent=31 // pred_check_branch
        %452 = sbr.rel (%p450) target = $region36
      $region35: #{_lambda_.18} parent=31 // pred_region
        %s453 = smul.u32 8, %s18
      $region36: #{_lambda_.18} parent=31 // pred_fallthru
        _
    $region32: #{_lambda_.18} parent=5 // pred_fallthru
      _
    %p454 = scmp.le.s32.totalorder 2, %s9
    // Predicated region
    $region37: #{_lambda_.18} parent=5 // pred_check
      %p455 = pneg %p454
    $region38: #{_lambda_.18} parent=5 // pred_check_branch
      %457 = sbr.rel (%p455) target = $region40
    $region39: #{_lambda_.18} parent=5 // pred_region
      %s458 = ssub.s32 %s9, 2
      // Predicated region
      $region41: #{_lambda_.18} parent=39 // pred_check
        %p459 = pneg %p130
      $region42: #{_lambda_.18} parent=39 // pred_check_branch
        %461 = sbr.rel (%p459) target = $region44
      $region43: #{_lambda_.18} parent=39 // pred_region
        %s462 = smul.u32 8, %s20
        %p463 = scmp.lt.s32.totalorder %s462, 15
        %s464 = scalar_select %p463, %s462, 15
        %p465 = scmp.lt.s32.totalorder %s21, 0
        %s466 = scalar_select %p465, %s21, 0
        %s467 = sadd.s32 %s466, %s464
        %s468 = smul.addr %s467, 4
        %s469 = scalar_lea.vmem %s3, %s468
      $region44: #{_lambda_.18} parent=39 // pred_fallthru
        _
    $region40: #{_lambda_.18} parent=5 // pred_fallthru
      _
  $region6: #{_lambda_.18} parent=0 // loop_footer
    %s13 = sadd.s32 1, %s9
  $region7: #{_lambda_.18} parent=0 // loop_footer_branch
    %8 = sbr.rel target = $region3
  $region8: #{_lambda_.18} parent=0 // loop_exit
    _

// kernel: _lambda_.17
$region0: #{_lambda_.17}
  #allocation0 [shape = 'u32[]', space=smem, size = 0x4, offset = 0x4, fixed_abs, tag = 'smem constant byte address 0x4 - core index']
  #allocation1 [shape = 'u32[144,128]{1,0:T(1,128)}', space=vmem, size = 0x12000, scoped, tag = 'internal scratch']
  %s0 = inlined_call_operand.vmem [shape: bf16[2,9,9,128], index: 0, kind: input, shape index: {}]
  %s1 = inlined_call_operand.vmem [shape: bf16[2,9,9,128], index: 1, kind: input, shape index: {}]
  %s2 = inlined_call_operand.vmem [shape: bf16[2,9,9,128], index: 2, kind: input, shape index: {}]
  %s3 = inlined_call_operand.vmem [shape: bf16[2,9,9,128], index: 3, kind: input, shape index: {}]
  %s4 = inlined_call_operand.vmem [shape: bf16[2,8,8,128], index: 4, kind: output, shape index: {}]
  %s5 = sld [smem:[#allocation0]]
  $region49: #{_lambda_.17} parent=0
    _
  %s7 = ssub.s32 1, %s5
  %s8 = scalar_select 0, %s7, %s5
  loop: start=0, step=1, limit=4
  $region2: #{_lambda_.17} parent=0 // loop_pre_header
    _
  $region3: #{_lambda_.17} parent=0 // loop_header
    %s10 = sphi 0, %s14
    %p11 = scmp.ge.s32.totalorder %s10, 4
    %s20 = sphi 0, %s22
    %s23 = sphi 0, %s20
    %s24 = sphi 0, %s23
    %s40 = sphi 0, %s24
    %s46 = sphi 0, %s48
    %s49 = sphi 0, %s46
    %s50 = sphi 0, %s49
    %s66 = sphi 0, %s50
    %s72 = sphi 0, %s74
    %s75 = sphi 0, %s72
    %s76 = sphi 0, %s75
    %s92 = sphi 0, %s76
    %s98 = sphi 0, %s100
    %s101 = sphi 0, %s98
    %s102 = sphi 0, %s101
    %s118 = sphi 0, %s102
    %s124 = sphi 0, %s126
    %s127 = sphi 0, %s124
    %s128 = sphi 0, %s127
    %s144 = sphi 0, %s128
  $region4: #{_lambda_.17} parent=0 // loop_header_branch
    %13 = sbr.rel (%p11) target = $region8
  $region5: #{_lambda_.17} parent=0 // loop_body
    %s15 = ssub.s32 %s10, 1
    %s16 = ssub.s32 %s10, 2
    %s17 = sadd.s32 %s10, 1
    %s18 = ssub.s32 %s10, %s17
    %p19 = scmp.eq.s32.totalorder %s18, 0
    %s21 = sadd.s32 %s20, 1
    %s22 = scalar_select %p19, %s20, %s21
    %p25 = pneg %p19
    %p26 = scmp.eq.s32.totalorder %s10, 1
    %p27 = por %p25, %p26
    %p28 = scmp.ne.s32.totalorder %s20, %s23
    %p29 = scmp.eq.s32.totalorder %s10, 0
    %p30 = por %p28, %p29
    %p31 = scmp.ne.s32.totalorder %s20, %s23
    %p32 = scmp.eq.s32.totalorder %s15, 1
    %p33 = por %p31, %p32
    %p34 = scmp.ne.s32.totalorder %s23, %s24
    %p35 = scmp.eq.s32.totalorder %s15, 0
    %p36 = por %p34, %p35
    %p37 = scmp.ne.s32.totalorder %s23, %s24
    %p38 = scmp.eq.s32.totalorder %s16, 1
    %p39 = por %p37, %p38
    %p41 = scmp.ne.s32.totalorder %s24, %s40
    %p42 = scmp.eq.s32.totalorder %s16, 0
    %p43 = por %p41, %p42
    %s44 = ssub.s32 %s10, %s17
    %p45 = scmp.eq.s32.totalorder %s44, 0
    %s47 = sadd.s32 %s46, 1
    %s48 = scalar_select %p45, %s46, %s47
    %p51 = pneg %p45
    %p52 = scmp.eq.s32.totalorder %s10, 1
    %p53 = por %p51, %p52
    %p54 = scmp.ne.s32.totalorder %s46, %s49
    %p55 = scmp.eq.s32.totalorder %s10, 0
    %p56 = por %p54, %p55
    %p57 = scmp.ne.s32.totalorder %s46, %s49
    %p58 = scmp.eq.s32.totalorder %s15, 1
    %p59 = por %p57, %p58
    %p60 = scmp.ne.s32.totalorder %s49, %s50
    %p61 = scmp.eq.s32.totalorder %s15, 0
    %p62 = por %p60, %p61
    %p63 = scmp.ne.s32.totalorder %s49, %s50
    %p64 = scmp.eq.s32.totalorder %s16, 1
    %p65 = por %p63, %p64
    %p67 = scmp.ne.s32.totalorder %s50, %s66
    %p68 = scmp.eq.s32.totalorder %s16, 0
    %p69 = por %p67, %p68
    %s70 = ssub.s32 %s10, %s17
    %p71 = scmp.eq.s32.totalorder %s70, 0
    %s73 = sadd.s32 %s72, 1
    %s74 = scalar_select %p71, %s72, %s73
    %p77 = pneg %p71
    %p78 = scmp.eq.s32.totalorder %s10, 1
    %p79 = por %p77, %p78
    %p80 = scmp.ne.s32.totalorder %s72, %s75
    %p81 = scmp.eq.s32.totalorder %s10, 0
    %p82 = por %p80, %p81
    %p83 = scmp.ne.s32.totalorder %s72, %s75
    %p84 = scmp.eq.s32.totalorder %s15, 1
    %p85 = por %p83, %p84
    %p86 = scmp.ne.s32.totalorder %s75, %s76
    %p87 = scmp.eq.s32.totalorder %s15, 0
    %p88 = por %p86, %p87
    %p89 = scmp.ne.s32.totalorder %s75, %s76
    %p90 = scmp.eq.s32.totalorder %s16, 1
    %p91 = por %p89, %p90
    %p93 = scmp.ne.s32.totalorder %s76, %s92
    %p94 = scmp.eq.s32.totalorder %s16, 0
    %p95 = por %p93, %p94
    %s96 = ssub.s32 %s10, %s17
    %p97 = scmp.eq.s32.totalorder %s96, 0
    %s99 = sadd.s32 %s98, 1
    %s100 = scalar_select %p97, %s98, %s99
    %p103 = pneg %p97
    %p104 = scmp.eq.s32.totalorder %s10, 1
    %p105 = por %p103, %p104
    %p106 = scmp.ne.s32.totalorder %s98, %s101
    %p107 = scmp.eq.s32.totalorder %s10, 0
    %p108 = por %p106, %p107
    %p109 = scmp.ne.s32.totalorder %s98, %s101
    %p110 = scmp.eq.s32.totalorder %s15, 1
    %p111 = por %p109, %p110
    %p112 = scmp.ne.s32.totalorder %s101, %s102
    %p113 = scmp.eq.s32.totalorder %s15, 0
    %p114 = por %p112, %p113
    %p115 = scmp.ne.s32.totalorder %s101, %s102
    %p116 = scmp.eq.s32.totalorder %s16, 1
    %p117 = por %p115, %p116
    %p119 = scmp.ne.s32.totalorder %s102, %s118
    %p120 = scmp.eq.s32.totalorder %s16, 0
    %p121 = por %p119, %p120
    %s122 = ssub.s32 %s10, %s17
    %p123 = scmp.eq.s32.totalorder %s122, 0
    %s125 = sadd.s32 %s124, 1
    %s126 = scalar_select %p123, %s124, %s125
    %p129 = pneg %p123
    %p130 = scmp.eq.s32.totalorder %s10, 1
    %p131 = por %p129, %p130
    %p132 = scmp.ne.s32.totalorder %s124, %s127
    %p133 = scmp.eq.s32.totalorder %s10, 0
    %p134 = por %p132, %p133
    %p135 = scmp.ne.s32.totalorder %s124, %s127
    %p136 = scmp.eq.s32.totalorder %s15, 1
    %p137 = por %p135, %p136
    %p138 = scmp.ne.s32.totalorder %s127, %s128
    %p139 = scmp.eq.s32.totalorder %s15, 0
    %p140 = por %p138, %p139
    %p141 = scmp.ne.s32.totalorder %s127, %s128
    %p142 = scmp.eq.s32.totalorder %s16, 1
    %p143 = por %p141, %p142
    %p145 = scmp.ne.s32.totalorder %s128, %s144
    %p146 = scmp.eq.s32.totalorder %s16, 0
    %p147 = por %p145, %p146
    %p148 = scmp.le.s32.totalorder 1, %s10
    %p149 = scmp.lt.s32.totalorder %s10, 3
    %p150 = pnand %p148, %p149
    %p151 = pneg %p150
    // Predicated region
    $region9: #{_lambda_.17} parent=5 // pred_check
      _
    $region10: #{_lambda_.17} parent=5 // pred_check_branch
      %153 = sbr.rel (%p150) target = $region12
    $region11: #{_lambda_.17} parent=5 // pred_region
      %s154 = ssub.s32 %s10, 1
    $region12: #{_lambda_.17} parent=5 // pred_fallthru
      _
    %p155 = scmp.lt.s32.totalorder %s10, 2
    // Predicated region
    $region13: #{_lambda_.17} parent=5 // pred_check
      %p156 = pneg %p155
    $region14: #{_lambda_.17} parent=5 // pred_check_branch
      %158 = sbr.rel (%p156) target = $region16
    $region15: #{_lambda_.17} parent=5 // pred_region
      // Predicated region
      $region17: #{_lambda_.17} parent=15 // pred_check
        %p159 = pneg %p30
      $region18: #{_lambda_.17} parent=15 // pred_check_branch
        %161 = sbr.rel (%p159) target = $region20
      $region19: #{_lambda_.17} parent=15 // pred_region
        %p162 = scmp.lt.s32.totalorder %s10, 1
        %s163 = scalar_select %p162, %s10, 1
        %s164 = smul.addr %s163, 18
        %s165 = smul.addr %s164, 4
        %s166 = scalar_lea.vmem %s0, %s165
      $region20: #{_lambda_.17} parent=15 // pred_fallthru
        _
      // Predicated region
      $region21: #{_lambda_.17} parent=15 // pred_check
        %p167 = pneg %p56
      $region22: #{_lambda_.17} parent=15 // pred_check_branch
        %169 = sbr.rel (%p167) target = $region24
      $region23: #{_lambda_.17} parent=15 // pred_region
        %p170 = scmp.lt.s32.totalorder %s10, 1
        %s171 = scalar_select %p170, %s10, 1
        %s172 = smul.addr %s171, 18
        %s173 = smul.addr %s172, 4
        %s174 = scalar_lea.vmem %s1, %s173
      $region24: #{_lambda_.17} parent=15 // pred_fallthru
        _
      // Predicated region
      $region25: #{_lambda_.17} parent=15 // pred_check
        %p175 = pneg %p82
      $region26: #{_lambda_.17} parent=15 // pred_check_branch
        %177 = sbr.rel (%p175) target = $region28
      $region27: #{_lambda_.17} parent=15 // pred_region
        %p178 = scmp.lt.s32.totalorder %s10, 1
        %s179 = scalar_select %p178, %s10, 1
        %s180 = smul.addr %s179, 18
        %s181 = smul.addr %s180, 4
        %s182 = scalar_lea.vmem %s2, %s181
      $region28: #{_lambda_.17} parent=15 // pred_fallthru
        _
      // Predicated region
      $region29: #{_lambda_.17} parent=15 // pred_check
        %p183 = pneg %p108
      $region30: #{_lambda_.17} parent=15 // pred_check_branch
        %185 = sbr.rel (%p183) target = $region32
      $region31: #{_lambda_.17} parent=15 // pred_region
        %p186 = scmp.lt.s32.totalorder %s10, 1
        %s187 = scalar_select %p186, %s10, 1
        %s188 = smul.addr %s187, 18
        %s189 = smul.addr %s188, 4
        %s190 = scalar_lea.vmem %s3, %s189
      $region32: #{_lambda_.17} parent=15 // pred_fallthru
        _
    $region16: #{_lambda_.17} parent=5 // pred_fallthru
      _
    %p191 = scmp.le.s32.totalorder 1, %s10
    %p192 = scmp.lt.s32.totalorder %s10, 3
    %p193 = pnand %p191, %p192
    %p194 = pneg %p193
    // Predicated region
    $region33: #{_lambda_.17} parent=5 // pred_check
      _
    $region34: #{_lambda_.17} parent=5 // pred_check_branch
      %196 = sbr.rel (%p193) target = $region36
    $region35: #{_lambda_.17} parent=5 // pred_region
      %s197 = ssub.s32 %s10, 1
      %p198 = scmp.lt.s32.totalorder %s15, 1
      %s199 = scalar_select %p198, %s15, 1
      %s200 = smul.addr %s199, 18
      %s201 = smul.addr %s200, 4
      %s202 = scalar_lea.vmem %s0, %s201
      %p203 = pneg %p36
      %p204 = pneg %p33
      %p205 = scmp.lt.s32.totalorder %s15, 1
      %s206 = scalar_select %p205, %s15, 1
      %s207 = smul.addr %s206, 18
      %s208 = smul.addr %s207, 4
      %s209 = scalar_lea.vmem %s1, %s208
      %p210 = pneg %p62
      %p211 = pneg %p59
      %p212 = scmp.lt.s32.totalorder %s15, 1
      %s213 = scalar_select %p212, %s15, 1
      %s214 = smul.addr %s213, 18
      %s215 = smul.addr %s214, 4
      %s216 = scalar_lea.vmem %s2, %s215
      %p217 = pneg %p88
      %p218 = pneg %p85
      %p219 = scmp.lt.s32.totalorder %s15, 1
      %s220 = scalar_select %p219, %s15, 1
      %s221 = smul.addr %s220, 18
      %s222 = smul.addr %s221, 4
      %s223 = scalar_lea.vmem %s3, %s222
      %p224 = pneg %p114
      %p225 = pneg %p111
      %p226 = pneg %p140
      %p227 = pneg %p137
      %p228 = scmp.lt.s32.totalorder %s15, 1
      %s229 = scalar_select %p228, %s15, 1
      %s230 = smul.addr %s229, 8
      %s231 = smul.addr %s230, 4
      %s232 = scalar_lea.vmem %s4, %s231
      %p233 = scmp.lt.s32.totalorder %s15, 1
      %s234 = scalar_select %p233, %s15, 1
      %s235 = smul.addr %s234, 18
      %s236 = smul.addr %s235, 4
      %s237 = scalar_lea.vmem %s0, %s236
      %p238 = scmp.lt.s32.totalorder %s15, 1
      %s239 = scalar_select %p238, %s15, 1
      %s240 = smul.addr %s239, 18
      %s241 = smul.addr %s240, 4
      %s242 = scalar_lea.vmem %s1, %s241
      %p243 = scmp.lt.s32.totalorder %s15, 1
      %s244 = scalar_select %p243, %s15, 1
      %s245 = smul.addr %s244, 18
      %s246 = smul.addr %s245, 4
      %s247 = scalar_lea.vmem %s2, %s246
      %p248 = scmp.lt.s32.totalorder %s15, 1
      %s249 = scalar_select %p248, %s15, 1
      %s250 = smul.addr %s249, 18
      %s251 = smul.addr %s250, 4
      %s252 = scalar_lea.vmem %s3, %s251
      %p253 = scmp.lt.s32.totalorder %s15, 1
      %s254 = scalar_select %p253, %s15, 1
      %s255 = smul.addr %s254, 8
      %s256 = smul.addr %s255, 4
      %s257 = scalar_lea.vmem %s4, %s256
      %v258 = vld [vmem:[%s237] sm:$0xf]
      %v259 = vld [vmem:[%s237 + $0x8] sm:$0xf]
      %v260 = vld [vmem:[%s237 + $0x10] sm:$0xf]
      %v261 = vld [vmem:[%s237 + $0x18] sm:$0xf]
      %v262 = vld [vmem:[%s237 + $0x20] sm:$0xf]
      %v263 = vld [vmem:[%s237 + $0x28] sm:$0xf]
      %v264 = vld [vmem:[%s237 + $0x30] sm:$0xf]
      %v265 = vld [vmem:[%s237 + $0x38] sm:$0xf]
      %v266 = vld [vmem:[%s242] sm:$0xf]
      %v267 = vld [vmem:[%s242 + $0x8] sm:$0xf]
      %v268 = vld [vmem:[%s242 + $0x10] sm:$0xf]
      %v269 = vld [vmem:[%s242 + $0x18] sm:$0xf]
      %v270 = vld [vmem:[%s242 + $0x20] sm:$0xf]
      %v271 = vld [vmem:[%s242 + $0x28] sm:$0xf]
      %v272 = vld [vmem:[%s242 + $0x30] sm:$0xf]
      %v273 = vld [vmem:[%s242 + $0x38] sm:$0xf]
      %v274 = vmax.bf16 %v258, %v266
      %v275 = vmax.bf16 %v259, %v267
      %v276 = vmax.bf16 %v260, %v268
      %v277 = vmax.bf16 %v261, %v269
      %v278 = vmax.bf16 %v262, %v270
      %v279 = vmax.bf16 %v263, %v271
      %v280 = vmax.bf16 %v264, %v272
      %v281 = vmax.bf16 %v265, %v273
      %v282 = vld [vmem:[%s237 + $0x4] sm:$0x1]
      %v283 = vld [vmem:[%s237 + $0xc] sm:$0x1]
      %v284 = vld [vmem:[%s237 + $0x14] sm:$0x1]
      %v285 = vld [vmem:[%s237 + $0x1c] sm:$0x1]
      %v286 = vld [vmem:[%s237 + $0x24] sm:$0x1]
      %v287 = vld [vmem:[%s237 + $0x2c] sm:$0x1]
      %v288 = vld [vmem:[%s237 + $0x34] sm:$0x1]
      %v289 = vld [vmem:[%s237 + $0x3c] sm:$0x1]
      %vm290 = vsmask.f32 3328
      %vm291 = vsmask.f32 7440
      %vm292 = vmor %vm290, %vm291
      %v294 = vshrl.u32 %v258, 16
      %v296 = vrot.slane %v294, 4
      %v297 = vshll.u32 %v258, 16
      %v299 = vrot.slane %v297, 5
      %v300 = vor.u32 %v296, %v299
      %v301 = vrot.slane %v300, 4
      %v303 = vshll.u32 %v282, 16
      %v305 = vrot.slane %v303, 5
      %v306 = vsel %vm292, %v301, %v305
      %v308 = vshrl.u32 %v259, 16
      %v310 = vrot.slane %v308, 4
      %v311 = vshll.u32 %v259, 16
      %v313 = vrot.slane %v311, 5
      %v314 = vor.u32 %v310, %v313
      %v315 = vrot.slane %v314, 4
      %v317 = vshll.u32 %v283, 16
      %v319 = vrot.slane %v317, 5
      %v320 = vsel %vm292, %v315, %v319
      %v322 = vshrl.u32 %v260, 16
      %v324 = vrot.slane %v322, 4
      %v325 = vshll.u32 %v260, 16
      %v327 = vrot.slane %v325, 5
      %v328 = vor.u32 %v324, %v327
      %v329 = vrot.slane %v328, 4
      %v331 = vshll.u32 %v284, 16
      %v333 = vrot.slane %v331, 5
      %v334 = vsel %vm292, %v329, %v333
      %v336 = vshrl.u32 %v261, 16
      %v338 = vrot.slane %v336, 4
      %v339 = vshll.u32 %v261, 16
      %v341 = vrot.slane %v339, 5
      %v342 = vor.u32 %v338, %v341
      %v343 = vrot.slane %v342, 4
      %v345 = vshll.u32 %v285, 16
      %v347 = vrot.slane %v345, 5
      %v348 = vsel %vm292, %v343, %v347
      %v350 = vshrl.u32 %v262, 16
      %v352 = vrot.slane %v350, 4
      %v353 = vshll.u32 %v262, 16
      %v355 = vrot.slane %v353, 5
      %v356 = vor.u32 %v352, %v355
      %v357 = vrot.slane %v356, 4
      %v359 = vshll.u32 %v286, 16
      %v361 = vrot.slane %v359, 5
      %v362 = vsel %vm292, %v357, %v361
      %v364 = vshrl.u32 %v263, 16
      %v366 = vrot.slane %v364, 4
      %v367 = vshll.u32 %v263, 16
      %v369 = vrot.slane %v367, 5
      %v370 = vor.u32 %v366, %v369
      %v371 = vrot.slane %v370, 4
      %v373 = vshll.u32 %v287, 16
      %v375 = vrot.slane %v373, 5
      %v376 = vsel %vm292, %v371, %v375
      %v378 = vshrl.u32 %v264, 16
      %v380 = vrot.slane %v378, 4
      %v381 = vshll.u32 %v264, 16
      %v383 = vrot.slane %v381, 5
      %v384 = vor.u32 %v380, %v383
      %v385 = vrot.slane %v384, 4
      %v387 = vshll.u32 %v288, 16
      %v389 = vrot.slane %v387, 5
      %v390 = vsel %vm292, %v385, %v389
      %v392 = vshrl.u32 %v265, 16
      %v394 = vrot.slane %v392, 4
      %v395 = vshll.u32 %v265, 16
      %v397 = vrot.slane %v395, 5
      %v398 = vor.u32 %v394, %v397
      %v399 = vrot.slane %v398, 4
      %v401 = vshll.u32 %v289, 16
      %v403 = vrot.slane %v401, 5
      %v404 = vsel %vm292, %v399, %v403
      %v413 = vmax.bf16 %v274, %v306
      %v414 = vmax.bf16 %v275, %v320
      %v415 = vmax.bf16 %v276, %v334
      %v416 = vmax.bf16 %v277, %v348
      %v417 = vmax.bf16 %v278, %v362
      %v418 = vmax.bf16 %v279, %v376
      %v419 = vmax.bf16 %v280, %v390
      %v420 = vmax.bf16 %v281, %v404
      %v421 = vld [vmem:[%s247] sm:$0xf]
      %v422 = vld [vmem:[%s247 + $0x8] sm:$0xf]
      %v423 = vld [vmem:[%s247 + $0x10] sm:$0xf]
      %v424 = vld [vmem:[%s247 + $0x18] sm:$0xf]
      %v425 = vld [vmem:[%s247 + $0x20] sm:$0xf]
      %v426 = vld [vmem:[%s247 + $0x28] sm:$0xf]
      %v427 = vld [vmem:[%s247 + $0x30] sm:$0xf]
      %v428 = vld [vmem:[%s247 + $0x38] sm:$0xf]
      %v429 = vmax.bf16 %v413, %v421
      %v430 = vmax.bf16 %v414, %v422
      %v431 = vmax.bf16 %v415, %v423
      %v432 = vmax.bf16 %v416, %v424
      %v433 = vmax.bf16 %v417, %v425
      %v434 = vmax.bf16 %v418, %v426
      %v435 = vmax.bf16 %v419, %v427
      %v436 = vmax.bf16 %v420, %v428
      %v437 = vld [vmem:[%s252] sm:$0xf]
      %v438 = vld [vmem:[%s252 + $0x8] sm:$0xf]
      %v439 = vld [vmem:[%s252 + $0x10] sm:$0xf]
      %v440 = vld [vmem:[%s252 + $0x18] sm:$0xf]
      %v441 = vld [vmem:[%s252 + $0x20] sm:$0xf]
      %v442 = vld [vmem:[%s252 + $0x28] sm:$0xf]
      %v443 = vld [vmem:[%s252 + $0x30] sm:$0xf]
      %v444 = vld [vmem:[%s252 + $0x38] sm:$0xf]
      %v445 = vmax.bf16 %v429, %v437
      %v446 = vmax.bf16 %v430, %v438
      %v447 = vmax.bf16 %v431, %v439
      %v448 = vmax.bf16 %v432, %v440
      %v449 = vmax.bf16 %v433, %v441
      %v450 = vmax.bf16 %v434, %v442
      %v451 = vmax.bf16 %v435, %v443
      %v452 = vmax.bf16 %v436, %v444
      %v453 = vld [vmem:[%s247 + $0x4] sm:$0x1]
      %v454 = vld [vmem:[%s247 + $0xc] sm:$0x1]
      %v455 = vld [vmem:[%s247 + $0x14] sm:$0x1]
      %v456 = vld [vmem:[%s247 + $0x1c] sm:$0x1]
      %v457 = vld [vmem:[%s247 + $0x24] sm:$0x1]
      %v458 = vld [vmem:[%s247 + $0x2c] sm:$0x1]
      %v459 = vld [vmem:[%s247 + $0x34] sm:$0x1]
      %v460 = vld [vmem:[%s247 + $0x3c] sm:$0x1]
      %v462 = vshrl.u32 %v421, 16
      %v464 = vrot.slane %v462, 4
      %v465 = vshll.u32 %v421, 16
      %v467 = vrot.slane %v465, 5
      %v468 = vor.u32 %v464, %v467
      %v469 = vrot.slane %v468, 4
      %v471 = vshll.u32 %v453, 16
      %v473 = vrot.slane %v471, 5
      %v474 = vsel %vm292, %v469, %v473
      %v476 = vshrl.u32 %v422, 16
      %v478 = vrot.slane %v476, 4
      %v479 = vshll.u32 %v422, 16
      %v481 = vrot.slane %v479, 5
      %v482 = vor.u32 %v478, %v481
      %v483 = vrot.slane %v482, 4
      %v485 = vshll.u32 %v454, 16
      %v487 = vrot.slane %v485, 5
      %v488 = vsel %vm292, %v483, %v487
      %v490 = vshrl.u32 %v423, 16
      %v492 = vrot.slane %v490, 4
      %v493 = vshll.u32 %v423, 16
      %v495 = vrot.slane %v493, 5
      %v496 = vor.u32 %v492, %v495
      %v497 = vrot.slane %v496, 4
      %v499 = vshll.u32 %v455, 16
      %v501 = vrot.slane %v499, 5
      %v502 = vsel %vm292, %v497, %v501
      %v504 = vshrl.u32 %v424, 16
      %v506 = vrot.slane %v504, 4
      %v507 = vshll.u32 %v424, 16
      %v509 = vrot.slane %v507, 5
      %v510 = vor.u32 %v506, %v509
      %v511 = vrot.slane %v510, 4
      %v513 = vshll.u32 %v456, 16
      %v515 = vrot.slane %v513, 5
      %v516 = vsel %vm292, %v511, %v515
      %v518 = vshrl.u32 %v425, 16
      %v520 = vrot.slane %v518, 4
      %v521 = vshll.u32 %v425, 16
      %v523 = vrot.slane %v521, 5
      %v524 = vor.u32 %v520, %v523
      %v525 = vrot.slane %v524, 4
      %v527 = vshll.u32 %v457, 16
      %v529 = vrot.slane %v527, 5
      %v530 = vsel %vm292, %v525, %v529
      %v532 = vshrl.u32 %v426, 16
      %v534 = vrot.slane %v532, 4
      %v535 = vshll.u32 %v426, 16
      %v537 = vrot.slane %v535, 5
      %v538 = vor.u32 %v534, %v537
      %v539 = vrot.slane %v538, 4
      %v541 = vshll.u32 %v458, 16
      %v543 = vrot.slane %v541, 5
      %v544 = vsel %vm292, %v539, %v543
      %v546 = vshrl.u32 %v427, 16
      %v548 = vrot.slane %v546, 4
      %v549 = vshll.u32 %v427, 16
      %v551 = vrot.slane %v549, 5
      %v552 = vor.u32 %v548, %v551
      %v553 = vrot.slane %v552, 4
      %v555 = vshll.u32 %v459, 16
      %v557 = vrot.slane %v555, 5
      %v558 = vsel %vm292, %v553, %v557
      %v560 = vshrl.u32 %v428, 16
      %v562 = vrot.slane %v560, 4
      %v563 = vshll.u32 %v428, 16
      %v565 = vrot.slane %v563, 5
      %v566 = vor.u32 %v562, %v565
      %v567 = vrot.slane %v566, 4
      %v569 = vshll.u32 %v460, 16
      %v571 = vrot.slane %v569, 5
      %v572 = vsel %vm292, %v567, %v571
      %v581 = vmax.bf16 %v445, %v474
      %v582 = vmax.bf16 %v446, %v488
      %v583 = vmax.bf16 %v447, %v502
      %v584 = vmax.bf16 %v448, %v516
      %v585 = vmax.bf16 %v449, %v530
      %v586 = vmax.bf16 %v450, %v544
      %v587 = vmax.bf16 %v451, %v558
      %v588 = vmax.bf16 %v452, %v572
      %s589 = scalar_lea.vmem %s237, 8
      %v590 = vld [vmem:[%s589] sm:$0xf]
      %v591 = vld [vmem:[%s589 + $0x8] sm:$0xf]
      %v592 = vld [vmem:[%s589 + $0x10] sm:$0xf]
      %v593 = vld [vmem:[%s589 + $0x18] sm:$0xf]
      %v594 = vld [vmem:[%s589 + $0x20] sm:$0xf]
      %v595 = vld [vmem:[%s589 + $0x28] sm:$0xf]
      %v596 = vld [vmem:[%s589 + $0x30] sm:$0xf]
      %v597 = vld [vmem:[%s589 + $0x38] sm:$0xf]
      %v598 = vmax.bf16 %v581, %v590
      %v599 = vmax.bf16 %v582, %v591
      %v600 = vmax.bf16 %v583, %v592
      %v601 = vmax.bf16 %v584, %v593
      %v602 = vmax.bf16 %v585, %v594
      %v603 = vmax.bf16 %v586, %v595
      %v604 = vmax.bf16 %v587, %v596
      %v605 = vmax.bf16 %v588, %v597
      %s606 = scalar_lea.vmem %s242, 8
      %v607 = vld [vmem:[%s606] sm:$0xf]
      %v608 = vld [vmem:[%s606 + $0x8] sm:$0xf]
      %v609 = vld [vmem:[%s606 + $0x10] sm:$0xf]
      %v610 = vld [vmem:[%s606 + $0x18] sm:$0xf]
      %v611 = vld [vmem:[%s606 + $0x20] sm:$0xf]
      %v612 = vld [vmem:[%s606 + $0x28] sm:$0xf]
      %v613 = vld [vmem:[%s606 + $0x30] sm:$0xf]
      %v614 = vld [vmem:[%s606 + $0x38] sm:$0xf]
      %v615 = vmax.bf16 %v598, %v607
      %v616 = vmax.bf16 %v599, %v608
      %v617 = vmax.bf16 %v600, %v609
      %v618 = vmax.bf16 %v601, %v610
      %v619 = vmax.bf16 %v602, %v611
      %v620 = vmax.bf16 %v603, %v612
      %v621 = vmax.bf16 %v604, %v613
      %v622 = vmax.bf16 %v605, %v614
      %v623 = vld [vmem:[%s589 + $0x4] sm:$0x1]
      %v624 = vld [vmem:[%s589 + $0xc] sm:$0x1]
      %v625 = vld [vmem:[%s589 + $0x14] sm:$0x1]
      %v626 = vld [vmem:[%s589 + $0x1c] sm:$0x1]
      %v627 = vld [vmem:[%s589 + $0x24] sm:$0x1]
      %v628 = vld [vmem:[%s589 + $0x2c] sm:$0x1]
      %v629 = vld [vmem:[%s589 + $0x34] sm:$0x1]
      %v630 = vld [vmem:[%s589 + $0x3c] sm:$0x1]
      %v632 = vshrl.u32 %v590, 16
      %v634 = vrot.slane %v632, 4
      %v635 = vshll.u32 %v590, 16
      %v637 = vrot.slane %v635, 5
      %v638 = vor.u32 %v634, %v637
      %v639 = vrot.slane %v638, 4
      %v641 = vshll.u32 %v623, 16
      %v643 = vrot.slane %v641, 5
      %v644 = vsel %vm292, %v639, %v643
      %v646 = vshrl.u32 %v591, 16
      %v648 = vrot.slane %v646, 4
      %v649 = vshll.u32 %v591, 16
      %v651 = vrot.slane %v649, 5
      %v652 = vor.u32 %v648, %v651
      %v653 = vrot.slane %v652, 4
      %v655 = vshll.u32 %v624, 16
      %v657 = vrot.slane %v655, 5
      %v658 = vsel %vm292, %v653, %v657
      %v660 = vshrl.u32 %v592, 16
      %v662 = vrot.slane %v660, 4
      %v663 = vshll.u32 %v592, 16
      %v665 = vrot.slane %v663, 5
      %v666 = vor.u32 %v662, %v665
      %v667 = vrot.slane %v666, 4
      %v669 = vshll.u32 %v625, 16
      %v671 = vrot.slane %v669, 5
      %v672 = vsel %vm292, %v667, %v671
      %v674 = vshrl.u32 %v593, 16
      %v676 = vrot.slane %v674, 4
      %v677 = vshll.u32 %v593, 16
      %v679 = vrot.slane %v677, 5
      %v680 = vor.u32 %v676, %v679
      %v681 = vrot.slane %v680, 4
      %v683 = vshll.u32 %v626, 16
      %v685 = vrot.slane %v683, 5
      %v686 = vsel %vm292, %v681, %v685
      %v688 = vshrl.u32 %v594, 16
      %v690 = vrot.slane %v688, 4
      %v691 = vshll.u32 %v594, 16
      %v693 = vrot.slane %v691, 5
      %v694 = vor.u32 %v690, %v693
      %v695 = vrot.slane %v694, 4
      %v697 = vshll.u32 %v627, 16
      %v699 = vrot.slane %v697, 5
      %v700 = vsel %vm292, %v695, %v699
      %v702 = vshrl.u32 %v595, 16
      %v704 = vrot.slane %v702, 4
      %v705 = vshll.u32 %v595, 16
      %v707 = vrot.slane %v705, 5
      %v708 = vor.u32 %v704, %v707
      %v709 = vrot.slane %v708, 4
      %v711 = vshll.u32 %v628, 16
      %v713 = vrot.slane %v711, 5
      %v714 = vsel %vm292, %v709, %v713
      %v716 = vshrl.u32 %v596, 16
      %v718 = vrot.slane %v716, 4
      %v719 = vshll.u32 %v596, 16
      %v721 = vrot.slane %v719, 5
      %v722 = vor.u32 %v718, %v721
      %v723 = vrot.slane %v722, 4
      %v725 = vshll.u32 %v629, 16
      %v727 = vrot.slane %v725, 5
      %v728 = vsel %vm292, %v723, %v727
      %v730 = vshrl.u32 %v597, 16
      %v732 = vrot.slane %v730, 4
      %v733 = vshll.u32 %v597, 16
      %v735 = vrot.slane %v733, 5
      %v736 = vor.u32 %v732, %v735
      %v737 = vrot.slane %v736, 4
      %v739 = vshll.u32 %v630, 16
      %v741 = vrot.slane %v739, 5
      %v742 = vsel %vm292, %v737, %v741
      %v751 = vmax.bf16 %v615, %v644
      %v752 = vmax.bf16 %v616, %v658
      %v753 = vmax.bf16 %v617, %v672
      %v754 = vmax.bf16 %v618, %v686
      %v755 = vmax.bf16 %v619, %v700
      %v756 = vmax.bf16 %v620, %v714
      %v757 = vmax.bf16 %v621, %v728
      %v758 = vmax.bf16 %v622, %v742
      %759 = vst [vmem:[%s257] sm:$0xf] %v751
      %760 = vst [vmem:[%s257 + $0x4] sm:$0xf] %v752
      %761 = vst [vmem:[%s257 + $0x8] sm:$0xf] %v753
      %762 = vst [vmem:[%s257 + $0xc] sm:$0xf] %v754
      %763 = vst [vmem:[%s257 + $0x10] sm:$0xf] %v755
      %764 = vst [vmem:[%s257 + $0x14] sm:$0xf] %v756
      %765 = vst [vmem:[%s257 + $0x18] sm:$0xf] %v757
      %766 = vst [vmem:[%s257 + $0x1c] sm:$0xf] %v758
      %p767 = scmp.lt.s32.totalorder %s15, 1
      %s768 = scalar_select %p767, %s15, 1
      %s769 = smul.addr %s768, 8
      %s770 = smul.addr %s769, 4
      %s771 = scalar_lea.vmem %s4, %s770
      // Predicated region
      $region37: #{_lambda_.17} parent=35 // pred_check
        %p772 = pneg %p137
      $region38: #{_lambda_.17} parent=35 // pred_check_branch
        %774 = sbr.rel (%p772) target = $region40
      $region39: #{_lambda_.17} parent=35 // pred_region
        _
      $region40: #{_lambda_.17} parent=35 // pred_fallthru
        _
    $region36: #{_lambda_.17} parent=5 // pred_fallthru
      _
    %p775 = scmp.le.s32.totalorder 2, %s10
    // Predicated region
    $region41: #{_lambda_.17} parent=5 // pred_check
      %p776 = pneg %p775
    $region42: #{_lambda_.17} parent=5 // pred_check_branch
      %778 = sbr.rel (%p776) target = $region44
    $region43: #{_lambda_.17} parent=5 // pred_region
      %s779 = ssub.s32 %s10, 2
      // Predicated region
      $region45: #{_lambda_.17} parent=43 // pred_check
        %p780 = pneg %p143
      $region46: #{_lambda_.17} parent=43 // pred_check_branch
        %782 = sbr.rel (%p780) target = $region48
      $region47: #{_lambda_.17} parent=43 // pred_region
        %p783 = scmp.lt.s32.totalorder %s16, 1
        %s784 = scalar_select %p783, %s16, 1
        %s785 = smul.addr %s784, 8
        %s786 = smul.addr %s785, 4
        %s787 = scalar_lea.vmem %s4, %s786
      $region48: #{_lambda_.17} parent=43 // pred_fallthru
        _
    $region44: #{_lambda_.17} parent=5 // pred_fallthru
      _
  $region6: #{_lambda_.17} parent=0 // loop_footer
    %s14 = sadd.s32 1, %s10
  $region7: #{_lambda_.17} parent=0 // loop_footer_branch
    %9 = sbr.rel target = $region3
  $region8: #{_lambda_.17} parent=0 // loop_exit
    _

// kernel: _lambda_.21
$region0: #{_lambda_.21}
  #allocation0 [shape = 'u32[]', space=smem, size = 0x4, offset = 0x4, fixed_abs, tag = 'smem constant byte address 0x4 - core index']
  #allocation1 [shape = 'u32[144,128]{1,0:T(1,128)}', space=vmem, size = 0x12000, scoped, tag = 'internal scratch']
  %s0 = inlined_call_operand.vmem [shape: bf16[128,128], index: 0, kind: input, shape index: {}]
  %s1 = inlined_call_operand.vmem [shape: bf16[128,128], index: 1, kind: input, shape index: {}]
  %s2 = inlined_call_operand.vmem [shape: f32[1,128], index: 2, kind: input, shape index: {}]
  %s3 = inlined_call_operand.vmem [shape: bf16[128,128], index: 3, kind: input, shape index: {}, may-alias: {3,4}]
  %s4 = inlined_call_operand.vmem [shape: bf16[128,128], index: 4, kind: output, shape index: {}, may-alias: {3,4}]
  %s5 = sld [smem:[#allocation0]]
  $region49: #{_lambda_.21} parent=0
    _
  %s7 = ssub.s32 1, %s5
  %s8 = scalar_select 0, %s7, %s5
  loop: start=0, step=1, limit=4
  $region2: #{_lambda_.21} parent=0 // loop_pre_header
    _
  $region3: #{_lambda_.21} parent=0 // loop_header
    %s10 = sphi 0, %s14
    %p11 = scmp.ge.s32.totalorder %s10, 4
    %s17 = sphi 0, %s29
    %s18 = sphi 0, %s25
    %s19 = sphi 0, %s17
    %s20 = sphi 0, %s18
    %s21 = sphi 0, %s19
    %s22 = sphi 0, %s20
    %s32 = sphi 0, %s34
    %s35 = sphi 0, %s32
    %s36 = sphi 0, %s35
    %s52 = sphi 0, %s36
    %s58 = sphi 0, %s60
    %s61 = sphi 0, %s58
    %s62 = sphi 0, %s61
    %s78 = sphi 0, %s62
    %s84 = sphi 0, %s86
    %s87 = sphi 0, %s84
    %s88 = sphi 0, %s87
    %s104 = sphi 0, %s88
    %s112 = sphi 0, %s114
    %s115 = sphi 0, %s112
    %s116 = sphi 0, %s115
    %s132 = sphi 0, %s116
    %s140 = sphi 0, %s142
    %s143 = sphi 0, %s140
    %s144 = sphi 0, %s143
    %s160 = sphi 0, %s144
  $region4: #{_lambda_.21} parent=0 // loop_header_branch
    %13 = sbr.rel (%p11) target = $region8
  $region5: #{_lambda_.21} parent=0 // loop_body
    %s15 = ssub.s32 %s10, 1
    %s16 = ssub.s32 %s10, 2
    %s23 = sadd.s32 1, %s18
    %p24 = scmp.ge.s32.totalorder %s23, 1
    %s25 = scalar_select %p24, 0, %s23
    %s26 = sadd.s32 1, %s17
    %s27 = scalar_select %p24, %s26, %s17
    %p28 = scmp.ge.s32.totalorder %s27, 2
    %s29 = scalar_select %p28, 0, %s27
    %s30 = ssub.s32 %s17, %s29
    %p31 = scmp.eq.s32.totalorder %s30, 0
    %s33 = sadd.s32 %s32, 1
    %s34 = scalar_select %p31, %s32, %s33
    %p37 = pneg %p31
    %p38 = scmp.eq.s32.totalorder %s10, 1
    %p39 = por %p37, %p38
    %p40 = scmp.ne.s32.totalorder %s32, %s35
    %p41 = scmp.eq.s32.totalorder %s10, 0
    %p42 = por %p40, %p41
    %p43 = scmp.ne.s32.totalorder %s32, %s35
    %p44 = scmp.eq.s32.totalorder %s15, 1
    %p45 = por %p43, %p44
    %p46 = scmp.ne.s32.totalorder %s35, %s36
    %p47 = scmp.eq.s32.totalorder %s15, 0
    %p48 = por %p46, %p47
    %p49 = scmp.ne.s32.totalorder %s35, %s36
    %p50 = scmp.eq.s32.totalorder %s16, 1
    %p51 = por %p49, %p50
    %p53 = scmp.ne.s32.totalorder %s36, %s52
    %p54 = scmp.eq.s32.totalorder %s16, 0
    %p55 = por %p53, %p54
    %s56 = ssub.s32 %s18, %s25
    %p57 = scmp.eq.s32.totalorder %s56, 0
    %s59 = sadd.s32 %s58, 1
    %s60 = scalar_select %p57, %s58, %s59
    %p63 = pneg %p57
    %p64 = scmp.eq.s32.totalorder %s10, 1
    %p65 = por %p63, %p64
    %p66 = scmp.ne.s32.totalorder %s58, %s61
    %p67 = scmp.eq.s32.totalorder %s10, 0
    %p68 = por %p66, %p67
    %p69 = scmp.ne.s32.totalorder %s58, %s61
    %p70 = scmp.eq.s32.totalorder %s15, 1
    %p71 = por %p69, %p70
    %p72 = scmp.ne.s32.totalorder %s61, %s62
    %p73 = scmp.eq.s32.totalorder %s15, 0
    %p74 = por %p72, %p73
    %p75 = scmp.ne.s32.totalorder %s61, %s62
    %p76 = scmp.eq.s32.totalorder %s16, 1
    %p77 = por %p75, %p76
    %p79 = scmp.ne.s32.totalorder %s62, %s78
    %p80 = scmp.eq.s32.totalorder %s16, 0
    %p81 = por %p79, %p80
    %s82 = ssub.s32 %s18, %s25
    %p83 = scmp.eq.s32.totalorder %s82, 0
    %s85 = sadd.s32 %s84, 1
    %s86 = scalar_select %p83, %s84, %s85
    %p89 = pneg %p83
    %p90 = scmp.eq.s32.totalorder %s10, 1
    %p91 = por %p89, %p90
    %p92 = scmp.ne.s32.totalorder %s84, %s87
    %p93 = scmp.eq.s32.totalorder %s10, 0
    %p94 = por %p92, %p93
    %p95 = scmp.ne.s32.totalorder %s84, %s87
    %p96 = scmp.eq.s32.totalorder %s15, 1
    %p97 = por %p95, %p96
    %p98 = scmp.ne.s32.totalorder %s87, %s88
    %p99 = scmp.eq.s32.totalorder %s15, 0
    %p100 = por %p98, %p99
    %p101 = scmp.ne.s32.totalorder %s87, %s88
    %p102 = scmp.eq.s32.totalorder %s16, 1
    %p103 = por %p101, %p102
    %p105 = scmp.ne.s32.totalorder %s88, %s104
    %p106 = scmp.eq.s32.totalorder %s16, 0
    %p107 = por %p105, %p106
    %s108 = ssub.s32 %s17, %s29
    %s109 = ssub.s32 %s18, %s25
    %s110 = sor.u32 %s108, %s109
    %p111 = scmp.eq.s32.totalorder %s110, 0
    %s113 = sadd.s32 %s112, 1
    %s114 = scalar_select %p111, %s112, %s113
    %p117 = pneg %p111
    %p118 = scmp.eq.s32.totalorder %s10, 1
    %p119 = por %p117, %p118
    %p120 = scmp.ne.s32.totalorder %s112, %s115
    %p121 = scmp.eq.s32.totalorder %s10, 0
    %p122 = por %p120, %p121
    %p123 = scmp.ne.s32.totalorder %s112, %s115
    %p124 = scmp.eq.s32.totalorder %s15, 1
    %p125 = por %p123, %p124
    %p126 = scmp.ne.s32.totalorder %s115, %s116
    %p127 = scmp.eq.s32.totalorder %s15, 0
    %p128 = por %p126, %p127
    %p129 = scmp.ne.s32.totalorder %s115, %s116
    %p130 = scmp.eq.s32.totalorder %s16, 1
    %p131 = por %p129, %p130
    %p133 = scmp.ne.s32.totalorder %s116, %s132
    %p134 = scmp.eq.s32.totalorder %s16, 0
    %p135 = por %p133, %p134
    %s136 = ssub.s32 %s17, %s29
    %s137 = ssub.s32 %s18, %s25
    %s138 = sor.u32 %s136, %s137
    %p139 = scmp.eq.s32.totalorder %s138, 0
    %s141 = sadd.s32 %s140, 1
    %s142 = scalar_select %p139, %s140, %s141
    %p145 = pneg %p139
    %p146 = scmp.eq.s32.totalorder %s10, 1
    %p147 = por %p145, %p146
    %p148 = scmp.ne.s32.totalorder %s140, %s143
    %p149 = scmp.eq.s32.totalorder %s10, 0
    %p150 = por %p148, %p149
    %p151 = scmp.ne.s32.totalorder %s140, %s143
    %p152 = scmp.eq.s32.totalorder %s15, 1
    %p153 = por %p151, %p152
    %p154 = scmp.ne.s32.totalorder %s143, %s144
    %p155 = scmp.eq.s32.totalorder %s15, 0
    %p156 = por %p154, %p155
    %p157 = scmp.ne.s32.totalorder %s143, %s144
    %p158 = scmp.eq.s32.totalorder %s16, 1
    %p159 = por %p157, %p158
    %p161 = scmp.ne.s32.totalorder %s144, %s160
    %p162 = scmp.eq.s32.totalorder %s16, 0
    %p163 = por %p161, %p162
    %p164 = scmp.le.s32.totalorder 1, %s10
    %p165 = scmp.lt.s32.totalorder %s10, 3
    %p166 = pnand %p164, %p165
    %p167 = pneg %p166
    // Predicated region
    $region9: #{_lambda_.21} parent=5 // pred_check
      _
    $region10: #{_lambda_.21} parent=5 // pred_check_branch
      %169 = sbr.rel (%p166) target = $region12
    $region11: #{_lambda_.21} parent=5 // pred_region
      %s170 = ssub.s32 %s10, 1
      // Predicated region
      $region13: #{_lambda_.21} parent=11 // pred_check
        %p171 = pneg %p74
      $region14: #{_lambda_.21} parent=11 // pred_check_branch
        %173 = sbr.rel (%p171) target = $region16
      $region15: #{_lambda_.21} parent=11 // pred_region
        %p174 = scmp.lt.s32.totalorder %s20, 0
        %s175 = scalar_select %p174, %s20, 0
        %s176 = smul.addr %s175, 4
        %s177 = scalar_lea.vmem %s1, %s176
      $region16: #{_lambda_.21} parent=11 // pred_fallthru
        _
      // Predicated region
      $region17: #{_lambda_.21} parent=11 // pred_check
        %p178 = pneg %p100
      $region18: #{_lambda_.21} parent=11 // pred_check_branch
        %180 = sbr.rel (%p178) target = $region20
      $region19: #{_lambda_.21} parent=11 // pred_region
        %p181 = scmp.lt.s32.totalorder %s20, 0
        %s182 = scalar_select %p181, %s20, 0
        %s183 = scalar_lea.vmem %s2, %s182
      $region20: #{_lambda_.21} parent=11 // pred_fallthru
        _
    $region12: #{_lambda_.21} parent=5 // pred_fallthru
      _
    %p184 = scmp.lt.s32.totalorder %s10, 2
    // Predicated region
    $region21: #{_lambda_.21} parent=5 // pred_check
      %p185 = pneg %p184
    $region22: #{_lambda_.21} parent=5 // pred_check_branch
      %187 = sbr.rel (%p185) target = $region24
    $region23: #{_lambda_.21} parent=5 // pred_region
      // Predicated region
      $region25: #{_lambda_.21} parent=23 // pred_check
        %p188 = pneg %p42
      $region26: #{_lambda_.21} parent=23 // pred_check_branch
        %190 = sbr.rel (%p188) target = $region28
      $region27: #{_lambda_.21} parent=23 // pred_region
        %s191 = smul.u32 8, %s17
        %p192 = scmp.lt.s32.totalorder %s191, 15
        %s193 = scalar_select %p192, %s191, 15
        %s194 = smul.addr %s193, 4
        %s195 = scalar_lea.vmem %s0, %s194
        %s196 = smul.u32 8, %s17
      $region28: #{_lambda_.21} parent=23 // pred_fallthru
        _
      // Predicated region
      $region29: #{_lambda_.21} parent=23 // pred_check
        %p197 = pneg %p122
      $region30: #{_lambda_.21} parent=23 // pred_check_branch
        %199 = sbr.rel (%p197) target = $region32
      $region31: #{_lambda_.21} parent=23 // pred_region
        %s200 = smul.u32 8, %s17
        %p201 = scmp.lt.s32.totalorder %s200, 15
        %s202 = scalar_select %p201, %s200, 15
        %p203 = scmp.lt.s32.totalorder %s18, 0
        %s204 = scalar_select %p203, %s18, 0
        %s205 = sadd.s32 %s204, %s202
        %s206 = smul.addr %s205, 4
        %s207 = scalar_lea.vmem %s3, %s206
        %s208 = smul.u32 8, %s17
      $region32: #{_lambda_.21} parent=23 // pred_fallthru
        _
    $region24: #{_lambda_.21} parent=5 // pred_fallthru
      _
    %p209 = scmp.le.s32.totalorder 1, %s10
    %p210 = scmp.lt.s32.totalorder %s10, 3
    %p211 = pnand %p209, %p210
    %p212 = pneg %p211
    // Predicated region
    $region33: #{_lambda_.21} parent=5 // pred_check
      _
    $region34: #{_lambda_.21} parent=5 // pred_check_branch
      %214 = sbr.rel (%p211) target = $region36
    $region35: #{_lambda_.21} parent=5 // pred_region
      %s215 = ssub.s32 %s10, 1
      %s216 = smul.u32 8, %s19
      %p217 = scmp.lt.s32.totalorder %s216, 15
      %s218 = scalar_select %p217, %s216, 15
      %s219 = smul.addr %s218, 4
      %s220 = scalar_lea.vmem %s0, %s219
      %p221 = pneg %p48
      %p222 = pneg %p45
      %p223 = scmp.lt.s32.totalorder %s20, 0
      %s224 = scalar_select %p223, %s20, 0
      %s225 = smul.addr %s224, 4
      %s226 = scalar_lea.vmem %s1, %s225
      %p227 = pneg %p74
      %p228 = pneg %p71
      %p229 = scmp.lt.s32.totalorder %s20, 0
      %s230 = scalar_select %p229, %s20, 0
      %s231 = scalar_lea.vmem %s2, %s230
      %p232 = pneg %p100
      %p233 = pneg %p97
      %s234 = smul.u32 8, %s19
      %p235 = scmp.lt.s32.totalorder %s234, 15
      %s236 = scalar_select %p235, %s234, 15
      %p237 = scmp.lt.s32.totalorder %s20, 0
      %s238 = scalar_select %p237, %s20, 0
      %s239 = sadd.s32 %s238, %s236
      %s240 = smul.addr %s239, 4
      %s241 = scalar_lea.vmem %s3, %s240
      %p242 = pneg %p128
      %p243 = pneg %p125
      %p244 = pneg %p156
      %p245 = pneg %p153
      %s246 = smul.u32 8, %s19
      %p247 = scmp.lt.s32.totalorder %s246, 15
      %s248 = scalar_select %p247, %s246, 15
      %p249 = scmp.lt.s32.totalorder %s20, 0
      %s250 = scalar_select %p249, %s20, 0
      %s251 = sadd.s32 %s250, %s248
      %s252 = smul.addr %s251, 4
      %s253 = scalar_lea.vmem %s4, %s252
      %s254 = smul.u32 8, %s19
      %p255 = scmp.lt.s32.totalorder %s254, 15
      %s256 = scalar_select %p255, %s254, 15
      %s257 = smul.addr %s256, 4
      %s258 = scalar_lea.vmem %s0, %s257
      %s259 = smul.u32 8, %s19
      %p260 = scmp.lt.s32.totalorder %s20, 0
      %s261 = scalar_select %p260, %s20, 0
      %s262 = smul.addr %s261, 4
      %s263 = scalar_lea.vmem %s1, %s262
      %p264 = scmp.lt.s32.totalorder %s20, 0
      %s265 = scalar_select %p264, %s20, 0
      %s266 = scalar_lea.vmem %s2, %s265
      %s267 = smul.u32 8, %s19
      %p268 = scmp.lt.s32.totalorder %s267, 15
      %s269 = scalar_select %p268, %s267, 15
      %p270 = scmp.lt.s32.totalorder %s20, 0
      %s271 = scalar_select %p270, %s20, 0
      %s272 = sadd.s32 %s271, %s269
      %s273 = smul.addr %s272, 4
      %s274 = scalar_lea.vmem %s3, %s273
      %s275 = smul.u32 8, %s19
      %s276 = smul.u32 8, %s19
      %p277 = scmp.lt.s32.totalorder %s276, 15
      %s278 = scalar_select %p277, %s276, 15
      %p279 = scmp.lt.s32.totalorder %s20, 0
      %s280 = scalar_select %p279, %s20, 0
      %s281 = sadd.s32 %s280, %s278
      %s282 = smul.addr %s281, 4
      %s283 = scalar_lea.vmem %s4, %s282
      %s284 = smul.u32 8, %s19
      %v286 = vld [vmem:[%s258] sm:$0xf]
      %v287 = vld [vmem:[%s258 + $0x4] sm:$0xf]
      %v288 = vld [vmem:[%s258 + $0x8] sm:$0xf]
      %v289 = vld [vmem:[%s258 + $0xc] sm:$0xf]
      %v290 = vld [vmem:[%s258 + $0x10] sm:$0xf]
      %v291 = vld [vmem:[%s258 + $0x14] sm:$0xf]
      %v292 = vld [vmem:[%s258 + $0x18] sm:$0xf]
      %v293 = vld [vmem:[%s258 + $0x1c] sm:$0xf]
      %v294 = vld [vmem:[%s263] sm:$0xf]
      %v295 = vld [vmem:[%s263 + $0x4] sm:$0xf]
      %v296 = vld [vmem:[%s263 + $0x8] sm:$0xf]
      %v297 = vld [vmem:[%s263 + $0xc] sm:$0xf]
      %v298 = vld [vmem:[%s263 + $0x10] sm:$0xf]
      %v299 = vld [vmem:[%s263 + $0x14] sm:$0xf]
      %v300 = vld [vmem:[%s263 + $0x18] sm:$0xf]
      %v301 = vld [vmem:[%s263 + $0x1c] sm:$0xf]
      %v302 = vld [vmem:[%s263 + $0x20] sm:$0xf]
      %v303 = vld [vmem:[%s263 + $0x24] sm:$0xf]
      %v304 = vld [vmem:[%s263 + $0x28] sm:$0xf]
      %v305 = vld [vmem:[%s263 + $0x2c] sm:$0xf]
      %v306 = vld [vmem:[%s263 + $0x30] sm:$0xf]
      %v307 = vld [vmem:[%s263 + $0x34] sm:$0xf]
      %v308 = vld [vmem:[%s263 + $0x38] sm:$0xf]
      %v309 = vld [vmem:[%s263 + $0x3c] sm:$0xf]
      %v310 = vld [vmem:[%s266] sm:$0x1]
      %v312 = vlaneseq
      %v313 = vshrl.u32 %v312, 7
      %v314 = vsub.s32 0, %v313
      %v315 = vrot.slane %v310, %v314
      %v325 = vunpack.c.l.b16 %v286
      %v326 = vunpack.c.l.b16 %v287
      %v327 = vunpack.c.l.b16 %v288
      %v328 = vunpack.c.l.b16 %v289
      %v329 = vunpack.c.l.b16 %v290
      %v330 = vunpack.c.l.b16 %v291
      %v331 = vunpack.c.l.b16 %v292
      %v332 = vunpack.c.l.b16 %v293
      %v333 = vpack.c.b16 %v326, %v325
      %v334 = vpack.c.b16 %v328, %v327
      %v335 = vpack.c.b16 %v330, %v329
      %v336 = vpack.c.b16 %v332, %v331
      %v357 = vunpack.c.l.b16 %v294
      %v358 = vunpack.c.l.b16 %v295
      %v359 = vunpack.c.l.b16 %v296
      %v360 = vunpack.c.l.b16 %v297
      %v361 = vunpack.c.l.b16 %v298
      %v362 = vunpack.c.l.b16 %v299
      %v363 = vunpack.c.l.b16 %v300
      %v364 = vunpack.c.l.b16 %v301
      %v365 = vunpack.c.l.b16 %v302
      %v366 = vunpack.c.l.b16 %v303
      %v367 = vunpack.c.l.b16 %v304
      %v368 = vunpack.c.l.b16 %v305
      %v369 = vunpack.c.l.b16 %v306
      %v370 = vunpack.c.l.b16 %v307
      %v371 = vunpack.c.l.b16 %v308
      %v372 = vunpack.c.l.b16 %v309
      %v373 = vpack.c.b16 %v358, %v357
      %v374 = vpack.c.b16 %v360, %v359
      %v375 = vpack.c.b16 %v362, %v361
      %v376 = vpack.c.b16 %v364, %v363
      %v377 = vpack.c.b16 %v366, %v365
      %v378 = vpack.c.b16 %v368, %v367
      %v379 = vpack.c.b16 %v370, %v369
      %v380 = vpack.c.b16 %v372, %v371
      %389 = vmatprep.subr.bf16.mxu0 0
      %390 = vmatpush1.bf16.msra.mxu0 %v373
      %391 = vmatprep.subr.bf16.mxu0 0
      %392 = vmatpush1.bf16.msra.mxu0 %v374
      %393 = vmatprep.subr.bf16.mxu0 0
      %394 = vmatpush1.bf16.msra.mxu0 %v375
      %395 = vmatprep.subr.bf16.mxu0 0
      %396 = vmatpush1.bf16.msra.mxu0 %v376
      %397 = vmatprep.subr.bf16.mxu0 0
      %398 = vmatpush1.bf16.msra.mxu0 %v377
      %399 = vmatprep.subr.bf16.mxu0 0
      %400 = vmatpush1.bf16.msra.mxu0 %v378
      %401 = vmatprep.subr.bf16.mxu0 0
      %402 = vmatpush1.bf16.msra.mxu0 %v379
      %403 = vmatprep.subr.bf16.mxu0 0
      %404 = vmatpush1.bf16.msra.mxu0 %v380
      %405 = vmatprep.subr.bf16.mxu0 0
      %406 = vmatpush1.bf16.msra.mxu0 0
      %407 = vmatprep.subr.bf16.mxu0 0
      %408 = vmatpush1.bf16.msra.mxu0 0
      %409 = vmatprep.subr.bf16.mxu0 0
      %410 = vmatpush1.bf16.msra.mxu0 0
      %411 = vmatprep.subr.bf16.mxu0 0
      %412 = vmatpush1.bf16.msra.mxu0 0
      %413 = vmatprep.subr.bf16.mxu0 0
      %414 = vmatpush1.bf16.msra.mxu0 0
      %415 = vmatprep.subr.bf16.mxu0 0
      %416 = vmatpush1.bf16.msra.mxu0 0
      %417 = vmatprep.subr.bf16.mxu0 0
      %418 = vmatpush1.bf16.msra.mxu0 0
      %419 = vmatprep.subr.bf16.mxu0 0
      %420 = vmatpush1.bf16.msra.mxu0 0
      %421 = vmatprep.mubr.bf16.mxu0 0
      %422 = vmatmul.mubr.bf16.gmra.mrb[0].mxu0 %v333
      %v423 = vpop.f32.mrb[0].mxu0
      %v424 = vadd.f32 %v315, %v423
      %v425 = vpop.f32.mrb[0].mxu0
      %v426 = vpop.f32.mrb[0].mxu0
      %v427 = vadd.f32 %v315, %v426
      %v428 = vpop.f32.mrb[0].mxu0
      %429 = vmatprep.mubr.bf16.mxu0 0
      %430 = vmatmul.mubr.bf16.gmra.mrb[0].mxu0 %v334
      %v431 = vpop.f32.mrb[0].mxu0
      %v432 = vadd.f32 %v315, %v431
      %v433 = vpop.f32.mrb[0].mxu0
      %v434 = vpop.f32.mrb[0].mxu0
      %v435 = vadd.f32 %v315, %v434
      %v436 = vpop.f32.mrb[0].mxu0
      %437 = vmatprep.mubr.bf16.mxu0 0
      %438 = vmatmul.mubr.bf16.gmra.mrb[0].mxu0 %v335
      %v439 = vpop.f32.mrb[0].mxu0
      %v440 = vadd.f32 %v315, %v439
      %v441 = vpop.f32.mrb[0].mxu0
      %v442 = vpop.f32.mrb[0].mxu0
      %v443 = vadd.f32 %v315, %v442
      %v444 = vpop.f32.mrb[0].mxu0
      %445 = vmatprep.mubr.bf16.mxu0 0
      %446 = vmatmul.mubr.bf16.gmra.mrb[0].mxu0 %v336
      %v447 = vpop.f32.mrb[0].mxu0
      %v448 = vadd.f32 %v315, %v447
      %v449 = vpop.f32.mrb[0].mxu0
      %v450 = vpop.f32.mrb[0].mxu0
      %v451 = vadd.f32 %v315, %v450
      %v452 = vpop.f32.mrb[0].mxu0
      %453 = vdwg.mxu0
      %v454 = vld [vmem:[%s274] sm:$0xf]
      %v455 = vld [vmem:[%s274 + $0x4] sm:$0xf]
      %v456 = vld [vmem:[%s274 + $0x8] sm:$0xf]
      %v457 = vld [vmem:[%s274 + $0xc] sm:$0xf]
      %v458 = vld [vmem:[%s274 + $0x10] sm:$0xf]
      %v459 = vld [vmem:[%s274 + $0x14] sm:$0xf]
      %v460 = vld [vmem:[%s274 + $0x18] sm:$0xf]
      %v461 = vld [vmem:[%s274 + $0x1c] sm:$0xf]
      %v462 = vunpack.c.l.bf16 %v454
      %v463 = vunpack.c.l.bf16 %v455
      %v464 = vunpack.c.l.bf16 %v456
      %v465 = vunpack.c.l.bf16 %v457
      %v466 = vunpack.c.l.bf16 %v458
      %v467 = vunpack.c.l.bf16 %v459
      %v468 = vunpack.c.l.bf16 %v460
      %v469 = vunpack.c.l.bf16 %v461
      %v470 = vadd.f32 %v424, %v462
      %v471 = vadd.f32 %v427, %v463
      %v472 = vadd.f32 %v432, %v464
      %v473 = vadd.f32 %v435, %v465
      %v474 = vadd.f32 %v440, %v466
      %v475 = vadd.f32 %v443, %v467
      %v476 = vadd.f32 %v448, %v468
      %v477 = vadd.f32 %v451, %v469
      %v478 = vmax.f32 %v470, 0.0
      %v479 = vmax.f32 %v471, 0.0
      %v480 = vmax.f32 %v472, 0.0
      %v481 = vmax.f32 %v473, 0.0
      %v482 = vmax.f32 %v474, 0.0
      %v483 = vmax.f32 %v475, 0.0
      %v484 = vmax.f32 %v476, 0.0
      %v485 = vmax.f32 %v477, 0.0
      %v486 = vpack.c.bf16 %v479, %v478
      %v487 = vpack.c.bf16 %v481, %v480
      %v488 = vpack.c.bf16 %v483, %v482
      %v489 = vpack.c.bf16 %v485, %v484
      %v494 = vunpack.c.l.b16 %v486
      %v495 = vunpack.c.h.b16 %v486
      %v496 = vunpack.c.l.b16 %v487
      %v497 = vunpack.c.h.b16 %v487
      %v498 = vunpack.c.l.b16 %v488
      %v499 = vunpack.c.h.b16 %v488
      %v500 = vunpack.c.l.b16 %v489
      %v501 = vunpack.c.h.b16 %v489
      %v502 = vpack.c.b16 %v494, %v494
      %v503 = vpack.c.b16 %v495, %v495
      %v504 = vpack.c.b16 %v496, %v496
      %v505 = vpack.c.b16 %v497, %v497
      %v506 = vpack.c.b16 %v498, %v498
      %v507 = vpack.c.b16 %v499, %v499
      %v508 = vpack.c.b16 %v500, %v500
      %v509 = vpack.c.b16 %v501, %v501
      %518 = vst [vmem:[%s283] sm:$0xf] %v502
      %519 = vst [vmem:[%s283 + $0x4] sm:$0xf] %v503
      %520 = vst [vmem:[%s283 + $0x8] sm:$0xf] %v504
      %521 = vst [vmem:[%s283 + $0xc] sm:$0xf] %v505
      %522 = vst [vmem:[%s283 + $0x10] sm:$0xf] %v506
      %523 = vst [vmem:[%s283 + $0x14] sm:$0xf] %v507
      %524 = vst [vmem:[%s283 + $0x18] sm:$0xf] %v508
      %525 = vst [vmem:[%s283 + $0x1c] sm:$0xf] %v509
      %s526 = smul.u32 8, %s19
      %p527 = scmp.lt.s32.totalorder %s526, 15
      %s528 = scalar_select %p527, %s526, 15
      %p529 = scmp.lt.s32.totalorder %s20, 0
      %s530 = scalar_select %p529, %s20, 0
      %s531 = sadd.s32 %s530, %s528
      %s532 = smul.addr %s531, 4
      %s533 = scalar_lea.vmem %s4, %s532
      // Predicated region
      $region37: #{_lambda_.21} parent=35 // pred_check
        %p534 = pneg %p153
      $region38: #{_lambda_.21} parent=35 // pred_check_branch
        %536 = sbr.rel (%p534) target = $region40
      $region39: #{_lambda_.21} parent=35 // pred_region
        %s537 = smul.u32 8, %s19
      $region40: #{_lambda_.21} parent=35 // pred_fallthru
        _
    $region36: #{_lambda_.21} parent=5 // pred_fallthru
      _
    %p538 = scmp.le.s32.totalorder 2, %s10
    // Predicated region
    $region41: #{_lambda_.21} parent=5 // pred_check
      %p539 = pneg %p538
    $region42: #{_lambda_.21} parent=5 // pred_check_branch
      %541 = sbr.rel (%p539) target = $region44
    $region43: #{_lambda_.21} parent=5 // pred_region
      %s542 = ssub.s32 %s10, 2
      // Predicated region
      $region45: #{_lambda_.21} parent=43 // pred_check
        %p543 = pneg %p159
      $region46: #{_lambda_.21} parent=43 // pred_check_branch
        %545 = sbr.rel (%p543) target = $region48
      $region47: #{_lambda_.21} parent=43 // pred_region
        %s546 = smul.u32 8, %s21
        %p547 = scmp.lt.s32.totalorder %s546, 15
        %s548 = scalar_select %p547, %s546, 15
        %p549 = scmp.lt.s32.totalorder %s22, 0
        %s550 = scalar_select %p549, %s22, 0
        %s551 = sadd.s32 %s550, %s548
        %s552 = smul.addr %s551, 4
        %s553 = scalar_lea.vmem %s4, %s552
      $region48: #{_lambda_.21} parent=43 // pred_fallthru
        _
    $region44: #{_lambda_.21} parent=5 // pred_fallthru
      _
  $region6: #{_lambda_.21} parent=0 // loop_footer
    %s14 = sadd.s32 1, %s10
  $region7: #{_lambda_.21} parent=0 // loop_footer_branch
    %9 = sbr.rel target = $region3
  $region8: #{_lambda_.21} parent=0 // loop_exit
    _

// kernel: _lambda_.20
$region0: #{_lambda_.20}
  #allocation0 [shape = 'u32[]', space=smem, size = 0x4, offset = 0x4, fixed_abs, tag = 'smem constant byte address 0x4 - core index']
  #allocation1 [shape = 'u32[144,128]{1,0:T(1,128)}', space=vmem, size = 0x12000, scoped, tag = 'internal scratch']
  %s0 = inlined_call_operand.vmem [shape: bf16[128,128], index: 0, kind: input, shape index: {}]
  %s1 = inlined_call_operand.vmem [shape: bf16[128,128], index: 1, kind: input, shape index: {}]
  %s2 = inlined_call_operand.vmem [shape: f32[1,128], index: 2, kind: input, shape index: {}]
  %s3 = inlined_call_operand.vmem [shape: bf16[128,128], index: 3, kind: output, shape index: {}]
  %s4 = sld [smem:[#allocation0]]
  $region45: #{_lambda_.20} parent=0
    _
  %s6 = ssub.s32 1, %s4
  %s7 = scalar_select 0, %s6, %s4
  loop: start=0, step=1, limit=4
  $region2: #{_lambda_.20} parent=0 // loop_pre_header
    _
  $region3: #{_lambda_.20} parent=0 // loop_header
    %s9 = sphi 0, %s13
    %p10 = scmp.ge.s32.totalorder %s9, 4
    %s16 = sphi 0, %s28
    %s17 = sphi 0, %s24
    %s18 = sphi 0, %s16
    %s19 = sphi 0, %s17
    %s20 = sphi 0, %s18
    %s21 = sphi 0, %s19
    %s31 = sphi 0, %s33
    %s34 = sphi 0, %s31
    %s35 = sphi 0, %s34
    %s51 = sphi 0, %s35
    %s57 = sphi 0, %s59
    %s60 = sphi 0, %s57
    %s61 = sphi 0, %s60
    %s77 = sphi 0, %s61
    %s83 = sphi 0, %s85
    %s86 = sphi 0, %s83
    %s87 = sphi 0, %s86
    %s103 = sphi 0, %s87
    %s111 = sphi 0, %s113
    %s114 = sphi 0, %s111
    %s115 = sphi 0, %s114
    %s131 = sphi 0, %s115
  $region4: #{_lambda_.20} parent=0 // loop_header_branch
    %12 = sbr.rel (%p10) target = $region8
  $region5: #{_lambda_.20} parent=0 // loop_body
    %s14 = ssub.s32 %s9, 1
    %s15 = ssub.s32 %s9, 2
    %s22 = sadd.s32 1, %s17
    %p23 = scmp.ge.s32.totalorder %s22, 1
    %s24 = scalar_select %p23, 0, %s22
    %s25 = sadd.s32 1, %s16
    %s26 = scalar_select %p23, %s25, %s16
    %p27 = scmp.ge.s32.totalorder %s26, 2
    %s28 = scalar_select %p27, 0, %s26
    %s29 = ssub.s32 %s16, %s28
    %p30 = scmp.eq.s32.totalorder %s29, 0
    %s32 = sadd.s32 %s31, 1
    %s33 = scalar_select %p30, %s31, %s32
    %p36 = pneg %p30
    %p37 = scmp.eq.s32.totalorder %s9, 1
    %p38 = por %p36, %p37
    %p39 = scmp.ne.s32.totalorder %s31, %s34
    %p40 = scmp.eq.s32.totalorder %s9, 0
    %p41 = por %p39, %p40
    %p42 = scmp.ne.s32.totalorder %s31, %s34
    %p43 = scmp.eq.s32.totalorder %s14, 1
    %p44 = por %p42, %p43
    %p45 = scmp.ne.s32.totalorder %s34, %s35
    %p46 = scmp.eq.s32.totalorder %s14, 0
    %p47 = por %p45, %p46
    %p48 = scmp.ne.s32.totalorder %s34, %s35
    %p49 = scmp.eq.s32.totalorder %s15, 1
    %p50 = por %p48, %p49
    %p52 = scmp.ne.s32.totalorder %s35, %s51
    %p53 = scmp.eq.s32.totalorder %s15, 0
    %p54 = por %p52, %p53
    %s55 = ssub.s32 %s17, %s24
    %p56 = scmp.eq.s32.totalorder %s55, 0
    %s58 = sadd.s32 %s57, 1
    %s59 = scalar_select %p56, %s57, %s58
    %p62 = pneg %p56
    %p63 = scmp.eq.s32.totalorder %s9, 1
    %p64 = por %p62, %p63
    %p65 = scmp.ne.s32.totalorder %s57, %s60
    %p66 = scmp.eq.s32.totalorder %s9, 0
    %p67 = por %p65, %p66
    %p68 = scmp.ne.s32.totalorder %s57, %s60
    %p69 = scmp.eq.s32.totalorder %s14, 1
    %p70 = por %p68, %p69
    %p71 = scmp.ne.s32.totalorder %s60, %s61
    %p72 = scmp.eq.s32.totalorder %s14, 0
    %p73 = por %p71, %p72
    %p74 = scmp.ne.s32.totalorder %s60, %s61
    %p75 = scmp.eq.s32.totalorder %s15, 1
    %p76 = por %p74, %p75
    %p78 = scmp.ne.s32.totalorder %s61, %s77
    %p79 = scmp.eq.s32.totalorder %s15, 0
    %p80 = por %p78, %p79
    %s81 = ssub.s32 %s17, %s24
    %p82 = scmp.eq.s32.totalorder %s81, 0
    %s84 = sadd.s32 %s83, 1
    %s85 = scalar_select %p82, %s83, %s84
    %p88 = pneg %p82
    %p89 = scmp.eq.s32.totalorder %s9, 1
    %p90 = por %p88, %p89
    %p91 = scmp.ne.s32.totalorder %s83, %s86
    %p92 = scmp.eq.s32.totalorder %s9, 0
    %p93 = por %p91, %p92
    %p94 = scmp.ne.s32.totalorder %s83, %s86
    %p95 = scmp.eq.s32.totalorder %s14, 1
    %p96 = por %p94, %p95
    %p97 = scmp.ne.s32.totalorder %s86, %s87
    %p98 = scmp.eq.s32.totalorder %s14, 0
    %p99 = por %p97, %p98
    %p100 = scmp.ne.s32.totalorder %s86, %s87
    %p101 = scmp.eq.s32.totalorder %s15, 1
    %p102 = por %p100, %p101
    %p104 = scmp.ne.s32.totalorder %s87, %s103
    %p105 = scmp.eq.s32.totalorder %s15, 0
    %p106 = por %p104, %p105
    %s107 = ssub.s32 %s16, %s28
    %s108 = ssub.s32 %s17, %s24
    %s109 = sor.u32 %s107, %s108
    %p110 = scmp.eq.s32.totalorder %s109, 0
    %s112 = sadd.s32 %s111, 1
    %s113 = scalar_select %p110, %s111, %s112
    %p116 = pneg %p110
    %p117 = scmp.eq.s32.totalorder %s9, 1
    %p118 = por %p116, %p117
    %p119 = scmp.ne.s32.totalorder %s111, %s114
    %p120 = scmp.eq.s32.totalorder %s9, 0
    %p121 = por %p119, %p120
    %p122 = scmp.ne.s32.totalorder %s111, %s114
    %p123 = scmp.eq.s32.totalorder %s14, 1
    %p124 = por %p122, %p123
    %p125 = scmp.ne.s32.totalorder %s114, %s115
    %p126 = scmp.eq.s32.totalorder %s14, 0
    %p127 = por %p125, %p126
    %p128 = scmp.ne.s32.totalorder %s114, %s115
    %p129 = scmp.eq.s32.totalorder %s15, 1
    %p130 = por %p128, %p129
    %p132 = scmp.ne.s32.totalorder %s115, %s131
    %p133 = scmp.eq.s32.totalorder %s15, 0
    %p134 = por %p132, %p133
    %p135 = scmp.le.s32.totalorder 1, %s9
    %p136 = scmp.lt.s32.totalorder %s9, 3
    %p137 = pnand %p135, %p136
    %p138 = pneg %p137
    // Predicated region
    $region9: #{_lambda_.20} parent=5 // pred_check
      _
    $region10: #{_lambda_.20} parent=5 // pred_check_branch
      %140 = sbr.rel (%p137) target = $region12
    $region11: #{_lambda_.20} parent=5 // pred_region
      %s141 = ssub.s32 %s9, 1
      // Predicated region
      $region13: #{_lambda_.20} parent=11 // pred_check
        %p142 = pneg %p73
      $region14: #{_lambda_.20} parent=11 // pred_check_branch
        %144 = sbr.rel (%p142) target = $region16
      $region15: #{_lambda_.20} parent=11 // pred_region
        %p145 = scmp.lt.s32.totalorder %s19, 0
        %s146 = scalar_select %p145, %s19, 0
        %s147 = smul.addr %s146, 4
        %s148 = scalar_lea.vmem %s1, %s147
      $region16: #{_lambda_.20} parent=11 // pred_fallthru
        _
      // Predicated region
      $region17: #{_lambda_.20} parent=11 // pred_check
        %p149 = pneg %p99
      $region18: #{_lambda_.20} parent=11 // pred_check_branch
        %151 = sbr.rel (%p149) target = $region20
      $region19: #{_lambda_.20} parent=11 // pred_region
        %p152 = scmp.lt.s32.totalorder %s19, 0
        %s153 = scalar_select %p152, %s19, 0
        %s154 = scalar_lea.vmem %s2, %s153
      $region20: #{_lambda_.20} parent=11 // pred_fallthru
        _
    $region12: #{_lambda_.20} parent=5 // pred_fallthru
      _
    %p155 = scmp.lt.s32.totalorder %s9, 2
    // Predicated region
    $region21: #{_lambda_.20} parent=5 // pred_check
      %p156 = pneg %p155
    $region22: #{_lambda_.20} parent=5 // pred_check_branch
      %158 = sbr.rel (%p156) target = $region24
    $region23: #{_lambda_.20} parent=5 // pred_region
      // Predicated region
      $region25: #{_lambda_.20} parent=23 // pred_check
        %p159 = pneg %p41
      $region26: #{_lambda_.20} parent=23 // pred_check_branch
        %161 = sbr.rel (%p159) target = $region28
      $region27: #{_lambda_.20} parent=23 // pred_region
        %s162 = smul.u32 8, %s16
        %p163 = scmp.lt.s32.totalorder %s162, 15
        %s164 = scalar_select %p163, %s162, 15
        %s165 = smul.addr %s164, 4
        %s166 = scalar_lea.vmem %s0, %s165
        %s167 = smul.u32 8, %s16
      $region28: #{_lambda_.20} parent=23 // pred_fallthru
        _
    $region24: #{_lambda_.20} parent=5 // pred_fallthru
      _
    %p168 = scmp.le.s32.totalorder 1, %s9
    %p169 = scmp.lt.s32.totalorder %s9, 3
    %p170 = pnand %p168, %p169
    %p171 = pneg %p170
    // Predicated region
    $region29: #{_lambda_.20} parent=5 // pred_check
      _
    $region30: #{_lambda_.20} parent=5 // pred_check_branch
      %173 = sbr.rel (%p170) target = $region32
    $region31: #{_lambda_.20} parent=5 // pred_region
      %s174 = ssub.s32 %s9, 1
      %s175 = smul.u32 8, %s18
      %p176 = scmp.lt.s32.totalorder %s175, 15
      %s177 = scalar_select %p176, %s175, 15
      %s178 = smul.addr %s177, 4
      %s179 = scalar_lea.vmem %s0, %s178
      %p180 = pneg %p47
      %p181 = pneg %p44
      %p182 = scmp.lt.s32.totalorder %s19, 0
      %s183 = scalar_select %p182, %s19, 0
      %s184 = smul.addr %s183, 4
      %s185 = scalar_lea.vmem %s1, %s184
      %p186 = pneg %p73
      %p187 = pneg %p70
      %p188 = scmp.lt.s32.totalorder %s19, 0
      %s189 = scalar_select %p188, %s19, 0
      %s190 = scalar_lea.vmem %s2, %s189
      %p191 = pneg %p99
      %p192 = pneg %p96
      %p193 = pneg %p127
      %p194 = pneg %p124
      %s195 = smul.u32 8, %s18
      %p196 = scmp.lt.s32.totalorder %s195, 15
      %s197 = scalar_select %p196, %s195, 15
      %p198 = scmp.lt.s32.totalorder %s19, 0
      %s199 = scalar_select %p198, %s19, 0
      %s200 = sadd.s32 %s199, %s197
      %s201 = smul.addr %s200, 4
      %s202 = scalar_lea.vmem %s3, %s201
      %s203 = smul.u32 8, %s18
      %p204 = scmp.lt.s32.totalorder %s203, 15
      %s205 = scalar_select %p204, %s203, 15
      %s206 = smul.addr %s205, 4
      %s207 = scalar_lea.vmem %s0, %s206
      %s208 = smul.u32 8, %s18
      %p209 = scmp.lt.s32.totalorder %s19, 0
      %s210 = scalar_select %p209, %s19, 0
      %s211 = smul.addr %s210, 4
      %s212 = scalar_lea.vmem %s1, %s211
      %p213 = scmp.lt.s32.totalorder %s19, 0
      %s214 = scalar_select %p213, %s19, 0
      %s215 = scalar_lea.vmem %s2, %s214
      %s216 = smul.u32 8, %s18
      %p217 = scmp.lt.s32.totalorder %s216, 15
      %s218 = scalar_select %p217, %s216, 15
      %p219 = scmp.lt.s32.totalorder %s19, 0
      %s220 = scalar_select %p219, %s19, 0
      %s221 = sadd.s32 %s220, %s218
      %s222 = smul.addr %s221, 4
      %s223 = scalar_lea.vmem %s3, %s222
      %s224 = smul.u32 8, %s18
      %v226 = vld [vmem:[%s207] sm:$0xf]
      %v227 = vld [vmem:[%s207 + $0x4] sm:$0xf]
      %v228 = vld [vmem:[%s207 + $0x8] sm:$0xf]
      %v229 = vld [vmem:[%s207 + $0xc] sm:$0xf]
      %v230 = vld [vmem:[%s207 + $0x10] sm:$0xf]
      %v231 = vld [vmem:[%s207 + $0x14] sm:$0xf]
      %v232 = vld [vmem:[%s207 + $0x18] sm:$0xf]
      %v233 = vld [vmem:[%s207 + $0x1c] sm:$0xf]
      %v234 = vld [vmem:[%s212] sm:$0xf]
      %v235 = vld [vmem:[%s212 + $0x4] sm:$0xf]
      %v236 = vld [vmem:[%s212 + $0x8] sm:$0xf]
      %v237 = vld [vmem:[%s212 + $0xc] sm:$0xf]
      %v238 = vld [vmem:[%s212 + $0x10] sm:$0xf]
      %v239 = vld [vmem:[%s212 + $0x14] sm:$0xf]
      %v240 = vld [vmem:[%s212 + $0x18] sm:$0xf]
      %v241 = vld [vmem:[%s212 + $0x1c] sm:$0xf]
      %v242 = vld [vmem:[%s212 + $0x20] sm:$0xf]
      %v243 = vld [vmem:[%s212 + $0x24] sm:$0xf]
      %v244 = vld [vmem:[%s212 + $0x28] sm:$0xf]
      %v245 = vld [vmem:[%s212 + $0x2c] sm:$0xf]
      %v246 = vld [vmem:[%s212 + $0x30] sm:$0xf]
      %v247 = vld [vmem:[%s212 + $0x34] sm:$0xf]
      %v248 = vld [vmem:[%s212 + $0x38] sm:$0xf]
      %v249 = vld [vmem:[%s212 + $0x3c] sm:$0xf]
      %v250 = vld [vmem:[%s215] sm:$0x1]
      %v252 = vlaneseq
      %v253 = vshrl.u32 %v252, 7
      %v254 = vsub.s32 0, %v253
      %v255 = vrot.slane %v250, %v254
      %v265 = vunpack.c.l.b16 %v226
      %v266 = vunpack.c.l.b16 %v227
      %v267 = vunpack.c.l.b16 %v228
      %v268 = vunpack.c.l.b16 %v229
      %v269 = vunpack.c.l.b16 %v230
      %v270 = vunpack.c.l.b16 %v231
      %v271 = vunpack.c.l.b16 %v232
      %v272 = vunpack.c.l.b16 %v233
      %v273 = vpack.c.b16 %v266, %v265
      %v274 = vpack.c.b16 %v268, %v267
      %v275 = vpack.c.b16 %v270, %v269
      %v276 = vpack.c.b16 %v272, %v271
      %v297 = vunpack.c.l.b16 %v234
      %v298 = vunpack.c.l.b16 %v235
      %v299 = vunpack.c.l.b16 %v236
      %v300 = vunpack.c.l.b16 %v237
      %v301 = vunpack.c.l.b16 %v238
      %v302 = vunpack.c.l.b16 %v239
      %v303 = vunpack.c.l.b16 %v240
      %v304 = vunpack.c.l.b16 %v241
      %v305 = vunpack.c.l.b16 %v242
      %v306 = vunpack.c.l.b16 %v243
      %v307 = vunpack.c.l.b16 %v244
      %v308 = vunpack.c.l.b16 %v245
      %v309 = vunpack.c.l.b16 %v246
      %v310 = vunpack.c.l.b16 %v247
      %v311 = vunpack.c.l.b16 %v248
      %v312 = vunpack.c.l.b16 %v249
      %v313 = vpack.c.b16 %v298, %v297
      %v314 = vpack.c.b16 %v300, %v299
      %v315 = vpack.c.b16 %v302, %v301
      %v316 = vpack.c.b16 %v304, %v303
      %v317 = vpack.c.b16 %v306, %v305
      %v318 = vpack.c.b16 %v308, %v307
      %v319 = vpack.c.b16 %v310, %v309
      %v320 = vpack.c.b16 %v312, %v311
      %329 = vmatprep.subr.bf16.mxu0 0
      %330 = vmatpush1.bf16.msra.mxu0 %v313
      %331 = vmatprep.subr.bf16.mxu0 0
      %332 = vmatpush1.bf16.msra.mxu0 %v314
      %333 = vmatprep.subr.bf16.mxu0 0
      %334 = vmatpush1.bf16.msra.mxu0 %v315
      %335 = vmatprep.subr.bf16.mxu0 0
      %336 = vmatpush1.bf16.msra.mxu0 %v316
      %337 = vmatprep.subr.bf16.mxu0 0
      %338 = vmatpush1.bf16.msra.mxu0 %v317
      %339 = vmatprep.subr.bf16.mxu0 0
      %340 = vmatpush1.bf16.msra.mxu0 %v318
      %341 = vmatprep.subr.bf16.mxu0 0
      %342 = vmatpush1.bf16.msra.mxu0 %v319
      %343 = vmatprep.subr.bf16.mxu0 0
      %344 = vmatpush1.bf16.msra.mxu0 %v320
      %345 = vmatprep.subr.bf16.mxu0 0
      %346 = vmatpush1.bf16.msra.mxu0 0
      %347 = vmatprep.subr.bf16.mxu0 0
      %348 = vmatpush1.bf16.msra.mxu0 0
      %349 = vmatprep.subr.bf16.mxu0 0
      %350 = vmatpush1.bf16.msra.mxu0 0
      %351 = vmatprep.subr.bf16.mxu0 0
      %352 = vmatpush1.bf16.msra.mxu0 0
      %353 = vmatprep.subr.bf16.mxu0 0
      %354 = vmatpush1.bf16.msra.mxu0 0
      %355 = vmatprep.subr.bf16.mxu0 0
      %356 = vmatpush1.bf16.msra.mxu0 0
      %357 = vmatprep.subr.bf16.mxu0 0
      %358 = vmatpush1.bf16.msra.mxu0 0
      %359 = vmatprep.subr.bf16.mxu0 0
      %360 = vmatpush1.bf16.msra.mxu0 0
      %361 = vmatprep.mubr.bf16.mxu0 0
      %362 = vmatmul.mubr.bf16.gmra.mrb[0].mxu0 %v273
      %v363 = vpop.f32.mrb[0].mxu0
      %v364 = vadd.f32 %v255, %v363
      %v365 = vpop.f32.mrb[0].mxu0
      %v366 = vpop.f32.mrb[0].mxu0
      %v367 = vadd.f32 %v255, %v366
      %v368 = vpop.f32.mrb[0].mxu0
      %369 = vmatprep.mubr.bf16.mxu0 0
      %370 = vmatmul.mubr.bf16.gmra.mrb[0].mxu0 %v274
      %v371 = vpop.f32.mrb[0].mxu0
      %v372 = vadd.f32 %v255, %v371
      %v373 = vpop.f32.mrb[0].mxu0
      %v374 = vpop.f32.mrb[0].mxu0
      %v375 = vadd.f32 %v255, %v374
      %v376 = vpop.f32.mrb[0].mxu0
      %377 = vmatprep.mubr.bf16.mxu0 0
      %378 = vmatmul.mubr.bf16.gmra.mrb[0].mxu0 %v275
      %v379 = vpop.f32.mrb[0].mxu0
      %v380 = vadd.f32 %v255, %v379
      %v381 = vpop.f32.mrb[0].mxu0
      %v382 = vpop.f32.mrb[0].mxu0
      %v383 = vadd.f32 %v255, %v382
      %v384 = vpop.f32.mrb[0].mxu0
      %385 = vmatprep.mubr.bf16.mxu0 0
      %386 = vmatmul.mubr.bf16.gmra.mrb[0].mxu0 %v276
      %v387 = vpop.f32.mrb[0].mxu0
      %v388 = vadd.f32 %v255, %v387
      %v389 = vpop.f32.mrb[0].mxu0
      %v390 = vpop.f32.mrb[0].mxu0
      %v391 = vadd.f32 %v255, %v390
      %v392 = vpop.f32.mrb[0].mxu0
      %393 = vdwg.mxu0
      %v394 = vpack.c.bf16 %v367, %v364
      %v395 = vpack.c.bf16 %v375, %v372
      %v396 = vpack.c.bf16 %v383, %v380
      %v397 = vpack.c.bf16 %v391, %v388
      %v402 = vunpack.c.l.b16 %v394
      %v403 = vunpack.c.h.b16 %v394
      %v404 = vunpack.c.l.b16 %v395
      %v405 = vunpack.c.h.b16 %v395
      %v406 = vunpack.c.l.b16 %v396
      %v407 = vunpack.c.h.b16 %v396
      %v408 = vunpack.c.l.b16 %v397
      %v409 = vunpack.c.h.b16 %v397
      %v410 = vpack.c.b16 %v402, %v402
      %v411 = vpack.c.b16 %v403, %v403
      %v412 = vpack.c.b16 %v404, %v404
      %v413 = vpack.c.b16 %v405, %v405
      %v414 = vpack.c.b16 %v406, %v406
      %v415 = vpack.c.b16 %v407, %v407
      %v416 = vpack.c.b16 %v408, %v408
      %v417 = vpack.c.b16 %v409, %v409
      %426 = vst [vmem:[%s223] sm:$0xf] %v410
      %427 = vst [vmem:[%s223 + $0x4] sm:$0xf] %v411
      %428 = vst [vmem:[%s223 + $0x8] sm:$0xf] %v412
      %429 = vst [vmem:[%s223 + $0xc] sm:$0xf] %v413
      %430 = vst [vmem:[%s223 + $0x10] sm:$0xf] %v414
      %431 = vst [vmem:[%s223 + $0x14] sm:$0xf] %v415
      %432 = vst [vmem:[%s223 + $0x18] sm:$0xf] %v416
      %433 = vst [vmem:[%s223 + $0x1c] sm:$0xf] %v417
      %s434 = smul.u32 8, %s18
      %p435 = scmp.lt.s32.totalorder %s434, 15
      %s436 = scalar_select %p435, %s434, 15
      %p437 = scmp.lt.s32.totalorder %s19, 0
      %s438 = scalar_select %p437, %s19, 0
      %s439 = sadd.s32 %s438, %s436
      %s440 = smul.addr %s439, 4
      %s441 = scalar_lea.vmem %s3, %s440
      // Predicated region
      $region33: #{_lambda_.20} parent=31 // pred_check
        %p442 = pneg %p124
      $region34: #{_lambda_.20} parent=31 // pred_check_branch
        %444 = sbr.rel (%p442) target = $region36
      $region35: #{_lambda_.20} parent=31 // pred_region
        %s445 = smul.u32 8, %s18
      $region36: #{_lambda_.20} parent=31 // pred_fallthru
        _
    $region32: #{_lambda_.20} parent=5 // pred_fallthru
      _
    %p446 = scmp.le.s32.totalorder 2, %s9
    // Predicated region
    $region37: #{_lambda_.20} parent=5 // pred_check
      %p447 = pneg %p446
    $region38: #{_lambda_.20} parent=5 // pred_check_branch
      %449 = sbr.rel (%p447) target = $region40
    $region39: #{_lambda_.20} parent=5 // pred_region
      %s450 = ssub.s32 %s9, 2
      // Predicated region
      $region41: #{_lambda_.20} parent=39 // pred_check
        %p451 = pneg %p130
      $region42: #{_lambda_.20} parent=39 // pred_check_branch
        %453 = sbr.rel (%p451) target = $region44
      $region43: #{_lambda_.20} parent=39 // pred_region
        %s454 = smul.u32 8, %s20
        %p455 = scmp.lt.s32.totalorder %s454, 15
        %s456 = scalar_select %p455, %s454, 15
        %p457 = scmp.lt.s32.totalorder %s21, 0
        %s458 = scalar_select %p457, %s21, 0
        %s459 = sadd.s32 %s458, %s456
        %s460 = smul.addr %s459, 4
        %s461 = scalar_lea.vmem %s3, %s460
      $region44: #{_lambda_.20} parent=39 // pred_fallthru
        _
    $region40: #{_lambda_.20} parent=5 // pred_fallthru
      _
  $region6: #{_lambda_.20} parent=0 // loop_footer
    %s13 = sadd.s32 1, %s9
  $region7: #{_lambda_.20} parent=0 // loop_footer_branch
    %8 = sbr.rel target = $region3
  $region8: #{_lambda_.20} parent=0 // loop_exit
    _

// kernel: _lambda_.19
$region0: #{_lambda_.19}
  #allocation0 [shape = 'u32[]', space=smem, size = 0x4, offset = 0x4, fixed_abs, tag = 'smem constant byte address 0x4 - core index']
  #allocation1 [shape = 'u32[144,128]{1,0:T(1,128)}', space=vmem, size = 0x12000, scoped, tag = 'internal scratch']
  %s0 = inlined_call_operand.vmem [shape: bf16[2,110,128], index: 0, kind: input, shape index: {}]
  %s1 = inlined_call_operand.vmem [shape: bf16[1152,128], index: 1, kind: input, shape index: {}]
  %s2 = inlined_call_operand.vmem [shape: f32[1,128], index: 2, kind: input, shape index: {}]
  %s3 = inlined_call_operand.vmem [shape: bf16[2,80,128], index: 3, kind: output, shape index: {}]
  %s4 = sld [smem:[#allocation0]]
  $region45: #{_lambda_.19} parent=0
    _
  %s6 = ssub.s32 1, %s4
  %s7 = scalar_select 0, %s6, %s4
  loop: start=0, step=1, limit=4
  $region2: #{_lambda_.19} parent=0 // loop_pre_header
    _
  $region3: #{_lambda_.19} parent=0 // loop_header
    %s9 = sphi 0, %s13
    %p10 = scmp.ge.s32.totalorder %s9, 4
    %s16 = sphi 0, %s28
    %s17 = sphi 0, %s24
    %s18 = sphi 0, %s16
    %s19 = sphi 0, %s17
    %s20 = sphi 0, %s18
    %s21 = sphi 0, %s19
    %s31 = sphi 0, %s33
    %s34 = sphi 0, %s31
    %s35 = sphi 0, %s34
    %s51 = sphi 0, %s35
    %s57 = sphi 0, %s59
    %s60 = sphi 0, %s57
    %s61 = sphi 0, %s60
    %s77 = sphi 0, %s61
    %s83 = sphi 0, %s85
    %s86 = sphi 0, %s83
    %s87 = sphi 0, %s86
    %s103 = sphi 0, %s87
    %s111 = sphi 0, %s113
    %s114 = sphi 0, %s111
    %s115 = sphi 0, %s114
    %s131 = sphi 0, %s115
  $region4: #{_lambda_.19} parent=0 // loop_header_branch
    %12 = sbr.rel (%p10) target = $region8
  $region5: #{_lambda_.19} parent=0 // loop_body
    %s14 = ssub.s32 %s9, 1
    %s15 = ssub.s32 %s9, 2
    %s22 = sadd.s32 1, %s17
    %p23 = scmp.ge.s32.totalorder %s22, 1
    %s24 = scalar_select %p23, 0, %s22
    %s25 = sadd.s32 1, %s16
    %s26 = scalar_select %p23, %s25, %s16
    %p27 = scmp.ge.s32.totalorder %s26, 2
    %s28 = scalar_select %p27, 0, %s26
    %s29 = ssub.s32 %s16, %s28
    %p30 = scmp.eq.s32.totalorder %s29, 0
    %s32 = sadd.s32 %s31, 1
    %s33 = scalar_select %p30, %s31, %s32
    %p36 = pneg %p30
    %p37 = scmp.eq.s32.totalorder %s9, 1
    %p38 = por %p36, %p37
    %p39 = scmp.ne.s32.totalorder %s31, %s34
    %p40 = scmp.eq.s32.totalorder %s9, 0
    %p41 = por %p39, %p40
    %p42 = scmp.ne.s32.totalorder %s31, %s34
    %p43 = scmp.eq.s32.totalorder %s14, 1
    %p44 = por %p42, %p43
    %p45 = scmp.ne.s32.totalorder %s34, %s35
    %p46 = scmp.eq.s32.totalorder %s14, 0
    %p47 = por %p45, %p46
    %p48 = scmp.ne.s32.totalorder %s34, %s35
    %p49 = scmp.eq.s32.totalorder %s15, 1
    %p50 = por %p48, %p49
    %p52 = scmp.ne.s32.totalorder %s35, %s51
    %p53 = scmp.eq.s32.totalorder %s15, 0
    %p54 = por %p52, %p53
    %s55 = ssub.s32 %s17, %s24
    %p56 = scmp.eq.s32.totalorder %s55, 0
    %s58 = sadd.s32 %s57, 1
    %s59 = scalar_select %p56, %s57, %s58
    %p62 = pneg %p56
    %p63 = scmp.eq.s32.totalorder %s9, 1
    %p64 = por %p62, %p63
    %p65 = scmp.ne.s32.totalorder %s57, %s60
    %p66 = scmp.eq.s32.totalorder %s9, 0
    %p67 = por %p65, %p66
    %p68 = scmp.ne.s32.totalorder %s57, %s60
    %p69 = scmp.eq.s32.totalorder %s14, 1
    %p70 = por %p68, %p69
    %p71 = scmp.ne.s32.totalorder %s60, %s61
    %p72 = scmp.eq.s32.totalorder %s14, 0
    %p73 = por %p71, %p72
    %p74 = scmp.ne.s32.totalorder %s60, %s61
    %p75 = scmp.eq.s32.totalorder %s15, 1
    %p76 = por %p74, %p75
    %p78 = scmp.ne.s32.totalorder %s61, %s77
    %p79 = scmp.eq.s32.totalorder %s15, 0
    %p80 = por %p78, %p79
    %s81 = ssub.s32 %s17, %s24
    %p82 = scmp.eq.s32.totalorder %s81, 0
    %s84 = sadd.s32 %s83, 1
    %s85 = scalar_select %p82, %s83, %s84
    %p88 = pneg %p82
    %p89 = scmp.eq.s32.totalorder %s9, 1
    %p90 = por %p88, %p89
    %p91 = scmp.ne.s32.totalorder %s83, %s86
    %p92 = scmp.eq.s32.totalorder %s9, 0
    %p93 = por %p91, %p92
    %p94 = scmp.ne.s32.totalorder %s83, %s86
    %p95 = scmp.eq.s32.totalorder %s14, 1
    %p96 = por %p94, %p95
    %p97 = scmp.ne.s32.totalorder %s86, %s87
    %p98 = scmp.eq.s32.totalorder %s14, 0
    %p99 = por %p97, %p98
    %p100 = scmp.ne.s32.totalorder %s86, %s87
    %p101 = scmp.eq.s32.totalorder %s15, 1
    %p102 = por %p100, %p101
    %p104 = scmp.ne.s32.totalorder %s87, %s103
    %p105 = scmp.eq.s32.totalorder %s15, 0
    %p106 = por %p104, %p105
    %s107 = ssub.s32 %s16, %s28
    %s108 = ssub.s32 %s17, %s24
    %s109 = sor.u32 %s107, %s108
    %p110 = scmp.eq.s32.totalorder %s109, 0
    %s112 = sadd.s32 %s111, 1
    %s113 = scalar_select %p110, %s111, %s112
    %p116 = pneg %p110
    %p117 = scmp.eq.s32.totalorder %s9, 1
    %p118 = por %p116, %p117
    %p119 = scmp.ne.s32.totalorder %s111, %s114
    %p120 = scmp.eq.s32.totalorder %s9, 0
    %p121 = por %p119, %p120
    %p122 = scmp.ne.s32.totalorder %s111, %s114
    %p123 = scmp.eq.s32.totalorder %s14, 1
    %p124 = por %p122, %p123
    %p125 = scmp.ne.s32.totalorder %s114, %s115
    %p126 = scmp.eq.s32.totalorder %s14, 0
    %p127 = por %p125, %p126
    %p128 = scmp.ne.s32.totalorder %s114, %s115
    %p129 = scmp.eq.s32.totalorder %s15, 1
    %p130 = por %p128, %p129
    %p132 = scmp.ne.s32.totalorder %s115, %s131
    %p133 = scmp.eq.s32.totalorder %s15, 0
    %p134 = por %p132, %p133
    %p135 = scmp.le.s32.totalorder 1, %s9
    %p136 = scmp.lt.s32.totalorder %s9, 3
    %p137 = pnand %p135, %p136
    %p138 = pneg %p137
    // Predicated region
    $region9: #{_lambda_.19} parent=5 // pred_check
      _
    $region10: #{_lambda_.19} parent=5 // pred_check_branch
      %140 = sbr.rel (%p137) target = $region12
    $region11: #{_lambda_.19} parent=5 // pred_region
      %s141 = ssub.s32 %s9, 1
      // Predicated region
      $region13: #{_lambda_.19} parent=11 // pred_check
        %p142 = pneg %p73
      $region14: #{_lambda_.19} parent=11 // pred_check_branch
        %144 = sbr.rel (%p142) target = $region16
      $region15: #{_lambda_.19} parent=11 // pred_region
        %p145 = scmp.lt.s32.totalorder %s19, 0
        %s146 = scalar_select %p145, %s19, 0
        %s147 = smul.addr %s146, 4
        %s148 = scalar_lea.vmem %s1, %s147
      $region16: #{_lambda_.19} parent=11 // pred_fallthru
        _
      // Predicated region
      $region17: #{_lambda_.19} parent=11 // pred_check
        %p149 = pneg %p99
      $region18: #{_lambda_.19} parent=11 // pred_check_branch
        %151 = sbr.rel (%p149) target = $region20
      $region19: #{_lambda_.19} parent=11 // pred_region
        %p152 = scmp.lt.s32.totalorder %s19, 0
        %s153 = scalar_select %p152, %s19, 0
        %s154 = scalar_lea.vmem %s2, %s153
      $region20: #{_lambda_.19} parent=11 // pred_fallthru
        _
    $region12: #{_lambda_.19} parent=5 // pred_fallthru
      _
    %p155 = scmp.lt.s32.totalorder %s9, 2
    // Predicated region
    $region21: #{_lambda_.19} parent=5 // pred_check
      %p156 = pneg %p155
    $region22: #{_lambda_.19} parent=5 // pred_check_branch
      %158 = sbr.rel (%p156) target = $region24
    $region23: #{_lambda_.19} parent=5 // pred_region
      // Predicated region
      $region25: #{_lambda_.19} parent=23 // pred_check
        %p159 = pneg %p41
      $region26: #{_lambda_.19} parent=23 // pred_check_branch
        %161 = sbr.rel (%p159) target = $region28
      $region27: #{_lambda_.19} parent=23 // pred_region
        %p162 = scmp.lt.s32.totalorder %s16, 1
        %s163 = scalar_select %p162, %s16, 1
        %s164 = smul.addr %s163, 14
        %s165 = smul.addr %s164, 4
        %s166 = scalar_lea.vmem %s0, %s165
      $region28: #{_lambda_.19} parent=23 // pred_fallthru
        _
    $region24: #{_lambda_.19} parent=5 // pred_fallthru
      _
    %p167 = scmp.le.s32.totalorder 1, %s9
    %p168 = scmp.lt.s32.totalorder %s9, 3
    %p169 = pnand %p167, %p168
    %p170 = pneg %p169
    // Predicated region
    $region29: #{_lambda_.19} parent=5 // pred_check
      _
    $region30: #{_lambda_.19} parent=5 // pred_check_branch
      %172 = sbr.rel (%p169) target = $region32
    $region31: #{_lambda_.19} parent=5 // pred_region
      %s173 = ssub.s32 %s9, 1
      %p174 = scmp.lt.s32.totalorder %s18, 1
      %s175 = scalar_select %p174, %s18, 1
      %s176 = smul.addr %s175, 14
      %s177 = smul.addr %s176, 4
      %s178 = scalar_lea.vmem %s0, %s177
      %p179 = pneg %p47
      %p180 = pneg %p44
      %p181 = scmp.lt.s32.totalorder %s19, 0
      %s182 = scalar_select %p181, %s19, 0
      %s183 = smul.addr %s182, 4
      %s184 = scalar_lea.vmem %s1, %s183
      %p185 = pneg %p73
      %p186 = pneg %p70
      %p187 = scmp.lt.s32.totalorder %s19, 0
      %s188 = scalar_select %p187, %s19, 0
      %s189 = scalar_lea.vmem %s2, %s188
      %p190 = pneg %p99
      %p191 = pneg %p96
      %p192 = pneg %p127
      %p193 = pneg %p124
      %p194 = scmp.lt.s32.totalorder %s18, 1
      %s195 = scalar_select %p194, %s18, 1
      %p196 = scmp.lt.s32.totalorder %s19, 0
      %s197 = scalar_select %p196, %s19, 0
      %s198 = smul.addr %s195, 10
      %s199 = sadd.s32 %s197, %s198
      %s200 = smul.addr %s199, 4
      %s201 = scalar_lea.vmem %s3, %s200
      %p202 = scmp.lt.s32.totalorder %s18, 1
      %s203 = scalar_select %p202, %s18, 1
      %s204 = smul.addr %s203, 14
      %s205 = smul.addr %s204, 4
      %s206 = scalar_lea.vmem %s0, %s205
      %p207 = scmp.lt.s32.totalorder %s19, 0
      %s208 = scalar_select %p207, %s19, 0
      %s209 = smul.addr %s208, 4
      %s210 = scalar_lea.vmem %s1, %s209
      %p211 = scmp.lt.s32.totalorder %s19, 0
      %s212 = scalar_select %p211, %s19, 0
      %s213 = scalar_lea.vmem %s2, %s212
      %p214 = scmp.lt.s32.totalorder %s18, 1
      %s215 = scalar_select %p214, %s18, 1
      %p216 = scmp.lt.s32.totalorder %s19, 0
      %s217 = scalar_select %p216, %s19, 0
      %s218 = smul.addr %s215, 10
      %s219 = sadd.s32 %s217, %s218
      %s220 = smul.addr %s219, 4
      %s221 = scalar_lea.vmem %s3, %s220
      %v223 = vld [vmem:[%s206] sm:$0xf]
      %v224 = vld [vmem:[%s206 + $0x4] sm:$0xf]
      %v225 = vld [vmem:[%s206 + $0x8] sm:$0xf]
      %v226 = vld [vmem:[%s206 + $0xc] sm:$0xf]
      %v227 = vld [vmem:[%s206 + $0x10] sm:$0xf]
      %v228 = vld [vmem:[%s206 + $0x14] sm:$0xf]
      %v229 = vld [vmem:[%s206 + $0x18] sm:$0xf]
      %v230 = vld [vmem:[%s206 + $0x1c] sm:$0xf]
      %v231 = vld [vmem:[%s206 + $0x20] sm:$0xf]
      %v232 = vld [vmem:[%s206 + $0x24] sm:$0xf]
      %v233 = vld [vmem:[%s210] sm:$0xf]
      %v234 = vld [vmem:[%s210 + $0x4] sm:$0xf]
      %v235 = vld [vmem:[%s210 + $0x8] sm:$0xf]
      %v236 = vld [vmem:[%s210 + $0xc] sm:$0xf]
      %v237 = vld [vmem:[%s210 + $0x10] sm:$0xf]
      %v238 = vld [vmem:[%s210 + $0x14] sm:$0xf]
      %v239 = vld [vmem:[%s210 + $0x18] sm:$0xf]
      %v240 = vld [vmem:[%s210 + $0x1c] sm:$0xf]
      %v241 = vld [vmem:[%s210 + $0x20] sm:$0xf]
      %v242 = vld [vmem:[%s210 + $0x24] sm:$0xf]
      %v243 = vld [vmem:[%s210 + $0x28] sm:$0xf]
      %v244 = vld [vmem:[%s210 + $0x2c] sm:$0xf]
      %v245 = vld [vmem:[%s210 + $0x30] sm:$0xf]
      %v246 = vld [vmem:[%s210 + $0x34] sm:$0xf]
      %v247 = vld [vmem:[%s210 + $0x38] sm:$0xf]
      %v248 = vld [vmem:[%s210 + $0x3c] sm:$0xf]
      %v249 = vld [vmem:[%s206 + $0x28] sm:$0x1]
      %v250 = vld [vmem:[%s210 + $0x40] sm:$0xf]
      %v251 = vld [vmem:[%s210 + $0x44] sm:$0xf]
      %v252 = vld [vmem:[%s210 + $0x48] sm:$0xf]
      %v253 = vld [vmem:[%s210 + $0x4c] sm:$0xf]
      %v254 = vld [vmem:[%s210 + $0x50] sm:$0xf]
      %v255 = vld [vmem:[%s210 + $0x54] sm:$0xf]
      %v256 = vld [vmem:[%s210 + $0x58] sm:$0xf]
      %v257 = vld [vmem:[%s210 + $0x5c] sm:$0xf]
      %v258 = vld [vmem:[%s210 + $0x60] sm:$0xf]
      %v259 = vld [vmem:[%s210 + $0x64] sm:$0xf]
      %v260 = vld [vmem:[%s210 + $0x68] sm:$0xf]
      %v261 = vld [vmem:[%s210 + $0x6c] sm:$0xf]
      %v262 = vld [vmem:[%s210 + $0x70] sm:$0xf]
      %v263 = vld [vmem:[%s210 + $0x74] sm:$0xf]
      %v264 = vld [vmem:[%s210 + $0x78] sm:$0xf]
      %v265 = vld [vmem:[%s210 + $0x7c] sm:$0xf]
      %v277 = vunpack.c.l.b16 %v223
      %v278 = vunpack.c.l.b16 %v224
      %v279 = vunpack.c.l.b16 %v225
      %v280 = vunpack.c.l.b16 %v226
      %v281 = vunpack.c.l.b16 %v227
      %v282 = vunpack.c.l.b16 %v228
      %v283 = vunpack.c.l.b16 %v229
      %v284 = vunpack.c.l.b16 %v230
      %v285 = vunpack.c.l.b16 %v231
      %v286 = vunpack.c.l.b16 %v232
      %v287 = vunpack.c.l.b16 %v249
      %v288 = vpack.c.b16 %v278, %v277
      %v289 = vpack.c.b16 %v280, %v279
      %v290 = vpack.c.b16 %v282, %v281
      %v291 = vpack.c.b16 %v284, %v283
      %v292 = vpack.c.b16 %v286, %v285
      %v293 = vpack.c.b16 %v287, %v287
      %vm294 = vsmask.f32 7424
      %v296 = vshrl.u32 %v288, 16
      %v298 = vshll.u32 %v288, 16
      %v300 = vrot.slane %v298, 1
      %v301 = vor.u32 %v296, %v300
      %v303 = vshll.u32 %v289, 16
      %v305 = vrot.slane %v303, 1
      %v306 = vsel %vm294, %v301, %v305
      %v307 = vshrl.u32 %v289, 16
      %v309 = vor.u32 %v307, %v305
      %v311 = vshll.u32 %v290, 16
      %v313 = vrot.slane %v311, 1
      %v314 = vsel %vm294, %v309, %v313
      %v315 = vshrl.u32 %v290, 16
      %v317 = vor.u32 %v315, %v313
      %v319 = vshll.u32 %v291, 16
      %v321 = vrot.slane %v319, 1
      %v322 = vsel %vm294, %v317, %v321
      %v323 = vshrl.u32 %v291, 16
      %v325 = vor.u32 %v323, %v321
      %v327 = vshll.u32 %v292, 16
      %v329 = vrot.slane %v327, 1
      %v330 = vsel %vm294, %v325, %v329
      %v331 = vshrl.u32 %v292, 16
      %v333 = vor.u32 %v331, %v329
      %v335 = vshll.u32 %v293, 16
      %v337 = vrot.slane %v335, 1
      %v338 = vsel %vm294, %v333, %v337
      %v360 = vunpack.c.l.b16 %v250
      %v361 = vunpack.c.l.b16 %v251
      %v362 = vunpack.c.l.b16 %v252
      %v363 = vunpack.c.l.b16 %v253
      %v364 = vunpack.c.l.b16 %v254
      %v365 = vunpack.c.l.b16 %v255
      %v366 = vunpack.c.l.b16 %v256
      %v367 = vunpack.c.l.b16 %v257
      %v368 = vunpack.c.l.b16 %v258
      %v369 = vunpack.c.l.b16 %v259
      %v370 = vunpack.c.l.b16 %v260
      %v371 = vunpack.c.l.b16 %v261
      %v372 = vunpack.c.l.b16 %v262
      %v373 = vunpack.c.l.b16 %v263
      %v374 = vunpack.c.l.b16 %v264
      %v375 = vunpack.c.l.b16 %v265
      %v376 = vpack.c.b16 %v361, %v360
      %v377 = vpack.c.b16 %v363, %v362
      %v378 = vpack.c.b16 %v365, %v364
      %v379 = vpack.c.b16 %v367, %v366
      %v380 = vpack.c.b16 %v369, %v368
      %v381 = vpack.c.b16 %v371, %v370
      %v382 = vpack.c.b16 %v373, %v372
      %v383 = vpack.c.b16 %v375, %v374
      %392 = vmatprep.subr.bf16.mxu0 0
      %393 = vmatpush1.bf16.msra.mxu0 %v376
      %394 = vmatprep.subr.bf16.mxu0 0
      %395 = vmatpush1.bf16.msra.mxu0 %v377
      %396 = vmatprep.subr.bf16.mxu0 0
      %397 = vmatpush1.bf16.msra.mxu0 %v378
      %398 = vmatprep.subr.bf16.mxu0 0
      %399 = vmatpush1.bf16.msra.mxu0 %v379
      %400 = vmatprep.subr.bf16.mxu0 0
      %401 = vmatpush1.bf16.msra.mxu0 %v380
      %402 = vmatprep.subr.bf16.mxu0 0
      %403 = vmatpush1.bf16.msra.mxu0 %v381
      %404 = vmatprep.subr.bf16.mxu0 0
      %405 = vmatpush1.bf16.msra.mxu0 %v382
      %406 = vmatprep.subr.bf16.mxu0 0
      %407 = vmatpush1.bf16.msra.mxu0 %v383
      %408 = vmatprep.subr.bf16.mxu0 0
      %409 = vmatpush1.bf16.msra.mxu0 0
      %410 = vmatprep.subr.bf16.mxu0 0
      %411 = vmatpush1.bf16.msra.mxu0 0
      %412 = vmatprep.subr.bf16.mxu0 0
      %413 = vmatpush1.bf16.msra.mxu0 0
      %414 = vmatprep.subr.bf16.mxu0 0
      %415 = vmatpush1.bf16.msra.mxu0 0
      %416 = vmatprep.subr.bf16.mxu0 0
      %417 = vmatpush1.bf16.msra.mxu0 0
      %418 = vmatprep.subr.bf16.mxu0 0
      %419 = vmatpush1.bf16.msra.mxu0 0
      %420 = vmatprep.subr.bf16.mxu0 0
      %421 = vmatpush1.bf16.msra.mxu0 0
      %422 = vmatprep.subr.bf16.mxu0 0
      %423 = vmatpush1.bf16.msra.mxu0 0
      %424 = vmatprep.mubr.bf16.mxu0 0
      %425 = vmatmul.mubr.bf16.gmra.mrb[0].mxu0 %v306
      %v426 = vpop.f32.mrb[0].mxu0
      %v427 = vadd.f32 0.0, %v426
      %v428 = vpop.f32.mrb[0].mxu0
      %v429 = vpop.f32.mrb[0].mxu0
      %v430 = vadd.f32 0.0, %v429
      %v431 = vpop.f32.mrb[0].mxu0
      %432 = vmatprep.mubr.bf16.mxu0 0
      %433 = vmatmul.mubr.bf16.gmra.mrb[0].mxu0 %v314
      %v434 = vpop.f32.mrb[0].mxu0
      %v435 = vadd.f32 0.0, %v434
      %v436 = vpop.f32.mrb[0].mxu0
      %v437 = vpop.f32.mrb[0].mxu0
      %v438 = vadd.f32 0.0, %v437
      %v439 = vpop.f32.mrb[0].mxu0
      %440 = vmatprep.mubr.bf16.mxu0 0
      %441 = vmatmul.mubr.bf16.gmra.mrb[0].mxu0 %v322
      %v442 = vpop.f32.mrb[0].mxu0
      %v443 = vadd.f32 0.0, %v442
      %v444 = vpop.f32.mrb[0].mxu0
      %v445 = vpop.f32.mrb[0].mxu0
      %v446 = vadd.f32 0.0, %v445
      %v447 = vpop.f32.mrb[0].mxu0
      %448 = vmatprep.mubr.bf16.mxu0 0
      %449 = vmatmul.mubr.bf16.gmra.mrb[0].mxu0 %v330
      %v450 = vpop.f32.mrb[0].mxu0
      %v451 = vadd.f32 0.0, %v450
      %v452 = vpop.f32.mrb[0].mxu0
      %v453 = vpop.f32.mrb[0].mxu0
      %v454 = vadd.f32 0.0, %v453
      %v455 = vpop.f32.mrb[0].mxu0
      %456 = vmatprep.mubr.bf16.mxu0 0
      %457 = vmatmul.mubr.bf16.gmra.mrb[0].mxu0 %v338
      %v458 = vpop.f32.mrb[0].mxu0
      %v459 = vadd.f32 0.0, %v458
      %v460 = vpop.f32.mrb[0].mxu0
      %v461 = vpop.f32.mrb[0].mxu0
      %v462 = vadd.f32 0.0, %v461
      %v463 = vpop.f32.mrb[0].mxu0
      %464 = vdwg.mxu0
      %v486 = vunpack.c.l.b16 %v233
      %v487 = vunpack.c.l.b16 %v234
      %v488 = vunpack.c.l.b16 %v235
      %v489 = vunpack.c.l.b16 %v236
      %v490 = vunpack.c.l.b16 %v237
      %v491 = vunpack.c.l.b16 %v238
      %v492 = vunpack.c.l.b16 %v239
      %v493 = vunpack.c.l.b16 %v240
      %v494 = vunpack.c.l.b16 %v241
      %v495 = vunpack.c.l.b16 %v242
      %v496 = vunpack.c.l.b16 %v243
      %v497 = vunpack.c.l.b16 %v244
      %v498 = vunpack.c.l.b16 %v245
      %v499 = vunpack.c.l.b16 %v246
      %v500 = vunpack.c.l.b16 %v247
      %v501 = vunpack.c.l.b16 %v248
      %v502 = vpack.c.b16 %v487, %v486
      %v503 = vpack.c.b16 %v489, %v488
      %v504 = vpack.c.b16 %v491, %v490
      %v505 = vpack.c.b16 %v493, %v492
      %v506 = vpack.c.b16 %v495, %v494
      %v507 = vpack.c.b16 %v497, %v496
      %v508 = vpack.c.b16 %v499, %v498
      %v509 = vpack.c.b16 %v501, %v500
      %518 = vmatprep.subr.bf16.mxu0 0
      %519 = vmatpush1.bf16.msra.mxu0 %v502
      %520 = vmatprep.subr.bf16.mxu0 0
      %521 = vmatpush1.bf16.msra.mxu0 %v503
      %522 = vmatprep.subr.bf16.mxu0 0
      %523 = vmatpush1.bf16.msra.mxu0 %v504
      %524 = vmatprep.subr.bf16.mxu0 0
      %525 = vmatpush1.bf16.msra.mxu0 %v505
      %526 = vmatprep.subr.bf16.mxu0 0
      %527 = vmatpush1.bf16.msra.mxu0 %v506
      %528 = vmatprep.subr.bf16.mxu0 0
      %529 = vmatpush1.bf16.msra.mxu0 %v507
      %530 = vmatprep.subr.bf16.mxu0 0
      %531 = vmatpush1.bf16.msra.mxu0 %v508
      %532 = vmatprep.subr.bf16.mxu0 0
      %533 = vmatpush1.bf16.msra.mxu0 %v509
      %534 = vmatprep.subr.bf16.mxu0 0
      %535 = vmatpush1.bf16.msra.mxu0 0
      %536 = vmatprep.subr.bf16.mxu0 0
      %537 = vmatpush1.bf16.msra.mxu0 0
      %538 = vmatprep.subr.bf16.mxu0 0
      %539 = vmatpush1.bf16.msra.mxu0 0
      %540 = vmatprep.subr.bf16.mxu0 0
      %541 = vmatpush1.bf16.msra.mxu0 0
      %542 = vmatprep.subr.bf16.mxu0 0
      %543 = vmatpush1.bf16.msra.mxu0 0
      %544 = vmatprep.subr.bf16.mxu0 0
      %545 = vmatpush1.bf16.msra.mxu0 0
      %546 = vmatprep.subr.bf16.mxu0 0
      %547 = vmatpush1.bf16.msra.mxu0 0
      %548 = vmatprep.subr.bf16.mxu0 0
      %549 = vmatpush1.bf16.msra.mxu0 0
      %550 = vmatprep.mubr.bf16.mxu0 0
      %551 = vmatmul.mubr.bf16.gmra.mrb[0].mxu0 %v288
      %v552 = vpop.f32.mrb[0].mxu0
      %v553 = vadd.f32 %v427, %v552
      %v554 = vpop.f32.mrb[0].mxu0
      %v555 = vpop.f32.mrb[0].mxu0
      %v556 = vadd.f32 %v430, %v555
      %v557 = vpop.f32.mrb[0].mxu0
      %558 = vmatprep.mubr.bf16.mxu0 0
      %559 = vmatmul.mubr.bf16.gmra.mrb[0].mxu0 %v289
      %v560 = vpop.f32.mrb[0].mxu0
      %v561 = vadd.f32 %v435, %v560
      %v562 = vpop.f32.mrb[0].mxu0
      %v563 = vpop.f32.mrb[0].mxu0
      %v564 = vadd.f32 %v438, %v563
      %v565 = vpop.f32.mrb[0].mxu0
      %566 = vmatprep.mubr.bf16.mxu0 0
      %567 = vmatmul.mubr.bf16.gmra.mrb[0].mxu0 %v290
      %v568 = vpop.f32.mrb[0].mxu0
      %v569 = vadd.f32 %v443, %v568
      %v570 = vpop.f32.mrb[0].mxu0
      %v571 = vpop.f32.mrb[0].mxu0
      %v572 = vadd.f32 %v446, %v571
      %v573 = vpop.f32.mrb[0].mxu0
      %574 = vmatprep.mubr.bf16.mxu0 0
      %575 = vmatmul.mubr.bf16.gmra.mrb[0].mxu0 %v291
      %v576 = vpop.f32.mrb[0].mxu0
      %v577 = vadd.f32 %v451, %v576
      %v578 = vpop.f32.mrb[0].mxu0
      %v579 = vpop.f32.mrb[0].mxu0
      %v580 = vadd.f32 %v454, %v579
      %v581 = vpop.f32.mrb[0].mxu0
      %582 = vmatprep.mubr.bf16.mxu0 0
      %583 = vmatmul.mubr.bf16.gmra.mrb[0].mxu0 %v292
      %v584 = vpop.f32.mrb[0].mxu0
      %v585 = vadd.f32 %v459, %v584
      %v586 = vpop.f32.mrb[0].mxu0
      %v587 = vpop.f32.mrb[0].mxu0
      %v588 = vadd.f32 %v462, %v587
      %v589 = vpop.f32.mrb[0].mxu0
      %590 = vdwg.mxu0
      %v591 = vld [vmem:[%s206] sm:$0xe]
      %v592 = vld [vmem:[%s210 + $0x80] sm:$0xf]
      %v593 = vld [vmem:[%s210 + $0x84] sm:$0xf]
      %v594 = vld [vmem:[%s210 + $0x88] sm:$0xf]
      %v595 = vld [vmem:[%s210 + $0x8c] sm:$0xf]
      %v596 = vld [vmem:[%s210 + $0x90] sm:$0xf]
      %v597 = vld [vmem:[%s210 + $0x94] sm:$0xf]
      %v598 = vld [vmem:[%s210 + $0x98] sm:$0xf]
      %v599 = vld [vmem:[%s210 + $0x9c] sm:$0xf]
      %v600 = vld [vmem:[%s210 + $0xa0] sm:$0xf]
      %v601 = vld [vmem:[%s210 + $0xa4] sm:$0xf]
      %v602 = vld [vmem:[%s210 + $0xa8] sm:$0xf]
      %v603 = vld [vmem:[%s210 + $0xac] sm:$0xf]
      %v604 = vld [vmem:[%s210 + $0xb0] sm:$0xf]
      %v605 = vld [vmem:[%s210 + $0xb4] sm:$0xf]
      %v606 = vld [vmem:[%s210 + $0xb8] sm:$0xf]
      %v607 = vld [vmem:[%s210 + $0xbc] sm:$0xf]
      %v609 = vunpack.c.l.b16 %v591
      %v610 = vpack.c.b16 %v278, %v609
      %vm611 = vcmask 1046528
      %v612 = vrot.slane %v610, 1
      %v613 = vrot.slane %v289, 1
      %v614 = vsel %vm611, %v612, %v613
      %v615 = vrot.slane %v290, 1
      %v616 = vsel %vm611, %v613, %v615
      %v617 = vrot.slane %v291, 1
      %v618 = vsel %vm611, %v615, %v617
      %v619 = vrot.slane %v292, 1
      %v620 = vsel %vm611, %v617, %v619
      %v621 = vrot.slane %v293, 1
      %v622 = vsel %vm611, %v619, %v621
      %v644 = vunpack.c.l.b16 %v592
      %v645 = vunpack.c.l.b16 %v593
      %v646 = vunpack.c.l.b16 %v594
      %v647 = vunpack.c.l.b16 %v595
      %v648 = vunpack.c.l.b16 %v596
      %v649 = vunpack.c.l.b16 %v597
      %v650 = vunpack.c.l.b16 %v598
      %v651 = vunpack.c.l.b16 %v599
      %v652 = vunpack.c.l.b16 %v600
      %v653 = vunpack.c.l.b16 %v601
      %v654 = vunpack.c.l.b16 %v602
      %v655 = vunpack.c.l.b16 %v603
      %v656 = vunpack.c.l.b16 %v604
      %v657 = vunpack.c.l.b16 %v605
      %v658 = vunpack.c.l.b16 %v606
      %v659 = vunpack.c.l.b16 %v607
      %v660 = vpack.c.b16 %v645, %v644
      %v661 = vpack.c.b16 %v647, %v646
      %v662 = vpack.c.b16 %v649, %v648
      %v663 = vpack.c.b16 %v651, %v650
      %v664 = vpack.c.b16 %v653, %v652
      %v665 = vpack.c.b16 %v655, %v654
      %v666 = vpack.c.b16 %v657, %v656
      %v667 = vpack.c.b16 %v659, %v658
      %676 = vmatprep.subr.bf16.mxu0 0
      %677 = vmatpush1.bf16.msra.mxu0 %v660
      %678 = vmatprep.subr.bf16.mxu0 0
      %679 = vmatpush1.bf16.msra.mxu0 %v661
      %680 = vmatprep.subr.bf16.mxu0 0
      %681 = vmatpush1.bf16.msra.mxu0 %v662
      %682 = vmatprep.subr.bf16.mxu0 0
      %683 = vmatpush1.bf16.msra.mxu0 %v663
      %684 = vmatprep.subr.bf16.mxu0 0
      %685 = vmatpush1.bf16.msra.mxu0 %v664
      %686 = vmatprep.subr.bf16.mxu0 0
      %687 = vmatpush1.bf16.msra.mxu0 %v665
      %688 = vmatprep.subr.bf16.mxu0 0
      %689 = vmatpush1.bf16.msra.mxu0 %v666
      %690 = vmatprep.subr.bf16.mxu0 0
      %691 = vmatpush1.bf16.msra.mxu0 %v667
      %692 = vmatprep.subr.bf16.mxu0 0
      %693 = vmatpush1.bf16.msra.mxu0 0
      %694 = vmatprep.subr.bf16.mxu0 0
      %695 = vmatpush1.bf16.msra.mxu0 0
      %696 = vmatprep.subr.bf16.mxu0 0
      %697 = vmatpush1.bf16.msra.mxu0 0
      %698 = vmatprep.subr.bf16.mxu0 0
      %699 = vmatpush1.bf16.msra.mxu0 0
      %700 = vmatprep.subr.bf16.mxu0 0
      %701 = vmatpush1.bf16.msra.mxu0 0
      %702 = vmatprep.subr.bf16.mxu0 0
      %703 = vmatpush1.bf16.msra.mxu0 0
      %704 = vmatprep.subr.bf16.mxu0 0
      %705 = vmatpush1.bf16.msra.mxu0 0
      %706 = vmatprep.subr.bf16.mxu0 0
      %707 = vmatpush1.bf16.msra.mxu0 0
      %708 = vmatprep.mubr.bf16.mxu0 0
      %709 = vmatmul.mubr.bf16.gmra.mrb[0].mxu0 %v614
      %v710 = vpop.f32.mrb[0].mxu0
      %v711 = vadd.f32 0.0, %v710
      %v712 = vpop.f32.mrb[0].mxu0
      %v713 = vpop.f32.mrb[0].mxu0
      %v714 = vadd.f32 0.0, %v713
      %v715 = vpop.f32.mrb[0].mxu0
      %716 = vmatprep.mubr.bf16.mxu0 0
      %717 = vmatmul.mubr.bf16.gmra.mrb[0].mxu0 %v616
      %v718 = vpop.f32.mrb[0].mxu0
      %v719 = vadd.f32 0.0, %v718
      %v720 = vpop.f32.mrb[0].mxu0
      %v721 = vpop.f32.mrb[0].mxu0
      %v722 = vadd.f32 0.0, %v721
      %v723 = vpop.f32.mrb[0].mxu0
      %724 = vmatprep.mubr.bf16.mxu0 0
      %725 = vmatmul.mubr.bf16.gmra.mrb[0].mxu0 %v618
      %v726 = vpop.f32.mrb[0].mxu0
      %v727 = vadd.f32 0.0, %v726
      %v728 = vpop.f32.mrb[0].mxu0
      %v729 = vpop.f32.mrb[0].mxu0
      %v730 = vadd.f32 0.0, %v729
      %v731 = vpop.f32.mrb[0].mxu0
      %732 = vmatprep.mubr.bf16.mxu0 0
      %733 = vmatmul.mubr.bf16.gmra.mrb[0].mxu0 %v620
      %v734 = vpop.f32.mrb[0].mxu0
      %v735 = vadd.f32 0.0, %v734
      %v736 = vpop.f32.mrb[0].mxu0
      %v737 = vpop.f32.mrb[0].mxu0
      %v738 = vadd.f32 0.0, %v737
      %v739 = vpop.f32.mrb[0].mxu0
      %740 = vmatprep.mubr.bf16.mxu0 0
      %741 = vmatmul.mubr.bf16.gmra.mrb[0].mxu0 %v622
      %v742 = vpop.f32.mrb[0].mxu0
      %v743 = vadd.f32 0.0, %v742
      %v744 = vpop.f32.mrb[0].mxu0
      %v745 = vpop.f32.mrb[0].mxu0
      %v746 = vadd.f32 0.0, %v745
      %v747 = vpop.f32.mrb[0].mxu0
      %748 = vdwg.mxu0
      %v749 = vadd.f32 %v553, %v711
      %v750 = vadd.f32 %v556, %v714
      %v751 = vadd.f32 %v561, %v719
      %v752 = vadd.f32 %v564, %v722
      %v753 = vadd.f32 %v569, %v727
      %v754 = vadd.f32 %v572, %v730
      %v755 = vadd.f32 %v577, %v735
      %v756 = vadd.f32 %v580, %v738
      %v757 = vadd.f32 %v585, %v743
      %v758 = vadd.f32 %v588, %v746
      %v759 = vld [vmem:[%s206 + $0x4] sm:$0xe]
      %v760 = vld [vmem:[%s206 + $0x8] sm:$0xf]
      %v761 = vld [vmem:[%s206 + $0xc] sm:$0xf]
      %v762 = vld [vmem:[%s206 + $0x10] sm:$0xf]
      %v763 = vld [vmem:[%s206 + $0x14] sm:$0xf]
      %v764 = vld [vmem:[%s206 + $0x18] sm:$0xf]
      %v765 = vld [vmem:[%s206 + $0x1c] sm:$0xf]
      %v766 = vld [vmem:[%s206 + $0x20] sm:$0xf]
      %v767 = vld [vmem:[%s206 + $0x24] sm:$0xf]
      %v768 = vld [vmem:[%s206 + $0x28] sm:$0xf]
      %v769 = vld [vmem:[%s206 + $0x2c] sm:$0x1]
      %v770 = vld [vmem:[%s210 + $0xc0] sm:$0xf]
      %v771 = vld [vmem:[%s210 + $0xc4] sm:$0xf]
      %v772 = vld [vmem:[%s210 + $0xc8] sm:$0xf]
      %v773 = vld [vmem:[%s210 + $0xcc] sm:$0xf]
      %v774 = vld [vmem:[%s210 + $0xd0] sm:$0xf]
      %v775 = vld [vmem:[%s210 + $0xd4] sm:$0xf]
      %v776 = vld [vmem:[%s210 + $0xd8] sm:$0xf]
      %v777 = vld [vmem:[%s210 + $0xdc] sm:$0xf]
      %v778 = vld [vmem:[%s210 + $0xe0] sm:$0xf]
      %v779 = vld [vmem:[%s210 + $0xe4] sm:$0xf]
      %v780 = vld [vmem:[%s210 + $0xe8] sm:$0xf]
      %v781 = vld [vmem:[%s210 + $0xec] sm:$0xf]
      %v782 = vld [vmem:[%s210 + $0xf0] sm:$0xf]
      %v783 = vld [vmem:[%s210 + $0xf4] sm:$0xf]
      %v784 = vld [vmem:[%s210 + $0xf8] sm:$0xf]
      %v785 = vld [vmem:[%s210 + $0xfc] sm:$0xf]
      %v797 = vunpack.c.l.b16 %v759
      %v798 = vunpack.c.l.b16 %v760
      %v799 = vunpack.c.l.b16 %v761
      %v800 = vunpack.c.l.b16 %v762
      %v801 = vunpack.c.l.b16 %v763
      %v802 = vunpack.c.l.b16 %v764
      %v803 = vunpack.c.l.b16 %v765
      %v804 = vunpack.c.l.b16 %v766
      %v805 = vunpack.c.l.b16 %v767
      %v806 = vunpack.c.l.b16 %v768
      %v807 = vunpack.c.l.b16 %v769
      %v808 = vpack.c.b16 %v798, %v797
      %v809 = vpack.c.b16 %v800, %v799
      %v810 = vpack.c.b16 %v802, %v801
      %v811 = vpack.c.b16 %v804, %v803
      %v812 = vpack.c.b16 %v806, %v805
      %v813 = vpack.c.b16 %v807, %v807
      %v814 = vrot.slane %v808, 1
      %v815 = vrot.slane %v809, 1
      %v816 = vsel %vm611, %v814, %v815
      %v817 = vrot.slane %v810, 1
      %v818 = vsel %vm611, %v815, %v817
      %v819 = vrot.slane %v811, 1
      %v820 = vsel %vm611, %v817, %v819
      %v821 = vrot.slane %v812, 1
      %v822 = vsel %vm611, %v819, %v821
      %v823 = vrot.slane %v813, 1
      %v824 = vsel %vm611, %v821, %v823
      %v846 = vunpack.c.l.b16 %v770
      %v847 = vunpack.c.l.b16 %v771
      %v848 = vunpack.c.l.b16 %v772
      %v849 = vunpack.c.l.b16 %v773
      %v850 = vunpack.c.l.b16 %v774
      %v851 = vunpack.c.l.b16 %v775
      %v852 = vunpack.c.l.b16 %v776
      %v853 = vunpack.c.l.b16 %v777
      %v854 = vunpack.c.l.b16 %v778
      %v855 = vunpack.c.l.b16 %v779
      %v856 = vunpack.c.l.b16 %v780
      %v857 = vunpack.c.l.b16 %v781
      %v858 = vunpack.c.l.b16 %v782
      %v859 = vunpack.c.l.b16 %v783
      %v860 = vunpack.c.l.b16 %v784
      %v861 = vunpack.c.l.b16 %v785
      %v862 = vpack.c.b16 %v847, %v846
      %v863 = vpack.c.b16 %v849, %v848
      %v864 = vpack.c.b16 %v851, %v850
      %v865 = vpack.c.b16 %v853, %v852
      %v866 = vpack.c.b16 %v855, %v854
      %v867 = vpack.c.b16 %v857, %v856
      %v868 = vpack.c.b16 %v859, %v858
      %v869 = vpack.c.b16 %v861, %v860
      %878 = vmatprep.subr.bf16.mxu0 0
      %879 = vmatpush1.bf16.msra.mxu0 %v862
      %880 = vmatprep.subr.bf16.mxu0 0
      %881 = vmatpush1.bf16.msra.mxu0 %v863
      %882 = vmatprep.subr.bf16.mxu0 0
      %883 = vmatpush1.bf16.msra.mxu0 %v864
      %884 = vmatprep.subr.bf16.mxu0 0
      %885 = vmatpush1.bf16.msra.mxu0 %v865
      %886 = vmatprep.subr.bf16.mxu0 0
      %887 = vmatpush1.bf16.msra.mxu0 %v866
      %888 = vmatprep.subr.bf16.mxu0 0
      %889 = vmatpush1.bf16.msra.mxu0 %v867
      %890 = vmatprep.subr.bf16.mxu0 0
      %891 = vmatpush1.bf16.msra.mxu0 %v868
      %892 = vmatprep.subr.bf16.mxu0 0
      %893 = vmatpush1.bf16.msra.mxu0 %v869
      %894 = vmatprep.subr.bf16.mxu0 0
      %895 = vmatpush1.bf16.msra.mxu0 0
      %896 = vmatprep.subr.bf16.mxu0 0
      %897 = vmatpush1.bf16.msra.mxu0 0
      %898 = vmatprep.subr.bf16.mxu0 0
      %899 = vmatpush1.bf16.msra.mxu0 0
      %900 = vmatprep.subr.bf16.mxu0 0
      %901 = vmatpush1.bf16.msra.mxu0 0
      %902 = vmatprep.subr.bf16.mxu0 0
      %903 = vmatpush1.bf16.msra.mxu0 0
      %904 = vmatprep.subr.bf16.mxu0 0
      %905 = vmatpush1.bf16.msra.mxu0 0
      %906 = vmatprep.subr.bf16.mxu0 0
      %907 = vmatpush1.bf16.msra.mxu0 0
      %908 = vmatprep.subr.bf16.mxu0 0
      %909 = vmatpush1.bf16.msra.mxu0 0
      %910 = vmatprep.mubr.bf16.mxu0 0
      %911 = vmatmul.mubr.bf16.gmra.mrb[0].mxu0 %v816
      %v912 = vpop.f32.mrb[0].mxu0
      %v913 = vadd.f32 0.0, %v912
      %v914 = vpop.f32.mrb[0].mxu0
      %v915 = vpop.f32.mrb[0].mxu0
      %v916 = vadd.f32 0.0, %v915
      %v917 = vpop.f32.mrb[0].mxu0
      %918 = vmatprep.mubr.bf16.mxu0 0
      %919 = vmatmul.mubr.bf16.gmra.mrb[0].mxu0 %v818
      %v920 = vpop.f32.mrb[0].mxu0
      %v921 = vadd.f32 0.0, %v920
      %v922 = vpop.f32.mrb[0].mxu0
      %v923 = vpop.f32.mrb[0].mxu0
      %v924 = vadd.f32 0.0, %v923
      %v925 = vpop.f32.mrb[0].mxu0
      %926 = vmatprep.mubr.bf16.mxu0 0
      %927 = vmatmul.mubr.bf16.gmra.mrb[0].mxu0 %v820
      %v928 = vpop.f32.mrb[0].mxu0
      %v929 = vadd.f32 0.0, %v928
      %v930 = vpop.f32.mrb[0].mxu0
      %v931 = vpop.f32.mrb[0].mxu0
      %v932 = vadd.f32 0.0, %v931
      %v933 = vpop.f32.mrb[0].mxu0
      %934 = vmatprep.mubr.bf16.mxu0 0
      %935 = vmatmul.mubr.bf16.gmra.mrb[0].mxu0 %v822
      %v936 = vpop.f32.mrb[0].mxu0
      %v937 = vadd.f32 0.0, %v936
      %v938 = vpop.f32.mrb[0].mxu0
      %v939 = vpop.f32.mrb[0].mxu0
      %v940 = vadd.f32 0.0, %v939
      %v941 = vpop.f32.mrb[0].mxu0
      %942 = vmatprep.mubr.bf16.mxu0 0
      %943 = vmatmul.mubr.bf16.gmra.mrb[0].mxu0 %v824
      %v944 = vpop.f32.mrb[0].mxu0
      %v945 = vadd.f32 0.0, %v944
      %v946 = vpop.f32.mrb[0].mxu0
      %v947 = vpop.f32.mrb[0].mxu0
      %v948 = vadd.f32 0.0, %v947
      %v949 = vpop.f32.mrb[0].mxu0
      %950 = vdwg.mxu0
      %v951 = vadd.f32 %v749, %v913
      %v952 = vadd.f32 %v750, %v916
      %v953 = vadd.f32 %v751, %v921
      %v954 = vadd.f32 %v752, %v924
      %v955 = vadd.f32 %v753, %v929
      %v956 = vadd.f32 %v754, %v932
      %v957 = vadd.f32 %v755, %v937
      %v958 = vadd.f32 %v756, %v940
      %v959 = vadd.f32 %v757, %v945
      %v960 = vadd.f32 %v758, %v948
      %v961 = vld [vmem:[%s206 + $0x2c] sm:$0x3]
      %v962 = vld [vmem:[%s210 + $0x100] sm:$0xf]
      %v963 = vld [vmem:[%s210 + $0x104] sm:$0xf]
      %v964 = vld [vmem:[%s210 + $0x108] sm:$0xf]
      %v965 = vld [vmem:[%s210 + $0x10c] sm:$0xf]
      %v966 = vld [vmem:[%s210 + $0x110] sm:$0xf]
      %v967 = vld [vmem:[%s210 + $0x114] sm:$0xf]
      %v968 = vld [vmem:[%s210 + $0x118] sm:$0xf]
      %v969 = vld [vmem:[%s210 + $0x11c] sm:$0xf]
      %v970 = vld [vmem:[%s210 + $0x120] sm:$0xf]
      %v971 = vld [vmem:[%s210 + $0x124] sm:$0xf]
      %v972 = vld [vmem:[%s210 + $0x128] sm:$0xf]
      %v973 = vld [vmem:[%s210 + $0x12c] sm:$0xf]
      %v974 = vld [vmem:[%s210 + $0x130] sm:$0xf]
      %v975 = vld [vmem:[%s210 + $0x134] sm:$0xf]
      %v976 = vld [vmem:[%s210 + $0x138] sm:$0xf]
      %v977 = vld [vmem:[%s210 + $0x13c] sm:$0xf]
      %v979 = vunpack.c.l.b16 %v961
      %v980 = vpack.c.b16 %v979, %v979
      %vm981 = vsmask.f32 6400
      %v983 = vshrl.u32 %v808, 16
      %v985 = vrot.slane %v983, 1
      %v986 = vshll.u32 %v808, 16
      %v988 = vrot.slane %v986, 2
      %v989 = vor.u32 %v985, %v988
      %v991 = vshrl.u32 %v809, 16
      %v993 = vrot.slane %v991, 1
      %v994 = vshll.u32 %v809, 16
      %v996 = vrot.slane %v994, 2
      %v997 = vor.u32 %v993, %v996
      %v998 = vsel %vm981, %v989, %v997
      %v1000 = vshrl.u32 %v810, 16
      %v1002 = vrot.slane %v1000, 1
      %v1003 = vshll.u32 %v810, 16
      %v1005 = vrot.slane %v1003, 2
      %v1006 = vor.u32 %v1002, %v1005
      %v1007 = vsel %vm981, %v997, %v1006
      %v1009 = vshrl.u32 %v811, 16
      %v1011 = vrot.slane %v1009, 1
      %v1012 = vshll.u32 %v811, 16
      %v1014 = vrot.slane %v1012, 2
      %v1015 = vor.u32 %v1011, %v1014
      %v1016 = vsel %vm981, %v1006, %v1015
      %v1018 = vshrl.u32 %v812, 16
      %v1020 = vrot.slane %v1018, 1
      %v1021 = vshll.u32 %v812, 16
      %v1023 = vrot.slane %v1021, 2
      %v1024 = vor.u32 %v1020, %v1023
      %v1025 = vsel %vm981, %v1015, %v1024
      %v1027 = vshrl.u32 %v980, 16
      %v1029 = vrot.slane %v1027, 1
      %v1030 = vshll.u32 %v980, 16
      %v1032 = vrot.slane %v1030, 2
      %v1033 = vor.u32 %v1029, %v1032
      %v1034 = vsel %vm981, %v1024, %v1033
      %v1056 = vunpack.c.l.b16 %v962
      %v1057 = vunpack.c.l.b16 %v963
      %v1058 = vunpack.c.l.b16 %v964
      %v1059 = vunpack.c.l.b16 %v965
      %v1060 = vunpack.c.l.b16 %v966
      %v1061 = vunpack.c.l.b16 %v967
      %v1062 = vunpack.c.l.b16 %v968
      %v1063 = vunpack.c.l.b16 %v969
      %v1064 = vunpack.c.l.b16 %v970
      %v1065 = vunpack.c.l.b16 %v971
      %v1066 = vunpack.c.l.b16 %v972
      %v1067 = vunpack.c.l.b16 %v973
      %v1068 = vunpack.c.l.b16 %v974
      %v1069 = vunpack.c.l.b16 %v975
      %v1070 = vunpack.c.l.b16 %v976
      %v1071 = vunpack.c.l.b16 %v977
      %v1072 = vpack.c.b16 %v1057, %v1056
      %v1073 = vpack.c.b16 %v1059, %v1058
      %v1074 = vpack.c.b16 %v1061, %v1060
      %v1075 = vpack.c.b16 %v1063, %v1062
      %v1076 = vpack.c.b16 %v1065, %v1064
      %v1077 = vpack.c.b16 %v1067, %v1066
      %v1078 = vpack.c.b16 %v1069, %v1068
      %v1079 = vpack.c.b16 %v1071, %v1070
      %1088 = vmatprep.subr.bf16.mxu0 0
      %1089 = vmatpush1.bf16.msra.mxu0 %v1072
      %1090 = vmatprep.subr.bf16.mxu0 0
      %1091 = vmatpush1.bf16.msra.mxu0 %v1073
      %1092 = vmatprep.subr.bf16.mxu0 0
      %1093 = vmatpush1.bf16.msra.mxu0 %v1074
      %1094 = vmatprep.subr.bf16.mxu0 0
      %1095 = vmatpush1.bf16.msra.mxu0 %v1075
      %1096 = vmatprep.subr.bf16.mxu0 0
      %1097 = vmatpush1.bf16.msra.mxu0 %v1076
      %1098 = vmatprep.subr.bf16.mxu0 0
      %1099 = vmatpush1.bf16.msra.mxu0 %v1077
      %1100 = vmatprep.subr.bf16.mxu0 0
      %1101 = vmatpush1.bf16.msra.mxu0 %v1078
      %1102 = vmatprep.subr.bf16.mxu0 0
      %1103 = vmatpush1.bf16.msra.mxu0 %v1079
      %1104 = vmatprep.subr.bf16.mxu0 0
      %1105 = vmatpush1.bf16.msra.mxu0 0
      %1106 = vmatprep.subr.bf16.mxu0 0
      %1107 = vmatpush1.bf16.msra.mxu0 0
      %1108 = vmatprep.subr.bf16.mxu0 0
      %1109 = vmatpush1.bf16.msra.mxu0 0
      %1110 = vmatprep.subr.bf16.mxu0 0
      %1111 = vmatpush1.bf16.msra.mxu0 0
      %1112 = vmatprep.subr.bf16.mxu0 0
      %1113 = vmatpush1.bf16.msra.mxu0 0
      %1114 = vmatprep.subr.bf16.mxu0 0
      %1115 = vmatpush1.bf16.msra.mxu0 0
      %1116 = vmatprep.subr.bf16.mxu0 0
      %1117 = vmatpush1.bf16.msra.mxu0 0
      %1118 = vmatprep.subr.bf16.mxu0 0
      %1119 = vmatpush1.bf16.msra.mxu0 0
      %1120 = vmatprep.mubr.bf16.mxu0 0
      %1121 = vmatmul.mubr.bf16.gmra.mrb[0].mxu0 %v998
      %v1122 = vpop.f32.mrb[0].mxu0
      %v1123 = vadd.f32 0.0, %v1122
      %v1124 = vpop.f32.mrb[0].mxu0
      %v1125 = vpop.f32.mrb[0].mxu0
      %v1126 = vadd.f32 0.0, %v1125
      %v1127 = vpop.f32.mrb[0].mxu0
      %1128 = vmatprep.mubr.bf16.mxu0 0
      %1129 = vmatmul.mubr.bf16.gmra.mrb[0].mxu0 %v1007
      %v1130 = vpop.f32.mrb[0].mxu0
      %v1131 = vadd.f32 0.0, %v1130
      %v1132 = vpop.f32.mrb[0].mxu0
      %v1133 = vpop.f32.mrb[0].mxu0
      %v1134 = vadd.f32 0.0, %v1133
      %v1135 = vpop.f32.mrb[0].mxu0
      %1136 = vmatprep.mubr.bf16.mxu0 0
      %1137 = vmatmul.mubr.bf16.gmra.mrb[0].mxu0 %v1016
      %v1138 = vpop.f32.mrb[0].mxu0
      %v1139 = vadd.f32 0.0, %v1138
      %v1140 = vpop.f32.mrb[0].mxu0
      %v1141 = vpop.f32.mrb[0].mxu0
      %v1142 = vadd.f32 0.0, %v1141
      %v1143 = vpop.f32.mrb[0].mxu0
      %1144 = vmatprep.mubr.bf16.mxu0 0
      %1145 = vmatmul.mubr.bf16.gmra.mrb[0].mxu0 %v1025
      %v1146 = vpop.f32.mrb[0].mxu0
      %v1147 = vadd.f32 0.0, %v1146
      %v1148 = vpop.f32.mrb[0].mxu0
      %v1149 = vpop.f32.mrb[0].mxu0
      %v1150 = vadd.f32 0.0, %v1149
      %v1151 = vpop.f32.mrb[0].mxu0
      %1152 = vmatprep.mubr.bf16.mxu0 0
      %1153 = vmatmul.mubr.bf16.gmra.mrb[0].mxu0 %v1034
      %v1154 = vpop.f32.mrb[0].mxu0
      %v1155 = vadd.f32 0.0, %v1154
      %v1156 = vpop.f32.mrb[0].mxu0
      %v1157 = vpop.f32.mrb[0].mxu0
      %v1158 = vadd.f32 0.0, %v1157
      %v1159 = vpop.f32.mrb[0].mxu0
      %1160 = vdwg.mxu0
      %v1161 = vadd.f32 %v951, %v1123
      %v1162 = vadd.f32 %v952, %v1126
      %v1163 = vadd.f32 %v953, %v1131
      %v1164 = vadd.f32 %v954, %v1134
      %v1165 = vadd.f32 %v955, %v1139
      %v1166 = vadd.f32 %v956, %v1142
      %v1167 = vadd.f32 %v957, %v1147
      %v1168 = vadd.f32 %v958, %v1150
      %v1169 = vadd.f32 %v959, %v1155
      %v1170 = vadd.f32 %v960, %v1158
      %v1171 = vld [vmem:[%s206 + $0x4] sm:$0xc]
      %v1172 = vld [vmem:[%s210 + $0x140] sm:$0xf]
      %v1173 = vld [vmem:[%s210 + $0x144] sm:$0xf]
      %v1174 = vld [vmem:[%s210 + $0x148] sm:$0xf]
      %v1175 = vld [vmem:[%s210 + $0x14c] sm:$0xf]
      %v1176 = vld [vmem:[%s210 + $0x150] sm:$0xf]
      %v1177 = vld [vmem:[%s210 + $0x154] sm:$0xf]
      %v1178 = vld [vmem:[%s210 + $0x158] sm:$0xf]
      %v1179 = vld [vmem:[%s210 + $0x15c] sm:$0xf]
      %v1180 = vld [vmem:[%s210 + $0x160] sm:$0xf]
      %v1181 = vld [vmem:[%s210 + $0x164] sm:$0xf]
      %v1182 = vld [vmem:[%s210 + $0x168] sm:$0xf]
      %v1183 = vld [vmem:[%s210 + $0x16c] sm:$0xf]
      %v1184 = vld [vmem:[%s210 + $0x170] sm:$0xf]
      %v1185 = vld [vmem:[%s210 + $0x174] sm:$0xf]
      %v1186 = vld [vmem:[%s210 + $0x178] sm:$0xf]
      %v1187 = vld [vmem:[%s210 + $0x17c] sm:$0xf]
      %v1189 = vunpack.c.l.b16 %v1171
      %v1190 = vpack.c.b16 %v798, %v1189
      %vm1191 = vcmask 1045504
      %v1192 = vrot.slane %v1190, 2
      %v1193 = vrot.slane %v809, 2
      %v1194 = vsel %vm1191, %v1192, %v1193
      %v1195 = vrot.slane %v810, 2
      %v1196 = vsel %vm1191, %v1193, %v1195
      %v1197 = vrot.slane %v811, 2
      %v1198 = vsel %vm1191, %v1195, %v1197
      %v1199 = vrot.slane %v812, 2
      %v1200 = vsel %vm1191, %v1197, %v1199
      %v1201 = vrot.slane %v980, 2
      %v1202 = vsel %vm1191, %v1199, %v1201
      %v1224 = vunpack.c.l.b16 %v1172
      %v1225 = vunpack.c.l.b16 %v1173
      %v1226 = vunpack.c.l.b16 %v1174
      %v1227 = vunpack.c.l.b16 %v1175
      %v1228 = vunpack.c.l.b16 %v1176
      %v1229 = vunpack.c.l.b16 %v1177
      %v1230 = vunpack.c.l.b16 %v1178
      %v1231 = vunpack.c.l.b16 %v1179
      %v1232 = vunpack.c.l.b16 %v1180
      %v1233 = vunpack.c.l.b16 %v1181
      %v1234 = vunpack.c.l.b16 %v1182
      %v1235 = vunpack.c.l.b16 %v1183
      %v1236 = vunpack.c.l.b16 %v1184
      %v1237 = vunpack.c.l.b16 %v1185
      %v1238 = vunpack.c.l.b16 %v1186
      %v1239 = vunpack.c.l.b16 %v1187
      %v1240 = vpack.c.b16 %v1225, %v1224
      %v1241 = vpack.c.b16 %v1227, %v1226
      %v1242 = vpack.c.b16 %v1229, %v1228
      %v1243 = vpack.c.b16 %v1231, %v1230
      %v1244 = vpack.c.b16 %v1233, %v1232
      %v1245 = vpack.c.b16 %v1235, %v1234
      %v1246 = vpack.c.b16 %v1237, %v1236
      %v1247 = vpack.c.b16 %v1239, %v1238
      %1256 = vmatprep.subr.bf16.mxu0 0
      %1257 = vmatpush1.bf16.msra.mxu0 %v1240
      %1258 = vmatprep.subr.bf16.mxu0 0
      %1259 = vmatpush1.bf16.msra.mxu0 %v1241
      %1260 = vmatprep.subr.bf16.mxu0 0
      %1261 = vmatpush1.bf16.msra.mxu0 %v1242
      %1262 = vmatprep.subr.bf16.mxu0 0
      %1263 = vmatpush1.bf16.msra.mxu0 %v1243
      %1264 = vmatprep.subr.bf16.mxu0 0
      %1265 = vmatpush1.bf16.msra.mxu0 %v1244
      %1266 = vmatprep.subr.bf16.mxu0 0
      %1267 = vmatpush1.bf16.msra.mxu0 %v1245
      %1268 = vmatprep.subr.bf16.mxu0 0
      %1269 = vmatpush1.bf16.msra.mxu0 %v1246
      %1270 = vmatprep.subr.bf16.mxu0 0
      %1271 = vmatpush1.bf16.msra.mxu0 %v1247
      %1272 = vmatprep.subr.bf16.mxu0 0
      %1273 = vmatpush1.bf16.msra.mxu0 0
      %1274 = vmatprep.subr.bf16.mxu0 0
      %1275 = vmatpush1.bf16.msra.mxu0 0
      %1276 = vmatprep.subr.bf16.mxu0 0
      %1277 = vmatpush1.bf16.msra.mxu0 0
      %1278 = vmatprep.subr.bf16.mxu0 0
      %1279 = vmatpush1.bf16.msra.mxu0 0
      %1280 = vmatprep.subr.bf16.mxu0 0
      %1281 = vmatpush1.bf16.msra.mxu0 0
      %1282 = vmatprep.subr.bf16.mxu0 0
      %1283 = vmatpush1.bf16.msra.mxu0 0
      %1284 = vmatprep.subr.bf16.mxu0 0
      %1285 = vmatpush1.bf16.msra.mxu0 0
      %1286 = vmatprep.subr.bf16.mxu0 0
      %1287 = vmatpush1.bf16.msra.mxu0 0
      %1288 = vmatprep.mubr.bf16.mxu0 0
      %1289 = vmatmul.mubr.bf16.gmra.mrb[0].mxu0 %v1194
      %v1290 = vpop.f32.mrb[0].mxu0
      %v1291 = vadd.f32 0.0, %v1290
      %v1292 = vpop.f32.mrb[0].mxu0
      %v1293 = vpop.f32.mrb[0].mxu0
      %v1294 = vadd.f32 0.0, %v1293
      %v1295 = vpop.f32.mrb[0].mxu0
      %1296 = vmatprep.mubr.bf16.mxu0 0
      %1297 = vmatmul.mubr.bf16.gmra.mrb[0].mxu0 %v1196
      %v1298 = vpop.f32.mrb[0].mxu0
      %v1299 = vadd.f32 0.0, %v1298
      %v1300 = vpop.f32.mrb[0].mxu0
      %v1301 = vpop.f32.mrb[0].mxu0
      %v1302 = vadd.f32 0.0, %v1301
      %v1303 = vpop.f32.mrb[0].mxu0
      %1304 = vmatprep.mubr.bf16.mxu0 0
      %1305 = vmatmul.mubr.bf16.gmra.mrb[0].mxu0 %v1198
      %v1306 = vpop.f32.mrb[0].mxu0
      %v1307 = vadd.f32 0.0, %v1306
      %v1308 = vpop.f32.mrb[0].mxu0
      %v1309 = vpop.f32.mrb[0].mxu0
      %v1310 = vadd.f32 0.0, %v1309
      %v1311 = vpop.f32.mrb[0].mxu0
      %1312 = vmatprep.mubr.bf16.mxu0 0
      %1313 = vmatmul.mubr.bf16.gmra.mrb[0].mxu0 %v1200
      %v1314 = vpop.f32.mrb[0].mxu0
      %v1315 = vadd.f32 0.0, %v1314
      %v1316 = vpop.f32.mrb[0].mxu0
      %v1317 = vpop.f32.mrb[0].mxu0
      %v1318 = vadd.f32 0.0, %v1317
      %v1319 = vpop.f32.mrb[0].mxu0
      %1320 = vmatprep.mubr.bf16.mxu0 0
      %1321 = vmatmul.mubr.bf16.gmra.mrb[0].mxu0 %v1202
      %v1322 = vpop.f32.mrb[0].mxu0
      %v1323 = vadd.f32 0.0, %v1322
      %v1324 = vpop.f32.mrb[0].mxu0
      %v1325 = vpop.f32.mrb[0].mxu0
      %v1326 = vadd.f32 0.0, %v1325
      %v1327 = vpop.f32.mrb[0].mxu0
      %1328 = vdwg.mxu0
      %v1329 = vadd.f32 %v1161, %v1291
      %v1330 = vadd.f32 %v1162, %v1294
      %v1331 = vadd.f32 %v1163, %v1299
      %v1332 = vadd.f32 %v1164, %v1302
      %v1333 = vadd.f32 %v1165, %v1307
      %v1334 = vadd.f32 %v1166, %v1310
      %v1335 = vadd.f32 %v1167, %v1315
      %v1336 = vadd.f32 %v1168, %v1318
      %v1337 = vadd.f32 %v1169, %v1323
      %v1338 = vadd.f32 %v1170, %v1326
      %v1339 = vld [vmem:[%s206 + $0x8] sm:$0xc]
      %v1340 = vld [vmem:[%s206 + $0xc] sm:$0xf]
      %v1341 = vld [vmem:[%s206 + $0x10] sm:$0xf]
      %v1342 = vld [vmem:[%s206 + $0x14] sm:$0xf]
      %v1343 = vld [vmem:[%s206 + $0x18] sm:$0xf]
      %v1344 = vld [vmem:[%s206 + $0x1c] sm:$0xf]
      %v1345 = vld [vmem:[%s206 + $0x20] sm:$0xf]
      %v1346 = vld [vmem:[%s206 + $0x24] sm:$0xf]
      %v1347 = vld [vmem:[%s206 + $0x28] sm:$0xf]
      %v1348 = vld [vmem:[%s206 + $0x2c] sm:$0xf]
      %v1349 = vld [vmem:[%s206 + $0x30] sm:$0x3]
      %v1350 = vld [vmem:[%s210 + $0x180] sm:$0xf]
      %v1351 = vld [vmem:[%s210 + $0x184] sm:$0xf]
      %v1352 = vld [vmem:[%s210 + $0x188] sm:$0xf]
      %v1353 = vld [vmem:[%s210 + $0x18c] sm:$0xf]
      %v1354 = vld [vmem:[%s210 + $0x190] sm:$0xf]
      %v1355 = vld [vmem:[%s210 + $0x194] sm:$0xf]
      %v1356 = vld [vmem:[%s210 + $0x198] sm:$0xf]
      %v1357 = vld [vmem:[%s210 + $0x19c] sm:$0xf]
      %v1358 = vld [vmem:[%s210 + $0x1a0] sm:$0xf]
      %v1359 = vld [vmem:[%s210 + $0x1a4] sm:$0xf]
      %v1360 = vld [vmem:[%s210 + $0x1a8] sm:$0xf]
      %v1361 = vld [vmem:[%s210 + $0x1ac] sm:$0xf]
      %v1362 = vld [vmem:[%s210 + $0x1b0] sm:$0xf]
      %v1363 = vld [vmem:[%s210 + $0x1b4] sm:$0xf]
      %v1364 = vld [vmem:[%s210 + $0x1b8] sm:$0xf]
      %v1365 = vld [vmem:[%s210 + $0x1bc] sm:$0xf]
      %v1377 = vunpack.c.l.b16 %v1339
      %v1378 = vunpack.c.l.b16 %v1340
      %v1379 = vunpack.c.l.b16 %v1341
      %v1380 = vunpack.c.l.b16 %v1342
      %v1381 = vunpack.c.l.b16 %v1343
      %v1382 = vunpack.c.l.b16 %v1344
      %v1383 = vunpack.c.l.b16 %v1345
      %v1384 = vunpack.c.l.b16 %v1346
      %v1385 = vunpack.c.l.b16 %v1347
      %v1386 = vunpack.c.l.b16 %v1348
      %v1387 = vunpack.c.l.b16 %v1349
      %v1388 = vpack.c.b16 %v1378, %v1377
      %v1389 = vpack.c.b16 %v1380, %v1379
      %v1390 = vpack.c.b16 %v1382, %v1381
      %v1391 = vpack.c.b16 %v1384, %v1383
      %v1392 = vpack.c.b16 %v1386, %v1385
      %v1393 = vpack.c.b16 %v1387, %v1387
      %v1394 = vrot.slane %v1388, 2
      %v1395 = vrot.slane %v1389, 2
      %v1396 = vsel %vm1191, %v1394, %v1395
      %v1397 = vrot.slane %v1390, 2
      %v1398 = vsel %vm1191, %v1395, %v1397
      %v1399 = vrot.slane %v1391, 2
      %v1400 = vsel %vm1191, %v1397, %v1399
      %v1401 = vrot.slane %v1392, 2
      %v1402 = vsel %vm1191, %v1399, %v1401
      %v1403 = vrot.slane %v1393, 2
      %v1404 = vsel %vm1191, %v1401, %v1403
      %v1426 = vunpack.c.l.b16 %v1350
      %v1427 = vunpack.c.l.b16 %v1351
      %v1428 = vunpack.c.l.b16 %v1352
      %v1429 = vunpack.c.l.b16 %v1353
      %v1430 = vunpack.c.l.b16 %v1354
      %v1431 = vunpack.c.l.b16 %v1355
      %v1432 = vunpack.c.l.b16 %v1356
      %v1433 = vunpack.c.l.b16 %v1357
      %v1434 = vunpack.c.l.b16 %v1358
      %v1435 = vunpack.c.l.b16 %v1359
      %v1436 = vunpack.c.l.b16 %v1360
      %v1437 = vunpack.c.l.b16 %v1361
      %v1438 = vunpack.c.l.b16 %v1362
      %v1439 = vunpack.c.l.b16 %v1363
      %v1440 = vunpack.c.l.b16 %v1364
      %v1441 = vunpack.c.l.b16 %v1365
      %v1442 = vpack.c.b16 %v1427, %v1426
      %v1443 = vpack.c.b16 %v1429, %v1428
      %v1444 = vpack.c.b16 %v1431, %v1430
      %v1445 = vpack.c.b16 %v1433, %v1432
      %v1446 = vpack.c.b16 %v1435, %v1434
      %v1447 = vpack.c.b16 %v1437, %v1436
      %v1448 = vpack.c.b16 %v1439, %v1438
      %v1449 = vpack.c.b16 %v1441, %v1440
      %1458 = vmatprep.subr.bf16.mxu0 0
      %1459 = vmatpush1.bf16.msra.mxu0 %v1442
      %1460 = vmatprep.subr.bf16.mxu0 0
      %1461 = vmatpush1.bf16.msra.mxu0 %v1443
      %1462 = vmatprep.subr.bf16.mxu0 0
      %1463 = vmatpush1.bf16.msra.mxu0 %v1444
      %1464 = vmatprep.subr.bf16.mxu0 0
      %1465 = vmatpush1.bf16.msra.mxu0 %v1445
      %1466 = vmatprep.subr.bf16.mxu0 0
      %1467 = vmatpush1.bf16.msra.mxu0 %v1446
      %1468 = vmatprep.subr.bf16.mxu0 0
      %1469 = vmatpush1.bf16.msra.mxu0 %v1447
      %1470 = vmatprep.subr.bf16.mxu0 0
      %1471 = vmatpush1.bf16.msra.mxu0 %v1448
      %1472 = vmatprep.subr.bf16.mxu0 0
      %1473 = vmatpush1.bf16.msra.mxu0 %v1449
      %1474 = vmatprep.subr.bf16.mxu0 0
      %1475 = vmatpush1.bf16.msra.mxu0 0
      %1476 = vmatprep.subr.bf16.mxu0 0
      %1477 = vmatpush1.bf16.msra.mxu0 0
      %1478 = vmatprep.subr.bf16.mxu0 0
      %1479 = vmatpush1.bf16.msra.mxu0 0
      %1480 = vmatprep.subr.bf16.mxu0 0
      %1481 = vmatpush1.bf16.msra.mxu0 0
      %1482 = vmatprep.subr.bf16.mxu0 0
      %1483 = vmatpush1.bf16.msra.mxu0 0
      %1484 = vmatprep.subr.bf16.mxu0 0
      %1485 = vmatpush1.bf16.msra.mxu0 0
      %1486 = vmatprep.subr.bf16.mxu0 0
      %1487 = vmatpush1.bf16.msra.mxu0 0
      %1488 = vmatprep.subr.bf16.mxu0 0
      %1489 = vmatpush1.bf16.msra.mxu0 0
      %1490 = vmatprep.mubr.bf16.mxu0 0
      %1491 = vmatmul.mubr.bf16.gmra.mrb[0].mxu0 %v1396
      %v1492 = vpop.f32.mrb[0].mxu0
      %v1493 = vadd.f32 0.0, %v1492
      %v1494 = vpop.f32.mrb[0].mxu0
      %v1495 = vpop.f32.mrb[0].mxu0
      %v1496 = vadd.f32 0.0, %v1495
      %v1497 = vpop.f32.mrb[0].mxu0
      %1498 = vmatprep.mubr.bf16.mxu0 0
      %1499 = vmatmul.mubr.bf16.gmra.mrb[0].mxu0 %v1398
      %v1500 = vpop.f32.mrb[0].mxu0
      %v1501 = vadd.f32 0.0, %v1500
      %v1502 = vpop.f32.mrb[0].mxu0
      %v1503 = vpop.f32.mrb[0].mxu0
      %v1504 = vadd.f32 0.0, %v1503
      %v1505 = vpop.f32.mrb[0].mxu0
      %1506 = vmatprep.mubr.bf16.mxu0 0
      %1507 = vmatmul.mubr.bf16.gmra.mrb[0].mxu0 %v1400
      %v1508 = vpop.f32.mrb[0].mxu0
      %v1509 = vadd.f32 0.0, %v1508
      %v1510 = vpop.f32.mrb[0].mxu0
      %v1511 = vpop.f32.mrb[0].mxu0
      %v1512 = vadd.f32 0.0, %v1511
      %v1513 = vpop.f32.mrb[0].mxu0
      %1514 = vmatprep.mubr.bf16.mxu0 0
      %1515 = vmatmul.mubr.bf16.gmra.mrb[0].mxu0 %v1402
      %v1516 = vpop.f32.mrb[0].mxu0
      %v1517 = vadd.f32 0.0, %v1516
      %v1518 = vpop.f32.mrb[0].mxu0
      %v1519 = vpop.f32.mrb[0].mxu0
      %v1520 = vadd.f32 0.0, %v1519
      %v1521 = vpop.f32.mrb[0].mxu0
      %1522 = vmatprep.mubr.bf16.mxu0 0
      %1523 = vmatmul.mubr.bf16.gmra.mrb[0].mxu0 %v1404
      %v1524 = vpop.f32.mrb[0].mxu0
      %v1525 = vadd.f32 0.0, %v1524
      %v1526 = vpop.f32.mrb[0].mxu0
      %v1527 = vpop.f32.mrb[0].mxu0
      %v1528 = vadd.f32 0.0, %v1527
      %v1529 = vpop.f32.mrb[0].mxu0
      %1530 = vdwg.mxu0
      %v1531 = vadd.f32 %v1329, %v1493
      %v1532 = vadd.f32 %v1330, %v1496
      %v1533 = vadd.f32 %v1331, %v1501
      %v1534 = vadd.f32 %v1332, %v1504
      %v1535 = vadd.f32 %v1333, %v1509
      %v1536 = vadd.f32 %v1334, %v1512
      %v1537 = vadd.f32 %v1335, %v1517
      %v1538 = vadd.f32 %v1336, %v1520
      %v1539 = vadd.f32 %v1337, %v1525
      %v1540 = vadd.f32 %v1338, %v1528
      %v1541 = vld [vmem:[%s206 + $0x30] sm:$0x7]
      %v1542 = vld [vmem:[%s210 + $0x1c0] sm:$0xf]
      %v1543 = vld [vmem:[%s210 + $0x1c4] sm:$0xf]
      %v1544 = vld [vmem:[%s210 + $0x1c8] sm:$0xf]
      %v1545 = vld [vmem:[%s210 + $0x1cc] sm:$0xf]
      %v1546 = vld [vmem:[%s210 + $0x1d0] sm:$0xf]
      %v1547 = vld [vmem:[%s210 + $0x1d4] sm:$0xf]
      %v1548 = vld [vmem:[%s210 + $0x1d8] sm:$0xf]
      %v1549 = vld [vmem:[%s210 + $0x1dc] sm:$0xf]
      %v1550 = vld [vmem:[%s210 + $0x1e0] sm:$0xf]
      %v1551 = vld [vmem:[%s210 + $0x1e4] sm:$0xf]
      %v1552 = vld [vmem:[%s210 + $0x1e8] sm:$0xf]
      %v1553 = vld [vmem:[%s210 + $0x1ec] sm:$0xf]
      %v1554 = vld [vmem:[%s210 + $0x1f0] sm:$0xf]
      %v1555 = vld [vmem:[%s210 + $0x1f4] sm:$0xf]
      %v1556 = vld [vmem:[%s210 + $0x1f8] sm:$0xf]
      %v1557 = vld [vmem:[%s210 + $0x1fc] sm:$0xf]
      %v1559 = vunpack.c.l.b16 %v1541
      %v1560 = vpack.c.b16 %v1559, %v1559
      %vm1561 = vsmask.f32 5376
      %v1563 = vshrl.u32 %v1388, 16
      %v1565 = vrot.slane %v1563, 2
      %v1566 = vshll.u32 %v1388, 16
      %v1568 = vrot.slane %v1566, 3
      %v1569 = vor.u32 %v1565, %v1568
      %v1571 = vshrl.u32 %v1389, 16
      %v1573 = vrot.slane %v1571, 2
      %v1574 = vshll.u32 %v1389, 16
      %v1576 = vrot.slane %v1574, 3
      %v1577 = vor.u32 %v1573, %v1576
      %v1578 = vsel %vm1561, %v1569, %v1577
      %v1580 = vshrl.u32 %v1390, 16
      %v1582 = vrot.slane %v1580, 2
      %v1583 = vshll.u32 %v1390, 16
      %v1585 = vrot.slane %v1583, 3
      %v1586 = vor.u32 %v1582, %v1585
      %v1587 = vsel %vm1561, %v1577, %v1586
      %v1589 = vshrl.u32 %v1391, 16
      %v1591 = vrot.slane %v1589, 2
      %v1592 = vshll.u32 %v1391, 16
      %v1594 = vrot.slane %v1592, 3
      %v1595 = vor.u32 %v1591, %v1594
      %v1596 = vsel %vm1561, %v1586, %v1595
      %v1598 = vshrl.u32 %v1392, 16
      %v1600 = vrot.slane %v1598, 2
      %v1601 = vshll.u32 %v1392, 16
      %v1603 = vrot.slane %v1601, 3
      %v1604 = vor.u32 %v1600, %v1603
      %v1605 = vsel %vm1561, %v1595, %v1604
      %v1607 = vshrl.u32 %v1560, 16
      %v1609 = vrot.slane %v1607, 2
      %v1610 = vshll.u32 %v1560, 16
      %v1612 = vrot.slane %v1610, 3
      %v1613 = vor.u32 %v1609, %v1612
      %v1614 = vsel %vm1561, %v1604, %v1613
      %v1636 = vunpack.c.l.b16 %v1542
      %v1637 = vunpack.c.l.b16 %v1543
      %v1638 = vunpack.c.l.b16 %v1544
      %v1639 = vunpack.c.l.b16 %v1545
      %v1640 = vunpack.c.l.b16 %v1546
      %v1641 = vunpack.c.l.b16 %v1547
      %v1642 = vunpack.c.l.b16 %v1548
      %v1643 = vunpack.c.l.b16 %v1549
      %v1644 = vunpack.c.l.b16 %v1550
      %v1645 = vunpack.c.l.b16 %v1551
      %v1646 = vunpack.c.l.b16 %v1552
      %v1647 = vunpack.c.l.b16 %v1553
      %v1648 = vunpack.c.l.b16 %v1554
      %v1649 = vunpack.c.l.b16 %v1555
      %v1650 = vunpack.c.l.b16 %v1556
      %v1651 = vunpack.c.l.b16 %v1557
      %v1652 = vpack.c.b16 %v1637, %v1636
      %v1653 = vpack.c.b16 %v1639, %v1638
      %v1654 = vpack.c.b16 %v1641, %v1640
      %v1655 = vpack.c.b16 %v1643, %v1642
      %v1656 = vpack.c.b16 %v1645, %v1644
      %v1657 = vpack.c.b16 %v1647, %v1646
      %v1658 = vpack.c.b16 %v1649, %v1648
      %v1659 = vpack.c.b16 %v1651, %v1650
      %1668 = vmatprep.subr.bf16.mxu0 0
      %1669 = vmatpush1.bf16.msra.mxu0 %v1652
      %1670 = vmatprep.subr.bf16.mxu0 0
      %1671 = vmatpush1.bf16.msra.mxu0 %v1653
      %1672 = vmatprep.subr.bf16.mxu0 0
      %1673 = vmatpush1.bf16.msra.mxu0 %v1654
      %1674 = vmatprep.subr.bf16.mxu0 0
      %1675 = vmatpush1.bf16.msra.mxu0 %v1655
      %1676 = vmatprep.subr.bf16.mxu0 0
      %1677 = vmatpush1.bf16.msra.mxu0 %v1656
      %1678 = vmatprep.subr.bf16.mxu0 0
      %1679 = vmatpush1.bf16.msra.mxu0 %v1657
      %1680 = vmatprep.subr.bf16.mxu0 0
      %1681 = vmatpush1.bf16.msra.mxu0 %v1658
      %1682 = vmatprep.subr.bf16.mxu0 0
      %1683 = vmatpush1.bf16.msra.mxu0 %v1659
      %1684 = vmatprep.subr.bf16.mxu0 0
      %1685 = vmatpush1.bf16.msra.mxu0 0
      %1686 = vmatprep.subr.bf16.mxu0 0
      %1687 = vmatpush1.bf16.msra.mxu0 0
      %1688 = vmatprep.subr.bf16.mxu0 0
      %1689 = vmatpush1.bf16.msra.mxu0 0
      %1690 = vmatprep.subr.bf16.mxu0 0
      %1691 = vmatpush1.bf16.msra.mxu0 0
      %1692 = vmatprep.subr.bf16.mxu0 0
      %1693 = vmatpush1.bf16.msra.mxu0 0
      %1694 = vmatprep.subr.bf16.mxu0 0
      %1695 = vmatpush1.bf16.msra.mxu0 0
      %1696 = vmatprep.subr.bf16.mxu0 0
      %1697 = vmatpush1.bf16.msra.mxu0 0
      %1698 = vmatprep.subr.bf16.mxu0 0
      %1699 = vmatpush1.bf16.msra.mxu0 0
      %1700 = vmatprep.mubr.bf16.mxu0 0
      %1701 = vmatmul.mubr.bf16.gmra.mrb[0].mxu0 %v1578
      %v1702 = vpop.f32.mrb[0].mxu0
      %v1703 = vadd.f32 0.0, %v1702
      %v1704 = vpop.f32.mrb[0].mxu0
      %v1705 = vpop.f32.mrb[0].mxu0
      %v1706 = vadd.f32 0.0, %v1705
      %v1707 = vpop.f32.mrb[0].mxu0
      %1708 = vmatprep.mubr.bf16.mxu0 0
      %1709 = vmatmul.mubr.bf16.gmra.mrb[0].mxu0 %v1587
      %v1710 = vpop.f32.mrb[0].mxu0
      %v1711 = vadd.f32 0.0, %v1710
      %v1712 = vpop.f32.mrb[0].mxu0
      %v1713 = vpop.f32.mrb[0].mxu0
      %v1714 = vadd.f32 0.0, %v1713
      %v1715 = vpop.f32.mrb[0].mxu0
      %1716 = vmatprep.mubr.bf16.mxu0 0
      %1717 = vmatmul.mubr.bf16.gmra.mrb[0].mxu0 %v1596
      %v1718 = vpop.f32.mrb[0].mxu0
      %v1719 = vadd.f32 0.0, %v1718
      %v1720 = vpop.f32.mrb[0].mxu0
      %v1721 = vpop.f32.mrb[0].mxu0
      %v1722 = vadd.f32 0.0, %v1721
      %v1723 = vpop.f32.mrb[0].mxu0
      %1724 = vmatprep.mubr.bf16.mxu0 0
      %1725 = vmatmul.mubr.bf16.gmra.mrb[0].mxu0 %v1605
      %v1726 = vpop.f32.mrb[0].mxu0
      %v1727 = vadd.f32 0.0, %v1726
      %v1728 = vpop.f32.mrb[0].mxu0
      %v1729 = vpop.f32.mrb[0].mxu0
      %v1730 = vadd.f32 0.0, %v1729
      %v1731 = vpop.f32.mrb[0].mxu0
      %1732 = vmatprep.mubr.bf16.mxu0 0
      %1733 = vmatmul.mubr.bf16.gmra.mrb[0].mxu0 %v1614
      %v1734 = vpop.f32.mrb[0].mxu0
      %v1735 = vadd.f32 0.0, %v1734
      %v1736 = vpop.f32.mrb[0].mxu0
      %v1737 = vpop.f32.mrb[0].mxu0
      %v1738 = vadd.f32 0.0, %v1737
      %v1739 = vpop.f32.mrb[0].mxu0
      %1740 = vdwg.mxu0
      %v1741 = vadd.f32 %v1531, %v1703
      %v1742 = vadd.f32 %v1532, %v1706
      %v1743 = vadd.f32 %v1533, %v1711
      %v1744 = vadd.f32 %v1534, %v1714
      %v1745 = vadd.f32 %v1535, %v1719
      %v1746 = vadd.f32 %v1536, %v1722
      %v1747 = vadd.f32 %v1537, %v1727
      %v1748 = vadd.f32 %v1538, %v1730
      %v1749 = vadd.f32 %v1539, %v1735
      %v1750 = vadd.f32 %v1540, %v1738
      %v1751 = vld [vmem:[%s206 + $0x8] sm:$0x8]
      %v1752 = vld [vmem:[%s210 + $0x200] sm:$0xf]
      %v1753 = vld [vmem:[%s210 + $0x204] sm:$0xf]
      %v1754 = vld [vmem:[%s210 + $0x208] sm:$0xf]
      %v1755 = vld [vmem:[%s210 + $0x20c] sm:$0xf]
      %v1756 = vld [vmem:[%s210 + $0x210] sm:$0xf]
      %v1757 = vld [vmem:[%s210 + $0x214] sm:$0xf]
      %v1758 = vld [vmem:[%s210 + $0x218] sm:$0xf]
      %v1759 = vld [vmem:[%s210 + $0x21c] sm:$0xf]
      %v1760 = vld [vmem:[%s210 + $0x220] sm:$0xf]
      %v1761 = vld [vmem:[%s210 + $0x224] sm:$0xf]
      %v1762 = vld [vmem:[%s210 + $0x228] sm:$0xf]
      %v1763 = vld [vmem:[%s210 + $0x22c] sm:$0xf]
      %v1764 = vld [vmem:[%s210 + $0x230] sm:$0xf]
      %v1765 = vld [vmem:[%s210 + $0x234] sm:$0xf]
      %v1766 = vld [vmem:[%s210 + $0x238] sm:$0xf]
      %v1767 = vld [vmem:[%s210 + $0x23c] sm:$0xf]
      %v1769 = vunpack.c.l.b16 %v1751
      %v1770 = vpack.c.b16 %v1378, %v1769
      %vm1771 = vcmask 1044480
      %v1772 = vrot.slane %v1770, 3
      %v1773 = vrot.slane %v1389, 3
      %v1774 = vsel %vm1771, %v1772, %v1773
      %v1775 = vrot.slane %v1390, 3
      %v1776 = vsel %vm1771, %v1773, %v1775
      %v1777 = vrot.slane %v1391, 3
      %v1778 = vsel %vm1771, %v1775, %v1777
      %v1779 = vrot.slane %v1392, 3
      %v1780 = vsel %vm1771, %v1777, %v1779
      %v1781 = vrot.slane %v1560, 3
      %v1782 = vsel %vm1771, %v1779, %v1781
      %v1804 = vunpack.c.l.b16 %v1752
      %v1805 = vunpack.c.l.b16 %v1753
      %v1806 = vunpack.c.l.b16 %v1754
      %v1807 = vunpack.c.l.b16 %v1755
      %v1808 = vunpack.c.l.b16 %v1756
      %v1809 = vunpack.c.l.b16 %v1757
      %v1810 = vunpack.c.l.b16 %v1758
      %v1811 = vunpack.c.l.b16 %v1759
      %v1812 = vunpack.c.l.b16 %v1760
      %v1813 = vunpack.c.l.b16 %v1761
      %v1814 = vunpack.c.l.b16 %v1762
      %v1815 = vunpack.c.l.b16 %v1763
      %v1816 = vunpack.c.l.b16 %v1764
      %v1817 = vunpack.c.l.b16 %v1765
      %v1818 = vunpack.c.l.b16 %v1766
      %v1819 = vunpack.c.l.b16 %v1767
      %v1820 = vpack.c.b16 %v1805, %v1804
      %v1821 = vpack.c.b16 %v1807, %v1806
      %v1822 = vpack.c.b16 %v1809, %v1808
      %v1823 = vpack.c.b16 %v1811, %v1810
      %v1824 = vpack.c.b16 %v1813, %v1812
      %v1825 = vpack.c.b16 %v1815, %v1814
      %v1826 = vpack.c.b16 %v1817, %v1816
      %v1827 = vpack.c.b16 %v1819, %v1818
      %1836 = vmatprep.subr.bf16.mxu0 0
      %1837 = vmatpush1.bf16.msra.mxu0 %v1820
      %1838 = vmatprep.subr.bf16.mxu0 0
      %1839 = vmatpush1.bf16.msra.mxu0 %v1821
      %1840 = vmatprep.subr.bf16.mxu0 0
      %1841 = vmatpush1.bf16.msra.mxu0 %v1822
      %1842 = vmatprep.subr.bf16.mxu0 0
      %1843 = vmatpush1.bf16.msra.mxu0 %v1823
      %1844 = vmatprep.subr.bf16.mxu0 0
      %1845 = vmatpush1.bf16.msra.mxu0 %v1824
      %1846 = vmatprep.subr.bf16.mxu0 0
      %1847 = vmatpush1.bf16.msra.mxu0 %v1825
      %1848 = vmatprep.subr.bf16.mxu0 0
      %1849 = vmatpush1.bf16.msra.mxu0 %v1826
      %1850 = vmatprep.subr.bf16.mxu0 0
      %1851 = vmatpush1.bf16.msra.mxu0 %v1827
      %1852 = vmatprep.subr.bf16.mxu0 0
      %1853 = vmatpush1.bf16.msra.mxu0 0
      %1854 = vmatprep.subr.bf16.mxu0 0
      %1855 = vmatpush1.bf16.msra.mxu0 0
      %1856 = vmatprep.subr.bf16.mxu0 0
      %1857 = vmatpush1.bf16.msra.mxu0 0
      %1858 = vmatprep.subr.bf16.mxu0 0
      %1859 = vmatpush1.bf16.msra.mxu0 0
      %1860 = vmatprep.subr.bf16.mxu0 0
      %1861 = vmatpush1.bf16.msra.mxu0 0
      %1862 = vmatprep.subr.bf16.mxu0 0
      %1863 = vmatpush1.bf16.msra.mxu0 0
      %1864 = vmatprep.subr.bf16.mxu0 0
      %1865 = vmatpush1.bf16.msra.mxu0 0
      %1866 = vmatprep.subr.bf16.mxu0 0
      %1867 = vmatpush1.bf16.msra.mxu0 0
      %1868 = vmatprep.mubr.bf16.mxu0 0
      %1869 = vmatmul.mubr.bf16.gmra.mrb[0].mxu0 %v1774
      %v1870 = vpop.f32.mrb[0].mxu0
      %v1871 = vadd.f32 0.0, %v1870
      %v1872 = vpop.f32.mrb[0].mxu0
      %v1873 = vpop.f32.mrb[0].mxu0
      %v1874 = vadd.f32 0.0, %v1873
      %v1875 = vpop.f32.mrb[0].mxu0
      %1876 = vmatprep.mubr.bf16.mxu0 0
      %1877 = vmatmul.mubr.bf16.gmra.mrb[0].mxu0 %v1776
      %v1878 = vpop.f32.mrb[0].mxu0
      %v1879 = vadd.f32 0.0, %v1878
      %v1880 = vpop.f32.mrb[0].mxu0
      %v1881 = vpop.f32.mrb[0].mxu0
      %v1882 = vadd.f32 0.0, %v1881
      %v1883 = vpop.f32.mrb[0].mxu0
      %1884 = vmatprep.mubr.bf16.mxu0 0
      %1885 = vmatmul.mubr.bf16.gmra.mrb[0].mxu0 %v1778
      %v1886 = vpop.f32.mrb[0].mxu0
      %v1887 = vadd.f32 0.0, %v1886
      %v1888 = vpop.f32.mrb[0].mxu0
      %v1889 = vpop.f32.mrb[0].mxu0
      %v1890 = vadd.f32 0.0, %v1889
      %v1891 = vpop.f32.mrb[0].mxu0
      %1892 = vmatprep.mubr.bf16.mxu0 0
      %1893 = vmatmul.mubr.bf16.gmra.mrb[0].mxu0 %v1780
      %v1894 = vpop.f32.mrb[0].mxu0
      %v1895 = vadd.f32 0.0, %v1894
      %v1896 = vpop.f32.mrb[0].mxu0
      %v1897 = vpop.f32.mrb[0].mxu0
      %v1898 = vadd.f32 0.0, %v1897
      %v1899 = vpop.f32.mrb[0].mxu0
      %1900 = vmatprep.mubr.bf16.mxu0 0
      %1901 = vmatmul.mubr.bf16.gmra.mrb[0].mxu0 %v1782
      %v1902 = vpop.f32.mrb[0].mxu0
      %v1903 = vadd.f32 0.0, %v1902
      %v1904 = vpop.f32.mrb[0].mxu0
      %v1905 = vpop.f32.mrb[0].mxu0
      %v1906 = vadd.f32 0.0, %v1905
      %v1907 = vpop.f32.mrb[0].mxu0
      %1908 = vdwg.mxu0
      %v1909 = vadd.f32 %v1741, %v1871
      %v1910 = vadd.f32 %v1742, %v1874
      %v1911 = vadd.f32 %v1743, %v1879
      %v1912 = vadd.f32 %v1744, %v1882
      %v1913 = vadd.f32 %v1745, %v1887
      %v1914 = vadd.f32 %v1746, %v1890
      %v1915 = vadd.f32 %v1747, %v1895
      %v1916 = vadd.f32 %v1748, %v1898
      %v1917 = vadd.f32 %v1749, %v1903
      %v1918 = vadd.f32 %v1750, %v1906
      %v1919 = vld [vmem:[%s213] sm:$0x1]
      %v1921 = vlaneseq
      %v1922 = vshrl.u32 %v1921, 7
      %v1923 = vsub.s32 0, %v1922
      %v1924 = vrot.slane %v1919, %v1923
      %v1926 = vadd.f32 %v1909, %v1924
      %v1927 = vadd.f32 %v1910, %v1924
      %v1928 = vadd.f32 %v1911, %v1924
      %v1929 = vadd.f32 %v1912, %v1924
      %v1930 = vadd.f32 %v1913, %v1924
      %v1931 = vadd.f32 %v1914, %v1924
      %v1932 = vadd.f32 %v1915, %v1924
      %v1933 = vadd.f32 %v1916, %v1924
      %v1934 = vadd.f32 %v1917, %v1924
      %v1935 = vadd.f32 %v1918, %v1924
      %v1936 = vmax.f32 %v1926, 0.0
      %v1937 = vmax.f32 %v1927, 0.0
      %v1938 = vmax.f32 %v1928, 0.0
      %v1939 = vmax.f32 %v1929, 0.0
      %v1940 = vmax.f32 %v1930, 0.0
      %v1941 = vmax.f32 %v1931, 0.0
      %v1942 = vmax.f32 %v1932, 0.0
      %v1943 = vmax.f32 %v1933, 0.0
      %v1944 = vmax.f32 %v1934, 0.0
      %v1945 = vmax.f32 %v1935, 0.0
      %v1946 = vpack.c.bf16 %v1937, %v1936
      %v1947 = vpack.c.bf16 %v1939, %v1938
      %v1948 = vpack.c.bf16 %v1941, %v1940
      %v1949 = vpack.c.bf16 %v1943, %v1942
      %v1950 = vpack.c.bf16 %v1945, %v1944
      %v1956 = vunpack.c.l.b16 %v1946
      %v1957 = vunpack.c.h.b16 %v1946
      %v1958 = vunpack.c.l.b16 %v1947
      %v1959 = vunpack.c.h.b16 %v1947
      %v1960 = vunpack.c.l.b16 %v1948
      %v1961 = vunpack.c.h.b16 %v1948
      %v1962 = vunpack.c.l.b16 %v1949
      %v1963 = vunpack.c.h.b16 %v1949
      %v1964 = vunpack.c.l.b16 %v1950
      %v1965 = vunpack.c.h.b16 %v1950
      %v1966 = vpack.c.b16 %v1956, %v1956
      %v1967 = vpack.c.b16 %v1957, %v1957
      %v1968 = vpack.c.b16 %v1958, %v1958
      %v1969 = vpack.c.b16 %v1959, %v1959
      %v1970 = vpack.c.b16 %v1960, %v1960
      %v1971 = vpack.c.b16 %v1961, %v1961
      %v1972 = vpack.c.b16 %v1962, %v1962
      %v1973 = vpack.c.b16 %v1963, %v1963
      %v1974 = vpack.c.b16 %v1964, %v1964
      %v1975 = vpack.c.b16 %v1965, %v1965
      %1986 = vst [vmem:[%s221] sm:$0xf] %v1966
      %1987 = vst [vmem:[%s221 + $0x4] sm:$0xf] %v1967
      %1988 = vst [vmem:[%s221 + $0x8] sm:$0xf] %v1968
      %1989 = vst [vmem:[%s221 + $0xc] sm:$0xf] %v1969
      %1990 = vst [vmem:[%s221 + $0x10] sm:$0xf] %v1970
      %1991 = vst [vmem:[%s221 + $0x14] sm:$0xf] %v1971
      %1992 = vst [vmem:[%s221 + $0x18] sm:$0xf] %v1972
      %1993 = vst [vmem:[%s221 + $0x1c] sm:$0xf] %v1973
      %1994 = vst [vmem:[%s221 + $0x20] sm:$0xf] %v1974
      %1995 = vst [vmem:[%s221 + $0x24] sm:$0xf] %v1975
      %p1996 = scmp.lt.s32.totalorder %s18, 1
      %s1997 = scalar_select %p1996, %s18, 1
      %p1998 = scmp.lt.s32.totalorder %s19, 0
      %s1999 = scalar_select %p1998, %s19, 0
      %s2000 = smul.addr %s1997, 10
      %s2001 = sadd.s32 %s1999, %s2000
      %s2002 = smul.addr %s2001, 4
      %s2003 = scalar_lea.vmem %s3, %s2002
      // Predicated region
      $region33: #{_lambda_.19} parent=31 // pred_check
        %p2004 = pneg %p124
      $region34: #{_lambda_.19} parent=31 // pred_check_branch
        %2006 = sbr.rel (%p2004) target = $region36
      $region35: #{_lambda_.19} parent=31 // pred_region
        _
      $region36: #{_lambda_.19} parent=31 // pred_fallthru
        _
    $region32: #{_lambda_.19} parent=5 // pred_fallthru
      _
    %p2007 = scmp.le.s32.totalorder 2, %s9
    // Predicated region
    $region37: #{_lambda_.19} parent=5 // pred_check
      %p2008 = pneg %p2007
    $region38: #{_lambda_.19} parent=5 // pred_check_branch
      %2010 = sbr.rel (%p2008) target = $region40
    $region39: #{_lambda_.19} parent=5 // pred_region
      %s2011 = ssub.s32 %s9, 2
      // Predicated region
      $region41: #{_lambda_.19} parent=39 // pred_check
        %p2012 = pneg %p130
      $region42: #{_lambda_.19} parent=39 // pred_check_branch
        %2014 = sbr.rel (%p2012) target = $region44
      $region43: #{_lambda_.19} parent=39 // pred_region
        %p2015 = scmp.lt.s32.totalorder %s20, 1
        %s2016 = scalar_select %p2015, %s20, 1
        %p2017 = scmp.lt.s32.totalorder %s21, 0
        %s2018 = scalar_select %p2017, %s21, 0
        %s2019 = smul.addr %s2016, 10
        %s2020 = sadd.s32 %s2018, %s2019
        %s2021 = smul.addr %s2020, 4
        %s2022 = scalar_lea.vmem %s3, %s2021
      $region44: #{_lambda_.19} parent=39 // pred_fallthru
        _
    $region40: #{_lambda_.19} parent=5 // pred_fallthru
      _
  $region6: #{_lambda_.19} parent=0 // loop_footer
    %s13 = sadd.s32 1, %s9
  $region7: #{_lambda_.19} parent=0 // loop_footer_branch
    %8 = sbr.rel target = $region3
  $region8: #{_lambda_.19} parent=0 // loop_exit
    _

// kernel: _lambda_.25
$region0: #{_lambda_.25}
  #allocation0 [shape = 'u32[]', space=smem, size = 0x4, offset = 0x4, fixed_abs, tag = 'smem constant byte address 0x4 - core index']
  #allocation1 [shape = 'u32[144,128]{1,0:T(1,128)}', space=vmem, size = 0x12000, scoped, tag = 'internal scratch']
  %s0 = inlined_call_operand.vmem [shape: bf16[32,128], index: 0, kind: input, shape index: {}]
  %s1 = inlined_call_operand.vmem [shape: bf16[128,128], index: 1, kind: input, shape index: {}]
  %s2 = inlined_call_operand.vmem [shape: f32[1,128], index: 2, kind: input, shape index: {}]
  %s3 = inlined_call_operand.vmem [shape: bf16[32,128], index: 3, kind: output, shape index: {}]
  %s4 = sld [smem:[#allocation0]]
  $region45: #{_lambda_.25} parent=0
    _
  %s6 = ssub.s32 1, %s4
  %s7 = scalar_select 0, %s6, %s4
  loop: start=0, step=1, limit=4
  $region2: #{_lambda_.25} parent=0 // loop_pre_header
    _
  $region3: #{_lambda_.25} parent=0 // loop_header
    %s9 = sphi 0, %s13
    %p10 = scmp.ge.s32.totalorder %s9, 4
    %s16 = sphi 0, %s28
    %s17 = sphi 0, %s24
    %s18 = sphi 0, %s16
    %s19 = sphi 0, %s17
    %s20 = sphi 0, %s18
    %s21 = sphi 0, %s19
    %s31 = sphi 0, %s33
    %s34 = sphi 0, %s31
    %s35 = sphi 0, %s34
    %s51 = sphi 0, %s35
    %s57 = sphi 0, %s59
    %s60 = sphi 0, %s57
    %s61 = sphi 0, %s60
    %s77 = sphi 0, %s61
    %s83 = sphi 0, %s85
    %s86 = sphi 0, %s83
    %s87 = sphi 0, %s86
    %s103 = sphi 0, %s87
    %s111 = sphi 0, %s113
    %s114 = sphi 0, %s111
    %s115 = sphi 0, %s114
    %s131 = sphi 0, %s115
  $region4: #{_lambda_.25} parent=0 // loop_header_branch
    %12 = sbr.rel (%p10) target = $region8
  $region5: #{_lambda_.25} parent=0 // loop_body
    %s14 = ssub.s32 %s9, 1
    %s15 = ssub.s32 %s9, 2
    %s22 = sadd.s32 1, %s17
    %p23 = scmp.ge.s32.totalorder %s22, 1
    %s24 = scalar_select %p23, 0, %s22
    %s25 = sadd.s32 1, %s16
    %s26 = scalar_select %p23, %s25, %s16
    %p27 = scmp.ge.s32.totalorder %s26, 2
    %s28 = scalar_select %p27, 0, %s26
    %s29 = ssub.s32 %s16, %s28
    %p30 = scmp.eq.s32.totalorder %s29, 0
    %s32 = sadd.s32 %s31, 1
    %s33 = scalar_select %p30, %s31, %s32
    %p36 = pneg %p30
    %p37 = scmp.eq.s32.totalorder %s9, 1
    %p38 = por %p36, %p37
    %p39 = scmp.ne.s32.totalorder %s31, %s34
    %p40 = scmp.eq.s32.totalorder %s9, 0
    %p41 = por %p39, %p40
    %p42 = scmp.ne.s32.totalorder %s31, %s34
    %p43 = scmp.eq.s32.totalorder %s14, 1
    %p44 = por %p42, %p43
    %p45 = scmp.ne.s32.totalorder %s34, %s35
    %p46 = scmp.eq.s32.totalorder %s14, 0
    %p47 = por %p45, %p46
    %p48 = scmp.ne.s32.totalorder %s34, %s35
    %p49 = scmp.eq.s32.totalorder %s15, 1
    %p50 = por %p48, %p49
    %p52 = scmp.ne.s32.totalorder %s35, %s51
    %p53 = scmp.eq.s32.totalorder %s15, 0
    %p54 = por %p52, %p53
    %s55 = ssub.s32 %s17, %s24
    %p56 = scmp.eq.s32.totalorder %s55, 0
    %s58 = sadd.s32 %s57, 1
    %s59 = scalar_select %p56, %s57, %s58
    %p62 = pneg %p56
    %p63 = scmp.eq.s32.totalorder %s9, 1
    %p64 = por %p62, %p63
    %p65 = scmp.ne.s32.totalorder %s57, %s60
    %p66 = scmp.eq.s32.totalorder %s9, 0
    %p67 = por %p65, %p66
    %p68 = scmp.ne.s32.totalorder %s57, %s60
    %p69 = scmp.eq.s32.totalorder %s14, 1
    %p70 = por %p68, %p69
    %p71 = scmp.ne.s32.totalorder %s60, %s61
    %p72 = scmp.eq.s32.totalorder %s14, 0
    %p73 = por %p71, %p72
    %p74 = scmp.ne.s32.totalorder %s60, %s61
    %p75 = scmp.eq.s32.totalorder %s15, 1
    %p76 = por %p74, %p75
    %p78 = scmp.ne.s32.totalorder %s61, %s77
    %p79 = scmp.eq.s32.totalorder %s15, 0
    %p80 = por %p78, %p79
    %s81 = ssub.s32 %s17, %s24
    %p82 = scmp.eq.s32.totalorder %s81, 0
    %s84 = sadd.s32 %s83, 1
    %s85 = scalar_select %p82, %s83, %s84
    %p88 = pneg %p82
    %p89 = scmp.eq.s32.totalorder %s9, 1
    %p90 = por %p88, %p89
    %p91 = scmp.ne.s32.totalorder %s83, %s86
    %p92 = scmp.eq.s32.totalorder %s9, 0
    %p93 = por %p91, %p92
    %p94 = scmp.ne.s32.totalorder %s83, %s86
    %p95 = scmp.eq.s32.totalorder %s14, 1
    %p96 = por %p94, %p95
    %p97 = scmp.ne.s32.totalorder %s86, %s87
    %p98 = scmp.eq.s32.totalorder %s14, 0
    %p99 = por %p97, %p98
    %p100 = scmp.ne.s32.totalorder %s86, %s87
    %p101 = scmp.eq.s32.totalorder %s15, 1
    %p102 = por %p100, %p101
    %p104 = scmp.ne.s32.totalorder %s87, %s103
    %p105 = scmp.eq.s32.totalorder %s15, 0
    %p106 = por %p104, %p105
    %s107 = ssub.s32 %s16, %s28
    %s108 = ssub.s32 %s17, %s24
    %s109 = sor.u32 %s107, %s108
    %p110 = scmp.eq.s32.totalorder %s109, 0
    %s112 = sadd.s32 %s111, 1
    %s113 = scalar_select %p110, %s111, %s112
    %p116 = pneg %p110
    %p117 = scmp.eq.s32.totalorder %s9, 1
    %p118 = por %p116, %p117
    %p119 = scmp.ne.s32.totalorder %s111, %s114
    %p120 = scmp.eq.s32.totalorder %s9, 0
    %p121 = por %p119, %p120
    %p122 = scmp.ne.s32.totalorder %s111, %s114
    %p123 = scmp.eq.s32.totalorder %s14, 1
    %p124 = por %p122, %p123
    %p125 = scmp.ne.s32.totalorder %s114, %s115
    %p126 = scmp.eq.s32.totalorder %s14, 0
    %p127 = por %p125, %p126
    %p128 = scmp.ne.s32.totalorder %s114, %s115
    %p129 = scmp.eq.s32.totalorder %s15, 1
    %p130 = por %p128, %p129
    %p132 = scmp.ne.s32.totalorder %s115, %s131
    %p133 = scmp.eq.s32.totalorder %s15, 0
    %p134 = por %p132, %p133
    %p135 = scmp.le.s32.totalorder 1, %s9
    %p136 = scmp.lt.s32.totalorder %s9, 3
    %p137 = pnand %p135, %p136
    %p138 = pneg %p137
    // Predicated region
    $region9: #{_lambda_.25} parent=5 // pred_check
      _
    $region10: #{_lambda_.25} parent=5 // pred_check_branch
      %140 = sbr.rel (%p137) target = $region12
    $region11: #{_lambda_.25} parent=5 // pred_region
      %s141 = ssub.s32 %s9, 1
      // Predicated region
      $region13: #{_lambda_.25} parent=11 // pred_check
        %p142 = pneg %p73
      $region14: #{_lambda_.25} parent=11 // pred_check_branch
        %144 = sbr.rel (%p142) target = $region16
      $region15: #{_lambda_.25} parent=11 // pred_region
        %p145 = scmp.lt.s32.totalorder %s19, 0
        %s146 = scalar_select %p145, %s19, 0
        %s147 = smul.addr %s146, 4
        %s148 = scalar_lea.vmem %s1, %s147
      $region16: #{_lambda_.25} parent=11 // pred_fallthru
        _
      // Predicated region
      $region17: #{_lambda_.25} parent=11 // pred_check
        %p149 = pneg %p99
      $region18: #{_lambda_.25} parent=11 // pred_check_branch
        %151 = sbr.rel (%p149) target = $region20
      $region19: #{_lambda_.25} parent=11 // pred_region
        %p152 = scmp.lt.s32.totalorder %s19, 0
        %s153 = scalar_select %p152, %s19, 0
        %s154 = scalar_lea.vmem %s2, %s153
      $region20: #{_lambda_.25} parent=11 // pred_fallthru
        _
    $region12: #{_lambda_.25} parent=5 // pred_fallthru
      _
    %p155 = scmp.lt.s32.totalorder %s9, 2
    // Predicated region
    $region21: #{_lambda_.25} parent=5 // pred_check
      %p156 = pneg %p155
    $region22: #{_lambda_.25} parent=5 // pred_check_branch
      %158 = sbr.rel (%p156) target = $region24
    $region23: #{_lambda_.25} parent=5 // pred_region
      // Predicated region
      $region25: #{_lambda_.25} parent=23 // pred_check
        %p159 = pneg %p41
      $region26: #{_lambda_.25} parent=23 // pred_check_branch
        %161 = sbr.rel (%p159) target = $region28
      $region27: #{_lambda_.25} parent=23 // pred_region
        %s162 = smul.u32 2, %s16
        %p163 = scmp.lt.s32.totalorder %s162, 3
        %s164 = scalar_select %p163, %s162, 3
        %s165 = smul.addr %s164, 4
        %s166 = scalar_lea.vmem %s0, %s165
        %s167 = smul.u32 2, %s16
      $region28: #{_lambda_.25} parent=23 // pred_fallthru
        _
    $region24: #{_lambda_.25} parent=5 // pred_fallthru
      _
    %p168 = scmp.le.s32.totalorder 1, %s9
    %p169 = scmp.lt.s32.totalorder %s9, 3
    %p170 = pnand %p168, %p169
    %p171 = pneg %p170
    // Predicated region
    $region29: #{_lambda_.25} parent=5 // pred_check
      _
    $region30: #{_lambda_.25} parent=5 // pred_check_branch
      %173 = sbr.rel (%p170) target = $region32
    $region31: #{_lambda_.25} parent=5 // pred_region
      %s174 = ssub.s32 %s9, 1
      %s175 = smul.u32 2, %s18
      %p176 = scmp.lt.s32.totalorder %s175, 3
      %s177 = scalar_select %p176, %s175, 3
      %s178 = smul.addr %s177, 4
      %s179 = scalar_lea.vmem %s0, %s178
      %p180 = pneg %p47
      %p181 = pneg %p44
      %p182 = scmp.lt.s32.totalorder %s19, 0
      %s183 = scalar_select %p182, %s19, 0
      %s184 = smul.addr %s183, 4
      %s185 = scalar_lea.vmem %s1, %s184
      %p186 = pneg %p73
      %p187 = pneg %p70
      %p188 = scmp.lt.s32.totalorder %s19, 0
      %s189 = scalar_select %p188, %s19, 0
      %s190 = scalar_lea.vmem %s2, %s189
      %p191 = pneg %p99
      %p192 = pneg %p96
      %p193 = pneg %p127
      %p194 = pneg %p124
      %s195 = smul.u32 2, %s18
      %p196 = scmp.lt.s32.totalorder %s195, 3
      %s197 = scalar_select %p196, %s195, 3
      %p198 = scmp.lt.s32.totalorder %s19, 0
      %s199 = scalar_select %p198, %s19, 0
      %s200 = sadd.s32 %s199, %s197
      %s201 = smul.addr %s200, 4
      %s202 = scalar_lea.vmem %s3, %s201
      %s203 = smul.u32 2, %s18
      %p204 = scmp.lt.s32.totalorder %s203, 3
      %s205 = scalar_select %p204, %s203, 3
      %s206 = smul.addr %s205, 4
      %s207 = scalar_lea.vmem %s0, %s206
      %s208 = smul.u32 2, %s18
      %p209 = scmp.lt.s32.totalorder %s19, 0
      %s210 = scalar_select %p209, %s19, 0
      %s211 = smul.addr %s210, 4
      %s212 = scalar_lea.vmem %s1, %s211
      %p213 = scmp.lt.s32.totalorder %s19, 0
      %s214 = scalar_select %p213, %s19, 0
      %s215 = scalar_lea.vmem %s2, %s214
      %s216 = smul.u32 2, %s18
      %p217 = scmp.lt.s32.totalorder %s216, 3
      %s218 = scalar_select %p217, %s216, 3
      %p219 = scmp.lt.s32.totalorder %s19, 0
      %s220 = scalar_select %p219, %s19, 0
      %s221 = sadd.s32 %s220, %s218
      %s222 = smul.addr %s221, 4
      %s223 = scalar_lea.vmem %s3, %s222
      %s224 = smul.u32 2, %s18
      %v226 = vld [vmem:[%s207] sm:$0xf]
      %v227 = vld [vmem:[%s207 + $0x4] sm:$0xf]
      %v228 = vld [vmem:[%s212] sm:$0xf]
      %v229 = vld [vmem:[%s212 + $0x4] sm:$0xf]
      %v230 = vld [vmem:[%s212 + $0x8] sm:$0xf]
      %v231 = vld [vmem:[%s212 + $0xc] sm:$0xf]
      %v232 = vld [vmem:[%s212 + $0x10] sm:$0xf]
      %v233 = vld [vmem:[%s212 + $0x14] sm:$0xf]
      %v234 = vld [vmem:[%s212 + $0x18] sm:$0xf]
      %v235 = vld [vmem:[%s212 + $0x1c] sm:$0xf]
      %v236 = vld [vmem:[%s212 + $0x20] sm:$0xf]
      %v237 = vld [vmem:[%s212 + $0x24] sm:$0xf]
      %v238 = vld [vmem:[%s212 + $0x28] sm:$0xf]
      %v239 = vld [vmem:[%s212 + $0x2c] sm:$0xf]
      %v240 = vld [vmem:[%s212 + $0x30] sm:$0xf]
      %v241 = vld [vmem:[%s212 + $0x34] sm:$0xf]
      %v242 = vld [vmem:[%s212 + $0x38] sm:$0xf]
      %v243 = vld [vmem:[%s212 + $0x3c] sm:$0xf]
      %v244 = vld [vmem:[%s215] sm:$0x1]
      %v246 = vlaneseq
      %v247 = vshrl.u32 %v246, 7
      %v248 = vsub.s32 0, %v247
      %v249 = vrot.slane %v244, %v248
      %v253 = vunpack.c.l.b16 %v226
      %v254 = vunpack.c.l.b16 %v227
      %v255 = vpack.c.b16 %v254, %v253
      %v273 = vunpack.c.l.b16 %v228
      %v274 = vunpack.c.l.b16 %v229
      %v275 = vunpack.c.l.b16 %v230
      %v276 = vunpack.c.l.b16 %v231
      %v277 = vunpack.c.l.b16 %v232
      %v278 = vunpack.c.l.b16 %v233
      %v279 = vunpack.c.l.b16 %v234
      %v280 = vunpack.c.l.b16 %v235
      %v281 = vunpack.c.l.b16 %v236
      %v282 = vunpack.c.l.b16 %v237
      %v283 = vunpack.c.l.b16 %v238
      %v284 = vunpack.c.l.b16 %v239
      %v285 = vunpack.c.l.b16 %v240
      %v286 = vunpack.c.l.b16 %v241
      %v287 = vunpack.c.l.b16 %v242
      %v288 = vunpack.c.l.b16 %v243
      %v289 = vpack.c.b16 %v274, %v273
      %v290 = vpack.c.b16 %v276, %v275
      %v291 = vpack.c.b16 %v278, %v277
      %v292 = vpack.c.b16 %v280, %v279
      %v293 = vpack.c.b16 %v282, %v281
      %v294 = vpack.c.b16 %v284, %v283
      %v295 = vpack.c.b16 %v286, %v285
      %v296 = vpack.c.b16 %v288, %v287
      %305 = vmatprep.subr.bf16.mxu0 0
      %306 = vmatpush1.bf16.msra.mxu0 %v289
      %307 = vmatprep.subr.bf16.mxu0 0
      %308 = vmatpush1.bf16.msra.mxu0 %v290
      %309 = vmatprep.subr.bf16.mxu0 0
      %310 = vmatpush1.bf16.msra.mxu0 %v291
      %311 = vmatprep.subr.bf16.mxu0 0
      %312 = vmatpush1.bf16.msra.mxu0 %v292
      %313 = vmatprep.subr.bf16.mxu0 0
      %314 = vmatpush1.bf16.msra.mxu0 %v293
      %315 = vmatprep.subr.bf16.mxu0 0
      %316 = vmatpush1.bf16.msra.mxu0 %v294
      %317 = vmatprep.subr.bf16.mxu0 0
      %318 = vmatpush1.bf16.msra.mxu0 %v295
      %319 = vmatprep.subr.bf16.mxu0 0
      %320 = vmatpush1.bf16.msra.mxu0 %v296
      %321 = vmatprep.subr.bf16.mxu0 0
      %322 = vmatpush1.bf16.msra.mxu0 0
      %323 = vmatprep.subr.bf16.mxu0 0
      %324 = vmatpush1.bf16.msra.mxu0 0
      %325 = vmatprep.subr.bf16.mxu0 0
      %326 = vmatpush1.bf16.msra.mxu0 0
      %327 = vmatprep.subr.bf16.mxu0 0
      %328 = vmatpush1.bf16.msra.mxu0 0
      %329 = vmatprep.subr.bf16.mxu0 0
      %330 = vmatpush1.bf16.msra.mxu0 0
      %331 = vmatprep.subr.bf16.mxu0 0
      %332 = vmatpush1.bf16.msra.mxu0 0
      %333 = vmatprep.subr.bf16.mxu0 0
      %334 = vmatpush1.bf16.msra.mxu0 0
      %335 = vmatprep.subr.bf16.mxu0 0
      %336 = vmatpush1.bf16.msra.mxu0 0
      %337 = vmatprep.mubr.bf16.mxu0 0
      %338 = vmatmul.mubr.bf16.gmra.mrb[0].mxu0 %v255
      %v339 = vpop.f32.mrb[0].mxu0
      %v340 = vadd.f32 %v249, %v339
      %v341 = vpop.f32.mrb[0].mxu0
      %v342 = vpop.f32.mrb[0].mxu0
      %v343 = vadd.f32 %v249, %v342
      %v344 = vpop.f32.mrb[0].mxu0
      %345 = vdwg.mxu0
      %v346 = vmax.f32 %v340, 0.0
      %v347 = vmax.f32 %v343, 0.0
      %v348 = vpack.c.bf16 %v347, %v346
      %v350 = vunpack.c.l.b16 %v348
      %v351 = vunpack.c.h.b16 %v348
      %v352 = vpack.c.b16 %v350, %v350
      %v353 = vpack.c.b16 %v351, %v351
      %356 = vst [vmem:[%s223] sm:$0xf] %v352
      %357 = vst [vmem:[%s223 + $0x4] sm:$0xf] %v353
      %s358 = smul.u32 2, %s18
      %p359 = scmp.lt.s32.totalorder %s358, 3
      %s360 = scalar_select %p359, %s358, 3
      %p361 = scmp.lt.s32.totalorder %s19, 0
      %s362 = scalar_select %p361, %s19, 0
      %s363 = sadd.s32 %s362, %s360
      %s364 = smul.addr %s363, 4
      %s365 = scalar_lea.vmem %s3, %s364
      // Predicated region
      $region33: #{_lambda_.25} parent=31 // pred_check
        %p366 = pneg %p124
      $region34: #{_lambda_.25} parent=31 // pred_check_branch
        %368 = sbr.rel (%p366) target = $region36
      $region35: #{_lambda_.25} parent=31 // pred_region
        %s369 = smul.u32 2, %s18
      $region36: #{_lambda_.25} parent=31 // pred_fallthru
        _
    $region32: #{_lambda_.25} parent=5 // pred_fallthru
      _
    %p370 = scmp.le.s32.totalorder 2, %s9
    // Predicated region
    $region37: #{_lambda_.25} parent=5 // pred_check
      %p371 = pneg %p370
    $region38: #{_lambda_.25} parent=5 // pred_check_branch
      %373 = sbr.rel (%p371) target = $region40
    $region39: #{_lambda_.25} parent=5 // pred_region
      %s374 = ssub.s32 %s9, 2
      // Predicated region
      $region41: #{_lambda_.25} parent=39 // pred_check
        %p375 = pneg %p130
      $region42: #{_lambda_.25} parent=39 // pred_check_branch
        %377 = sbr.rel (%p375) target = $region44
      $region43: #{_lambda_.25} parent=39 // pred_region
        %s378 = smul.u32 2, %s20
        %p379 = scmp.lt.s32.totalorder %s378, 3
        %s380 = scalar_select %p379, %s378, 3
        %p381 = scmp.lt.s32.totalorder %s21, 0
        %s382 = scalar_select %p381, %s21, 0
        %s383 = sadd.s32 %s382, %s380
        %s384 = smul.addr %s383, 4
        %s385 = scalar_lea.vmem %s3, %s384
      $region44: #{_lambda_.25} parent=39 // pred_fallthru
        _
    $region40: #{_lambda_.25} parent=5 // pred_fallthru
      _
  $region6: #{_lambda_.25} parent=0 // loop_footer
    %s13 = sadd.s32 1, %s9
  $region7: #{_lambda_.25} parent=0 // loop_footer_branch
    %8 = sbr.rel target = $region3
  $region8: #{_lambda_.25} parent=0 // loop_exit
    _

// kernel: _lambda_.27
$region0: #{_lambda_.27}
  #allocation0 [shape = 'u32[]', space=smem, size = 0x4, offset = 0x4, fixed_abs, tag = 'smem constant byte address 0x4 - core index']
  #allocation1 [shape = 'u32[144,128]{1,0:T(1,128)}', space=vmem, size = 0x12000, scoped, tag = 'internal scratch']
  %s0 = inlined_call_operand.vmem [shape: bf16[32,128], index: 0, kind: input, shape index: {}]
  %s1 = inlined_call_operand.vmem [shape: bf16[128,128], index: 1, kind: input, shape index: {}]
  %s2 = inlined_call_operand.vmem [shape: f32[1,128], index: 2, kind: input, shape index: {}]
  %s3 = inlined_call_operand.vmem [shape: bf16[32,128], index: 3, kind: output, shape index: {}]
  %s4 = sld [smem:[#allocation0]]
  $region45: #{_lambda_.27} parent=0
    _
  %s6 = ssub.s32 1, %s4
  %s7 = scalar_select 0, %s6, %s4
  loop: start=0, step=1, limit=4
  $region2: #{_lambda_.27} parent=0 // loop_pre_header
    _
  $region3: #{_lambda_.27} parent=0 // loop_header
    %s9 = sphi 0, %s13
    %p10 = scmp.ge.s32.totalorder %s9, 4
    %s16 = sphi 0, %s28
    %s17 = sphi 0, %s24
    %s18 = sphi 0, %s16
    %s19 = sphi 0, %s17
    %s20 = sphi 0, %s18
    %s21 = sphi 0, %s19
    %s31 = sphi 0, %s33
    %s34 = sphi 0, %s31
    %s35 = sphi 0, %s34
    %s51 = sphi 0, %s35
    %s57 = sphi 0, %s59
    %s60 = sphi 0, %s57
    %s61 = sphi 0, %s60
    %s77 = sphi 0, %s61
    %s83 = sphi 0, %s85
    %s86 = sphi 0, %s83
    %s87 = sphi 0, %s86
    %s103 = sphi 0, %s87
    %s111 = sphi 0, %s113
    %s114 = sphi 0, %s111
    %s115 = sphi 0, %s114
    %s131 = sphi 0, %s115
  $region4: #{_lambda_.27} parent=0 // loop_header_branch
    %12 = sbr.rel (%p10) target = $region8
  $region5: #{_lambda_.27} parent=0 // loop_body
    %s14 = ssub.s32 %s9, 1
    %s15 = ssub.s32 %s9, 2
    %s22 = sadd.s32 1, %s17
    %p23 = scmp.ge.s32.totalorder %s22, 1
    %s24 = scalar_select %p23, 0, %s22
    %s25 = sadd.s32 1, %s16
    %s26 = scalar_select %p23, %s25, %s16
    %p27 = scmp.ge.s32.totalorder %s26, 2
    %s28 = scalar_select %p27, 0, %s26
    %s29 = ssub.s32 %s16, %s28
    %p30 = scmp.eq.s32.totalorder %s29, 0
    %s32 = sadd.s32 %s31, 1
    %s33 = scalar_select %p30, %s31, %s32
    %p36 = pneg %p30
    %p37 = scmp.eq.s32.totalorder %s9, 1
    %p38 = por %p36, %p37
    %p39 = scmp.ne.s32.totalorder %s31, %s34
    %p40 = scmp.eq.s32.totalorder %s9, 0
    %p41 = por %p39, %p40
    %p42 = scmp.ne.s32.totalorder %s31, %s34
    %p43 = scmp.eq.s32.totalorder %s14, 1
    %p44 = por %p42, %p43
    %p45 = scmp.ne.s32.totalorder %s34, %s35
    %p46 = scmp.eq.s32.totalorder %s14, 0
    %p47 = por %p45, %p46
    %p48 = scmp.ne.s32.totalorder %s34, %s35
    %p49 = scmp.eq.s32.totalorder %s15, 1
    %p50 = por %p48, %p49
    %p52 = scmp.ne.s32.totalorder %s35, %s51
    %p53 = scmp.eq.s32.totalorder %s15, 0
    %p54 = por %p52, %p53
    %s55 = ssub.s32 %s17, %s24
    %p56 = scmp.eq.s32.totalorder %s55, 0
    %s58 = sadd.s32 %s57, 1
    %s59 = scalar_select %p56, %s57, %s58
    %p62 = pneg %p56
    %p63 = scmp.eq.s32.totalorder %s9, 1
    %p64 = por %p62, %p63
    %p65 = scmp.ne.s32.totalorder %s57, %s60
    %p66 = scmp.eq.s32.totalorder %s9, 0
    %p67 = por %p65, %p66
    %p68 = scmp.ne.s32.totalorder %s57, %s60
    %p69 = scmp.eq.s32.totalorder %s14, 1
    %p70 = por %p68, %p69
    %p71 = scmp.ne.s32.totalorder %s60, %s61
    %p72 = scmp.eq.s32.totalorder %s14, 0
    %p73 = por %p71, %p72
    %p74 = scmp.ne.s32.totalorder %s60, %s61
    %p75 = scmp.eq.s32.totalorder %s15, 1
    %p76 = por %p74, %p75
    %p78 = scmp.ne.s32.totalorder %s61, %s77
    %p79 = scmp.eq.s32.totalorder %s15, 0
    %p80 = por %p78, %p79
    %s81 = ssub.s32 %s17, %s24
    %p82 = scmp.eq.s32.totalorder %s81, 0
    %s84 = sadd.s32 %s83, 1
    %s85 = scalar_select %p82, %s83, %s84
    %p88 = pneg %p82
    %p89 = scmp.eq.s32.totalorder %s9, 1
    %p90 = por %p88, %p89
    %p91 = scmp.ne.s32.totalorder %s83, %s86
    %p92 = scmp.eq.s32.totalorder %s9, 0
    %p93 = por %p91, %p92
    %p94 = scmp.ne.s32.totalorder %s83, %s86
    %p95 = scmp.eq.s32.totalorder %s14, 1
    %p96 = por %p94, %p95
    %p97 = scmp.ne.s32.totalorder %s86, %s87
    %p98 = scmp.eq.s32.totalorder %s14, 0
    %p99 = por %p97, %p98
    %p100 = scmp.ne.s32.totalorder %s86, %s87
    %p101 = scmp.eq.s32.totalorder %s15, 1
    %p102 = por %p100, %p101
    %p104 = scmp.ne.s32.totalorder %s87, %s103
    %p105 = scmp.eq.s32.totalorder %s15, 0
    %p106 = por %p104, %p105
    %s107 = ssub.s32 %s16, %s28
    %s108 = ssub.s32 %s17, %s24
    %s109 = sor.u32 %s107, %s108
    %p110 = scmp.eq.s32.totalorder %s109, 0
    %s112 = sadd.s32 %s111, 1
    %s113 = scalar_select %p110, %s111, %s112
    %p116 = pneg %p110
    %p117 = scmp.eq.s32.totalorder %s9, 1
    %p118 = por %p116, %p117
    %p119 = scmp.ne.s32.totalorder %s111, %s114
    %p120 = scmp.eq.s32.totalorder %s9, 0
    %p121 = por %p119, %p120
    %p122 = scmp.ne.s32.totalorder %s111, %s114
    %p123 = scmp.eq.s32.totalorder %s14, 1
    %p124 = por %p122, %p123
    %p125 = scmp.ne.s32.totalorder %s114, %s115
    %p126 = scmp.eq.s32.totalorder %s14, 0
    %p127 = por %p125, %p126
    %p128 = scmp.ne.s32.totalorder %s114, %s115
    %p129 = scmp.eq.s32.totalorder %s15, 1
    %p130 = por %p128, %p129
    %p132 = scmp.ne.s32.totalorder %s115, %s131
    %p133 = scmp.eq.s32.totalorder %s15, 0
    %p134 = por %p132, %p133
    %p135 = scmp.le.s32.totalorder 1, %s9
    %p136 = scmp.lt.s32.totalorder %s9, 3
    %p137 = pnand %p135, %p136
    %p138 = pneg %p137
    // Predicated region
    $region9: #{_lambda_.27} parent=5 // pred_check
      _
    $region10: #{_lambda_.27} parent=5 // pred_check_branch
      %140 = sbr.rel (%p137) target = $region12
    $region11: #{_lambda_.27} parent=5 // pred_region
      %s141 = ssub.s32 %s9, 1
      // Predicated region
      $region13: #{_lambda_.27} parent=11 // pred_check
        %p142 = pneg %p73
      $region14: #{_lambda_.27} parent=11 // pred_check_branch
        %144 = sbr.rel (%p142) target = $region16
      $region15: #{_lambda_.27} parent=11 // pred_region
        %p145 = scmp.lt.s32.totalorder %s19, 0
        %s146 = scalar_select %p145, %s19, 0
        %s147 = smul.addr %s146, 4
        %s148 = scalar_lea.vmem %s1, %s147
      $region16: #{_lambda_.27} parent=11 // pred_fallthru
        _
      // Predicated region
      $region17: #{_lambda_.27} parent=11 // pred_check
        %p149 = pneg %p99
      $region18: #{_lambda_.27} parent=11 // pred_check_branch
        %151 = sbr.rel (%p149) target = $region20
      $region19: #{_lambda_.27} parent=11 // pred_region
        %p152 = scmp.lt.s32.totalorder %s19, 0
        %s153 = scalar_select %p152, %s19, 0
        %s154 = scalar_lea.vmem %s2, %s153
      $region20: #{_lambda_.27} parent=11 // pred_fallthru
        _
    $region12: #{_lambda_.27} parent=5 // pred_fallthru
      _
    %p155 = scmp.lt.s32.totalorder %s9, 2
    // Predicated region
    $region21: #{_lambda_.27} parent=5 // pred_check
      %p156 = pneg %p155
    $region22: #{_lambda_.27} parent=5 // pred_check_branch
      %158 = sbr.rel (%p156) target = $region24
    $region23: #{_lambda_.27} parent=5 // pred_region
      // Predicated region
      $region25: #{_lambda_.27} parent=23 // pred_check
        %p159 = pneg %p41
      $region26: #{_lambda_.27} parent=23 // pred_check_branch
        %161 = sbr.rel (%p159) target = $region28
      $region27: #{_lambda_.27} parent=23 // pred_region
        %s162 = smul.u32 2, %s16
        %p163 = scmp.lt.s32.totalorder %s162, 3
        %s164 = scalar_select %p163, %s162, 3
        %s165 = smul.addr %s164, 4
        %s166 = scalar_lea.vmem %s0, %s165
        %s167 = smul.u32 2, %s16
      $region28: #{_lambda_.27} parent=23 // pred_fallthru
        _
    $region24: #{_lambda_.27} parent=5 // pred_fallthru
      _
    %p168 = scmp.le.s32.totalorder 1, %s9
    %p169 = scmp.lt.s32.totalorder %s9, 3
    %p170 = pnand %p168, %p169
    %p171 = pneg %p170
    // Predicated region
    $region29: #{_lambda_.27} parent=5 // pred_check
      _
    $region30: #{_lambda_.27} parent=5 // pred_check_branch
      %173 = sbr.rel (%p170) target = $region32
    $region31: #{_lambda_.27} parent=5 // pred_region
      %s174 = ssub.s32 %s9, 1
      %s175 = smul.u32 2, %s18
      %p176 = scmp.lt.s32.totalorder %s175, 3
      %s177 = scalar_select %p176, %s175, 3
      %s178 = smul.addr %s177, 4
      %s179 = scalar_lea.vmem %s0, %s178
      %p180 = pneg %p47
      %p181 = pneg %p44
      %p182 = scmp.lt.s32.totalorder %s19, 0
      %s183 = scalar_select %p182, %s19, 0
      %s184 = smul.addr %s183, 4
      %s185 = scalar_lea.vmem %s1, %s184
      %p186 = pneg %p73
      %p187 = pneg %p70
      %p188 = scmp.lt.s32.totalorder %s19, 0
      %s189 = scalar_select %p188, %s19, 0
      %s190 = scalar_lea.vmem %s2, %s189
      %p191 = pneg %p99
      %p192 = pneg %p96
      %p193 = pneg %p127
      %p194 = pneg %p124
      %s195 = smul.u32 2, %s18
      %p196 = scmp.lt.s32.totalorder %s195, 3
      %s197 = scalar_select %p196, %s195, 3
      %p198 = scmp.lt.s32.totalorder %s19, 0
      %s199 = scalar_select %p198, %s19, 0
      %s200 = sadd.s32 %s199, %s197
      %s201 = smul.addr %s200, 4
      %s202 = scalar_lea.vmem %s3, %s201
      %s203 = smul.u32 2, %s18
      %p204 = scmp.lt.s32.totalorder %s203, 3
      %s205 = scalar_select %p204, %s203, 3
      %s206 = smul.addr %s205, 4
      %s207 = scalar_lea.vmem %s0, %s206
      %s208 = smul.u32 2, %s18
      %p209 = scmp.lt.s32.totalorder %s19, 0
      %s210 = scalar_select %p209, %s19, 0
      %s211 = smul.addr %s210, 4
      %s212 = scalar_lea.vmem %s1, %s211
      %p213 = scmp.lt.s32.totalorder %s19, 0
      %s214 = scalar_select %p213, %s19, 0
      %s215 = scalar_lea.vmem %s2, %s214
      %s216 = smul.u32 2, %s18
      %p217 = scmp.lt.s32.totalorder %s216, 3
      %s218 = scalar_select %p217, %s216, 3
      %p219 = scmp.lt.s32.totalorder %s19, 0
      %s220 = scalar_select %p219, %s19, 0
      %s221 = sadd.s32 %s220, %s218
      %s222 = smul.addr %s221, 4
      %s223 = scalar_lea.vmem %s3, %s222
      %s224 = smul.u32 2, %s18
      %v226 = vld [vmem:[%s207] sm:$0xf]
      %v227 = vld [vmem:[%s207 + $0x4] sm:$0xf]
      %v228 = vld [vmem:[%s212] sm:$0xf]
      %v229 = vld [vmem:[%s212 + $0x4] sm:$0xf]
      %v230 = vld [vmem:[%s212 + $0x8] sm:$0xf]
      %v231 = vld [vmem:[%s212 + $0xc] sm:$0xf]
      %v232 = vld [vmem:[%s212 + $0x10] sm:$0xf]
      %v233 = vld [vmem:[%s212 + $0x14] sm:$0xf]
      %v234 = vld [vmem:[%s212 + $0x18] sm:$0xf]
      %v235 = vld [vmem:[%s212 + $0x1c] sm:$0xf]
      %v236 = vld [vmem:[%s212 + $0x20] sm:$0xf]
      %v237 = vld [vmem:[%s212 + $0x24] sm:$0xf]
      %v238 = vld [vmem:[%s212 + $0x28] sm:$0xf]
      %v239 = vld [vmem:[%s212 + $0x2c] sm:$0xf]
      %v240 = vld [vmem:[%s212 + $0x30] sm:$0xf]
      %v241 = vld [vmem:[%s212 + $0x34] sm:$0xf]
      %v242 = vld [vmem:[%s212 + $0x38] sm:$0xf]
      %v243 = vld [vmem:[%s212 + $0x3c] sm:$0xf]
      %v244 = vld [vmem:[%s215] sm:$0x1]
      %v246 = vlaneseq
      %v247 = vshrl.u32 %v246, 7
      %v248 = vsub.s32 0, %v247
      %v249 = vrot.slane %v244, %v248
      %v253 = vunpack.c.l.b16 %v226
      %v254 = vunpack.c.l.b16 %v227
      %v255 = vpack.c.b16 %v254, %v253
      %v273 = vunpack.c.l.b16 %v228
      %v274 = vunpack.c.l.b16 %v229
      %v275 = vunpack.c.l.b16 %v230
      %v276 = vunpack.c.l.b16 %v231
      %v277 = vunpack.c.l.b16 %v232
      %v278 = vunpack.c.l.b16 %v233
      %v279 = vunpack.c.l.b16 %v234
      %v280 = vunpack.c.l.b16 %v235
      %v281 = vunpack.c.l.b16 %v236
      %v282 = vunpack.c.l.b16 %v237
      %v283 = vunpack.c.l.b16 %v238
      %v284 = vunpack.c.l.b16 %v239
      %v285 = vunpack.c.l.b16 %v240
      %v286 = vunpack.c.l.b16 %v241
      %v287 = vunpack.c.l.b16 %v242
      %v288 = vunpack.c.l.b16 %v243
      %v289 = vpack.c.b16 %v274, %v273
      %v290 = vpack.c.b16 %v276, %v275
      %v291 = vpack.c.b16 %v278, %v277
      %v292 = vpack.c.b16 %v280, %v279
      %v293 = vpack.c.b16 %v282, %v281
      %v294 = vpack.c.b16 %v284, %v283
      %v295 = vpack.c.b16 %v286, %v285
      %v296 = vpack.c.b16 %v288, %v287
      %305 = vmatprep.subr.bf16.mxu0 0
      %306 = vmatpush1.bf16.msra.mxu0 %v289
      %307 = vmatprep.subr.bf16.mxu0 0
      %308 = vmatpush1.bf16.msra.mxu0 %v290
      %309 = vmatprep.subr.bf16.mxu0 0
      %310 = vmatpush1.bf16.msra.mxu0 %v291
      %311 = vmatprep.subr.bf16.mxu0 0
      %312 = vmatpush1.bf16.msra.mxu0 %v292
      %313 = vmatprep.subr.bf16.mxu0 0
      %314 = vmatpush1.bf16.msra.mxu0 %v293
      %315 = vmatprep.subr.bf16.mxu0 0
      %316 = vmatpush1.bf16.msra.mxu0 %v294
      %317 = vmatprep.subr.bf16.mxu0 0
      %318 = vmatpush1.bf16.msra.mxu0 %v295
      %319 = vmatprep.subr.bf16.mxu0 0
      %320 = vmatpush1.bf16.msra.mxu0 %v296
      %321 = vmatprep.subr.bf16.mxu0 0
      %322 = vmatpush1.bf16.msra.mxu0 0
      %323 = vmatprep.subr.bf16.mxu0 0
      %324 = vmatpush1.bf16.msra.mxu0 0
      %325 = vmatprep.subr.bf16.mxu0 0
      %326 = vmatpush1.bf16.msra.mxu0 0
      %327 = vmatprep.subr.bf16.mxu0 0
      %328 = vmatpush1.bf16.msra.mxu0 0
      %329 = vmatprep.subr.bf16.mxu0 0
      %330 = vmatpush1.bf16.msra.mxu0 0
      %331 = vmatprep.subr.bf16.mxu0 0
      %332 = vmatpush1.bf16.msra.mxu0 0
      %333 = vmatprep.subr.bf16.mxu0 0
      %334 = vmatpush1.bf16.msra.mxu0 0
      %335 = vmatprep.subr.bf16.mxu0 0
      %336 = vmatpush1.bf16.msra.mxu0 0
      %337 = vmatprep.mubr.bf16.mxu0 0
      %338 = vmatmul.mubr.bf16.gmra.mrb[0].mxu0 %v255
      %v339 = vpop.f32.mrb[0].mxu0
      %v340 = vadd.f32 %v249, %v339
      %v341 = vpop.f32.mrb[0].mxu0
      %v342 = vpop.f32.mrb[0].mxu0
      %v343 = vadd.f32 %v249, %v342
      %v344 = vpop.f32.mrb[0].mxu0
      %345 = vdwg.mxu0
      %v346 = vpack.c.bf16 %v343, %v340
      %v348 = vunpack.c.l.b16 %v346
      %v349 = vunpack.c.h.b16 %v346
      %v350 = vpack.c.b16 %v348, %v348
      %v351 = vpack.c.b16 %v349, %v349
      %354 = vst [vmem:[%s223] sm:$0xf] %v350
      %355 = vst [vmem:[%s223 + $0x4] sm:$0xf] %v351
      %s356 = smul.u32 2, %s18
      %p357 = scmp.lt.s32.totalorder %s356, 3
      %s358 = scalar_select %p357, %s356, 3
      %p359 = scmp.lt.s32.totalorder %s19, 0
      %s360 = scalar_select %p359, %s19, 0
      %s361 = sadd.s32 %s360, %s358
      %s362 = smul.addr %s361, 4
      %s363 = scalar_lea.vmem %s3, %s362
      // Predicated region
      $region33: #{_lambda_.27} parent=31 // pred_check
        %p364 = pneg %p124
      $region34: #{_lambda_.27} parent=31 // pred_check_branch
        %366 = sbr.rel (%p364) target = $region36
      $region35: #{_lambda_.27} parent=31 // pred_region
        %s367 = smul.u32 2, %s18
      $region36: #{_lambda_.27} parent=31 // pred_fallthru
        _
    $region32: #{_lambda_.27} parent=5 // pred_fallthru
      _
    %p368 = scmp.le.s32.totalorder 2, %s9
    // Predicated region
    $region37: #{_lambda_.27} parent=5 // pred_check
      %p369 = pneg %p368
    $region38: #{_lambda_.27} parent=5 // pred_check_branch
      %371 = sbr.rel (%p369) target = $region40
    $region39: #{_lambda_.27} parent=5 // pred_region
      %s372 = ssub.s32 %s9, 2
      // Predicated region
      $region41: #{_lambda_.27} parent=39 // pred_check
        %p373 = pneg %p130
      $region42: #{_lambda_.27} parent=39 // pred_check_branch
        %375 = sbr.rel (%p373) target = $region44
      $region43: #{_lambda_.27} parent=39 // pred_region
        %s376 = smul.u32 2, %s20
        %p377 = scmp.lt.s32.totalorder %s376, 3
        %s378 = scalar_select %p377, %s376, 3
        %p379 = scmp.lt.s32.totalorder %s21, 0
        %s380 = scalar_select %p379, %s21, 0
        %s381 = sadd.s32 %s380, %s378
        %s382 = smul.addr %s381, 4
        %s383 = scalar_lea.vmem %s3, %s382
      $region44: #{_lambda_.27} parent=39 // pred_fallthru
        _
    $region40: #{_lambda_.27} parent=5 // pred_fallthru
      _
  $region6: #{_lambda_.27} parent=0 // loop_footer
    %s13 = sadd.s32 1, %s9
  $region7: #{_lambda_.27} parent=0 // loop_footer_branch
    %8 = sbr.rel target = $region3
  $region8: #{_lambda_.27} parent=0 // loop_exit
    _

// kernel: _lambda_.28
$region0: #{_lambda_.28}
  #allocation0 [shape = 'u32[]', space=smem, size = 0x4, offset = 0x4, fixed_abs, tag = 'smem constant byte address 0x4 - core index']
  #allocation1 [shape = 'u32[144,128]{1,0:T(1,128)}', space=vmem, size = 0x12000, scoped, tag = 'internal scratch']
  %s0 = inlined_call_operand.vmem [shape: bf16[32,128], index: 0, kind: input, shape index: {}]
  %s1 = inlined_call_operand.vmem [shape: bf16[128,128], index: 1, kind: input, shape index: {}]
  %s2 = inlined_call_operand.vmem [shape: f32[1,128], index: 2, kind: input, shape index: {}]
  %s3 = inlined_call_operand.vmem [shape: bf16[32,128], index: 3, kind: input, shape index: {}, may-alias: {3,4}]
  %s4 = inlined_call_operand.vmem [shape: bf16[32,128], index: 4, kind: output, shape index: {}, may-alias: {3,4}]
  %s5 = sld [smem:[#allocation0]]
  $region49: #{_lambda_.28} parent=0
    _
  %s7 = ssub.s32 1, %s5
  %s8 = scalar_select 0, %s7, %s5
  loop: start=0, step=1, limit=4
  $region2: #{_lambda_.28} parent=0 // loop_pre_header
    _
  $region3: #{_lambda_.28} parent=0 // loop_header
    %s10 = sphi 0, %s14
    %p11 = scmp.ge.s32.totalorder %s10, 4
    %s17 = sphi 0, %s29
    %s18 = sphi 0, %s25
    %s19 = sphi 0, %s17
    %s20 = sphi 0, %s18
    %s21 = sphi 0, %s19
    %s22 = sphi 0, %s20
    %s32 = sphi 0, %s34
    %s35 = sphi 0, %s32
    %s36 = sphi 0, %s35
    %s52 = sphi 0, %s36
    %s58 = sphi 0, %s60
    %s61 = sphi 0, %s58
    %s62 = sphi 0, %s61
    %s78 = sphi 0, %s62
    %s84 = sphi 0, %s86
    %s87 = sphi 0, %s84
    %s88 = sphi 0, %s87
    %s104 = sphi 0, %s88
    %s112 = sphi 0, %s114
    %s115 = sphi 0, %s112
    %s116 = sphi 0, %s115
    %s132 = sphi 0, %s116
    %s140 = sphi 0, %s142
    %s143 = sphi 0, %s140
    %s144 = sphi 0, %s143
    %s160 = sphi 0, %s144
  $region4: #{_lambda_.28} parent=0 // loop_header_branch
    %13 = sbr.rel (%p11) target = $region8
  $region5: #{_lambda_.28} parent=0 // loop_body
    %s15 = ssub.s32 %s10, 1
    %s16 = ssub.s32 %s10, 2
    %s23 = sadd.s32 1, %s18
    %p24 = scmp.ge.s32.totalorder %s23, 1
    %s25 = scalar_select %p24, 0, %s23
    %s26 = sadd.s32 1, %s17
    %s27 = scalar_select %p24, %s26, %s17
    %p28 = scmp.ge.s32.totalorder %s27, 2
    %s29 = scalar_select %p28, 0, %s27
    %s30 = ssub.s32 %s17, %s29
    %p31 = scmp.eq.s32.totalorder %s30, 0
    %s33 = sadd.s32 %s32, 1
    %s34 = scalar_select %p31, %s32, %s33
    %p37 = pneg %p31
    %p38 = scmp.eq.s32.totalorder %s10, 1
    %p39 = por %p37, %p38
    %p40 = scmp.ne.s32.totalorder %s32, %s35
    %p41 = scmp.eq.s32.totalorder %s10, 0
    %p42 = por %p40, %p41
    %p43 = scmp.ne.s32.totalorder %s32, %s35
    %p44 = scmp.eq.s32.totalorder %s15, 1
    %p45 = por %p43, %p44
    %p46 = scmp.ne.s32.totalorder %s35, %s36
    %p47 = scmp.eq.s32.totalorder %s15, 0
    %p48 = por %p46, %p47
    %p49 = scmp.ne.s32.totalorder %s35, %s36
    %p50 = scmp.eq.s32.totalorder %s16, 1
    %p51 = por %p49, %p50
    %p53 = scmp.ne.s32.totalorder %s36, %s52
    %p54 = scmp.eq.s32.totalorder %s16, 0
    %p55 = por %p53, %p54
    %s56 = ssub.s32 %s18, %s25
    %p57 = scmp.eq.s32.totalorder %s56, 0
    %s59 = sadd.s32 %s58, 1
    %s60 = scalar_select %p57, %s58, %s59
    %p63 = pneg %p57
    %p64 = scmp.eq.s32.totalorder %s10, 1
    %p65 = por %p63, %p64
    %p66 = scmp.ne.s32.totalorder %s58, %s61
    %p67 = scmp.eq.s32.totalorder %s10, 0
    %p68 = por %p66, %p67
    %p69 = scmp.ne.s32.totalorder %s58, %s61
    %p70 = scmp.eq.s32.totalorder %s15, 1
    %p71 = por %p69, %p70
    %p72 = scmp.ne.s32.totalorder %s61, %s62
    %p73 = scmp.eq.s32.totalorder %s15, 0
    %p74 = por %p72, %p73
    %p75 = scmp.ne.s32.totalorder %s61, %s62
    %p76 = scmp.eq.s32.totalorder %s16, 1
    %p77 = por %p75, %p76
    %p79 = scmp.ne.s32.totalorder %s62, %s78
    %p80 = scmp.eq.s32.totalorder %s16, 0
    %p81 = por %p79, %p80
    %s82 = ssub.s32 %s18, %s25
    %p83 = scmp.eq.s32.totalorder %s82, 0
    %s85 = sadd.s32 %s84, 1
    %s86 = scalar_select %p83, %s84, %s85
    %p89 = pneg %p83
    %p90 = scmp.eq.s32.totalorder %s10, 1
    %p91 = por %p89, %p90
    %p92 = scmp.ne.s32.totalorder %s84, %s87
    %p93 = scmp.eq.s32.totalorder %s10, 0
    %p94 = por %p92, %p93
    %p95 = scmp.ne.s32.totalorder %s84, %s87
    %p96 = scmp.eq.s32.totalorder %s15, 1
    %p97 = por %p95, %p96
    %p98 = scmp.ne.s32.totalorder %s87, %s88
    %p99 = scmp.eq.s32.totalorder %s15, 0
    %p100 = por %p98, %p99
    %p101 = scmp.ne.s32.totalorder %s87, %s88
    %p102 = scmp.eq.s32.totalorder %s16, 1
    %p103 = por %p101, %p102
    %p105 = scmp.ne.s32.totalorder %s88, %s104
    %p106 = scmp.eq.s32.totalorder %s16, 0
    %p107 = por %p105, %p106
    %s108 = ssub.s32 %s17, %s29
    %s109 = ssub.s32 %s18, %s25
    %s110 = sor.u32 %s108, %s109
    %p111 = scmp.eq.s32.totalorder %s110, 0
    %s113 = sadd.s32 %s112, 1
    %s114 = scalar_select %p111, %s112, %s113
    %p117 = pneg %p111
    %p118 = scmp.eq.s32.totalorder %s10, 1
    %p119 = por %p117, %p118
    %p120 = scmp.ne.s32.totalorder %s112, %s115
    %p121 = scmp.eq.s32.totalorder %s10, 0
    %p122 = por %p120, %p121
    %p123 = scmp.ne.s32.totalorder %s112, %s115
    %p124 = scmp.eq.s32.totalorder %s15, 1
    %p125 = por %p123, %p124
    %p126 = scmp.ne.s32.totalorder %s115, %s116
    %p127 = scmp.eq.s32.totalorder %s15, 0
    %p128 = por %p126, %p127
    %p129 = scmp.ne.s32.totalorder %s115, %s116
    %p130 = scmp.eq.s32.totalorder %s16, 1
    %p131 = por %p129, %p130
    %p133 = scmp.ne.s32.totalorder %s116, %s132
    %p134 = scmp.eq.s32.totalorder %s16, 0
    %p135 = por %p133, %p134
    %s136 = ssub.s32 %s17, %s29
    %s137 = ssub.s32 %s18, %s25
    %s138 = sor.u32 %s136, %s137
    %p139 = scmp.eq.s32.totalorder %s138, 0
    %s141 = sadd.s32 %s140, 1
    %s142 = scalar_select %p139, %s140, %s141
    %p145 = pneg %p139
    %p146 = scmp.eq.s32.totalorder %s10, 1
    %p147 = por %p145, %p146
    %p148 = scmp.ne.s32.totalorder %s140, %s143
    %p149 = scmp.eq.s32.totalorder %s10, 0
    %p150 = por %p148, %p149
    %p151 = scmp.ne.s32.totalorder %s140, %s143
    %p152 = scmp.eq.s32.totalorder %s15, 1
    %p153 = por %p151, %p152
    %p154 = scmp.ne.s32.totalorder %s143, %s144
    %p155 = scmp.eq.s32.totalorder %s15, 0
    %p156 = por %p154, %p155
    %p157 = scmp.ne.s32.totalorder %s143, %s144
    %p158 = scmp.eq.s32.totalorder %s16, 1
    %p159 = por %p157, %p158
    %p161 = scmp.ne.s32.totalorder %s144, %s160
    %p162 = scmp.eq.s32.totalorder %s16, 0
    %p163 = por %p161, %p162
    %p164 = scmp.le.s32.totalorder 1, %s10
    %p165 = scmp.lt.s32.totalorder %s10, 3
    %p166 = pnand %p164, %p165
    %p167 = pneg %p166
    // Predicated region
    $region9: #{_lambda_.28} parent=5 // pred_check
      _
    $region10: #{_lambda_.28} parent=5 // pred_check_branch
      %169 = sbr.rel (%p166) target = $region12
    $region11: #{_lambda_.28} parent=5 // pred_region
      %s170 = ssub.s32 %s10, 1
      // Predicated region
      $region13: #{_lambda_.28} parent=11 // pred_check
        %p171 = pneg %p74
      $region14: #{_lambda_.28} parent=11 // pred_check_branch
        %173 = sbr.rel (%p171) target = $region16
      $region15: #{_lambda_.28} parent=11 // pred_region
        %p174 = scmp.lt.s32.totalorder %s20, 0
        %s175 = scalar_select %p174, %s20, 0
        %s176 = smul.addr %s175, 4
        %s177 = scalar_lea.vmem %s1, %s176
      $region16: #{_lambda_.28} parent=11 // pred_fallthru
        _
      // Predicated region
      $region17: #{_lambda_.28} parent=11 // pred_check
        %p178 = pneg %p100
      $region18: #{_lambda_.28} parent=11 // pred_check_branch
        %180 = sbr.rel (%p178) target = $region20
      $region19: #{_lambda_.28} parent=11 // pred_region
        %p181 = scmp.lt.s32.totalorder %s20, 0
        %s182 = scalar_select %p181, %s20, 0
        %s183 = scalar_lea.vmem %s2, %s182
      $region20: #{_lambda_.28} parent=11 // pred_fallthru
        _
    $region12: #{_lambda_.28} parent=5 // pred_fallthru
      _
    %p184 = scmp.lt.s32.totalorder %s10, 2
    // Predicated region
    $region21: #{_lambda_.28} parent=5 // pred_check
      %p185 = pneg %p184
    $region22: #{_lambda_.28} parent=5 // pred_check_branch
      %187 = sbr.rel (%p185) target = $region24
    $region23: #{_lambda_.28} parent=5 // pred_region
      // Predicated region
      $region25: #{_lambda_.28} parent=23 // pred_check
        %p188 = pneg %p42
      $region26: #{_lambda_.28} parent=23 // pred_check_branch
        %190 = sbr.rel (%p188) target = $region28
      $region27: #{_lambda_.28} parent=23 // pred_region
        %s191 = smul.u32 2, %s17
        %p192 = scmp.lt.s32.totalorder %s191, 3
        %s193 = scalar_select %p192, %s191, 3
        %s194 = smul.addr %s193, 4
        %s195 = scalar_lea.vmem %s0, %s194
        %s196 = smul.u32 2, %s17
      $region28: #{_lambda_.28} parent=23 // pred_fallthru
        _
      // Predicated region
      $region29: #{_lambda_.28} parent=23 // pred_check
        %p197 = pneg %p122
      $region30: #{_lambda_.28} parent=23 // pred_check_branch
        %199 = sbr.rel (%p197) target = $region32
      $region31: #{_lambda_.28} parent=23 // pred_region
        %s200 = smul.u32 2, %s17
        %p201 = scmp.lt.s32.totalorder %s200, 3
        %s202 = scalar_select %p201, %s200, 3
        %p203 = scmp.lt.s32.totalorder %s18, 0
        %s204 = scalar_select %p203, %s18, 0
        %s205 = sadd.s32 %s204, %s202
        %s206 = smul.addr %s205, 4
        %s207 = scalar_lea.vmem %s3, %s206
        %s208 = smul.u32 2, %s17
      $region32: #{_lambda_.28} parent=23 // pred_fallthru
        _
    $region24: #{_lambda_.28} parent=5 // pred_fallthru
      _
    %p209 = scmp.le.s32.totalorder 1, %s10
    %p210 = scmp.lt.s32.totalorder %s10, 3
    %p211 = pnand %p209, %p210
    %p212 = pneg %p211
    // Predicated region
    $region33: #{_lambda_.28} parent=5 // pred_check
      _
    $region34: #{_lambda_.28} parent=5 // pred_check_branch
      %214 = sbr.rel (%p211) target = $region36
    $region35: #{_lambda_.28} parent=5 // pred_region
      %s215 = ssub.s32 %s10, 1
      %s216 = smul.u32 2, %s19
      %p217 = scmp.lt.s32.totalorder %s216, 3
      %s218 = scalar_select %p217, %s216, 3
      %s219 = smul.addr %s218, 4
      %s220 = scalar_lea.vmem %s0, %s219
      %p221 = pneg %p48
      %p222 = pneg %p45
      %p223 = scmp.lt.s32.totalorder %s20, 0
      %s224 = scalar_select %p223, %s20, 0
      %s225 = smul.addr %s224, 4
      %s226 = scalar_lea.vmem %s1, %s225
      %p227 = pneg %p74
      %p228 = pneg %p71
      %p229 = scmp.lt.s32.totalorder %s20, 0
      %s230 = scalar_select %p229, %s20, 0
      %s231 = scalar_lea.vmem %s2, %s230
      %p232 = pneg %p100
      %p233 = pneg %p97
      %s234 = smul.u32 2, %s19
      %p235 = scmp.lt.s32.totalorder %s234, 3
      %s236 = scalar_select %p235, %s234, 3
      %p237 = scmp.lt.s32.totalorder %s20, 0
      %s238 = scalar_select %p237, %s20, 0
      %s239 = sadd.s32 %s238, %s236
      %s240 = smul.addr %s239, 4
      %s241 = scalar_lea.vmem %s3, %s240
      %p242 = pneg %p128
      %p243 = pneg %p125
      %p244 = pneg %p156
      %p245 = pneg %p153
      %s246 = smul.u32 2, %s19
      %p247 = scmp.lt.s32.totalorder %s246, 3
      %s248 = scalar_select %p247, %s246, 3
      %p249 = scmp.lt.s32.totalorder %s20, 0
      %s250 = scalar_select %p249, %s20, 0
      %s251 = sadd.s32 %s250, %s248
      %s252 = smul.addr %s251, 4
      %s253 = scalar_lea.vmem %s4, %s252
      %s254 = smul.u32 2, %s19
      %p255 = scmp.lt.s32.totalorder %s254, 3
      %s256 = scalar_select %p255, %s254, 3
      %s257 = smul.addr %s256, 4
      %s258 = scalar_lea.vmem %s0, %s257
      %s259 = smul.u32 2, %s19
      %p260 = scmp.lt.s32.totalorder %s20, 0
      %s261 = scalar_select %p260, %s20, 0
      %s262 = smul.addr %s261, 4
      %s263 = scalar_lea.vmem %s1, %s262
      %p264 = scmp.lt.s32.totalorder %s20, 0
      %s265 = scalar_select %p264, %s20, 0
      %s266 = scalar_lea.vmem %s2, %s265
      %s267 = smul.u32 2, %s19
      %p268 = scmp.lt.s32.totalorder %s267, 3
      %s269 = scalar_select %p268, %s267, 3
      %p270 = scmp.lt.s32.totalorder %s20, 0
      %s271 = scalar_select %p270, %s20, 0
      %s272 = sadd.s32 %s271, %s269
      %s273 = smul.addr %s272, 4
      %s274 = scalar_lea.vmem %s3, %s273
      %s275 = smul.u32 2, %s19
      %s276 = smul.u32 2, %s19
      %p277 = scmp.lt.s32.totalorder %s276, 3
      %s278 = scalar_select %p277, %s276, 3
      %p279 = scmp.lt.s32.totalorder %s20, 0
      %s280 = scalar_select %p279, %s20, 0
      %s281 = sadd.s32 %s280, %s278
      %s282 = smul.addr %s281, 4
      %s283 = scalar_lea.vmem %s4, %s282
      %s284 = smul.u32 2, %s19
      %v286 = vld [vmem:[%s258] sm:$0xf]
      %v287 = vld [vmem:[%s258 + $0x4] sm:$0xf]
      %v288 = vld [vmem:[%s263] sm:$0xf]
      %v289 = vld [vmem:[%s263 + $0x4] sm:$0xf]
      %v290 = vld [vmem:[%s263 + $0x8] sm:$0xf]
      %v291 = vld [vmem:[%s263 + $0xc] sm:$0xf]
      %v292 = vld [vmem:[%s263 + $0x10] sm:$0xf]
      %v293 = vld [vmem:[%s263 + $0x14] sm:$0xf]
      %v294 = vld [vmem:[%s263 + $0x18] sm:$0xf]
      %v295 = vld [vmem:[%s263 + $0x1c] sm:$0xf]
      %v296 = vld [vmem:[%s263 + $0x20] sm:$0xf]
      %v297 = vld [vmem:[%s263 + $0x24] sm:$0xf]
      %v298 = vld [vmem:[%s263 + $0x28] sm:$0xf]
      %v299 = vld [vmem:[%s263 + $0x2c] sm:$0xf]
      %v300 = vld [vmem:[%s263 + $0x30] sm:$0xf]
      %v301 = vld [vmem:[%s263 + $0x34] sm:$0xf]
      %v302 = vld [vmem:[%s263 + $0x38] sm:$0xf]
      %v303 = vld [vmem:[%s263 + $0x3c] sm:$0xf]
      %v304 = vld [vmem:[%s266] sm:$0x1]
      %v306 = vlaneseq
      %v307 = vshrl.u32 %v306, 7
      %v308 = vsub.s32 0, %v307
      %v309 = vrot.slane %v304, %v308
      %v313 = vunpack.c.l.b16 %v286
      %v314 = vunpack.c.l.b16 %v287
      %v315 = vpack.c.b16 %v314, %v313
      %v333 = vunpack.c.l.b16 %v288
      %v334 = vunpack.c.l.b16 %v289
      %v335 = vunpack.c.l.b16 %v290
      %v336 = vunpack.c.l.b16 %v291
      %v337 = vunpack.c.l.b16 %v292
      %v338 = vunpack.c.l.b16 %v293
      %v339 = vunpack.c.l.b16 %v294
      %v340 = vunpack.c.l.b16 %v295
      %v341 = vunpack.c.l.b16 %v296
      %v342 = vunpack.c.l.b16 %v297
      %v343 = vunpack.c.l.b16 %v298
      %v344 = vunpack.c.l.b16 %v299
      %v345 = vunpack.c.l.b16 %v300
      %v346 = vunpack.c.l.b16 %v301
      %v347 = vunpack.c.l.b16 %v302
      %v348 = vunpack.c.l.b16 %v303
      %v349 = vpack.c.b16 %v334, %v333
      %v350 = vpack.c.b16 %v336, %v335
      %v351 = vpack.c.b16 %v338, %v337
      %v352 = vpack.c.b16 %v340, %v339
      %v353 = vpack.c.b16 %v342, %v341
      %v354 = vpack.c.b16 %v344, %v343
      %v355 = vpack.c.b16 %v346, %v345
      %v356 = vpack.c.b16 %v348, %v347
      %365 = vmatprep.subr.bf16.mxu0 0
      %366 = vmatpush1.bf16.msra.mxu0 %v349
      %367 = vmatprep.subr.bf16.mxu0 0
      %368 = vmatpush1.bf16.msra.mxu0 %v350
      %369 = vmatprep.subr.bf16.mxu0 0
      %370 = vmatpush1.bf16.msra.mxu0 %v351
      %371 = vmatprep.subr.bf16.mxu0 0
      %372 = vmatpush1.bf16.msra.mxu0 %v352
      %373 = vmatprep.subr.bf16.mxu0 0
      %374 = vmatpush1.bf16.msra.mxu0 %v353
      %375 = vmatprep.subr.bf16.mxu0 0
      %376 = vmatpush1.bf16.msra.mxu0 %v354
      %377 = vmatprep.subr.bf16.mxu0 0
      %378 = vmatpush1.bf16.msra.mxu0 %v355
      %379 = vmatprep.subr.bf16.mxu0 0
      %380 = vmatpush1.bf16.msra.mxu0 %v356
      %381 = vmatprep.subr.bf16.mxu0 0
      %382 = vmatpush1.bf16.msra.mxu0 0
      %383 = vmatprep.subr.bf16.mxu0 0
      %384 = vmatpush1.bf16.msra.mxu0 0
      %385 = vmatprep.subr.bf16.mxu0 0
      %386 = vmatpush1.bf16.msra.mxu0 0
      %387 = vmatprep.subr.bf16.mxu0 0
      %388 = vmatpush1.bf16.msra.mxu0 0
      %389 = vmatprep.subr.bf16.mxu0 0
      %390 = vmatpush1.bf16.msra.mxu0 0
      %391 = vmatprep.subr.bf16.mxu0 0
      %392 = vmatpush1.bf16.msra.mxu0 0
      %393 = vmatprep.subr.bf16.mxu0 0
      %394 = vmatpush1.bf16.msra.mxu0 0
      %395 = vmatprep.subr.bf16.mxu0 0
      %396 = vmatpush1.bf16.msra.mxu0 0
      %397 = vmatprep.mubr.bf16.mxu0 0
      %398 = vmatmul.mubr.bf16.gmra.mrb[0].mxu0 %v315
      %v399 = vpop.f32.mrb[0].mxu0
      %v400 = vadd.f32 %v309, %v399
      %v401 = vpop.f32.mrb[0].mxu0
      %v402 = vpop.f32.mrb[0].mxu0
      %v403 = vadd.f32 %v309, %v402
      %v404 = vpop.f32.mrb[0].mxu0
      %405 = vdwg.mxu0
      %v406 = vld [vmem:[%s274] sm:$0xf]
      %v407 = vld [vmem:[%s274 + $0x4] sm:$0xf]
      %v408 = vunpack.c.l.bf16 %v406
      %v409 = vunpack.c.l.bf16 %v407
      %v410 = vadd.f32 %v400, %v408
      %v411 = vadd.f32 %v403, %v409
      %v412 = vmax.f32 %v410, 0.0
      %v413 = vmax.f32 %v411, 0.0
      %v414 = vpack.c.bf16 %v413, %v412
      %v416 = vunpack.c.l.b16 %v414
      %v417 = vunpack.c.h.b16 %v414
      %v418 = vpack.c.b16 %v416, %v416
      %v419 = vpack.c.b16 %v417, %v417
      %422 = vst [vmem:[%s283] sm:$0xf] %v418
      %423 = vst [vmem:[%s283 + $0x4] sm:$0xf] %v419
      %s424 = smul.u32 2, %s19
      %p425 = scmp.lt.s32.totalorder %s424, 3
      %s426 = scalar_select %p425, %s424, 3
      %p427 = scmp.lt.s32.totalorder %s20, 0
      %s428 = scalar_select %p427, %s20, 0
      %s429 = sadd.s32 %s428, %s426
      %s430 = smul.addr %s429, 4
      %s431 = scalar_lea.vmem %s4, %s430
      // Predicated region
      $region37: #{_lambda_.28} parent=35 // pred_check
        %p432 = pneg %p153
      $region38: #{_lambda_.28} parent=35 // pred_check_branch
        %434 = sbr.rel (%p432) target = $region40
      $region39: #{_lambda_.28} parent=35 // pred_region
        %s435 = smul.u32 2, %s19
      $region40: #{_lambda_.28} parent=35 // pred_fallthru
        _
    $region36: #{_lambda_.28} parent=5 // pred_fallthru
      _
    %p436 = scmp.le.s32.totalorder 2, %s10
    // Predicated region
    $region41: #{_lambda_.28} parent=5 // pred_check
      %p437 = pneg %p436
    $region42: #{_lambda_.28} parent=5 // pred_check_branch
      %439 = sbr.rel (%p437) target = $region44
    $region43: #{_lambda_.28} parent=5 // pred_region
      %s440 = ssub.s32 %s10, 2
      // Predicated region
      $region45: #{_lambda_.28} parent=43 // pred_check
        %p441 = pneg %p159
      $region46: #{_lambda_.28} parent=43 // pred_check_branch
        %443 = sbr.rel (%p441) target = $region48
      $region47: #{_lambda_.28} parent=43 // pred_region
        %s444 = smul.u32 2, %s21
        %p445 = scmp.lt.s32.totalorder %s444, 3
        %s446 = scalar_select %p445, %s444, 3
        %p447 = scmp.lt.s32.totalorder %s22, 0
        %s448 = scalar_select %p447, %s22, 0
        %s449 = sadd.s32 %s448, %s446
        %s450 = smul.addr %s449, 4
        %s451 = scalar_lea.vmem %s4, %s450
      $region48: #{_lambda_.28} parent=43 // pred_fallthru
        _
    $region44: #{_lambda_.28} parent=5 // pred_fallthru
      _
  $region6: #{_lambda_.28} parent=0 // loop_footer
    %s14 = sadd.s32 1, %s10
  $region7: #{_lambda_.28} parent=0 // loop_footer_branch
    %9 = sbr.rel target = $region3
  $region8: #{_lambda_.28} parent=0 // loop_exit
    _

// kernel: _lambda_.26
$region0: #{_lambda_.26}
  #allocation0 [shape = 'u32[]', space=smem, size = 0x4, offset = 0x4, fixed_abs, tag = 'smem constant byte address 0x4 - core index']
  #allocation1 [shape = 'u32[144,128]{1,0:T(1,128)}', space=vmem, size = 0x12000, scoped, tag = 'internal scratch']
  %s0 = inlined_call_operand.vmem [shape: bf16[2,42,128], index: 0, kind: input, shape index: {}]
  %s1 = inlined_call_operand.vmem [shape: bf16[1152,128], index: 1, kind: input, shape index: {}]
  %s2 = inlined_call_operand.vmem [shape: f32[1,128], index: 2, kind: input, shape index: {}]
  %s3 = inlined_call_operand.vmem [shape: bf16[2,24,128], index: 3, kind: output, shape index: {}]
  %s4 = sld [smem:[#allocation0]]
  $region45: #{_lambda_.26} parent=0
    _
  %s6 = ssub.s32 1, %s4
  %s7 = scalar_select 0, %s6, %s4
  loop: start=0, step=1, limit=4
  $region2: #{_lambda_.26} parent=0 // loop_pre_header
    _
  $region3: #{_lambda_.26} parent=0 // loop_header
    %s9 = sphi 0, %s13
    %p10 = scmp.ge.s32.totalorder %s9, 4
    %s16 = sphi 0, %s28
    %s17 = sphi 0, %s24
    %s18 = sphi 0, %s16
    %s19 = sphi 0, %s17
    %s20 = sphi 0, %s18
    %s21 = sphi 0, %s19
    %s31 = sphi 0, %s33
    %s34 = sphi 0, %s31
    %s35 = sphi 0, %s34
    %s51 = sphi 0, %s35
    %s57 = sphi 0, %s59
    %s60 = sphi 0, %s57
    %s61 = sphi 0, %s60
    %s77 = sphi 0, %s61
    %s83 = sphi 0, %s85
    %s86 = sphi 0, %s83
    %s87 = sphi 0, %s86
    %s103 = sphi 0, %s87
    %s111 = sphi 0, %s113
    %s114 = sphi 0, %s111
    %s115 = sphi 0, %s114
    %s131 = sphi 0, %s115
  $region4: #{_lambda_.26} parent=0 // loop_header_branch
    %12 = sbr.rel (%p10) target = $region8
  $region5: #{_lambda_.26} parent=0 // loop_body
    %s14 = ssub.s32 %s9, 1
    %s15 = ssub.s32 %s9, 2
    %s22 = sadd.s32 1, %s17
    %p23 = scmp.ge.s32.totalorder %s22, 1
    %s24 = scalar_select %p23, 0, %s22
    %s25 = sadd.s32 1, %s16
    %s26 = scalar_select %p23, %s25, %s16
    %p27 = scmp.ge.s32.totalorder %s26, 2
    %s28 = scalar_select %p27, 0, %s26
    %s29 = ssub.s32 %s16, %s28
    %p30 = scmp.eq.s32.totalorder %s29, 0
    %s32 = sadd.s32 %s31, 1
    %s33 = scalar_select %p30, %s31, %s32
    %p36 = pneg %p30
    %p37 = scmp.eq.s32.totalorder %s9, 1
    %p38 = por %p36, %p37
    %p39 = scmp.ne.s32.totalorder %s31, %s34
    %p40 = scmp.eq.s32.totalorder %s9, 0
    %p41 = por %p39, %p40
    %p42 = scmp.ne.s32.totalorder %s31, %s34
    %p43 = scmp.eq.s32.totalorder %s14, 1
    %p44 = por %p42, %p43
    %p45 = scmp.ne.s32.totalorder %s34, %s35
    %p46 = scmp.eq.s32.totalorder %s14, 0
    %p47 = por %p45, %p46
    %p48 = scmp.ne.s32.totalorder %s34, %s35
    %p49 = scmp.eq.s32.totalorder %s15, 1
    %p50 = por %p48, %p49
    %p52 = scmp.ne.s32.totalorder %s35, %s51
    %p53 = scmp.eq.s32.totalorder %s15, 0
    %p54 = por %p52, %p53
    %s55 = ssub.s32 %s17, %s24
    %p56 = scmp.eq.s32.totalorder %s55, 0
    %s58 = sadd.s32 %s57, 1
    %s59 = scalar_select %p56, %s57, %s58
    %p62 = pneg %p56
    %p63 = scmp.eq.s32.totalorder %s9, 1
    %p64 = por %p62, %p63
    %p65 = scmp.ne.s32.totalorder %s57, %s60
    %p66 = scmp.eq.s32.totalorder %s9, 0
    %p67 = por %p65, %p66
    %p68 = scmp.ne.s32.totalorder %s57, %s60
    %p69 = scmp.eq.s32.totalorder %s14, 1
    %p70 = por %p68, %p69
    %p71 = scmp.ne.s32.totalorder %s60, %s61
    %p72 = scmp.eq.s32.totalorder %s14, 0
    %p73 = por %p71, %p72
    %p74 = scmp.ne.s32.totalorder %s60, %s61
    %p75 = scmp.eq.s32.totalorder %s15, 1
    %p76 = por %p74, %p75
    %p78 = scmp.ne.s32.totalorder %s61, %s77
    %p79 = scmp.eq.s32.totalorder %s15, 0
    %p80 = por %p78, %p79
    %s81 = ssub.s32 %s17, %s24
    %p82 = scmp.eq.s32.totalorder %s81, 0
    %s84 = sadd.s32 %s83, 1
    %s85 = scalar_select %p82, %s83, %s84
    %p88 = pneg %p82
    %p89 = scmp.eq.s32.totalorder %s9, 1
    %p90 = por %p88, %p89
    %p91 = scmp.ne.s32.totalorder %s83, %s86
    %p92 = scmp.eq.s32.totalorder %s9, 0
    %p93 = por %p91, %p92
    %p94 = scmp.ne.s32.totalorder %s83, %s86
    %p95 = scmp.eq.s32.totalorder %s14, 1
    %p96 = por %p94, %p95
    %p97 = scmp.ne.s32.totalorder %s86, %s87
    %p98 = scmp.eq.s32.totalorder %s14, 0
    %p99 = por %p97, %p98
    %p100 = scmp.ne.s32.totalorder %s86, %s87
    %p101 = scmp.eq.s32.totalorder %s15, 1
    %p102 = por %p100, %p101
    %p104 = scmp.ne.s32.totalorder %s87, %s103
    %p105 = scmp.eq.s32.totalorder %s15, 0
    %p106 = por %p104, %p105
    %s107 = ssub.s32 %s16, %s28
    %s108 = ssub.s32 %s17, %s24
    %s109 = sor.u32 %s107, %s108
    %p110 = scmp.eq.s32.totalorder %s109, 0
    %s112 = sadd.s32 %s111, 1
    %s113 = scalar_select %p110, %s111, %s112
    %p116 = pneg %p110
    %p117 = scmp.eq.s32.totalorder %s9, 1
    %p118 = por %p116, %p117
    %p119 = scmp.ne.s32.totalorder %s111, %s114
    %p120 = scmp.eq.s32.totalorder %s9, 0
    %p121 = por %p119, %p120
    %p122 = scmp.ne.s32.totalorder %s111, %s114
    %p123 = scmp.eq.s32.totalorder %s14, 1
    %p124 = por %p122, %p123
    %p125 = scmp.ne.s32.totalorder %s114, %s115
    %p126 = scmp.eq.s32.totalorder %s14, 0
    %p127 = por %p125, %p126
    %p128 = scmp.ne.s32.totalorder %s114, %s115
    %p129 = scmp.eq.s32.totalorder %s15, 1
    %p130 = por %p128, %p129
    %p132 = scmp.ne.s32.totalorder %s115, %s131
    %p133 = scmp.eq.s32.totalorder %s15, 0
    %p134 = por %p132, %p133
    %p135 = scmp.le.s32.totalorder 1, %s9
    %p136 = scmp.lt.s32.totalorder %s9, 3
    %p137 = pnand %p135, %p136
    %p138 = pneg %p137
    // Predicated region
    $region9: #{_lambda_.26} parent=5 // pred_check
      _
    $region10: #{_lambda_.26} parent=5 // pred_check_branch
      %140 = sbr.rel (%p137) target = $region12
    $region11: #{_lambda_.26} parent=5 // pred_region
      %s141 = ssub.s32 %s9, 1
      // Predicated region
      $region13: #{_lambda_.26} parent=11 // pred_check
        %p142 = pneg %p73
      $region14: #{_lambda_.26} parent=11 // pred_check_branch
        %144 = sbr.rel (%p142) target = $region16
      $region15: #{_lambda_.26} parent=11 // pred_region
        %p145 = scmp.lt.s32.totalorder %s19, 0
        %s146 = scalar_select %p145, %s19, 0
        %s147 = smul.addr %s146, 4
        %s148 = scalar_lea.vmem %s1, %s147
      $region16: #{_lambda_.26} parent=11 // pred_fallthru
        _
      // Predicated region
      $region17: #{_lambda_.26} parent=11 // pred_check
        %p149 = pneg %p99
      $region18: #{_lambda_.26} parent=11 // pred_check_branch
        %151 = sbr.rel (%p149) target = $region20
      $region19: #{_lambda_.26} parent=11 // pred_region
        %p152 = scmp.lt.s32.totalorder %s19, 0
        %s153 = scalar_select %p152, %s19, 0
        %s154 = scalar_lea.vmem %s2, %s153
      $region20: #{_lambda_.26} parent=11 // pred_fallthru
        _
    $region12: #{_lambda_.26} parent=5 // pred_fallthru
      _
    %p155 = scmp.lt.s32.totalorder %s9, 2
    // Predicated region
    $region21: #{_lambda_.26} parent=5 // pred_check
      %p156 = pneg %p155
    $region22: #{_lambda_.26} parent=5 // pred_check_branch
      %158 = sbr.rel (%p156) target = $region24
    $region23: #{_lambda_.26} parent=5 // pred_region
      // Predicated region
      $region25: #{_lambda_.26} parent=23 // pred_check
        %p159 = pneg %p41
      $region26: #{_lambda_.26} parent=23 // pred_check_branch
        %161 = sbr.rel (%p159) target = $region28
      $region27: #{_lambda_.26} parent=23 // pred_region
        %p162 = scmp.lt.s32.totalorder %s16, 1
        %s163 = scalar_select %p162, %s16, 1
        %s164 = smul.addr %s163, 6
        %s165 = smul.addr %s164, 4
        %s166 = scalar_lea.vmem %s0, %s165
      $region28: #{_lambda_.26} parent=23 // pred_fallthru
        _
    $region24: #{_lambda_.26} parent=5 // pred_fallthru
      _
    %p167 = scmp.le.s32.totalorder 1, %s9
    %p168 = scmp.lt.s32.totalorder %s9, 3
    %p169 = pnand %p167, %p168
    %p170 = pneg %p169
    // Predicated region
    $region29: #{_lambda_.26} parent=5 // pred_check
      _
    $region30: #{_lambda_.26} parent=5 // pred_check_branch
      %172 = sbr.rel (%p169) target = $region32
    $region31: #{_lambda_.26} parent=5 // pred_region
      %s173 = ssub.s32 %s9, 1
      %p174 = scmp.lt.s32.totalorder %s18, 1
      %s175 = scalar_select %p174, %s18, 1
      %s176 = smul.addr %s175, 6
      %s177 = smul.addr %s176, 4
      %s178 = scalar_lea.vmem %s0, %s177
      %p179 = pneg %p47
      %p180 = pneg %p44
      %p181 = scmp.lt.s32.totalorder %s19, 0
      %s182 = scalar_select %p181, %s19, 0
      %s183 = smul.addr %s182, 4
      %s184 = scalar_lea.vmem %s1, %s183
      %p185 = pneg %p73
      %p186 = pneg %p70
      %p187 = scmp.lt.s32.totalorder %s19, 0
      %s188 = scalar_select %p187, %s19, 0
      %s189 = scalar_lea.vmem %s2, %s188
      %p190 = pneg %p99
      %p191 = pneg %p96
      %p192 = pneg %p127
      %p193 = pneg %p124
      %p194 = scmp.lt.s32.totalorder %s18, 1
      %s195 = scalar_select %p194, %s18, 1
      %p196 = scmp.lt.s32.totalorder %s19, 0
      %s197 = scalar_select %p196, %s19, 0
      %s198 = smul.addr %s195, 3
      %s199 = sadd.s32 %s197, %s198
      %s200 = smul.addr %s199, 4
      %s201 = scalar_lea.vmem %s3, %s200
      %p202 = scmp.lt.s32.totalorder %s18, 1
      %s203 = scalar_select %p202, %s18, 1
      %s204 = smul.addr %s203, 6
      %s205 = smul.addr %s204, 4
      %s206 = scalar_lea.vmem %s0, %s205
      %p207 = scmp.lt.s32.totalorder %s19, 0
      %s208 = scalar_select %p207, %s19, 0
      %s209 = smul.addr %s208, 4
      %s210 = scalar_lea.vmem %s1, %s209
      %p211 = scmp.lt.s32.totalorder %s19, 0
      %s212 = scalar_select %p211, %s19, 0
      %s213 = scalar_lea.vmem %s2, %s212
      %p214 = scmp.lt.s32.totalorder %s18, 1
      %s215 = scalar_select %p214, %s18, 1
      %p216 = scmp.lt.s32.totalorder %s19, 0
      %s217 = scalar_select %p216, %s19, 0
      %s218 = smul.addr %s215, 3
      %s219 = sadd.s32 %s217, %s218
      %s220 = smul.addr %s219, 4
      %s221 = scalar_lea.vmem %s3, %s220
      %v223 = vld [vmem:[%s206] sm:$0xf]
      %v224 = vld [vmem:[%s206 + $0x4] sm:$0xf]
      %v225 = vld [vmem:[%s206 + $0x8] sm:$0xf]
      %v226 = vld [vmem:[%s210] sm:$0xf]
      %v227 = vld [vmem:[%s210 + $0x4] sm:$0xf]
      %v228 = vld [vmem:[%s210 + $0x8] sm:$0xf]
      %v229 = vld [vmem:[%s210 + $0xc] sm:$0xf]
      %v230 = vld [vmem:[%s210 + $0x10] sm:$0xf]
      %v231 = vld [vmem:[%s210 + $0x14] sm:$0xf]
      %v232 = vld [vmem:[%s210 + $0x18] sm:$0xf]
      %v233 = vld [vmem:[%s210 + $0x1c] sm:$0xf]
      %v234 = vld [vmem:[%s210 + $0x20] sm:$0xf]
      %v235 = vld [vmem:[%s210 + $0x24] sm:$0xf]
      %v236 = vld [vmem:[%s210 + $0x28] sm:$0xf]
      %v237 = vld [vmem:[%s210 + $0x2c] sm:$0xf]
      %v238 = vld [vmem:[%s210 + $0x30] sm:$0xf]
      %v239 = vld [vmem:[%s210 + $0x34] sm:$0xf]
      %v240 = vld [vmem:[%s210 + $0x38] sm:$0xf]
      %v241 = vld [vmem:[%s210 + $0x3c] sm:$0xf]
      %v242 = vld [vmem:[%s206 + $0xc] sm:$0x1]
      %v243 = vld [vmem:[%s210 + $0x40] sm:$0xf]
      %v244 = vld [vmem:[%s210 + $0x44] sm:$0xf]
      %v245 = vld [vmem:[%s210 + $0x48] sm:$0xf]
      %v246 = vld [vmem:[%s210 + $0x4c] sm:$0xf]
      %v247 = vld [vmem:[%s210 + $0x50] sm:$0xf]
      %v248 = vld [vmem:[%s210 + $0x54] sm:$0xf]
      %v249 = vld [vmem:[%s210 + $0x58] sm:$0xf]
      %v250 = vld [vmem:[%s210 + $0x5c] sm:$0xf]
      %v251 = vld [vmem:[%s210 + $0x60] sm:$0xf]
      %v252 = vld [vmem:[%s210 + $0x64] sm:$0xf]
      %v253 = vld [vmem:[%s210 + $0x68] sm:$0xf]
      %v254 = vld [vmem:[%s210 + $0x6c] sm:$0xf]
      %v255 = vld [vmem:[%s210 + $0x70] sm:$0xf]
      %v256 = vld [vmem:[%s210 + $0x74] sm:$0xf]
      %v257 = vld [vmem:[%s210 + $0x78] sm:$0xf]
      %v258 = vld [vmem:[%s210 + $0x7c] sm:$0xf]
      %v263 = vunpack.c.l.b16 %v223
      %v264 = vunpack.c.l.b16 %v224
      %v265 = vunpack.c.l.b16 %v225
      %v266 = vunpack.c.l.b16 %v242
      %v267 = vpack.c.b16 %v264, %v263
      %v268 = vpack.c.b16 %v266, %v265
      %vm269 = vsmask.f32 7424
      %v271 = vshrl.u32 %v267, 16
      %v273 = vshll.u32 %v267, 16
      %v275 = vrot.slane %v273, 1
      %v276 = vor.u32 %v271, %v275
      %v278 = vshll.u32 %v268, 16
      %v280 = vrot.slane %v278, 1
      %v281 = vsel %vm269, %v276, %v280
      %v282 = vshrl.u32 %v268, 16
      %v284 = vor.u32 %v282, %v280
      %v303 = vunpack.c.l.b16 %v243
      %v304 = vunpack.c.l.b16 %v244
      %v305 = vunpack.c.l.b16 %v245
      %v306 = vunpack.c.l.b16 %v246
      %v307 = vunpack.c.l.b16 %v247
      %v308 = vunpack.c.l.b16 %v248
      %v309 = vunpack.c.l.b16 %v249
      %v310 = vunpack.c.l.b16 %v250
      %v311 = vunpack.c.l.b16 %v251
      %v312 = vunpack.c.l.b16 %v252
      %v313 = vunpack.c.l.b16 %v253
      %v314 = vunpack.c.l.b16 %v254
      %v315 = vunpack.c.l.b16 %v255
      %v316 = vunpack.c.l.b16 %v256
      %v317 = vunpack.c.l.b16 %v257
      %v318 = vunpack.c.l.b16 %v258
      %v319 = vpack.c.b16 %v304, %v303
      %v320 = vpack.c.b16 %v306, %v305
      %v321 = vpack.c.b16 %v308, %v307
      %v322 = vpack.c.b16 %v310, %v309
      %v323 = vpack.c.b16 %v312, %v311
      %v324 = vpack.c.b16 %v314, %v313
      %v325 = vpack.c.b16 %v316, %v315
      %v326 = vpack.c.b16 %v318, %v317
      %335 = vmatprep.subr.bf16.mxu0 0
      %336 = vmatpush1.bf16.msra.mxu0 %v319
      %337 = vmatprep.subr.bf16.mxu0 0
      %338 = vmatpush1.bf16.msra.mxu0 %v320
      %339 = vmatprep.subr.bf16.mxu0 0
      %340 = vmatpush1.bf16.msra.mxu0 %v321
      %341 = vmatprep.subr.bf16.mxu0 0
      %342 = vmatpush1.bf16.msra.mxu0 %v322
      %343 = vmatprep.subr.bf16.mxu0 0
      %344 = vmatpush1.bf16.msra.mxu0 %v323
      %345 = vmatprep.subr.bf16.mxu0 0
      %346 = vmatpush1.bf16.msra.mxu0 %v324
      %347 = vmatprep.subr.bf16.mxu0 0
      %348 = vmatpush1.bf16.msra.mxu0 %v325
      %349 = vmatprep.subr.bf16.mxu0 0
      %350 = vmatpush1.bf16.msra.mxu0 %v326
      %351 = vmatprep.subr.bf16.mxu0 0
      %352 = vmatpush1.bf16.msra.mxu0 0
      %353 = vmatprep.subr.bf16.mxu0 0
      %354 = vmatpush1.bf16.msra.mxu0 0
      %355 = vmatprep.subr.bf16.mxu0 0
      %356 = vmatpush1.bf16.msra.mxu0 0
      %357 = vmatprep.subr.bf16.mxu0 0
      %358 = vmatpush1.bf16.msra.mxu0 0
      %359 = vmatprep.subr.bf16.mxu0 0
      %360 = vmatpush1.bf16.msra.mxu0 0
      %361 = vmatprep.subr.bf16.mxu0 0
      %362 = vmatpush1.bf16.msra.mxu0 0
      %363 = vmatprep.subr.bf16.mxu0 0
      %364 = vmatpush1.bf16.msra.mxu0 0
      %365 = vmatprep.subr.bf16.mxu0 0
      %366 = vmatpush1.bf16.msra.mxu0 0
      %367 = vmatprep.mubr.bf16.mxu0 0
      %368 = vmatmul.mubr.bf16.gmra.mrb[0].mxu0 %v281
      %v369 = vpop.f32.mrb[0].mxu0
      %v370 = vadd.f32 0.0, %v369
      %v371 = vpop.f32.mrb[0].mxu0
      %v372 = vpop.f32.mrb[0].mxu0
      %v373 = vadd.f32 0.0, %v372
      %v374 = vpop.f32.mrb[0].mxu0
      %375 = vmatprep.mubr.bf16.mxu0 0
      %376 = vmatmul.mubr.bf16.gmra.mrb[0].mxu0 %v284
      %v377 = vpop.f32.mrb[0].mxu0
      %v378 = vadd.f32 0.0, %v377
      %v379 = vpop.f32.mrb[0].mxu0
      %v380 = vpop.f32.mrb[0].mxu0
      %v381 = vpop.f32.mrb[0].mxu0
      %382 = vdwg.mxu0
      %v383 = vpack.c.b16 %v265, %v265
      %v402 = vunpack.c.l.b16 %v226
      %v403 = vunpack.c.l.b16 %v227
      %v404 = vunpack.c.l.b16 %v228
      %v405 = vunpack.c.l.b16 %v229
      %v406 = vunpack.c.l.b16 %v230
      %v407 = vunpack.c.l.b16 %v231
      %v408 = vunpack.c.l.b16 %v232
      %v409 = vunpack.c.l.b16 %v233
      %v410 = vunpack.c.l.b16 %v234
      %v411 = vunpack.c.l.b16 %v235
      %v412 = vunpack.c.l.b16 %v236
      %v413 = vunpack.c.l.b16 %v237
      %v414 = vunpack.c.l.b16 %v238
      %v415 = vunpack.c.l.b16 %v239
      %v416 = vunpack.c.l.b16 %v240
      %v417 = vunpack.c.l.b16 %v241
      %v418 = vpack.c.b16 %v403, %v402
      %v419 = vpack.c.b16 %v405, %v404
      %v420 = vpack.c.b16 %v407, %v406
      %v421 = vpack.c.b16 %v409, %v408
      %v422 = vpack.c.b16 %v411, %v410
      %v423 = vpack.c.b16 %v413, %v412
      %v424 = vpack.c.b16 %v415, %v414
      %v425 = vpack.c.b16 %v417, %v416
      %434 = vmatprep.subr.bf16.mxu0 0
      %435 = vmatpush1.bf16.msra.mxu0 %v418
      %436 = vmatprep.subr.bf16.mxu0 0
      %437 = vmatpush1.bf16.msra.mxu0 %v419
      %438 = vmatprep.subr.bf16.mxu0 0
      %439 = vmatpush1.bf16.msra.mxu0 %v420
      %440 = vmatprep.subr.bf16.mxu0 0
      %441 = vmatpush1.bf16.msra.mxu0 %v421
      %442 = vmatprep.subr.bf16.mxu0 0
      %443 = vmatpush1.bf16.msra.mxu0 %v422
      %444 = vmatprep.subr.bf16.mxu0 0
      %445 = vmatpush1.bf16.msra.mxu0 %v423
      %446 = vmatprep.subr.bf16.mxu0 0
      %447 = vmatpush1.bf16.msra.mxu0 %v424
      %448 = vmatprep.subr.bf16.mxu0 0
      %449 = vmatpush1.bf16.msra.mxu0 %v425
      %450 = vmatprep.subr.bf16.mxu0 0
      %451 = vmatpush1.bf16.msra.mxu0 0
      %452 = vmatprep.subr.bf16.mxu0 0
      %453 = vmatpush1.bf16.msra.mxu0 0
      %454 = vmatprep.subr.bf16.mxu0 0
      %455 = vmatpush1.bf16.msra.mxu0 0
      %456 = vmatprep.subr.bf16.mxu0 0
      %457 = vmatpush1.bf16.msra.mxu0 0
      %458 = vmatprep.subr.bf16.mxu0 0
      %459 = vmatpush1.bf16.msra.mxu0 0
      %460 = vmatprep.subr.bf16.mxu0 0
      %461 = vmatpush1.bf16.msra.mxu0 0
      %462 = vmatprep.subr.bf16.mxu0 0
      %463 = vmatpush1.bf16.msra.mxu0 0
      %464 = vmatprep.subr.bf16.mxu0 0
      %465 = vmatpush1.bf16.msra.mxu0 0
      %466 = vmatprep.mubr.bf16.mxu0 0
      %467 = vmatmul.mubr.bf16.gmra.mrb[0].mxu0 %v267
      %v468 = vpop.f32.mrb[0].mxu0
      %v469 = vadd.f32 %v370, %v468
      %v470 = vpop.f32.mrb[0].mxu0
      %v471 = vpop.f32.mrb[0].mxu0
      %v472 = vadd.f32 %v373, %v471
      %v473 = vpop.f32.mrb[0].mxu0
      %474 = vmatprep.mubr.bf16.mxu0 0
      %475 = vmatmul.mubr.bf16.gmra.mrb[0].mxu0 %v383
      %v476 = vpop.f32.mrb[0].mxu0
      %v477 = vadd.f32 %v378, %v476
      %v478 = vpop.f32.mrb[0].mxu0
      %v479 = vpop.f32.mrb[0].mxu0
      %v480 = vpop.f32.mrb[0].mxu0
      %481 = vdwg.mxu0
      %v482 = vld [vmem:[%s206] sm:$0xe]
      %v483 = vld [vmem:[%s210 + $0x80] sm:$0xf]
      %v484 = vld [vmem:[%s210 + $0x84] sm:$0xf]
      %v485 = vld [vmem:[%s210 + $0x88] sm:$0xf]
      %v486 = vld [vmem:[%s210 + $0x8c] sm:$0xf]
      %v487 = vld [vmem:[%s210 + $0x90] sm:$0xf]
      %v488 = vld [vmem:[%s210 + $0x94] sm:$0xf]
      %v489 = vld [vmem:[%s210 + $0x98] sm:$0xf]
      %v490 = vld [vmem:[%s210 + $0x9c] sm:$0xf]
      %v491 = vld [vmem:[%s210 + $0xa0] sm:$0xf]
      %v492 = vld [vmem:[%s210 + $0xa4] sm:$0xf]
      %v493 = vld [vmem:[%s210 + $0xa8] sm:$0xf]
      %v494 = vld [vmem:[%s210 + $0xac] sm:$0xf]
      %v495 = vld [vmem:[%s210 + $0xb0] sm:$0xf]
      %v496 = vld [vmem:[%s210 + $0xb4] sm:$0xf]
      %v497 = vld [vmem:[%s210 + $0xb8] sm:$0xf]
      %v498 = vld [vmem:[%s210 + $0xbc] sm:$0xf]
      %v500 = vunpack.c.l.b16 %v482
      %v501 = vpack.c.b16 %v264, %v500
      %vm502 = vcmask 1046528
      %v503 = vrot.slane %v501, 1
      %v504 = vrot.slane %v268, 1
      %v505 = vsel %vm502, %v503, %v504
      %v524 = vunpack.c.l.b16 %v483
      %v525 = vunpack.c.l.b16 %v484
      %v526 = vunpack.c.l.b16 %v485
      %v527 = vunpack.c.l.b16 %v486
      %v528 = vunpack.c.l.b16 %v487
      %v529 = vunpack.c.l.b16 %v488
      %v530 = vunpack.c.l.b16 %v489
      %v531 = vunpack.c.l.b16 %v490
      %v532 = vunpack.c.l.b16 %v491
      %v533 = vunpack.c.l.b16 %v492
      %v534 = vunpack.c.l.b16 %v493
      %v535 = vunpack.c.l.b16 %v494
      %v536 = vunpack.c.l.b16 %v495
      %v537 = vunpack.c.l.b16 %v496
      %v538 = vunpack.c.l.b16 %v497
      %v539 = vunpack.c.l.b16 %v498
      %v540 = vpack.c.b16 %v525, %v524
      %v541 = vpack.c.b16 %v527, %v526
      %v542 = vpack.c.b16 %v529, %v528
      %v543 = vpack.c.b16 %v531, %v530
      %v544 = vpack.c.b16 %v533, %v532
      %v545 = vpack.c.b16 %v535, %v534
      %v546 = vpack.c.b16 %v537, %v536
      %v547 = vpack.c.b16 %v539, %v538
      %556 = vmatprep.subr.bf16.mxu0 0
      %557 = vmatpush1.bf16.msra.mxu0 %v540
      %558 = vmatprep.subr.bf16.mxu0 0
      %559 = vmatpush1.bf16.msra.mxu0 %v541
      %560 = vmatprep.subr.bf16.mxu0 0
      %561 = vmatpush1.bf16.msra.mxu0 %v542
      %562 = vmatprep.subr.bf16.mxu0 0
      %563 = vmatpush1.bf16.msra.mxu0 %v543
      %564 = vmatprep.subr.bf16.mxu0 0
      %565 = vmatpush1.bf16.msra.mxu0 %v544
      %566 = vmatprep.subr.bf16.mxu0 0
      %567 = vmatpush1.bf16.msra.mxu0 %v545
      %568 = vmatprep.subr.bf16.mxu0 0
      %569 = vmatpush1.bf16.msra.mxu0 %v546
      %570 = vmatprep.subr.bf16.mxu0 0
      %571 = vmatpush1.bf16.msra.mxu0 %v547
      %572 = vmatprep.subr.bf16.mxu0 0
      %573 = vmatpush1.bf16.msra.mxu0 0
      %574 = vmatprep.subr.bf16.mxu0 0
      %575 = vmatpush1.bf16.msra.mxu0 0
      %576 = vmatprep.subr.bf16.mxu0 0
      %577 = vmatpush1.bf16.msra.mxu0 0
      %578 = vmatprep.subr.bf16.mxu0 0
      %579 = vmatpush1.bf16.msra.mxu0 0
      %580 = vmatprep.subr.bf16.mxu0 0
      %581 = vmatpush1.bf16.msra.mxu0 0
      %582 = vmatprep.subr.bf16.mxu0 0
      %583 = vmatpush1.bf16.msra.mxu0 0
      %584 = vmatprep.subr.bf16.mxu0 0
      %585 = vmatpush1.bf16.msra.mxu0 0
      %586 = vmatprep.subr.bf16.mxu0 0
      %587 = vmatpush1.bf16.msra.mxu0 0
      %588 = vmatprep.mubr.bf16.mxu0 0
      %589 = vmatmul.mubr.bf16.gmra.mrb[0].mxu0 %v505
      %v590 = vpop.f32.mrb[0].mxu0
      %v591 = vadd.f32 0.0, %v590
      %v592 = vpop.f32.mrb[0].mxu0
      %v593 = vpop.f32.mrb[0].mxu0
      %v594 = vadd.f32 0.0, %v593
      %v595 = vpop.f32.mrb[0].mxu0
      %596 = vmatprep.mubr.bf16.mxu0 0
      %597 = vmatmul.mubr.bf16.gmra.mrb[0].mxu0 %v504
      %v598 = vpop.f32.mrb[0].mxu0
      %v599 = vadd.f32 0.0, %v598
      %v600 = vpop.f32.mrb[0].mxu0
      %v601 = vpop.f32.mrb[0].mxu0
      %v602 = vpop.f32.mrb[0].mxu0
      %603 = vdwg.mxu0
      %v604 = vadd.f32 %v469, %v591
      %v605 = vadd.f32 %v472, %v594
      %v606 = vadd.f32 %v477, %v599
      %v607 = vld [vmem:[%s206] sm:$0x8]
      %v608 = vld [vmem:[%s206 + $0xc] sm:$0x7]
      %v609 = vld [vmem:[%s210 + $0xc0] sm:$0xf]
      %v610 = vld [vmem:[%s210 + $0xc4] sm:$0xf]
      %v611 = vld [vmem:[%s210 + $0xc8] sm:$0xf]
      %v612 = vld [vmem:[%s210 + $0xcc] sm:$0xf]
      %v613 = vld [vmem:[%s210 + $0xd0] sm:$0xf]
      %v614 = vld [vmem:[%s210 + $0xd4] sm:$0xf]
      %v615 = vld [vmem:[%s210 + $0xd8] sm:$0xf]
      %v616 = vld [vmem:[%s210 + $0xdc] sm:$0xf]
      %v617 = vld [vmem:[%s210 + $0xe0] sm:$0xf]
      %v618 = vld [vmem:[%s210 + $0xe4] sm:$0xf]
      %v619 = vld [vmem:[%s210 + $0xe8] sm:$0xf]
      %v620 = vld [vmem:[%s210 + $0xec] sm:$0xf]
      %v621 = vld [vmem:[%s210 + $0xf0] sm:$0xf]
      %v622 = vld [vmem:[%s210 + $0xf4] sm:$0xf]
      %v623 = vld [vmem:[%s210 + $0xf8] sm:$0xf]
      %v624 = vld [vmem:[%s210 + $0xfc] sm:$0xf]
      %v627 = vunpack.c.l.b16 %v607
      %v628 = vunpack.c.l.b16 %v608
      %v629 = vpack.c.b16 %v264, %v627
      %v630 = vpack.c.b16 %v628, %v265
      %vm631 = vcmask 1044480
      %v632 = vrot.slane %v629, 3
      %v633 = vrot.slane %v630, 3
      %v634 = vsel %vm631, %v632, %v633
      %v653 = vunpack.c.l.b16 %v609
      %v654 = vunpack.c.l.b16 %v610
      %v655 = vunpack.c.l.b16 %v611
      %v656 = vunpack.c.l.b16 %v612
      %v657 = vunpack.c.l.b16 %v613
      %v658 = vunpack.c.l.b16 %v614
      %v659 = vunpack.c.l.b16 %v615
      %v660 = vunpack.c.l.b16 %v616
      %v661 = vunpack.c.l.b16 %v617
      %v662 = vunpack.c.l.b16 %v618
      %v663 = vunpack.c.l.b16 %v619
      %v664 = vunpack.c.l.b16 %v620
      %v665 = vunpack.c.l.b16 %v621
      %v666 = vunpack.c.l.b16 %v622
      %v667 = vunpack.c.l.b16 %v623
      %v668 = vunpack.c.l.b16 %v624
      %v669 = vpack.c.b16 %v654, %v653
      %v670 = vpack.c.b16 %v656, %v655
      %v671 = vpack.c.b16 %v658, %v657
      %v672 = vpack.c.b16 %v660, %v659
      %v673 = vpack.c.b16 %v662, %v661
      %v674 = vpack.c.b16 %v664, %v663
      %v675 = vpack.c.b16 %v666, %v665
      %v676 = vpack.c.b16 %v668, %v667
      %685 = vmatprep.subr.bf16.mxu0 0
      %686 = vmatpush1.bf16.msra.mxu0 %v669
      %687 = vmatprep.subr.bf16.mxu0 0
      %688 = vmatpush1.bf16.msra.mxu0 %v670
      %689 = vmatprep.subr.bf16.mxu0 0
      %690 = vmatpush1.bf16.msra.mxu0 %v671
      %691 = vmatprep.subr.bf16.mxu0 0
      %692 = vmatpush1.bf16.msra.mxu0 %v672
      %693 = vmatprep.subr.bf16.mxu0 0
      %694 = vmatpush1.bf16.msra.mxu0 %v673
      %695 = vmatprep.subr.bf16.mxu0 0
      %696 = vmatpush1.bf16.msra.mxu0 %v674
      %697 = vmatprep.subr.bf16.mxu0 0
      %698 = vmatpush1.bf16.msra.mxu0 %v675
      %699 = vmatprep.subr.bf16.mxu0 0
      %700 = vmatpush1.bf16.msra.mxu0 %v676
      %701 = vmatprep.subr.bf16.mxu0 0
      %702 = vmatpush1.bf16.msra.mxu0 0
      %703 = vmatprep.subr.bf16.mxu0 0
      %704 = vmatpush1.bf16.msra.mxu0 0
      %705 = vmatprep.subr.bf16.mxu0 0
      %706 = vmatpush1.bf16.msra.mxu0 0
      %707 = vmatprep.subr.bf16.mxu0 0
      %708 = vmatpush1.bf16.msra.mxu0 0
      %709 = vmatprep.subr.bf16.mxu0 0
      %710 = vmatpush1.bf16.msra.mxu0 0
      %711 = vmatprep.subr.bf16.mxu0 0
      %712 = vmatpush1.bf16.msra.mxu0 0
      %713 = vmatprep.subr.bf16.mxu0 0
      %714 = vmatpush1.bf16.msra.mxu0 0
      %715 = vmatprep.subr.bf16.mxu0 0
      %716 = vmatpush1.bf16.msra.mxu0 0
      %717 = vmatprep.mubr.bf16.mxu0 0
      %718 = vmatmul.mubr.bf16.gmra.mrb[0].mxu0 %v634
      %v719 = vpop.f32.mrb[0].mxu0
      %v720 = vadd.f32 0.0, %v719
      %v721 = vpop.f32.mrb[0].mxu0
      %v722 = vpop.f32.mrb[0].mxu0
      %v723 = vadd.f32 0.0, %v722
      %v724 = vpop.f32.mrb[0].mxu0
      %725 = vmatprep.mubr.bf16.mxu0 0
      %726 = vmatmul.mubr.bf16.gmra.mrb[0].mxu0 %v633
      %v727 = vpop.f32.mrb[0].mxu0
      %v728 = vadd.f32 0.0, %v727
      %v729 = vpop.f32.mrb[0].mxu0
      %v730 = vpop.f32.mrb[0].mxu0
      %v731 = vpop.f32.mrb[0].mxu0
      %732 = vdwg.mxu0
      %v733 = vadd.f32 %v604, %v720
      %v734 = vadd.f32 %v605, %v723
      %v735 = vadd.f32 %v606, %v728
      %v736 = vld [vmem:[%s206 + $0xc] sm:$0xf]
      %v737 = vld [vmem:[%s210 + $0x100] sm:$0xf]
      %v738 = vld [vmem:[%s210 + $0x104] sm:$0xf]
      %v739 = vld [vmem:[%s210 + $0x108] sm:$0xf]
      %v740 = vld [vmem:[%s210 + $0x10c] sm:$0xf]
      %v741 = vld [vmem:[%s210 + $0x110] sm:$0xf]
      %v742 = vld [vmem:[%s210 + $0x114] sm:$0xf]
      %v743 = vld [vmem:[%s210 + $0x118] sm:$0xf]
      %v744 = vld [vmem:[%s210 + $0x11c] sm:$0xf]
      %v745 = vld [vmem:[%s210 + $0x120] sm:$0xf]
      %v746 = vld [vmem:[%s210 + $0x124] sm:$0xf]
      %v747 = vld [vmem:[%s210 + $0x128] sm:$0xf]
      %v748 = vld [vmem:[%s210 + $0x12c] sm:$0xf]
      %v749 = vld [vmem:[%s210 + $0x130] sm:$0xf]
      %v750 = vld [vmem:[%s210 + $0x134] sm:$0xf]
      %v751 = vld [vmem:[%s210 + $0x138] sm:$0xf]
      %v752 = vld [vmem:[%s210 + $0x13c] sm:$0xf]
      %v754 = vunpack.c.l.b16 %v736
      %v755 = vpack.c.b16 %v754, %v265
      %vm756 = vsmask.f32 4352
      %v758 = vshrl.u32 %v629, 16
      %v760 = vrot.slane %v758, 3
      %v761 = vshll.u32 %v629, 16
      %v763 = vrot.slane %v761, 4
      %v764 = vor.u32 %v760, %v763
      %v766 = vshrl.u32 %v755, 16
      %v768 = vrot.slane %v766, 3
      %v769 = vshll.u32 %v755, 16
      %v771 = vrot.slane %v769, 4
      %v772 = vor.u32 %v768, %v771
      %v773 = vsel %vm756, %v764, %v772
      %v792 = vunpack.c.l.b16 %v737
      %v793 = vunpack.c.l.b16 %v738
      %v794 = vunpack.c.l.b16 %v739
      %v795 = vunpack.c.l.b16 %v740
      %v796 = vunpack.c.l.b16 %v741
      %v797 = vunpack.c.l.b16 %v742
      %v798 = vunpack.c.l.b16 %v743
      %v799 = vunpack.c.l.b16 %v744
      %v800 = vunpack.c.l.b16 %v745
      %v801 = vunpack.c.l.b16 %v746
      %v802 = vunpack.c.l.b16 %v747
      %v803 = vunpack.c.l.b16 %v748
      %v804 = vunpack.c.l.b16 %v749
      %v805 = vunpack.c.l.b16 %v750
      %v806 = vunpack.c.l.b16 %v751
      %v807 = vunpack.c.l.b16 %v752
      %v808 = vpack.c.b16 %v793, %v792
      %v809 = vpack.c.b16 %v795, %v794
      %v810 = vpack.c.b16 %v797, %v796
      %v811 = vpack.c.b16 %v799, %v798
      %v812 = vpack.c.b16 %v801, %v800
      %v813 = vpack.c.b16 %v803, %v802
      %v814 = vpack.c.b16 %v805, %v804
      %v815 = vpack.c.b16 %v807, %v806
      %824 = vmatprep.subr.bf16.mxu0 0
      %825 = vmatpush1.bf16.msra.mxu0 %v808
      %826 = vmatprep.subr.bf16.mxu0 0
      %827 = vmatpush1.bf16.msra.mxu0 %v809
      %828 = vmatprep.subr.bf16.mxu0 0
      %829 = vmatpush1.bf16.msra.mxu0 %v810
      %830 = vmatprep.subr.bf16.mxu0 0
      %831 = vmatpush1.bf16.msra.mxu0 %v811
      %832 = vmatprep.subr.bf16.mxu0 0
      %833 = vmatpush1.bf16.msra.mxu0 %v812
      %834 = vmatprep.subr.bf16.mxu0 0
      %835 = vmatpush1.bf16.msra.mxu0 %v813
      %836 = vmatprep.subr.bf16.mxu0 0
      %837 = vmatpush1.bf16.msra.mxu0 %v814
      %838 = vmatprep.subr.bf16.mxu0 0
      %839 = vmatpush1.bf16.msra.mxu0 %v815
      %840 = vmatprep.subr.bf16.mxu0 0
      %841 = vmatpush1.bf16.msra.mxu0 0
      %842 = vmatprep.subr.bf16.mxu0 0
      %843 = vmatpush1.bf16.msra.mxu0 0
      %844 = vmatprep.subr.bf16.mxu0 0
      %845 = vmatpush1.bf16.msra.mxu0 0
      %846 = vmatprep.subr.bf16.mxu0 0
      %847 = vmatpush1.bf16.msra.mxu0 0
      %848 = vmatprep.subr.bf16.mxu0 0
      %849 = vmatpush1.bf16.msra.mxu0 0
      %850 = vmatprep.subr.bf16.mxu0 0
      %851 = vmatpush1.bf16.msra.mxu0 0
      %852 = vmatprep.subr.bf16.mxu0 0
      %853 = vmatpush1.bf16.msra.mxu0 0
      %854 = vmatprep.subr.bf16.mxu0 0
      %855 = vmatpush1.bf16.msra.mxu0 0
      %856 = vmatprep.mubr.bf16.mxu0 0
      %857 = vmatmul.mubr.bf16.gmra.mrb[0].mxu0 %v773
      %v858 = vpop.f32.mrb[0].mxu0
      %v859 = vadd.f32 0.0, %v858
      %v860 = vpop.f32.mrb[0].mxu0
      %v861 = vpop.f32.mrb[0].mxu0
      %v862 = vadd.f32 0.0, %v861
      %v863 = vpop.f32.mrb[0].mxu0
      %864 = vmatprep.mubr.bf16.mxu0 0
      %865 = vmatmul.mubr.bf16.gmra.mrb[0].mxu0 %v772
      %v866 = vpop.f32.mrb[0].mxu0
      %v867 = vadd.f32 0.0, %v866
      %v868 = vpop.f32.mrb[0].mxu0
      %v869 = vpop.f32.mrb[0].mxu0
      %v870 = vpop.f32.mrb[0].mxu0
      %871 = vdwg.mxu0
      %v872 = vadd.f32 %v733, %v859
      %v873 = vadd.f32 %v734, %v862
      %v874 = vadd.f32 %v735, %v867
      %v875 = vld [vmem:[%s210 + $0x140] sm:$0xf]
      %v876 = vld [vmem:[%s210 + $0x144] sm:$0xf]
      %v877 = vld [vmem:[%s210 + $0x148] sm:$0xf]
      %v878 = vld [vmem:[%s210 + $0x14c] sm:$0xf]
      %v879 = vld [vmem:[%s210 + $0x150] sm:$0xf]
      %v880 = vld [vmem:[%s210 + $0x154] sm:$0xf]
      %v881 = vld [vmem:[%s210 + $0x158] sm:$0xf]
      %v882 = vld [vmem:[%s210 + $0x15c] sm:$0xf]
      %v883 = vld [vmem:[%s210 + $0x160] sm:$0xf]
      %v884 = vld [vmem:[%s210 + $0x164] sm:$0xf]
      %v885 = vld [vmem:[%s210 + $0x168] sm:$0xf]
      %v886 = vld [vmem:[%s210 + $0x16c] sm:$0xf]
      %v887 = vld [vmem:[%s210 + $0x170] sm:$0xf]
      %v888 = vld [vmem:[%s210 + $0x174] sm:$0xf]
      %v889 = vld [vmem:[%s210 + $0x178] sm:$0xf]
      %v890 = vld [vmem:[%s210 + $0x17c] sm:$0xf]
      %v891 = vpack.c.b16 %v265, %v264
      %v892 = vpack.c.b16 %v754, %v754
      %v911 = vunpack.c.l.b16 %v875
      %v912 = vunpack.c.l.b16 %v876
      %v913 = vunpack.c.l.b16 %v877
      %v914 = vunpack.c.l.b16 %v878
      %v915 = vunpack.c.l.b16 %v879
      %v916 = vunpack.c.l.b16 %v880
      %v917 = vunpack.c.l.b16 %v881
      %v918 = vunpack.c.l.b16 %v882
      %v919 = vunpack.c.l.b16 %v883
      %v920 = vunpack.c.l.b16 %v884
      %v921 = vunpack.c.l.b16 %v885
      %v922 = vunpack.c.l.b16 %v886
      %v923 = vunpack.c.l.b16 %v887
      %v924 = vunpack.c.l.b16 %v888
      %v925 = vunpack.c.l.b16 %v889
      %v926 = vunpack.c.l.b16 %v890
      %v927 = vpack.c.b16 %v912, %v911
      %v928 = vpack.c.b16 %v914, %v913
      %v929 = vpack.c.b16 %v916, %v915
      %v930 = vpack.c.b16 %v918, %v917
      %v931 = vpack.c.b16 %v920, %v919
      %v932 = vpack.c.b16 %v922, %v921
      %v933 = vpack.c.b16 %v924, %v923
      %v934 = vpack.c.b16 %v926, %v925
      %943 = vmatprep.subr.bf16.mxu0 0
      %944 = vmatpush1.bf16.msra.mxu0 %v927
      %945 = vmatprep.subr.bf16.mxu0 0
      %946 = vmatpush1.bf16.msra.mxu0 %v928
      %947 = vmatprep.subr.bf16.mxu0 0
      %948 = vmatpush1.bf16.msra.mxu0 %v929
      %949 = vmatprep.subr.bf16.mxu0 0
      %950 = vmatpush1.bf16.msra.mxu0 %v930
      %951 = vmatprep.subr.bf16.mxu0 0
      %952 = vmatpush1.bf16.msra.mxu0 %v931
      %953 = vmatprep.subr.bf16.mxu0 0
      %954 = vmatpush1.bf16.msra.mxu0 %v932
      %955 = vmatprep.subr.bf16.mxu0 0
      %956 = vmatpush1.bf16.msra.mxu0 %v933
      %957 = vmatprep.subr.bf16.mxu0 0
      %958 = vmatpush1.bf16.msra.mxu0 %v934
      %959 = vmatprep.subr.bf16.mxu0 0
      %960 = vmatpush1.bf16.msra.mxu0 0
      %961 = vmatprep.subr.bf16.mxu0 0
      %962 = vmatpush1.bf16.msra.mxu0 0
      %963 = vmatprep.subr.bf16.mxu0 0
      %964 = vmatpush1.bf16.msra.mxu0 0
      %965 = vmatprep.subr.bf16.mxu0 0
      %966 = vmatpush1.bf16.msra.mxu0 0
      %967 = vmatprep.subr.bf16.mxu0 0
      %968 = vmatpush1.bf16.msra.mxu0 0
      %969 = vmatprep.subr.bf16.mxu0 0
      %970 = vmatpush1.bf16.msra.mxu0 0
      %971 = vmatprep.subr.bf16.mxu0 0
      %972 = vmatpush1.bf16.msra.mxu0 0
      %973 = vmatprep.subr.bf16.mxu0 0
      %974 = vmatpush1.bf16.msra.mxu0 0
      %975 = vmatprep.mubr.bf16.mxu0 0
      %976 = vmatmul.mubr.bf16.gmra.mrb[0].mxu0 %v891
      %v977 = vpop.f32.mrb[0].mxu0
      %v978 = vadd.f32 0.0, %v977
      %v979 = vpop.f32.mrb[0].mxu0
      %v980 = vpop.f32.mrb[0].mxu0
      %v981 = vadd.f32 0.0, %v980
      %v982 = vpop.f32.mrb[0].mxu0
      %983 = vmatprep.mubr.bf16.mxu0 0
      %984 = vmatmul.mubr.bf16.gmra.mrb[0].mxu0 %v892
      %v985 = vpop.f32.mrb[0].mxu0
      %v986 = vadd.f32 0.0, %v985
      %v987 = vpop.f32.mrb[0].mxu0
      %v988 = vpop.f32.mrb[0].mxu0
      %v989 = vpop.f32.mrb[0].mxu0
      %990 = vdwg.mxu0
      %v991 = vadd.f32 %v872, %v978
      %v992 = vadd.f32 %v873, %v981
      %v993 = vadd.f32 %v874, %v986
      %v994 = vld [vmem:[%s206 + $0x4] sm:$0xc]
      %v995 = vld [vmem:[%s206 + $0x8] sm:$0xf]
      %v996 = vld [vmem:[%s206 + $0xc] sm:$0xf]
      %v997 = vld [vmem:[%s206 + $0x10] sm:$0x3]
      %v998 = vld [vmem:[%s210 + $0x180] sm:$0xf]
      %v999 = vld [vmem:[%s210 + $0x184] sm:$0xf]
      %v1000 = vld [vmem:[%s210 + $0x188] sm:$0xf]
      %v1001 = vld [vmem:[%s210 + $0x18c] sm:$0xf]
      %v1002 = vld [vmem:[%s210 + $0x190] sm:$0xf]
      %v1003 = vld [vmem:[%s210 + $0x194] sm:$0xf]
      %v1004 = vld [vmem:[%s210 + $0x198] sm:$0xf]
      %v1005 = vld [vmem:[%s210 + $0x19c] sm:$0xf]
      %v1006 = vld [vmem:[%s210 + $0x1a0] sm:$0xf]
      %v1007 = vld [vmem:[%s210 + $0x1a4] sm:$0xf]
      %v1008 = vld [vmem:[%s210 + $0x1a8] sm:$0xf]
      %v1009 = vld [vmem:[%s210 + $0x1ac] sm:$0xf]
      %v1010 = vld [vmem:[%s210 + $0x1b0] sm:$0xf]
      %v1011 = vld [vmem:[%s210 + $0x1b4] sm:$0xf]
      %v1012 = vld [vmem:[%s210 + $0x1b8] sm:$0xf]
      %v1013 = vld [vmem:[%s210 + $0x1bc] sm:$0xf]
      %v1018 = vunpack.c.l.b16 %v994
      %v1019 = vunpack.c.l.b16 %v995
      %v1020 = vunpack.c.l.b16 %v996
      %v1021 = vunpack.c.l.b16 %v997
      %v1022 = vpack.c.b16 %v1019, %v1018
      %v1023 = vpack.c.b16 %v1021, %v1020
      %vm1024 = vcmask 1045504
      %v1025 = vrot.slane %v1022, 2
      %v1026 = vrot.slane %v1023, 2
      %v1027 = vsel %vm1024, %v1025, %v1026
      %v1046 = vunpack.c.l.b16 %v998
      %v1047 = vunpack.c.l.b16 %v999
      %v1048 = vunpack.c.l.b16 %v1000
      %v1049 = vunpack.c.l.b16 %v1001
      %v1050 = vunpack.c.l.b16 %v1002
      %v1051 = vunpack.c.l.b16 %v1003
      %v1052 = vunpack.c.l.b16 %v1004
      %v1053 = vunpack.c.l.b16 %v1005
      %v1054 = vunpack.c.l.b16 %v1006
      %v1055 = vunpack.c.l.b16 %v1007
      %v1056 = vunpack.c.l.b16 %v1008
      %v1057 = vunpack.c.l.b16 %v1009
      %v1058 = vunpack.c.l.b16 %v1010
      %v1059 = vunpack.c.l.b16 %v1011
      %v1060 = vunpack.c.l.b16 %v1012
      %v1061 = vunpack.c.l.b16 %v1013
      %v1062 = vpack.c.b16 %v1047, %v1046
      %v1063 = vpack.c.b16 %v1049, %v1048
      %v1064 = vpack.c.b16 %v1051, %v1050
      %v1065 = vpack.c.b16 %v1053, %v1052
      %v1066 = vpack.c.b16 %v1055, %v1054
      %v1067 = vpack.c.b16 %v1057, %v1056
      %v1068 = vpack.c.b16 %v1059, %v1058
      %v1069 = vpack.c.b16 %v1061, %v1060
      %1078 = vmatprep.subr.bf16.mxu0 0
      %1079 = vmatpush1.bf16.msra.mxu0 %v1062
      %1080 = vmatprep.subr.bf16.mxu0 0
      %1081 = vmatpush1.bf16.msra.mxu0 %v1063
      %1082 = vmatprep.subr.bf16.mxu0 0
      %1083 = vmatpush1.bf16.msra.mxu0 %v1064
      %1084 = vmatprep.subr.bf16.mxu0 0
      %1085 = vmatpush1.bf16.msra.mxu0 %v1065
      %1086 = vmatprep.subr.bf16.mxu0 0
      %1087 = vmatpush1.bf16.msra.mxu0 %v1066
      %1088 = vmatprep.subr.bf16.mxu0 0
      %1089 = vmatpush1.bf16.msra.mxu0 %v1067
      %1090 = vmatprep.subr.bf16.mxu0 0
      %1091 = vmatpush1.bf16.msra.mxu0 %v1068
      %1092 = vmatprep.subr.bf16.mxu0 0
      %1093 = vmatpush1.bf16.msra.mxu0 %v1069
      %1094 = vmatprep.subr.bf16.mxu0 0
      %1095 = vmatpush1.bf16.msra.mxu0 0
      %1096 = vmatprep.subr.bf16.mxu0 0
      %1097 = vmatpush1.bf16.msra.mxu0 0
      %1098 = vmatprep.subr.bf16.mxu0 0
      %1099 = vmatpush1.bf16.msra.mxu0 0
      %1100 = vmatprep.subr.bf16.mxu0 0
      %1101 = vmatpush1.bf16.msra.mxu0 0
      %1102 = vmatprep.subr.bf16.mxu0 0
      %1103 = vmatpush1.bf16.msra.mxu0 0
      %1104 = vmatprep.subr.bf16.mxu0 0
      %1105 = vmatpush1.bf16.msra.mxu0 0
      %1106 = vmatprep.subr.bf16.mxu0 0
      %1107 = vmatpush1.bf16.msra.mxu0 0
      %1108 = vmatprep.subr.bf16.mxu0 0
      %1109 = vmatpush1.bf16.msra.mxu0 0
      %1110 = vmatprep.mubr.bf16.mxu0 0
      %1111 = vmatmul.mubr.bf16.gmra.mrb[0].mxu0 %v1027
      %v1112 = vpop.f32.mrb[0].mxu0
      %v1113 = vadd.f32 0.0, %v1112
      %v1114 = vpop.f32.mrb[0].mxu0
      %v1115 = vpop.f32.mrb[0].mxu0
      %v1116 = vadd.f32 0.0, %v1115
      %v1117 = vpop.f32.mrb[0].mxu0
      %1118 = vmatprep.mubr.bf16.mxu0 0
      %1119 = vmatmul.mubr.bf16.gmra.mrb[0].mxu0 %v1026
      %v1120 = vpop.f32.mrb[0].mxu0
      %v1121 = vadd.f32 0.0, %v1120
      %v1122 = vpop.f32.mrb[0].mxu0
      %v1123 = vpop.f32.mrb[0].mxu0
      %v1124 = vpop.f32.mrb[0].mxu0
      %1125 = vdwg.mxu0
      %v1126 = vadd.f32 %v991, %v1113
      %v1127 = vadd.f32 %v992, %v1116
      %v1128 = vadd.f32 %v993, %v1121
      %v1129 = vld [vmem:[%s206 + $0x10] sm:$0x7]
      %v1130 = vld [vmem:[%s210 + $0x1c0] sm:$0xf]
      %v1131 = vld [vmem:[%s210 + $0x1c4] sm:$0xf]
      %v1132 = vld [vmem:[%s210 + $0x1c8] sm:$0xf]
      %v1133 = vld [vmem:[%s210 + $0x1cc] sm:$0xf]
      %v1134 = vld [vmem:[%s210 + $0x1d0] sm:$0xf]
      %v1135 = vld [vmem:[%s210 + $0x1d4] sm:$0xf]
      %v1136 = vld [vmem:[%s210 + $0x1d8] sm:$0xf]
      %v1137 = vld [vmem:[%s210 + $0x1dc] sm:$0xf]
      %v1138 = vld [vmem:[%s210 + $0x1e0] sm:$0xf]
      %v1139 = vld [vmem:[%s210 + $0x1e4] sm:$0xf]
      %v1140 = vld [vmem:[%s210 + $0x1e8] sm:$0xf]
      %v1141 = vld [vmem:[%s210 + $0x1ec] sm:$0xf]
      %v1142 = vld [vmem:[%s210 + $0x1f0] sm:$0xf]
      %v1143 = vld [vmem:[%s210 + $0x1f4] sm:$0xf]
      %v1144 = vld [vmem:[%s210 + $0x1f8] sm:$0xf]
      %v1145 = vld [vmem:[%s210 + $0x1fc] sm:$0xf]
      %v1147 = vunpack.c.l.b16 %v1129
      %v1148 = vpack.c.b16 %v1147, %v1020
      %vm1149 = vsmask.f32 5376
      %v1151 = vshrl.u32 %v1022, 16
      %v1153 = vrot.slane %v1151, 2
      %v1154 = vshll.u32 %v1022, 16
      %v1156 = vrot.slane %v1154, 3
      %v1157 = vor.u32 %v1153, %v1156
      %v1159 = vshrl.u32 %v1148, 16
      %v1161 = vrot.slane %v1159, 2
      %v1162 = vshll.u32 %v1148, 16
      %v1164 = vrot.slane %v1162, 3
      %v1165 = vor.u32 %v1161, %v1164
      %v1166 = vsel %vm1149, %v1157, %v1165
      %v1185 = vunpack.c.l.b16 %v1130
      %v1186 = vunpack.c.l.b16 %v1131
      %v1187 = vunpack.c.l.b16 %v1132
      %v1188 = vunpack.c.l.b16 %v1133
      %v1189 = vunpack.c.l.b16 %v1134
      %v1190 = vunpack.c.l.b16 %v1135
      %v1191 = vunpack.c.l.b16 %v1136
      %v1192 = vunpack.c.l.b16 %v1137
      %v1193 = vunpack.c.l.b16 %v1138
      %v1194 = vunpack.c.l.b16 %v1139
      %v1195 = vunpack.c.l.b16 %v1140
      %v1196 = vunpack.c.l.b16 %v1141
      %v1197 = vunpack.c.l.b16 %v1142
      %v1198 = vunpack.c.l.b16 %v1143
      %v1199 = vunpack.c.l.b16 %v1144
      %v1200 = vunpack.c.l.b16 %v1145
      %v1201 = vpack.c.b16 %v1186, %v1185
      %v1202 = vpack.c.b16 %v1188, %v1187
      %v1203 = vpack.c.b16 %v1190, %v1189
      %v1204 = vpack.c.b16 %v1192, %v1191
      %v1205 = vpack.c.b16 %v1194, %v1193
      %v1206 = vpack.c.b16 %v1196, %v1195
      %v1207 = vpack.c.b16 %v1198, %v1197
      %v1208 = vpack.c.b16 %v1200, %v1199
      %1217 = vmatprep.subr.bf16.mxu0 0
      %1218 = vmatpush1.bf16.msra.mxu0 %v1201
      %1219 = vmatprep.subr.bf16.mxu0 0
      %1220 = vmatpush1.bf16.msra.mxu0 %v1202
      %1221 = vmatprep.subr.bf16.mxu0 0
      %1222 = vmatpush1.bf16.msra.mxu0 %v1203
      %1223 = vmatprep.subr.bf16.mxu0 0
      %1224 = vmatpush1.bf16.msra.mxu0 %v1204
      %1225 = vmatprep.subr.bf16.mxu0 0
      %1226 = vmatpush1.bf16.msra.mxu0 %v1205
      %1227 = vmatprep.subr.bf16.mxu0 0
      %1228 = vmatpush1.bf16.msra.mxu0 %v1206
      %1229 = vmatprep.subr.bf16.mxu0 0
      %1230 = vmatpush1.bf16.msra.mxu0 %v1207
      %1231 = vmatprep.subr.bf16.mxu0 0
      %1232 = vmatpush1.bf16.msra.mxu0 %v1208
      %1233 = vmatprep.subr.bf16.mxu0 0
      %1234 = vmatpush1.bf16.msra.mxu0 0
      %1235 = vmatprep.subr.bf16.mxu0 0
      %1236 = vmatpush1.bf16.msra.mxu0 0
      %1237 = vmatprep.subr.bf16.mxu0 0
      %1238 = vmatpush1.bf16.msra.mxu0 0
      %1239 = vmatprep.subr.bf16.mxu0 0
      %1240 = vmatpush1.bf16.msra.mxu0 0
      %1241 = vmatprep.subr.bf16.mxu0 0
      %1242 = vmatpush1.bf16.msra.mxu0 0
      %1243 = vmatprep.subr.bf16.mxu0 0
      %1244 = vmatpush1.bf16.msra.mxu0 0
      %1245 = vmatprep.subr.bf16.mxu0 0
      %1246 = vmatpush1.bf16.msra.mxu0 0
      %1247 = vmatprep.subr.bf16.mxu0 0
      %1248 = vmatpush1.bf16.msra.mxu0 0
      %1249 = vmatprep.mubr.bf16.mxu0 0
      %1250 = vmatmul.mubr.bf16.gmra.mrb[0].mxu0 %v1166
      %v1251 = vpop.f32.mrb[0].mxu0
      %v1252 = vadd.f32 0.0, %v1251
      %v1253 = vpop.f32.mrb[0].mxu0
      %v1254 = vpop.f32.mrb[0].mxu0
      %v1255 = vadd.f32 0.0, %v1254
      %v1256 = vpop.f32.mrb[0].mxu0
      %1257 = vmatprep.mubr.bf16.mxu0 0
      %1258 = vmatmul.mubr.bf16.gmra.mrb[0].mxu0 %v1165
      %v1259 = vpop.f32.mrb[0].mxu0
      %v1260 = vadd.f32 0.0, %v1259
      %v1261 = vpop.f32.mrb[0].mxu0
      %v1262 = vpop.f32.mrb[0].mxu0
      %v1263 = vpop.f32.mrb[0].mxu0
      %1264 = vdwg.mxu0
      %v1265 = vadd.f32 %v1126, %v1252
      %v1266 = vadd.f32 %v1127, %v1255
      %v1267 = vadd.f32 %v1128, %v1260
      %v1268 = vld [vmem:[%s206 + $0x4] sm:$0x8]
      %v1269 = vld [vmem:[%s210 + $0x200] sm:$0xf]
      %v1270 = vld [vmem:[%s210 + $0x204] sm:$0xf]
      %v1271 = vld [vmem:[%s210 + $0x208] sm:$0xf]
      %v1272 = vld [vmem:[%s210 + $0x20c] sm:$0xf]
      %v1273 = vld [vmem:[%s210 + $0x210] sm:$0xf]
      %v1274 = vld [vmem:[%s210 + $0x214] sm:$0xf]
      %v1275 = vld [vmem:[%s210 + $0x218] sm:$0xf]
      %v1276 = vld [vmem:[%s210 + $0x21c] sm:$0xf]
      %v1277 = vld [vmem:[%s210 + $0x220] sm:$0xf]
      %v1278 = vld [vmem:[%s210 + $0x224] sm:$0xf]
      %v1279 = vld [vmem:[%s210 + $0x228] sm:$0xf]
      %v1280 = vld [vmem:[%s210 + $0x22c] sm:$0xf]
      %v1281 = vld [vmem:[%s210 + $0x230] sm:$0xf]
      %v1282 = vld [vmem:[%s210 + $0x234] sm:$0xf]
      %v1283 = vld [vmem:[%s210 + $0x238] sm:$0xf]
      %v1284 = vld [vmem:[%s210 + $0x23c] sm:$0xf]
      %v1286 = vunpack.c.l.b16 %v1268
      %v1287 = vpack.c.b16 %v1019, %v1286
      %v1288 = vrot.slane %v1287, 3
      %v1289 = vrot.slane %v1148, 3
      %v1290 = vsel %vm631, %v1288, %v1289
      %v1309 = vunpack.c.l.b16 %v1269
      %v1310 = vunpack.c.l.b16 %v1270
      %v1311 = vunpack.c.l.b16 %v1271
      %v1312 = vunpack.c.l.b16 %v1272
      %v1313 = vunpack.c.l.b16 %v1273
      %v1314 = vunpack.c.l.b16 %v1274
      %v1315 = vunpack.c.l.b16 %v1275
      %v1316 = vunpack.c.l.b16 %v1276
      %v1317 = vunpack.c.l.b16 %v1277
      %v1318 = vunpack.c.l.b16 %v1278
      %v1319 = vunpack.c.l.b16 %v1279
      %v1320 = vunpack.c.l.b16 %v1280
      %v1321 = vunpack.c.l.b16 %v1281
      %v1322 = vunpack.c.l.b16 %v1282
      %v1323 = vunpack.c.l.b16 %v1283
      %v1324 = vunpack.c.l.b16 %v1284
      %v1325 = vpack.c.b16 %v1310, %v1309
      %v1326 = vpack.c.b16 %v1312, %v1311
      %v1327 = vpack.c.b16 %v1314, %v1313
      %v1328 = vpack.c.b16 %v1316, %v1315
      %v1329 = vpack.c.b16 %v1318, %v1317
      %v1330 = vpack.c.b16 %v1320, %v1319
      %v1331 = vpack.c.b16 %v1322, %v1321
      %v1332 = vpack.c.b16 %v1324, %v1323
      %1341 = vmatprep.subr.bf16.mxu0 0
      %1342 = vmatpush1.bf16.msra.mxu0 %v1325
      %1343 = vmatprep.subr.bf16.mxu0 0
      %1344 = vmatpush1.bf16.msra.mxu0 %v1326
      %1345 = vmatprep.subr.bf16.mxu0 0
      %1346 = vmatpush1.bf16.msra.mxu0 %v1327
      %1347 = vmatprep.subr.bf16.mxu0 0
      %1348 = vmatpush1.bf16.msra.mxu0 %v1328
      %1349 = vmatprep.subr.bf16.mxu0 0
      %1350 = vmatpush1.bf16.msra.mxu0 %v1329
      %1351 = vmatprep.subr.bf16.mxu0 0
      %1352 = vmatpush1.bf16.msra.mxu0 %v1330
      %1353 = vmatprep.subr.bf16.mxu0 0
      %1354 = vmatpush1.bf16.msra.mxu0 %v1331
      %1355 = vmatprep.subr.bf16.mxu0 0
      %1356 = vmatpush1.bf16.msra.mxu0 %v1332
      %1357 = vmatprep.subr.bf16.mxu0 0
      %1358 = vmatpush1.bf16.msra.mxu0 0
      %1359 = vmatprep.subr.bf16.mxu0 0
      %1360 = vmatpush1.bf16.msra.mxu0 0
      %1361 = vmatprep.subr.bf16.mxu0 0
      %1362 = vmatpush1.bf16.msra.mxu0 0
      %1363 = vmatprep.subr.bf16.mxu0 0
      %1364 = vmatpush1.bf16.msra.mxu0 0
      %1365 = vmatprep.subr.bf16.mxu0 0
      %1366 = vmatpush1.bf16.msra.mxu0 0
      %1367 = vmatprep.subr.bf16.mxu0 0
      %1368 = vmatpush1.bf16.msra.mxu0 0
      %1369 = vmatprep.subr.bf16.mxu0 0
      %1370 = vmatpush1.bf16.msra.mxu0 0
      %1371 = vmatprep.subr.bf16.mxu0 0
      %1372 = vmatpush1.bf16.msra.mxu0 0
      %1373 = vmatprep.mubr.bf16.mxu0 0
      %1374 = vmatmul.mubr.bf16.gmra.mrb[0].mxu0 %v1290
      %v1375 = vpop.f32.mrb[0].mxu0
      %v1376 = vadd.f32 0.0, %v1375
      %v1377 = vpop.f32.mrb[0].mxu0
      %v1378 = vpop.f32.mrb[0].mxu0
      %v1379 = vadd.f32 0.0, %v1378
      %v1380 = vpop.f32.mrb[0].mxu0
      %1381 = vmatprep.mubr.bf16.mxu0 0
      %1382 = vmatmul.mubr.bf16.gmra.mrb[0].mxu0 %v1289
      %v1383 = vpop.f32.mrb[0].mxu0
      %v1384 = vadd.f32 0.0, %v1383
      %v1385 = vpop.f32.mrb[0].mxu0
      %v1386 = vpop.f32.mrb[0].mxu0
      %v1387 = vpop.f32.mrb[0].mxu0
      %1388 = vdwg.mxu0
      %v1389 = vadd.f32 %v1265, %v1376
      %v1390 = vadd.f32 %v1266, %v1379
      %v1391 = vadd.f32 %v1267, %v1384
      %v1392 = vld [vmem:[%s213] sm:$0x1]
      %v1394 = vlaneseq
      %v1395 = vshrl.u32 %v1394, 7
      %v1396 = vsub.s32 0, %v1395
      %v1397 = vrot.slane %v1392, %v1396
      %v1399 = vadd.f32 %v1389, %v1397
      %v1400 = vadd.f32 %v1390, %v1397
      %v1401 = vadd.f32 %v1391, %v1397
      %v1402 = vmax.f32 %v1399, 0.0
      %v1403 = vmax.f32 %v1400, 0.0
      %v1404 = vmax.f32 %v1401, 0.0
      %v1405 = vpack.c.bf16 %v1403, %v1402
      %v1406 = vpack.c.bf16 %v1404, %v1404
      %v1409 = vunpack.c.l.b16 %v1405
      %v1410 = vunpack.c.h.b16 %v1405
      %v1411 = vunpack.c.l.b16 %v1406
      %v1412 = vpack.c.b16 %v1409, %v1409
      %v1413 = vpack.c.b16 %v1410, %v1410
      %v1414 = vpack.c.b16 %v1411, %v1411
      %1418 = vst [vmem:[%s221] sm:$0xf] %v1412
      %1419 = vst [vmem:[%s221 + $0x4] sm:$0xf] %v1413
      %1420 = vst [vmem:[%s221 + $0x8] sm:$0xf] %v1414
      %p1421 = scmp.lt.s32.totalorder %s18, 1
      %s1422 = scalar_select %p1421, %s18, 1
      %p1423 = scmp.lt.s32.totalorder %s19, 0
      %s1424 = scalar_select %p1423, %s19, 0
      %s1425 = smul.addr %s1422, 3
      %s1426 = sadd.s32 %s1424, %s1425
      %s1427 = smul.addr %s1426, 4
      %s1428 = scalar_lea.vmem %s3, %s1427
      // Predicated region
      $region33: #{_lambda_.26} parent=31 // pred_check
        %p1429 = pneg %p124
      $region34: #{_lambda_.26} parent=31 // pred_check_branch
        %1431 = sbr.rel (%p1429) target = $region36
      $region35: #{_lambda_.26} parent=31 // pred_region
        _
      $region36: #{_lambda_.26} parent=31 // pred_fallthru
        _
    $region32: #{_lambda_.26} parent=5 // pred_fallthru
      _
    %p1432 = scmp.le.s32.totalorder 2, %s9
    // Predicated region
    $region37: #{_lambda_.26} parent=5 // pred_check
      %p1433 = pneg %p1432
    $region38: #{_lambda_.26} parent=5 // pred_check_branch
      %1435 = sbr.rel (%p1433) target = $region40
    $region39: #{_lambda_.26} parent=5 // pred_region
      %s1436 = ssub.s32 %s9, 2
      // Predicated region
      $region41: #{_lambda_.26} parent=39 // pred_check
        %p1437 = pneg %p130
      $region42: #{_lambda_.26} parent=39 // pred_check_branch
        %1439 = sbr.rel (%p1437) target = $region44
      $region43: #{_lambda_.26} parent=39 // pred_region
        %p1440 = scmp.lt.s32.totalorder %s20, 1
        %s1441 = scalar_select %p1440, %s20, 1
        %p1442 = scmp.lt.s32.totalorder %s21, 0
        %s1443 = scalar_select %p1442, %s21, 0
        %s1444 = smul.addr %s1441, 3
        %s1445 = sadd.s32 %s1443, %s1444
        %s1446 = smul.addr %s1445, 4
        %s1447 = scalar_lea.vmem %s3, %s1446
      $region44: #{_lambda_.26} parent=39 // pred_fallthru
        _
    $region40: #{_lambda_.26} parent=5 // pred_fallthru
      _
  $region6: #{_lambda_.26} parent=0 // loop_footer
    %s13 = sadd.s32 1, %s9
  $region7: #{_lambda_.26} parent=0 // loop_footer_branch
    %8 = sbr.rel target = $region3
  $region8: #{_lambda_.26} parent=0 // loop_exit
    _

</llo_original>
